<compile_context>
chip_gen: v6e
topology: v6e:2x2x1
jax: 0.10.0
libtpu: 0.0.40
codegen_flags: <defaults>
</compile_context>

<pallas_src>
import functools

import jax
import jax.numpy as jnp
from jax.experimental import pallas as pl
from jax.experimental.pallas import tpu as pltpu


# ------------------------------ small helpers -------------------------------

def _round_up(v, m):
    return -(-v // m) * m


def _padded_block_bytes(shape, itemsize):
    """Rough VMEM footprint of a block, accounting for (8,128) tiling of the
    trailing two dims."""
    s = list(shape)
    if len(s) >= 2:
        s[-1] = _round_up(s[-1], 128)
        s[-2] = _round_up(s[-2], 8)
    elif len(s) == 1:
        s[-1] = _round_up(s[-1], 128)
    n = 1
    for v in s:
        n *= v
    return n * itemsize


def _pick_row_tile(rows, lanes, itemsize, target_bytes=2 << 20):
    """Largest row tile (multiple of 8 dividing `rows`) within a bytes target;
    the whole extent if it already fits."""
    target = max(8, target_bytes // (lanes * itemsize))
    if rows <= target:
        return rows
    best = None
    tr = 8
    while tr <= target:
        if rows % tr == 0:
            best = tr
        tr += 8
    return best if best is not None else rows


# ----------------------------- Pallas kernels ------------------------------

def _conv3d_taps_stats_kernel(x_ref, w_ref, mask_ref, y_ref, sum_ref, sq_ref,
                              *, wp, pc):
    """One output depth plane of a 3x3x3/pad=1 conv as 27 shifted matmuls + BN stats.

    Grid = (N, D): outer batch axis is megacore-parallel; inner depth axis is the
    sequential accumulation axis for the per-sample BN statistics.

      x_ref   : (1, D+2, P_pad, Cin) bf16  padded channels-last slab, resident per n
      w_ref   : (27, Cin, Co)        bf16  tap weights, t = kd*9 + kh*3 + kw
      mask_ref: (Pc, 1)              f32   1.0 on valid (non-halo) output rows
      y_ref   : (1, 1, Pc, Co)       f32   conv output rows for plane (n, d)
      sum_ref : (1, 1, Co)           f32   per-sample masked sum    (BN stats)
      sq_ref  : (1, 1, Co)           f32   per-sample masked sum^2  (BN stats)
    """
    d = pl.program_id(1)

    @pl.when(d == 0)
    def _():
        sum_ref[...] = jnp.zeros_like(sum_ref)
        sq_ref[...] = jnp.zeros_like(sq_ref)

    co = y_ref.shape[-1]
    # Value accumulator is fine at these block sizes; switch to a VMEM scratch
    # accumulator if vreg spills show up at large Cout.
    acc = jnp.zeros((pc, co), jnp.float32)
    for kd in range(3):
        for kh in range(3):
            for kw in range(3):
                t = kd * 9 + kh * 3 + kw
                # Output row j (padded HW row r = j + wp + 1) reads input row
                # j + kh*wp + kw of padded depth plane d + kd.
                tap = x_ref[0, d + kd, pl.ds(kh * wp + kw, pc), :]
                acc = acc + jnp.dot(tap, w_ref[t],
                                    preferred_element_type=jnp.float32)

    y_ref[...] = acc.reshape(y_ref.shape)

    m = mask_ref[...]                                 # (Pc, 1); halo rows zeroed
    ym = acc * m
    sum_ref[...] += jnp.sum(ym, axis=0, keepdims=True).reshape(1, 1, -1)
    sq_ref[...] += jnp.sum(ym * acc, axis=0, keepdims=True).reshape(1, 1, -1)


def _bn_relu_add_skip_kernel(z_ref, skip_ref, scale_ref, shift_ref, sb_ref, o_ref):
    """Lane-dense fused: out = relu(z*scale + shift) + skip + skip_bias."""
    o_ref[...] = (jnp.maximum(z_ref[...] * scale_ref[...] + shift_ref[...], 0.0)
                  + skip_ref[...] + sb_ref[...])


# ------------------------------ Pallas wrappers ----------------------------

def conv3d_taps_with_stats(xpad, w_taps, mask, wp):
    """3x3x3 conv (padded-row layout per depth plane) + masked BN-stat partials."""
    N, Dp2, Ppad, Cin = xpad.shape
    D = Dp2 - 2
    Co = w_taps.shape[-1]
    Pc = mask.shape[0]

    need = (2 * _padded_block_bytes((Dp2, Ppad, Cin), 2)     # slab, double buffered
            + 2 * _padded_block_bytes((Pc, Co), 4)           # y block, double buffered
            + _padded_block_bytes((27, Cin, Co), 2)          # weights
            + _padded_block_bytes((Pc, 1), 4)                # mask
            + 4 * _padded_block_bytes((1, Co), 4))           # stats accumulators
    vmem_limit = int(min(max(2 * need, 8 << 20), 32 << 20))

    kernel = functools.partial(_conv3d_taps_stats_kernel, wp=wp, pc=Pc)
    return pl.pallas_call(
        kernel,
        out_shape=(jax.ShapeDtypeStruct((N, D, Pc, Co), jnp.float32),
                   jax.ShapeDtypeStruct((N, 1, Co), jnp.float32),
                   jax.ShapeDtypeStruct((N, 1, Co), jnp.float32)),
        grid_spec=pltpu.PrefetchScalarGridSpec(
            num_scalar_prefetch=0, grid=(N, D),
            in_specs=[pl.BlockSpec((1, Dp2, Ppad, Cin), lambda n, d: (n, 0, 0, 0)),
                      pl.BlockSpec((27, Cin, Co), lambda n, d: (0, 0, 0)),
                      pl.BlockSpec((Pc, 1), lambda n, d: (0, 0))],
            out_specs=(pl.BlockSpec((1, 1, Pc, Co), lambda n, d: (n, d, 0, 0)),
                       pl.BlockSpec((1, 1, Co), lambda n, d: (n, 0, 0)),
                       pl.BlockSpec((1, 1, Co), lambda n, d: (n, 0, 0)))),
        compiler_params=pltpu.CompilerParams(
            dimension_semantics=("parallel", "arbitrary"),
            vmem_limit_bytes=vmem_limit),
    )(xpad, w_taps, mask)


def bn_relu_add_skip(z, skip, scale, shift, skip_b):
    """out = relu(z*scale + shift) + skip + skip_b, on a lane-dense (rows,128) view."""
    M, C = z.shape
    if (M * C) % 128 == 0 and 128 % C == 0:
        rows, lanes, rep = (M * C) // 128, 128, 128 // C
    else:  # fallback: per-channel lanes (lane-sparse but always legal)
        rows, lanes, rep = M, C, 1
    z2 = z.reshape(rows, lanes)
    s2 = skip.reshape(rows, lanes)
    sc = jnp.tile(scale.reshape(1, C), (1, rep))
    sh = jnp.tile(shift.reshape(1, C), (1, rep))
    sb = jnp.tile(skip_b.reshape(1, C), (1, rep))
    tr = _pick_row_tile(rows, lanes, 4)
    out = pl.pallas_call(
        _bn_relu_add_skip_kernel,
        out_shape=jax.ShapeDtypeStruct((rows, lanes), jnp.float32),
        grid_spec=pltpu.PrefetchScalarGridSpec(
            num_scalar_prefetch=0, grid=(rows // tr,),
            in_specs=[pl.BlockSpec((tr, lanes), lambda i: (i, 0)),
                      pl.BlockSpec((tr, lanes), lambda i: (i, 0)),
                      pl.BlockSpec((1, lanes), lambda i: (0, 0)),
                      pl.BlockSpec((1, lanes), lambda i: (0, 0)),
                      pl.BlockSpec((1, lanes), lambda i: (0, 0))],
            out_specs=pl.BlockSpec((tr, lanes), lambda i: (i, 0))),
        compiler_params=pltpu.CompilerParams(
            dimension_semantics=("parallel",)),
    )(z2, s2, sc, sh, sb)
    return out.reshape(M, C)


# ------------------------------ JAX glue ------------------------------------

def _pad_and_flatten_slab(x_cl):
    """(N, D, H, W, C) -> (N, D+2, P_pad, C): zero-pad every spatial dim by 1,
    flatten (H+2, W+2) into rows, and append a few zero rows so every tap's
    shifted window stays in bounds (P_pad is a sublane multiple)."""
    N, D, H, W, C = x_cl.shape
    Hp, Wp = H + 2, W + 2
    P = Hp * Wp
    Ppad = _round_up(P + 2, 8)
    xp = jnp.pad(x_cl, ((0, 0), (1, 1), (1, 1), (1, 1), (0, 0)))
    xf = xp.reshape(N, D + 2, P, C)
    return jnp.pad(xf, ((0, 0), (0, 0), (0, Ppad - P), (0, 0)))


def _taps_weight(w):
    """PyTorch (Cout, Cin, 3, 3, 3) -> (27, Cin, Cout) with t = kd*9 + kh*3 + kw."""
    Cout, Cin = w.shape[0], w.shape[1]
    return jnp.transpose(w, (2, 3, 4, 1, 0)).reshape(27, Cin, Cout)


def _extract_valid(y, H, W):
    """(N, D, Pc=H*(W+2), Co) padded-row conv output -> (N, D, H, W, Co)."""
    N, D, _, Co = y.shape
    Wp = W + 2
    return y.reshape(N, D, H, Wp, Co)[:, :, :, :W, :]


def res_block_forward(x, p, eps=1e-5):
    N, Cin, D, H, W = x.shape
    Co = p["w1"].shape[0]
    Wp = W + 2
    Pc = H * Wp                      # computed rows per plane (halo rows masked)
    M = N * D * H * W

    # channels-last padded slab for conv1/skip, bf16 (halves the dominant DMA)
    x_cl = jnp.transpose(x, (0, 2, 3, 4, 1))
    xpad = _pad_and_flatten_slab(x_cl).astype(jnp.bfloat16)

    # conv1 and skip weights concatenated -> one matmul per tap
    w1s = jnp.concatenate([_taps_weight(p["w1"]), _taps_weight(p["skip_w"])],
                          axis=-1).astype(jnp.bfloat16)
    w2t = _taps_weight(p["w2"]).astype(jnp.bfloat16)

    # validity mask over the Pc computed rows (halo columns excluded from BN stats)
    mask = ((jnp.arange(Pc) % Wp) < W).astype(jnp.float32).reshape(Pc, 1)

    # pass 1: conv1 + skip conv fused (slab read once) with BN1 stats epilogue.
    # Conv biases b1/b2 are dropped: batch-stats BN re-centers, exact cancellation.
    ycat, s1, q1 = conv3d_taps_with_stats(xpad, w1s, mask, Wp)
    mean1 = jnp.sum(s1, axis=(0, 1))[:Co] / M
    var1 = jnp.sum(q1, axis=(0, 1))[:Co] / M - mean1 * mean1
    scale1 = p["gamma1"] * jax.lax.rsqrt(var1 + eps)
    shift1 = p["beta1"] - mean1 * scale1

    ycat_v = _extract_valid(ycat, H, W)              # (N, D, H, W, 2*Co)
    y1, skip = ycat_v[..., :Co], ycat_v[..., Co:]

    # BN1 + ReLU in plain jnp: XLA fuses it into the pad/cast producer of the
    # conv2 slab (no standalone elementwise pallas_call / extra slab pass).
    h1 = jnp.maximum(y1 * scale1 + shift1, 0.0)
    hpad = _pad_and_flatten_slab(h1).astype(jnp.bfloat16)

    # pass 2: conv2 with BN2 stats epilogue.
    z, s2, q2 = conv3d_taps_with_stats(hpad, w2t, mask, Wp)
    mean2 = jnp.sum(s2, axis=(0, 1)) / M
    var2 = jnp.sum(q2, axis=(0, 1)) / M - mean2 * mean2
    scale2 = p["gamma2"] * jax.lax.rsqrt(var2 + eps)
    shift2 = p["beta2"] - mean2 * scale2

    z_v = _extract_valid(z, H, W).reshape(M, Co)
    skip_f = skip.reshape(M, Co)

    # pass 3: BN2 + ReLU + skip (+ skip bias), lane-dense fused elementwise kernel.
    out = bn_relu_add_skip(z_v, skip_f, scale2, shift2, p["skip_b"])
    return jnp.transpose(out.reshape(N, D, H, W, Co), (0, 4, 1, 2, 3))


# ------------------------------ reference -----------------------------------

def reference_forward(x, p, eps=1e-5):
    dn = ("NCDHW", "OIDHW", "NCDHW")

    def conv(inp, w, b):
        y = jax.lax.conv_general_dilated(
            inp, w, window_strides=(1, 1, 1),
            padding=((1, 1), (1, 1), (1, 1)), dimension_numbers=dn)
        return y + b.reshape(1, -1, 1, 1, 1)

    def bn(y, gamma, beta):
        mean = y.mean(axis=(0, 2, 3, 4), keepdims=True)
        var = y.var(axis=(0, 2, 3, 4), keepdims=True)
        return ((y - mean) / jnp.sqrt(var + eps)
                * gamma.reshape(1, -1, 1, 1, 1) + beta.reshape(1, -1, 1, 1, 1))

    skip = conv(x, p["skip_w"], p["skip_b"])
    y = jax.nn.relu(bn(conv(x, p["w1"], p["b1"]), p["gamma1"], p["beta1"]))
    y = jax.nn.relu(bn(conv(y, p["w2"], p["b2"]), p["gamma2"], p["beta2"]))
    return skip + y


# --------------------------------- main --------------------------------------

if __name__ == "__main__":
    key = jax.random.PRNGKey(0)
    N, Cin, Cout, D, H, W = 2, 4, 8, 8, 8, 8   # M = N*D*H*W = 1024

    ks = jax.random.split(key, 8)
    params = {
        "w1": 0.1 * jax.random.normal(ks[0], (Cout, Cin, 3, 3, 3), jnp.float32),
        "b1": 0.1 * jax.random.normal(ks[1], (Cout,), jnp.float32),
        "gamma1": jnp.ones((Cout,), jnp.float32),   # PyTorch BN init
        "beta1": jnp.zeros((Cout,), jnp.float32),
        "w2": 0.1 * jax.random.normal(ks[2], (Cout, Cout, 3, 3, 3), jnp.float32),
        "b2": 0.1 * jax.random.normal(ks[3], (Cout,), jnp.float32),
        "gamma2": jnp.ones((Cout,), jnp.float32),
        "beta2": jnp.zeros((Cout,), jnp.float32),
        "skip_w": 0.1 * jax.random.normal(ks[4], (Cout, Cin, 3, 3, 3), jnp.float32),
        "skip_b": 0.1 * jax.random.normal(ks[5], (Cout,), jnp.float32),
    }
    x = jax.random.normal(ks[6], (N, Cin, D, H, W), jnp.float32)

    fwd = jax.jit(res_block_forward)
    ref_fwd = jax.jit(reference_forward)

    out = jax.block_until_ready(fwd(x, params))
    ref = jax.block_until_ready(ref_fwd(x, params))

    assert out.shape == (N, Cout, D, H, W), out.shape
    if not jnp.allclose(out, ref, rtol=2e-2, atol=2e-2):
        raise AssertionError(
            f"mismatch: max abs diff = {float(jnp.max(jnp.abs(out - ref)))}")
    print("KERNEL_OK")
</pallas_src>

<mosaic_0001>
module attributes {stable_mosaic.version = 11 : i64} {
  func.func @_conv3d_taps_stats_kernel(%arg0: i32, %arg1: i32, %arg2: memref<1x10x104x4xbf16, #tpu.memory_space<vmem>>, %arg3: memref<27x4x16xbf16, #tpu.memory_space<vmem>>, %arg4: memref<80x1xf32, #tpu.memory_space<vmem>>, %arg5: memref<1x1x80x16xf32, #tpu.memory_space<vmem>>, %arg6: memref<1x1x16xf32, #tpu.memory_space<vmem>>, %arg7: memref<1x1x16xf32, #tpu.memory_space<vmem>>) attributes {dimension_semantics = [#tpu.dimension_semantics<parallel>, #tpu.dimension_semantics<arbitrary>], iteration_bounds = array<i64: 2, 8>, scalar_prefetch = 0 : i64, scratch_operands = 0 : i64, tpu.core_type = #tpu.core_type<tc>, window_params = [{transform_indices = @transform_0, window_bounds = array<i64: 1, 10, 104, 4>}, {pipeline_mode = #tpu.pipeline_mode<synchronous>, transform_indices = @transform_1, window_bounds = array<i64: 27, 4, 16>}, {pipeline_mode = #tpu.pipeline_mode<synchronous>, transform_indices = @transform_2, window_bounds = array<i64: 80, 1>}, {transform_indices = @transform_3, window_bounds = array<i64: 1, 1, 80, 16>}, {transform_indices = @transform_4, window_bounds = array<i64: 1, 1, 16>}, {transform_indices = @transform_5, window_bounds = array<i64: 1, 1, 16>}]} {
    %c0_i32 = arith.constant 0 : i32
    %0 = arith.cmpi eq, %arg1, %c0_i32 : i32
    %1 = arith.extui %0 : i1 to i32
    %c0_i32_0 = arith.constant 0 : i32
    %2 = arith.cmpi ne, %1, %c0_i32_0 : i32
    scf.if %2 {
      %cst_208 = arith.constant 0.000000e+00 : f32
      %238 = vector.broadcast %cst_208 : f32 to vector<1x1x16xf32>
      %c0_209 = arith.constant 0 : index
      %c0_210 = arith.constant 0 : index
      %c0_211 = arith.constant 0 : index
      %239 = vector.load %arg6[%c0_209, %c0_210, %c0_211] : memref<1x1x16xf32, #tpu.memory_space<vmem>>, vector<1x1x16xf32>
      tpu.vector_store %arg6[%c0_209, %c0_210, %c0_211], %238 {strides = array<i32>} : memref<1x1x16xf32, #tpu.memory_space<vmem>>, vector<1x1x16xf32>,
      %cst_212 = arith.constant 0.000000e+00 : f32
      %240 = vector.broadcast %cst_212 : f32 to vector<1x1x16xf32>
      %c0_213 = arith.constant 0 : index
      %c0_214 = arith.constant 0 : index
      %c0_215 = arith.constant 0 : index
      %241 = vector.load %arg7[%c0_213, %c0_214, %c0_215] : memref<1x1x16xf32, #tpu.memory_space<vmem>>, vector<1x1x16xf32>
      tpu.vector_store %arg7[%c0_213, %c0_214, %c0_215], %240 {strides = array<i32>} : memref<1x1x16xf32, #tpu.memory_space<vmem>>, vector<1x1x16xf32>,
    } else {
    }
    %cst = arith.constant 0.000000e+00 : f32
    %3 = vector.broadcast %cst : f32 to vector<80x16xf32>
    %c0_i32_1 = arith.constant 0 : i32
    %4 = arith.addi %arg1, %c0_i32_1 : i32
    %c0 = arith.constant 0 : index
    %5 = arith.index_cast %4 : i32 to index
    %c0_2 = arith.constant 0 : index
    %c0_3 = arith.constant 0 : index
    %6 = vector.load %arg2[%c0, %5, %c0_2, %c0_3] : memref<1x10x104x4xbf16, #tpu.memory_space<vmem>>, vector<1x1x80x4xbf16>
    %7 = vector.shape_cast %6 : vector<1x1x80x4xbf16> to vector<80x4xbf16>
    %c0_4 = arith.constant 0 : index
    %c0_5 = arith.constant 0 : index
    %c0_6 = arith.constant 0 : index
    %8 = vector.load %arg3[%c0_4, %c0_5, %c0_6] : memref<27x4x16xbf16, #tpu.memory_space<vmem>>, vector<1x4x16xbf16>
    %9 = vector.shape_cast %8 : vector<1x4x16xbf16> to vector<4x16xbf16>
    %cst_7 = arith.constant dense<0.000000e+00> : vector<80x16xf32>
    %10 = tpu.matmul %7, %9, %cst_7 {dimension_numbers = #tpu.dot_dimension_numbers<[1], [0], [0], [1], [0, 0, 1, 1], [], []>} : vector<80x4xbf16>, vector<4x16xbf16>, vector<80x16xf32> -> vector<80x16xf32>
    %11 = arith.addf %3, %10 : vector<80x16xf32>
    %c0_i32_8 = arith.constant 0 : i32
    %12 = arith.addi %arg1, %c0_i32_8 : i32
    %c0_9 = arith.constant 0 : index
    %13 = arith.index_cast %12 : i32 to index
    %c1 = arith.constant 1 : index
    %c0_10 = arith.constant 0 : index
    %14 = vector.load %arg2[%c0_9, %13, %c1, %c0_10] : memref<1x10x104x4xbf16, #tpu.memory_space<vmem>>, vector<1x1x80x4xbf16>
    %15 = vector.shape_cast %14 : vector<1x1x80x4xbf16> to vector<80x4xbf16>
    %c1_11 = arith.constant 1 : index
    %c0_12 = arith.constant 0 : index
    %c0_13 = arith.constant 0 : index
    %16 = vector.load %arg3[%c1_11, %c0_12, %c0_13] : memref<27x4x16xbf16, #tpu.memory_space<vmem>>, vector<1x4x16xbf16>
    %17 = vector.shape_cast %16 : vector<1x4x16xbf16> to vector<4x16xbf16>
    %cst_14 = arith.constant dense<0.000000e+00> : vector<80x16xf32>
    %18 = tpu.matmul %15, %17, %cst_14 {dimension_numbers = #tpu.dot_dimension_numbers<[1], [0], [0], [1], [0, 0, 1, 1], [], []>} : vector<80x4xbf16>, vector<4x16xbf16>, vector<80x16xf32> -> vector<80x16xf32>
    %19 = arith.addf %11, %18 : vector<80x16xf32>
    %c0_i32_15 = arith.constant 0 : i32
    %20 = arith.addi %arg1, %c0_i32_15 : i32
    %c0_16 = arith.constant 0 : index
    %21 = arith.index_cast %20 : i32 to index
    %c2 = arith.constant 2 : index
    %c0_17 = arith.constant 0 : index
    %22 = vector.load %arg2[%c0_16, %21, %c2, %c0_17] : memref<1x10x104x4xbf16, #tpu.memory_space<vmem>>, vector<1x1x80x4xbf16>
    %23 = vector.shape_cast %22 : vector<1x1x80x4xbf16> to vector<80x4xbf16>
    %c2_18 = arith.constant 2 : index
    %c0_19 = arith.constant 0 : index
    %c0_20 = arith.constant 0 : index
    %24 = vector.load %arg3[%c2_18, %c0_19, %c0_20] : memref<27x4x16xbf16, #tpu.memory_space<vmem>>, vector<1x4x16xbf16>
    %25 = vector.shape_cast %24 : vector<1x4x16xbf16> to vector<4x16xbf16>
    %cst_21 = arith.constant dense<0.000000e+00> : vector<80x16xf32>
    %26 = tpu.matmul %23, %25, %cst_21 {dimension_numbers = #tpu.dot_dimension_numbers<[1], [0], [0], [1], [0, 0, 1, 1], [], []>} : vector<80x4xbf16>, vector<4x16xbf16>, vector<80x16xf32> -> vector<80x16xf32>
    %27 = arith.addf %19, %26 : vector<80x16xf32>
    %c0_i32_22 = arith.constant 0 : i32
    %28 = arith.addi %arg1, %c0_i32_22 : i32
    %c0_23 = arith.constant 0 : index
    %29 = arith.index_cast %28 : i32 to index
    %c10 = arith.constant 10 : index
    %c0_24 = arith.constant 0 : index
    %30 = vector.load %arg2[%c0_23, %29, %c10, %c0_24] : memref<1x10x104x4xbf16, #tpu.memory_space<vmem>>, vector<1x1x80x4xbf16>
    %31 = vector.shape_cast %30 : vector<1x1x80x4xbf16> to vector<80x4xbf16>
    %c3 = arith.constant 3 : index
    %c0_25 = arith.constant 0 : index
    %c0_26 = arith.constant 0 : index
    %32 = vector.load %arg3[%c3, %c0_25, %c0_26] : memref<27x4x16xbf16, #tpu.memory_space<vmem>>, vector<1x4x16xbf16>
    %33 = vector.shape_cast %32 : vector<1x4x16xbf16> to vector<4x16xbf16>
    %cst_27 = arith.constant dense<0.000000e+00> : vector<80x16xf32>
    %34 = tpu.matmul %31, %33, %cst_27 {dimension_numbers = #tpu.dot_dimension_numbers<[1], [0], [0], [1], [0, 0, 1, 1], [], []>} : vector<80x4xbf16>, vector<4x16xbf16>, vector<80x16xf32> -> vector<80x16xf32>
    %35 = arith.addf %27, %34 : vector<80x16xf32>
    %c0_i32_28 = arith.constant 0 : i32
    %36 = arith.addi %arg1, %c0_i32_28 : i32
    %c0_29 = arith.constant 0 : index
    %37 = arith.index_cast %36 : i32 to index
    %c11 = arith.constant 11 : index
    %c0_30 = arith.constant 0 : index
    %38 = vector.load %arg2[%c0_29, %37, %c11, %c0_30] : memref<1x10x104x4xbf16, #tpu.memory_space<vmem>>, vector<1x1x80x4xbf16>
    %39 = vector.shape_cast %38 : vector<1x1x80x4xbf16> to vector<80x4xbf16>
    %c4 = arith.constant 4 : index
    %c0_31 = arith.constant 0 : index
    %c0_32 = arith.constant 0 : index
    %40 = vector.load %arg3[%c4, %c0_31, %c0_32] : memref<27x4x16xbf16, #tpu.memory_space<vmem>>, vector<1x4x16xbf16>
    %41 = vector.shape_cast %40 : vector<1x4x16xbf16> to vector<4x16xbf16>
    %cst_33 = arith.constant dense<0.000000e+00> : vector<80x16xf32>
    %42 = tpu.matmul %39, %41, %cst_33 {dimension_numbers = #tpu.dot_dimension_numbers<[1], [0], [0], [1], [0, 0, 1, 1], [], []>} : vector<80x4xbf16>, vector<4x16xbf16>, vector<80x16xf32> -> vector<80x16xf32>
    %43 = arith.addf %35, %42 : vector<80x16xf32>
    %c0_i32_34 = arith.constant 0 : i32
    %44 = arith.addi %arg1, %c0_i32_34 : i32
    %c0_35 = arith.constant 0 : index
    %45 = arith.index_cast %44 : i32 to index
    %c12 = arith.constant 12 : index
    %c0_36 = arith.constant 0 : index
    %46 = vector.load %arg2[%c0_35, %45, %c12, %c0_36] : memref<1x10x104x4xbf16, #tpu.memory_space<vmem>>, vector<1x1x80x4xbf16>
    %47 = vector.shape_cast %46 : vector<1x1x80x4xbf16> to vector<80x4xbf16>
    %c5 = arith.constant 5 : index
    %c0_37 = arith.constant 0 : index
    %c0_38 = arith.constant 0 : index
    %48 = vector.load %arg3[%c5, %c0_37, %c0_38] : memref<27x4x16xbf16, #tpu.memory_space<vmem>>, vector<1x4x16xbf16>
    %49 = vector.shape_cast %48 : vector<1x4x16xbf16> to vector<4x16xbf16>
    %cst_39 = arith.constant dense<0.000000e+00> : vector<80x16xf32>
    %50 = tpu.matmul %47, %49, %cst_39 {dimension_numbers = #tpu.dot_dimension_numbers<[1], [0], [0], [1], [0, 0, 1, 1], [], []>} : vector<80x4xbf16>, vector<4x16xbf16>, vector<80x16xf32> -> vector<80x16xf32>
    %51 = arith.addf %43, %50 : vector<80x16xf32>
    %c0_i32_40 = arith.constant 0 : i32
    %52 = arith.addi %arg1, %c0_i32_40 : i32
    %c0_41 = arith.constant 0 : index
    %53 = arith.index_cast %52 : i32 to index
    %c20 = arith.constant 20 : index
    %c0_42 = arith.constant 0 : index
    %54 = vector.load %arg2[%c0_41, %53, %c20, %c0_42] : memref<1x10x104x4xbf16, #tpu.memory_space<vmem>>, vector<1x1x80x4xbf16>
    %55 = vector.shape_cast %54 : vector<1x1x80x4xbf16> to vector<80x4xbf16>
    %c6 = arith.constant 6 : index
    %c0_43 = arith.constant 0 : index
    %c0_44 = arith.constant 0 : index
    %56 = vector.load %arg3[%c6, %c0_43, %c0_44] : memref<27x4x16xbf16, #tpu.memory_space<vmem>>, vector<1x4x16xbf16>
    %57 = vector.shape_cast %56 : vector<1x4x16xbf16> to vector<4x16xbf16>
    %cst_45 = arith.constant dense<0.000000e+00> : vector<80x16xf32>
    %58 = tpu.matmul %55, %57, %cst_45 {dimension_numbers = #tpu.dot_dimension_numbers<[1], [0], [0], [1], [0, 0, 1, 1], [], []>} : vector<80x4xbf16>, vector<4x16xbf16>, vector<80x16xf32> -> vector<80x16xf32>
    %59 = arith.addf %51, %58 : vector<80x16xf32>
    %c0_i32_46 = arith.constant 0 : i32
    %60 = arith.addi %arg1, %c0_i32_46 : i32
    %c0_47 = arith.constant 0 : index
    %61 = arith.index_cast %60 : i32 to index
    %c21 = arith.constant 21 : index
    %c0_48 = arith.constant 0 : index
    %62 = vector.load %arg2[%c0_47, %61, %c21, %c0_48] : memref<1x10x104x4xbf16, #tpu.memory_space<vmem>>, vector<1x1x80x4xbf16>
    %63 = vector.shape_cast %62 : vector<1x1x80x4xbf16> to vector<80x4xbf16>
    %c7 = arith.constant 7 : index
    %c0_49 = arith.constant 0 : index
    %c0_50 = arith.constant 0 : index
    %64 = vector.load %arg3[%c7, %c0_49, %c0_50] : memref<27x4x16xbf16, #tpu.memory_space<vmem>>, vector<1x4x16xbf16>
    %65 = vector.shape_cast %64 : vector<1x4x16xbf16> to vector<4x16xbf16>
    %cst_51 = arith.constant dense<0.000000e+00> : vector<80x16xf32>
    %66 = tpu.matmul %63, %65, %cst_51 {dimension_numbers = #tpu.dot_dimension_numbers<[1], [0], [0], [1], [0, 0, 1, 1], [], []>} : vector<80x4xbf16>, vector<4x16xbf16>, vector<80x16xf32> -> vector<80x16xf32>
    %67 = arith.addf %59, %66 : vector<80x16xf32>
    %c0_i32_52 = arith.constant 0 : i32
    %68 = arith.addi %arg1, %c0_i32_52 : i32
    %c0_53 = arith.constant 0 : index
    %69 = arith.index_cast %68 : i32 to index
    %c22 = arith.constant 22 : index
    %c0_54 = arith.constant 0 : index
    %70 = vector.load %arg2[%c0_53, %69, %c22, %c0_54] : memref<1x10x104x4xbf16, #tpu.memory_space<vmem>>, vector<1x1x80x4xbf16>
    %71 = vector.shape_cast %70 : vector<1x1x80x4xbf16> to vector<80x4xbf16>
    %c8 = arith.constant 8 : index
    %c0_55 = arith.constant 0 : index
    %c0_56 = arith.constant 0 : index
    %72 = vector.load %arg3[%c8, %c0_55, %c0_56] : memref<27x4x16xbf16, #tpu.memory_space<vmem>>, vector<1x4x16xbf16>
    %73 = vector.shape_cast %72 : vector<1x4x16xbf16> to vector<4x16xbf16>
    %cst_57 = arith.constant dense<0.000000e+00> : vector<80x16xf32>
    %74 = tpu.matmul %71, %73, %cst_57 {dimension_numbers = #tpu.dot_dimension_numbers<[1], [0], [0], [1], [0, 0, 1, 1], [], []>} : vector<80x4xbf16>, vector<4x16xbf16>, vector<80x16xf32> -> vector<80x16xf32>
    %75 = arith.addf %67, %74 : vector<80x16xf32>
    %c1_i32 = arith.constant 1 : i32
    %76 = arith.addi %arg1, %c1_i32 : i32
    %c0_58 = arith.constant 0 : index
    %77 = arith.index_cast %76 : i32 to index
    %c0_59 = arith.constant 0 : index
    %c0_60 = arith.constant 0 : index
    %78 = vector.load %arg2[%c0_58, %77, %c0_59, %c0_60] : memref<1x10x104x4xbf16, #tpu.memory_space<vmem>>, vector<1x1x80x4xbf16>
    %79 = vector.shape_cast %78 : vector<1x1x80x4xbf16> to vector<80x4xbf16>
    %c9 = arith.constant 9 : index
    %c0_61 = arith.constant 0 : index
    %c0_62 = arith.constant 0 : index
    %80 = vector.load %arg3[%c9, %c0_61, %c0_62] : memref<27x4x16xbf16, #tpu.memory_space<vmem>>, vector<1x4x16xbf16>
    %81 = vector.shape_cast %80 : vector<1x4x16xbf16> to vector<4x16xbf16>
    %cst_63 = arith.constant dense<0.000000e+00> : vector<80x16xf32>
    %82 = tpu.matmul %79, %81, %cst_63 {dimension_numbers = #tpu.dot_dimension_numbers<[1], [0], [0], [1], [0, 0, 1, 1], [], []>} : vector<80x4xbf16>, vector<4x16xbf16>, vector<80x16xf32> -> vector<80x16xf32>
    %83 = arith.addf %75, %82 : vector<80x16xf32>
    %c1_i32_64 = arith.constant 1 : i32
    %84 = arith.addi %arg1, %c1_i32_64 : i32
    %c0_65 = arith.constant 0 : index
    %85 = arith.index_cast %84 : i32 to index
    %c1_66 = arith.constant 1 : index
    %c0_67 = arith.constant 0 : index
    %86 = vector.load %arg2[%c0_65, %85, %c1_66, %c0_67] : memref<1x10x104x4xbf16, #tpu.memory_space<vmem>>, vector<1x1x80x4xbf16>
    %87 = vector.shape_cast %86 : vector<1x1x80x4xbf16> to vector<80x4xbf16>
    %c10_68 = arith.constant 10 : index
    %c0_69 = arith.constant 0 : index
    %c0_70 = arith.constant 0 : index
    %88 = vector.load %arg3[%c10_68, %c0_69, %c0_70] : memref<27x4x16xbf16, #tpu.memory_space<vmem>>, vector<1x4x16xbf16>
    %89 = vector.shape_cast %88 : vector<1x4x16xbf16> to vector<4x16xbf16>
    %cst_71 = arith.constant dense<0.000000e+00> : vector<80x16xf32>
    %90 = tpu.matmul %87, %89, %cst_71 {dimension_numbers = #tpu.dot_dimension_numbers<[1], [0], [0], [1], [0, 0, 1, 1], [], []>} : vector<80x4xbf16>, vector<4x16xbf16>, vector<80x16xf32> -> vector<80x16xf32>
    %91 = arith.addf %83, %90 : vector<80x16xf32>
    %c1_i32_72 = arith.constant 1 : i32
    %92 = arith.addi %arg1, %c1_i32_72 : i32
    %c0_73 = arith.constant 0 : index
    %93 = arith.index_cast %92 : i32 to index
    %c2_74 = arith.constant 2 : index
    %c0_75 = arith.constant 0 : index
    %94 = vector.load %arg2[%c0_73, %93, %c2_74, %c0_75] : memref<1x10x104x4xbf16, #tpu.memory_space<vmem>>, vector<1x1x80x4xbf16>
    %95 = vector.shape_cast %94 : vector<1x1x80x4xbf16> to vector<80x4xbf16>
    %c11_76 = arith.constant 11 : index
    %c0_77 = arith.constant 0 : index
    %c0_78 = arith.constant 0 : index
    %96 = vector.load %arg3[%c11_76, %c0_77, %c0_78] : memref<27x4x16xbf16, #tpu.memory_space<vmem>>, vector<1x4x16xbf16>
    %97 = vector.shape_cast %96 : vector<1x4x16xbf16> to vector<4x16xbf16>
    %cst_79 = arith.constant dense<0.000000e+00> : vector<80x16xf32>
    %98 = tpu.matmul %95, %97, %cst_79 {dimension_numbers = #tpu.dot_dimension_numbers<[1], [0], [0], [1], [0, 0, 1, 1], [], []>} : vector<80x4xbf16>, vector<4x16xbf16>, vector<80x16xf32> -> vector<80x16xf32>
    %99 = arith.addf %91, %98 : vector<80x16xf32>
    %c1_i32_80 = arith.constant 1 : i32
    %100 = arith.addi %arg1, %c1_i32_80 : i32
    %c0_81 = arith.constant 0 : index
    %101 = arith.index_cast %100 : i32 to index
    %c10_82 = arith.constant 10 : index
    %c0_83 = arith.constant 0 : index
    %102 = vector.load %arg2[%c0_81, %101, %c10_82, %c0_83] : memref<1x10x104x4xbf16, #tpu.memory_space<vmem>>, vector<1x1x80x4xbf16>
    %103 = vector.shape_cast %102 : vector<1x1x80x4xbf16> to vector<80x4xbf16>
    %c12_84 = arith.constant 12 : index
    %c0_85 = arith.constant 0 : index
    %c0_86 = arith.constant 0 : index
    %104 = vector.load %arg3[%c12_84, %c0_85, %c0_86] : memref<27x4x16xbf16, #tpu.memory_space<vmem>>, vector<1x4x16xbf16>
    %105 = vector.shape_cast %104 : vector<1x4x16xbf16> to vector<4x16xbf16>
    %cst_87 = arith.constant dense<0.000000e+00> : vector<80x16xf32>
    %106 = tpu.matmul %103, %105, %cst_87 {dimension_numbers = #tpu.dot_dimension_numbers<[1], [0], [0], [1], [0, 0, 1, 1], [], []>} : vector<80x4xbf16>, vector<4x16xbf16>, vector<80x16xf32> -> vector<80x16xf32>
    %107 = arith.addf %99, %106 : vector<80x16xf32>
    %c1_i32_88 = arith.constant 1 : i32
    %108 = arith.addi %arg1, %c1_i32_88 : i32
    %c0_89 = arith.constant 0 : index
    %109 = arith.index_cast %108 : i32 to index
    %c11_90 = arith.constant 11 : index
    %c0_91 = arith.constant 0 : index
    %110 = vector.load %arg2[%c0_89, %109, %c11_90, %c0_91] : memref<1x10x104x4xbf16, #tpu.memory_space<vmem>>, vector<1x1x80x4xbf16>
    %111 = vector.shape_cast %110 : vector<1x1x80x4xbf16> to vector<80x4xbf16>
    %c13 = arith.constant 13 : index
    %c0_92 = arith.constant 0 : index
    %c0_93 = arith.constant 0 : index
    %112 = vector.load %arg3[%c13, %c0_92, %c0_93] : memref<27x4x16xbf16, #tpu.memory_space<vmem>>, vector<1x4x16xbf16>
    %113 = vector.shape_cast %112 : vector<1x4x16xbf16> to vector<4x16xbf16>
    %cst_94 = arith.constant dense<0.000000e+00> : vector<80x16xf32>
    %114 = tpu.matmul %111, %113, %cst_94 {dimension_numbers = #tpu.dot_dimension_numbers<[1], [0], [0], [1], [0, 0, 1, 1], [], []>} : vector<80x4xbf16>, vector<4x16xbf16>, vector<80x16xf32> -> vector<80x16xf32>
    %115 = arith.addf %107, %114 : vector<80x16xf32>
    %c1_i32_95 = arith.constant 1 : i32
    %116 = arith.addi %arg1, %c1_i32_95 : i32
    %c0_96 = arith.constant 0 : index
    %117 = arith.index_cast %116 : i32 to index
    %c12_97 = arith.constant 12 : index
    %c0_98 = arith.constant 0 : index
    %118 = vector.load %arg2[%c0_96, %117, %c12_97, %c0_98] : memref<1x10x104x4xbf16, #tpu.memory_space<vmem>>, vector<1x1x80x4xbf16>
    %119 = vector.shape_cast %118 : vector<1x1x80x4xbf16> to vector<80x4xbf16>
    %c14 = arith.constant 14 : index
    %c0_99 = arith.constant 0 : index
    %c0_100 = arith.constant 0 : index
    %120 = vector.load %arg3[%c14, %c0_99, %c0_100] : memref<27x4x16xbf16, #tpu.memory_space<vmem>>, vector<1x4x16xbf16>
    %121 = vector.shape_cast %120 : vector<1x4x16xbf16> to vector<4x16xbf16>
    %cst_101 = arith.constant dense<0.000000e+00> : vector<80x16xf32>
    %122 = tpu.matmul %119, %121, %cst_101 {dimension_numbers = #tpu.dot_dimension_numbers<[1], [0], [0], [1], [0, 0, 1, 1], [], []>} : vector<80x4xbf16>, vector<4x16xbf16>, vector<80x16xf32> -> vector<80x16xf32>
    %123 = arith.addf %115, %122 : vector<80x16xf32>
    %c1_i32_102 = arith.constant 1 : i32
    %124 = arith.addi %arg1, %c1_i32_102 : i32
    %c0_103 = arith.constant 0 : index
    %125 = arith.index_cast %124 : i32 to index
    %c20_104 = arith.constant 20 : index
    %c0_105 = arith.constant 0 : index
    %126 = vector.load %arg2[%c0_103, %125, %c20_104, %c0_105] : memref<1x10x104x4xbf16, #tpu.memory_space<vmem>>, vector<1x1x80x4xbf16>
    %127 = vector.shape_cast %126 : vector<1x1x80x4xbf16> to vector<80x4xbf16>
    %c15 = arith.constant 15 : index
    %c0_106 = arith.constant 0 : index
    %c0_107 = arith.constant 0 : index
    %128 = vector.load %arg3[%c15, %c0_106, %c0_107] : memref<27x4x16xbf16, #tpu.memory_space<vmem>>, vector<1x4x16xbf16>
    %129 = vector.shape_cast %128 : vector<1x4x16xbf16> to vector<4x16xbf16>
    %cst_108 = arith.constant dense<0.000000e+00> : vector<80x16xf32>
    %130 = tpu.matmul %127, %129, %cst_108 {dimension_numbers = #tpu.dot_dimension_numbers<[1], [0], [0], [1], [0, 0, 1, 1], [], []>} : vector<80x4xbf16>, vector<4x16xbf16>, vector<80x16xf32> -> vector<80x16xf32>
    %131 = arith.addf %123, %130 : vector<80x16xf32>
    %c1_i32_109 = arith.constant 1 : i32
    %132 = arith.addi %arg1, %c1_i32_109 : i32
    %c0_110 = arith.constant 0 : index
    %133 = arith.index_cast %132 : i32 to index
    %c21_111 = arith.constant 21 : index
    %c0_112 = arith.constant 0 : index
    %134 = vector.load %arg2[%c0_110, %133, %c21_111, %c0_112] : memref<1x10x104x4xbf16, #tpu.memory_space<vmem>>, vector<1x1x80x4xbf16>
    %135 = vector.shape_cast %134 : vector<1x1x80x4xbf16> to vector<80x4xbf16>
    %c16 = arith.constant 16 : index
    %c0_113 = arith.constant 0 : index
    %c0_114 = arith.constant 0 : index
    %136 = vector.load %arg3[%c16, %c0_113, %c0_114] : memref<27x4x16xbf16, #tpu.memory_space<vmem>>, vector<1x4x16xbf16>
    %137 = vector.shape_cast %136 : vector<1x4x16xbf16> to vector<4x16xbf16>
    %cst_115 = arith.constant dense<0.000000e+00> : vector<80x16xf32>
    %138 = tpu.matmul %135, %137, %cst_115 {dimension_numbers = #tpu.dot_dimension_numbers<[1], [0], [0], [1], [0, 0, 1, 1], [], []>} : vector<80x4xbf16>, vector<4x16xbf16>, vector<80x16xf32> -> vector<80x16xf32>
    %139 = arith.addf %131, %138 : vector<80x16xf32>
    %c1_i32_116 = arith.constant 1 : i32
    %140 = arith.addi %arg1, %c1_i32_116 : i32
    %c0_117 = arith.constant 0 : index
    %141 = arith.index_cast %140 : i32 to index
    %c22_118 = arith.constant 22 : index
    %c0_119 = arith.constant 0 : index
    %142 = vector.load %arg2[%c0_117, %141, %c22_118, %c0_119] : memref<1x10x104x4xbf16, #tpu.memory_space<vmem>>, vector<1x1x80x4xbf16>
    %143 = vector.shape_cast %142 : vector<1x1x80x4xbf16> to vector<80x4xbf16>
    %c17 = arith.constant 17 : index
    %c0_120 = arith.constant 0 : index
    %c0_121 = arith.constant 0 : index
    %144 = vector.load %arg3[%c17, %c0_120, %c0_121] : memref<27x4x16xbf16, #tpu.memory_space<vmem>>, vector<1x4x16xbf16>
    %145 = vector.shape_cast %144 : vector<1x4x16xbf16> to vector<4x16xbf16>
    %cst_122 = arith.constant dense<0.000000e+00> : vector<80x16xf32>
    %146 = tpu.matmul %143, %145, %cst_122 {dimension_numbers = #tpu.dot_dimension_numbers<[1], [0], [0], [1], [0, 0, 1, 1], [], []>} : vector<80x4xbf16>, vector<4x16xbf16>, vector<80x16xf32> -> vector<80x16xf32>
    %147 = arith.addf %139, %146 : vector<80x16xf32>
    %c2_i32 = arith.constant 2 : i32
    %148 = arith.addi %arg1, %c2_i32 : i32
    %c0_123 = arith.constant 0 : index
    %149 = arith.index_cast %148 : i32 to index
    %c0_124 = arith.constant 0 : index
    %c0_125 = arith.constant 0 : index
    %150 = vector.load %arg2[%c0_123, %149, %c0_124, %c0_125] : memref<1x10x104x4xbf16, #tpu.memory_space<vmem>>, vector<1x1x80x4xbf16>
    %151 = vector.shape_cast %150 : vector<1x1x80x4xbf16> to vector<80x4xbf16>
    %c18 = arith.constant 18 : index
    %c0_126 = arith.constant 0 : index
    %c0_127 = arith.constant 0 : index
    %152 = vector.load %arg3[%c18, %c0_126, %c0_127] : memref<27x4x16xbf16, #tpu.memory_space<vmem>>, vector<1x4x16xbf16>
    %153 = vector.shape_cast %152 : vector<1x4x16xbf16> to vector<4x16xbf16>
    %cst_128 = arith.constant dense<0.000000e+00> : vector<80x16xf32>
    %154 = tpu.matmul %151, %153, %cst_128 {dimension_numbers = #tpu.dot_dimension_numbers<[1], [0], [0], [1], [0, 0, 1, 1], [], []>} : vector<80x4xbf16>, vector<4x16xbf16>, vector<80x16xf32> -> vector<80x16xf32>
    %155 = arith.addf %147, %154 : vector<80x16xf32>
    %c2_i32_129 = arith.constant 2 : i32
    %156 = arith.addi %arg1, %c2_i32_129 : i32
    %c0_130 = arith.constant 0 : index
    %157 = arith.index_cast %156 : i32 to index
    %c1_131 = arith.constant 1 : index
    %c0_132 = arith.constant 0 : index
    %158 = vector.load %arg2[%c0_130, %157, %c1_131, %c0_132] : memref<1x10x104x4xbf16, #tpu.memory_space<vmem>>, vector<1x1x80x4xbf16>
    %159 = vector.shape_cast %158 : vector<1x1x80x4xbf16> to vector<80x4xbf16>
    %c19 = arith.constant 19 : index
    %c0_133 = arith.constant 0 : index
    %c0_134 = arith.constant 0 : index
    %160 = vector.load %arg3[%c19, %c0_133, %c0_134] : memref<27x4x16xbf16, #tpu.memory_space<vmem>>, vector<1x4x16xbf16>
    %161 = vector.shape_cast %160 : vector<1x4x16xbf16> to vector<4x16xbf16>
    %cst_135 = arith.constant dense<0.000000e+00> : vector<80x16xf32>
    %162 = tpu.matmul %159, %161, %cst_135 {dimension_numbers = #tpu.dot_dimension_numbers<[1], [0], [0], [1], [0, 0, 1, 1], [], []>} : vector<80x4xbf16>, vector<4x16xbf16>, vector<80x16xf32> -> vector<80x16xf32>
    %163 = arith.addf %155, %162 : vector<80x16xf32>
    %c2_i32_136 = arith.constant 2 : i32
    %164 = arith.addi %arg1, %c2_i32_136 : i32
    %c0_137 = arith.constant 0 : index
    %165 = arith.index_cast %164 : i32 to index
    %c2_138 = arith.constant 2 : index
    %c0_139 = arith.constant 0 : index
    %166 = vector.load %arg2[%c0_137, %165, %c2_138, %c0_139] : memref<1x10x104x4xbf16, #tpu.memory_space<vmem>>, vector<1x1x80x4xbf16>
    %167 = vector.shape_cast %166 : vector<1x1x80x4xbf16> to vector<80x4xbf16>
    %c20_140 = arith.constant 20 : index
    %c0_141 = arith.constant 0 : index
    %c0_142 = arith.constant 0 : index
    %168 = vector.load %arg3[%c20_140, %c0_141, %c0_142] : memref<27x4x16xbf16, #tpu.memory_space<vmem>>, vector<1x4x16xbf16>
    %169 = vector.shape_cast %168 : vector<1x4x16xbf16> to vector<4x16xbf16>
    %cst_143 = arith.constant dense<0.000000e+00> : vector<80x16xf32>
    %170 = tpu.matmul %167, %169, %cst_143 {dimension_numbers = #tpu.dot_dimension_numbers<[1], [0], [0], [1], [0, 0, 1, 1], [], []>} : vector<80x4xbf16>, vector<4x16xbf16>, vector<80x16xf32> -> vector<80x16xf32>
    %171 = arith.addf %163, %170 : vector<80x16xf32>
    %c2_i32_144 = arith.constant 2 : i32
    %172 = arith.addi %arg1, %c2_i32_144 : i32
    %c0_145 = arith.constant 0 : index
    %173 = arith.index_cast %172 : i32 to index
    %c10_146 = arith.constant 10 : index
    %c0_147 = arith.constant 0 : index
    %174 = vector.load %arg2[%c0_145, %173, %c10_146, %c0_147] : memref<1x10x104x4xbf16, #tpu.memory_space<vmem>>, vector<1x1x80x4xbf16>
    %175 = vector.shape_cast %174 : vector<1x1x80x4xbf16> to vector<80x4xbf16>
    %c21_148 = arith.constant 21 : index
    %c0_149 = arith.constant 0 : index
    %c0_150 = arith.constant 0 : index
    %176 = vector.load %arg3[%c21_148, %c0_149, %c0_150] : memref<27x4x16xbf16, #tpu.memory_space<vmem>>, vector<1x4x16xbf16>
    %177 = vector.shape_cast %176 : vector<1x4x16xbf16> to vector<4x16xbf16>
    %cst_151 = arith.constant dense<0.000000e+00> : vector<80x16xf32>
    %178 = tpu.matmul %175, %177, %cst_151 {dimension_numbers = #tpu.dot_dimension_numbers<[1], [0], [0], [1], [0, 0, 1, 1], [], []>} : vector<80x4xbf16>, vector<4x16xbf16>, vector<80x16xf32> -> vector<80x16xf32>
    %179 = arith.addf %171, %178 : vector<80x16xf32>
    %c2_i32_152 = arith.constant 2 : i32
    %180 = arith.addi %arg1, %c2_i32_152 : i32
    %c0_153 = arith.constant 0 : index
    %181 = arith.index_cast %180 : i32 to index
    %c11_154 = arith.constant 11 : index
    %c0_155 = arith.constant 0 : index
    %182 = vector.load %arg2[%c0_153, %181, %c11_154, %c0_155] : memref<1x10x104x4xbf16, #tpu.memory_space<vmem>>, vector<1x1x80x4xbf16>
    %183 = vector.shape_cast %182 : vector<1x1x80x4xbf16> to vector<80x4xbf16>
    %c22_156 = arith.constant 22 : index
    %c0_157 = arith.constant 0 : index
    %c0_158 = arith.constant 0 : index
    %184 = vector.load %arg3[%c22_156, %c0_157, %c0_158] : memref<27x4x16xbf16, #tpu.memory_space<vmem>>, vector<1x4x16xbf16>
    %185 = vector.shape_cast %184 : vector<1x4x16xbf16> to vector<4x16xbf16>
    %cst_159 = arith.constant dense<0.000000e+00> : vector<80x16xf32>
    %186 = tpu.matmul %183, %185, %cst_159 {dimension_numbers = #tpu.dot_dimension_numbers<[1], [0], [0], [1], [0, 0, 1, 1], [], []>} : vector<80x4xbf16>, vector<4x16xbf16>, vector<80x16xf32> -> vector<80x16xf32>
    %187 = arith.addf %179, %186 : vector<80x16xf32>
    %c2_i32_160 = arith.constant 2 : i32
    %188 = arith.addi %arg1, %c2_i32_160 : i32
    %c0_161 = arith.constant 0 : index
    %189 = arith.index_cast %188 : i32 to index
    %c12_162 = arith.constant 12 : index
    %c0_163 = arith.constant 0 : index
    %190 = vector.load %arg2[%c0_161, %189, %c12_162, %c0_163] : memref<1x10x104x4xbf16, #tpu.memory_space<vmem>>, vector<1x1x80x4xbf16>
    %191 = vector.shape_cast %190 : vector<1x1x80x4xbf16> to vector<80x4xbf16>
    %c23 = arith.constant 23 : index
    %c0_164 = arith.constant 0 : index
    %c0_165 = arith.constant 0 : index
    %192 = vector.load %arg3[%c23, %c0_164, %c0_165] : memref<27x4x16xbf16, #tpu.memory_space<vmem>>, vector<1x4x16xbf16>
    %193 = vector.shape_cast %192 : vector<1x4x16xbf16> to vector<4x16xbf16>
    %cst_166 = arith.constant dense<0.000000e+00> : vector<80x16xf32>
    %194 = tpu.matmul %191, %193, %cst_166 {dimension_numbers = #tpu.dot_dimension_numbers<[1], [0], [0], [1], [0, 0, 1, 1], [], []>} : vector<80x4xbf16>, vector<4x16xbf16>, vector<80x16xf32> -> vector<80x16xf32>
    %195 = arith.addf %187, %194 : vector<80x16xf32>
    %c2_i32_167 = arith.constant 2 : i32
    %196 = arith.addi %arg1, %c2_i32_167 : i32
    %c0_168 = arith.constant 0 : index
    %197 = arith.index_cast %196 : i32 to index
    %c20_169 = arith.constant 20 : index
    %c0_170 = arith.constant 0 : index
    %198 = vector.load %arg2[%c0_168, %197, %c20_169, %c0_170] : memref<1x10x104x4xbf16, #tpu.memory_space<vmem>>, vector<1x1x80x4xbf16>
    %199 = vector.shape_cast %198 : vector<1x1x80x4xbf16> to vector<80x4xbf16>
    %c24 = arith.constant 24 : index
    %c0_171 = arith.constant 0 : index
    %c0_172 = arith.constant 0 : index
    %200 = vector.load %arg3[%c24, %c0_171, %c0_172] : memref<27x4x16xbf16, #tpu.memory_space<vmem>>, vector<1x4x16xbf16>
    %201 = vector.shape_cast %200 : vector<1x4x16xbf16> to vector<4x16xbf16>
    %cst_173 = arith.constant dense<0.000000e+00> : vector<80x16xf32>
    %202 = tpu.matmul %199, %201, %cst_173 {dimension_numbers = #tpu.dot_dimension_numbers<[1], [0], [0], [1], [0, 0, 1, 1], [], []>} : vector<80x4xbf16>, vector<4x16xbf16>, vector<80x16xf32> -> vector<80x16xf32>
    %203 = arith.addf %195, %202 : vector<80x16xf32>
    %c2_i32_174 = arith.constant 2 : i32
    %204 = arith.addi %arg1, %c2_i32_174 : i32
    %c0_175 = arith.constant 0 : index
    %205 = arith.index_cast %204 : i32 to index
    %c21_176 = arith.constant 21 : index
    %c0_177 = arith.constant 0 : index
    %206 = vector.load %arg2[%c0_175, %205, %c21_176, %c0_177] : memref<1x10x104x4xbf16, #tpu.memory_space<vmem>>, vector<1x1x80x4xbf16>
    %207 = vector.shape_cast %206 : vector<1x1x80x4xbf16> to vector<80x4xbf16>
    %c25 = arith.constant 25 : index
    %c0_178 = arith.constant 0 : index
    %c0_179 = arith.constant 0 : index
    %208 = vector.load %arg3[%c25, %c0_178, %c0_179] : memref<27x4x16xbf16, #tpu.memory_space<vmem>>, vector<1x4x16xbf16>
    %209 = vector.shape_cast %208 : vector<1x4x16xbf16> to vector<4x16xbf16>
    %cst_180 = arith.constant dense<0.000000e+00> : vector<80x16xf32>
    %210 = tpu.matmul %207, %209, %cst_180 {dimension_numbers = #tpu.dot_dimension_numbers<[1], [0], [0], [1], [0, 0, 1, 1], [], []>} : vector<80x4xbf16>, vector<4x16xbf16>, vector<80x16xf32> -> vector<80x16xf32>
    %211 = arith.addf %203, %210 : vector<80x16xf32>
    %c2_i32_181 = arith.constant 2 : i32
    %212 = arith.addi %arg1, %c2_i32_181 : i32
    %c0_182 = arith.constant 0 : index
    %213 = arith.index_cast %212 : i32 to index
    %c22_183 = arith.constant 22 : index
    %c0_184 = arith.constant 0 : index
    %214 = vector.load %arg2[%c0_182, %213, %c22_183, %c0_184] : memref<1x10x104x4xbf16, #tpu.memory_space<vmem>>, vector<1x1x80x4xbf16>
    %215 = vector.shape_cast %214 : vector<1x1x80x4xbf16> to vector<80x4xbf16>
    %c26 = arith.constant 26 : index
    %c0_185 = arith.constant 0 : index
    %c0_186 = arith.constant 0 : index
    %216 = vector.load %arg3[%c26, %c0_185, %c0_186] : memref<27x4x16xbf16, #tpu.memory_space<vmem>>, vector<1x4x16xbf16>
    %217 = vector.shape_cast %216 : vector<1x4x16xbf16> to vector<4x16xbf16>
    %cst_187 = arith.constant dense<0.000000e+00> : vector<80x16xf32>
    %218 = tpu.matmul %215, %217, %cst_187 {dimension_numbers = #tpu.dot_dimension_numbers<[1], [0], [0], [1], [0, 0, 1, 1], [], []>} : vector<80x4xbf16>, vector<4x16xbf16>, vector<80x16xf32> -> vector<80x16xf32>
    %219 = arith.addf %211, %218 : vector<80x16xf32>
    %220 = vector.shape_cast %219 : vector<80x16xf32> to vector<1x1x80x16xf32>
    %c0_188 = arith.constant 0 : index
    %c0_189 = arith.constant 0 : index
    %c0_190 = arith.constant 0 : index
    %c0_191 = arith.constant 0 : index
    %221 = vector.load %arg5[%c0_188, %c0_189, %c0_190, %c0_191] : memref<1x1x80x16xf32, #tpu.memory_space<vmem>>, vector<1x1x80x16xf32>
    tpu.vector_store %arg5[%c0_188, %c0_189, %c0_190, %c0_191], %220 {strides = array<i32>} : memref<1x1x80x16xf32, #tpu.memory_space<vmem>>, vector<1x1x80x16xf32>,
    %c0_192 = arith.constant 0 : index
    %c0_193 = arith.constant 0 : index
    %222 = vector.load %arg4[%c0_192, %c0_193] : memref<80x1xf32, #tpu.memory_space<vmem>>, vector<80x1xf32>
    %223 = vector.broadcast %222 : vector<80x1xf32> to vector<80x16xf32>
    %224 = arith.mulf %219, %223 : vector<80x16xf32>
    %c0_194 = arith.constant 0 : index
    %c0_195 = arith.constant 0 : index
    %c0_196 = arith.constant 0 : index
    %225 = vector.load %arg6[%c0_194, %c0_195, %c0_196] : memref<1x1x16xf32, #tpu.memory_space<vmem>>, vector<1x1x16xf32>
    %cst_197 = arith.constant dense<0.000000e+00> : vector<16xf32>
    %226 = vector.multi_reduction <add>, %224, %cst_197 [0] : vector<80x16xf32> to vector<16xf32>
    %227 = vector.shape_cast %226 : vector<16xf32> to vector<1x16xf32>
    %228 = vector.shape_cast %227 : vector<1x16xf32> to vector<1x1x16xf32>
    %229 = arith.addf %225, %228 : vector<1x1x16xf32>
    %c0_198 = arith.constant 0 : index
    %c0_199 = arith.constant 0 : index
    %c0_200 = arith.constant 0 : index
    %230 = vector.load %arg6[%c0_198, %c0_199, %c0_200] : memref<1x1x16xf32, #tpu.memory_space<vmem>>, vector<1x1x16xf32>
    tpu.vector_store %arg6[%c0_198, %c0_199, %c0_200], %229 {strides = array<i32>} : memref<1x1x16xf32, #tpu.memory_space<vmem>>, vector<1x1x16xf32>,
    %c0_201 = arith.constant 0 : index
    %c0_202 = arith.constant 0 : index
    %c0_203 = arith.constant 0 : index
    %231 = vector.load %arg7[%c0_201, %c0_202, %c0_203] : memref<1x1x16xf32, #tpu.memory_space<vmem>>, vector<1x1x16xf32>
    %232 = arith.mulf %224, %219 : vector<80x16xf32>
    %cst_204 = arith.constant dense<0.000000e+00> : vector<16xf32>
    %233 = vector.multi_reduction <add>, %232, %cst_204 [0] : vector<80x16xf32> to vector<16xf32>
    %234 = vector.shape_cast %233 : vector<16xf32> to vector<1x16xf32>
    %235 = vector.shape_cast %234 : vector<1x16xf32> to vector<1x1x16xf32>
    %236 = arith.addf %231, %235 : vector<1x1x16xf32>
    %c0_205 = arith.constant 0 : index
    %c0_206 = arith.constant 0 : index
    %c0_207 = arith.constant 0 : index
    %237 = vector.load %arg7[%c0_205, %c0_206, %c0_207] : memref<1x1x16xf32, #tpu.memory_space<vmem>>, vector<1x1x16xf32>
    tpu.vector_store %arg7[%c0_205, %c0_206, %c0_207], %236 {strides = array<i32>} : memref<1x1x16xf32, #tpu.memory_space<vmem>>, vector<1x1x16xf32>,
    return
  }
  func.func @transform_0(%arg0: i32, %arg1: i32) -> (i32, i32, i32, i32) {
    %c0_i32 = arith.constant 0 : i32
    %c0_i32_0 = arith.constant 0 : i32
    %c0_i32_1 = arith.constant 0 : i32
    %c0_i32_2 = arith.constant 0 : i32
    return %arg0, %c0_i32, %c0_i32_0, %c0_i32_1 : i32, i32, i32, i32
  }
  func.func @transform_1(%arg0: i32, %arg1: i32) -> (i32, i32, i32) {
    %c0_i32 = arith.constant 0 : i32
    %c0_i32_0 = arith.constant 0 : i32
    %c0_i32_1 = arith.constant 0 : i32
    %c0_i32_2 = arith.constant 0 : i32
    return %c0_i32, %c0_i32_0, %c0_i32_1 : i32, i32, i32
  }
  func.func @transform_2(%arg0: i32, %arg1: i32) -> (i32, i32) {
    %c0_i32 = arith.constant 0 : i32
    %c0_i32_0 = arith.constant 0 : i32
    %c0_i32_1 = arith.constant 0 : i32
    return %c0_i32, %c0_i32_0 : i32, i32
  }
  func.func @transform_3(%arg0: i32, %arg1: i32) -> (i32, i32, i32, i32) {
    %c0_i32 = arith.constant 0 : i32
    %c0_i32_0 = arith.constant 0 : i32
    %c0_i32_1 = arith.constant 0 : i32
    return %arg0, %arg1, %c0_i32, %c0_i32_0 : i32, i32, i32, i32
  }
  func.func @transform_4(%arg0: i32, %arg1: i32) -> (i32, i32, i32) {
    %c0_i32 = arith.constant 0 : i32
    %c0_i32_0 = arith.constant 0 : i32
    %c0_i32_1 = arith.constant 0 : i32
    return %arg0, %c0_i32, %c0_i32_0 : i32, i32, i32
  }
  func.func @transform_5(%arg0: i32, %arg1: i32) -> (i32, i32, i32) {
    %c0_i32 = arith.constant 0 : i32
    %c0_i32_0 = arith.constant 0 : i32
    %c0_i32_1 = arith.constant 0 : i32
    return %arg0, %c0_i32, %c0_i32_0 : i32, i32, i32
  }
}

module attributes {stable_mosaic.version = 11 : i64} {
  func.func @_conv3d_taps_stats_kernel(%arg0: i32, %arg1: i32, %arg2: memref<1x10x104x8xbf16, #tpu.memory_space<vmem>>, %arg3: memref<27x8x8xbf16, #tpu.memory_space<vmem>>, %arg4: memref<80x1xf32, #tpu.memory_space<vmem>>, %arg5: memref<1x1x80x8xf32, #tpu.memory_space<vmem>>, %arg6: memref<1x1x8xf32, #tpu.memory_space<vmem>>, %arg7: memref<1x1x8xf32, #tpu.memory_space<vmem>>) attributes {dimension_semantics = [#tpu.dimension_semantics<parallel>, #tpu.dimension_semantics<arbitrary>], iteration_bounds = array<i64: 2, 8>, scalar_prefetch = 0 : i64, scratch_operands = 0 : i64, tpu.core_type = #tpu.core_type<tc>, window_params = [{transform_indices = @transform_0, window_bounds = array<i64: 1, 10, 104, 8>}, {pipeline_mode = #tpu.pipeline_mode<synchronous>, transform_indices = @transform_1, window_bounds = array<i64: 27, 8, 8>}, {pipeline_mode = #tpu.pipeline_mode<synchronous>, transform_indices = @transform_2, window_bounds = array<i64: 80, 1>}, {transform_indices = @transform_3, window_bounds = array<i64: 1, 1, 80, 8>}, {transform_indices = @transform_4, window_bounds = array<i64: 1, 1, 8>}, {transform_indices = @transform_5, window_bounds = array<i64: 1, 1, 8>}]} {
    %c0_i32 = arith.constant 0 : i32
    %0 = arith.cmpi eq, %arg1, %c0_i32 : i32
    %1 = arith.extui %0 : i1 to i32
    %c0_i32_0 = arith.constant 0 : i32
    %2 = arith.cmpi ne, %1, %c0_i32_0 : i32
    scf.if %2 {
      %cst_208 = arith.constant 0.000000e+00 : f32
      %238 = vector.broadcast %cst_208 : f32 to vector<1x1x8xf32>
      %c0_209 = arith.constant 0 : index
      %c0_210 = arith.constant 0 : index
      %c0_211 = arith.constant 0 : index
      %239 = vector.load %arg6[%c0_209, %c0_210, %c0_211] : memref<1x1x8xf32, #tpu.memory_space<vmem>>, vector<1x1x8xf32>
      tpu.vector_store %arg6[%c0_209, %c0_210, %c0_211], %238 {strides = array<i32>} : memref<1x1x8xf32, #tpu.memory_space<vmem>>, vector<1x1x8xf32>,
      %cst_212 = arith.constant 0.000000e+00 : f32
      %240 = vector.broadcast %cst_212 : f32 to vector<1x1x8xf32>
      %c0_213 = arith.constant 0 : index
      %c0_214 = arith.constant 0 : index
      %c0_215 = arith.constant 0 : index
      %241 = vector.load %arg7[%c0_213, %c0_214, %c0_215] : memref<1x1x8xf32, #tpu.memory_space<vmem>>, vector<1x1x8xf32>
      tpu.vector_store %arg7[%c0_213, %c0_214, %c0_215], %240 {strides = array<i32>} : memref<1x1x8xf32, #tpu.memory_space<vmem>>, vector<1x1x8xf32>,
    } else {
    }
    %cst = arith.constant 0.000000e+00 : f32
    %3 = vector.broadcast %cst : f32 to vector<80x8xf32>
    %c0_i32_1 = arith.constant 0 : i32
    %4 = arith.addi %arg1, %c0_i32_1 : i32
    %c0 = arith.constant 0 : index
    %5 = arith.index_cast %4 : i32 to index
    %c0_2 = arith.constant 0 : index
    %c0_3 = arith.constant 0 : index
    %6 = vector.load %arg2[%c0, %5, %c0_2, %c0_3] : memref<1x10x104x8xbf16, #tpu.memory_space<vmem>>, vector<1x1x80x8xbf16>
    %7 = vector.shape_cast %6 : vector<1x1x80x8xbf16> to vector<80x8xbf16>
    %c0_4 = arith.constant 0 : index
    %c0_5 = arith.constant 0 : index
    %c0_6 = arith.constant 0 : index
    %8 = vector.load %arg3[%c0_4, %c0_5, %c0_6] : memref<27x8x8xbf16, #tpu.memory_space<vmem>>, vector<1x8x8xbf16>
    %9 = vector.shape_cast %8 : vector<1x8x8xbf16> to vector<8x8xbf16>
    %cst_7 = arith.constant dense<0.000000e+00> : vector<80x8xf32>
    %10 = tpu.matmul %7, %9, %cst_7 {dimension_numbers = #tpu.dot_dimension_numbers<[1], [0], [0], [1], [0, 0, 1, 1], [], []>} : vector<80x8xbf16>, vector<8x8xbf16>, vector<80x8xf32> -> vector<80x8xf32>
    %11 = arith.addf %3, %10 : vector<80x8xf32>
    %c0_i32_8 = arith.constant 0 : i32
    %12 = arith.addi %arg1, %c0_i32_8 : i32
    %c0_9 = arith.constant 0 : index
    %13 = arith.index_cast %12 : i32 to index
    %c1 = arith.constant 1 : index
    %c0_10 = arith.constant 0 : index
    %14 = vector.load %arg2[%c0_9, %13, %c1, %c0_10] : memref<1x10x104x8xbf16, #tpu.memory_space<vmem>>, vector<1x1x80x8xbf16>
    %15 = vector.shape_cast %14 : vector<1x1x80x8xbf16> to vector<80x8xbf16>
    %c1_11 = arith.constant 1 : index
    %c0_12 = arith.constant 0 : index
    %c0_13 = arith.constant 0 : index
    %16 = vector.load %arg3[%c1_11, %c0_12, %c0_13] : memref<27x8x8xbf16, #tpu.memory_space<vmem>>, vector<1x8x8xbf16>
    %17 = vector.shape_cast %16 : vector<1x8x8xbf16> to vector<8x8xbf16>
    %cst_14 = arith.constant dense<0.000000e+00> : vector<80x8xf32>
    %18 = tpu.matmul %15, %17, %cst_14 {dimension_numbers = #tpu.dot_dimension_numbers<[1], [0], [0], [1], [0, 0, 1, 1], [], []>} : vector<80x8xbf16>, vector<8x8xbf16>, vector<80x8xf32> -> vector<80x8xf32>
    %19 = arith.addf %11, %18 : vector<80x8xf32>
    %c0_i32_15 = arith.constant 0 : i32
    %20 = arith.addi %arg1, %c0_i32_15 : i32
    %c0_16 = arith.constant 0 : index
    %21 = arith.index_cast %20 : i32 to index
    %c2 = arith.constant 2 : index
    %c0_17 = arith.constant 0 : index
    %22 = vector.load %arg2[%c0_16, %21, %c2, %c0_17] : memref<1x10x104x8xbf16, #tpu.memory_space<vmem>>, vector<1x1x80x8xbf16>
    %23 = vector.shape_cast %22 : vector<1x1x80x8xbf16> to vector<80x8xbf16>
    %c2_18 = arith.constant 2 : index
    %c0_19 = arith.constant 0 : index
    %c0_20 = arith.constant 0 : index
    %24 = vector.load %arg3[%c2_18, %c0_19, %c0_20] : memref<27x8x8xbf16, #tpu.memory_space<vmem>>, vector<1x8x8xbf16>
    %25 = vector.shape_cast %24 : vector<1x8x8xbf16> to vector<8x8xbf16>
    %cst_21 = arith.constant dense<0.000000e+00> : vector<80x8xf32>
    %26 = tpu.matmul %23, %25, %cst_21 {dimension_numbers = #tpu.dot_dimension_numbers<[1], [0], [0], [1], [0, 0, 1, 1], [], []>} : vector<80x8xbf16>, vector<8x8xbf16>, vector<80x8xf32> -> vector<80x8xf32>
    %27 = arith.addf %19, %26 : vector<80x8xf32>
    %c0_i32_22 = arith.constant 0 : i32
    %28 = arith.addi %arg1, %c0_i32_22 : i32
    %c0_23 = arith.constant 0 : index
    %29 = arith.index_cast %28 : i32 to index
    %c10 = arith.constant 10 : index
    %c0_24 = arith.constant 0 : index
    %30 = vector.load %arg2[%c0_23, %29, %c10, %c0_24] : memref<1x10x104x8xbf16, #tpu.memory_space<vmem>>, vector<1x1x80x8xbf16>
    %31 = vector.shape_cast %30 : vector<1x1x80x8xbf16> to vector<80x8xbf16>
    %c3 = arith.constant 3 : index
    %c0_25 = arith.constant 0 : index
    %c0_26 = arith.constant 0 : index
    %32 = vector.load %arg3[%c3, %c0_25, %c0_26] : memref<27x8x8xbf16, #tpu.memory_space<vmem>>, vector<1x8x8xbf16>
    %33 = vector.shape_cast %32 : vector<1x8x8xbf16> to vector<8x8xbf16>
    %cst_27 = arith.constant dense<0.000000e+00> : vector<80x8xf32>
    %34 = tpu.matmul %31, %33, %cst_27 {dimension_numbers = #tpu.dot_dimension_numbers<[1], [0], [0], [1], [0, 0, 1, 1], [], []>} : vector<80x8xbf16>, vector<8x8xbf16>, vector<80x8xf32> -> vector<80x8xf32>
    %35 = arith.addf %27, %34 : vector<80x8xf32>
    %c0_i32_28 = arith.constant 0 : i32
    %36 = arith.addi %arg1, %c0_i32_28 : i32
    %c0_29 = arith.constant 0 : index
    %37 = arith.index_cast %36 : i32 to index
    %c11 = arith.constant 11 : index
    %c0_30 = arith.constant 0 : index
    %38 = vector.load %arg2[%c0_29, %37, %c11, %c0_30] : memref<1x10x104x8xbf16, #tpu.memory_space<vmem>>, vector<1x1x80x8xbf16>
    %39 = vector.shape_cast %38 : vector<1x1x80x8xbf16> to vector<80x8xbf16>
    %c4 = arith.constant 4 : index
    %c0_31 = arith.constant 0 : index
    %c0_32 = arith.constant 0 : index
    %40 = vector.load %arg3[%c4, %c0_31, %c0_32] : memref<27x8x8xbf16, #tpu.memory_space<vmem>>, vector<1x8x8xbf16>
    %41 = vector.shape_cast %40 : vector<1x8x8xbf16> to vector<8x8xbf16>
    %cst_33 = arith.constant dense<0.000000e+00> : vector<80x8xf32>
    %42 = tpu.matmul %39, %41, %cst_33 {dimension_numbers = #tpu.dot_dimension_numbers<[1], [0], [0], [1], [0, 0, 1, 1], [], []>} : vector<80x8xbf16>, vector<8x8xbf16>, vector<80x8xf32> -> vector<80x8xf32>
    %43 = arith.addf %35, %42 : vector<80x8xf32>
    %c0_i32_34 = arith.constant 0 : i32
    %44 = arith.addi %arg1, %c0_i32_34 : i32
    %c0_35 = arith.constant 0 : index
    %45 = arith.index_cast %44 : i32 to index
    %c12 = arith.constant 12 : index
    %c0_36 = arith.constant 0 : index
    %46 = vector.load %arg2[%c0_35, %45, %c12, %c0_36] : memref<1x10x104x8xbf16, #tpu.memory_space<vmem>>, vector<1x1x80x8xbf16>
    %47 = vector.shape_cast %46 : vector<1x1x80x8xbf16> to vector<80x8xbf16>
    %c5 = arith.constant 5 : index
    %c0_37 = arith.constant 0 : index
    %c0_38 = arith.constant 0 : index
    %48 = vector.load %arg3[%c5, %c0_37, %c0_38] : memref<27x8x8xbf16, #tpu.memory_space<vmem>>, vector<1x8x8xbf16>
    %49 = vector.shape_cast %48 : vector<1x8x8xbf16> to vector<8x8xbf16>
    %cst_39 = arith.constant dense<0.000000e+00> : vector<80x8xf32>
    %50 = tpu.matmul %47, %49, %cst_39 {dimension_numbers = #tpu.dot_dimension_numbers<[1], [0], [0], [1], [0, 0, 1, 1], [], []>} : vector<80x8xbf16>, vector<8x8xbf16>, vector<80x8xf32> -> vector<80x8xf32>
    %51 = arith.addf %43, %50 : vector<80x8xf32>
    %c0_i32_40 = arith.constant 0 : i32
    %52 = arith.addi %arg1, %c0_i32_40 : i32
    %c0_41 = arith.constant 0 : index
    %53 = arith.index_cast %52 : i32 to index
    %c20 = arith.constant 20 : index
    %c0_42 = arith.constant 0 : index
    %54 = vector.load %arg2[%c0_41, %53, %c20, %c0_42] : memref<1x10x104x8xbf16, #tpu.memory_space<vmem>>, vector<1x1x80x8xbf16>
    %55 = vector.shape_cast %54 : vector<1x1x80x8xbf16> to vector<80x8xbf16>
    %c6 = arith.constant 6 : index
    %c0_43 = arith.constant 0 : index
    %c0_44 = arith.constant 0 : index
    %56 = vector.load %arg3[%c6, %c0_43, %c0_44] : memref<27x8x8xbf16, #tpu.memory_space<vmem>>, vector<1x8x8xbf16>
    %57 = vector.shape_cast %56 : vector<1x8x8xbf16> to vector<8x8xbf16>
    %cst_45 = arith.constant dense<0.000000e+00> : vector<80x8xf32>
    %58 = tpu.matmul %55, %57, %cst_45 {dimension_numbers = #tpu.dot_dimension_numbers<[1], [0], [0], [1], [0, 0, 1, 1], [], []>} : vector<80x8xbf16>, vector<8x8xbf16>, vector<80x8xf32> -> vector<80x8xf32>
    %59 = arith.addf %51, %58 : vector<80x8xf32>
    %c0_i32_46 = arith.constant 0 : i32
    %60 = arith.addi %arg1, %c0_i32_46 : i32
    %c0_47 = arith.constant 0 : index
    %61 = arith.index_cast %60 : i32 to index
    %c21 = arith.constant 21 : index
    %c0_48 = arith.constant 0 : index
    %62 = vector.load %arg2[%c0_47, %61, %c21, %c0_48] : memref<1x10x104x8xbf16, #tpu.memory_space<vmem>>, vector<1x1x80x8xbf16>
    %63 = vector.shape_cast %62 : vector<1x1x80x8xbf16> to vector<80x8xbf16>
    %c7 = arith.constant 7 : index
    %c0_49 = arith.constant 0 : index
    %c0_50 = arith.constant 0 : index
    %64 = vector.load %arg3[%c7, %c0_49, %c0_50] : memref<27x8x8xbf16, #tpu.memory_space<vmem>>, vector<1x8x8xbf16>
    %65 = vector.shape_cast %64 : vector<1x8x8xbf16> to vector<8x8xbf16>
    %cst_51 = arith.constant dense<0.000000e+00> : vector<80x8xf32>
    %66 = tpu.matmul %63, %65, %cst_51 {dimension_numbers = #tpu.dot_dimension_numbers<[1], [0], [0], [1], [0, 0, 1, 1], [], []>} : vector<80x8xbf16>, vector<8x8xbf16>, vector<80x8xf32> -> vector<80x8xf32>
    %67 = arith.addf %59, %66 : vector<80x8xf32>
    %c0_i32_52 = arith.constant 0 : i32
    %68 = arith.addi %arg1, %c0_i32_52 : i32
    %c0_53 = arith.constant 0 : index
    %69 = arith.index_cast %68 : i32 to index
    %c22 = arith.constant 22 : index
    %c0_54 = arith.constant 0 : index
    %70 = vector.load %arg2[%c0_53, %69, %c22, %c0_54] : memref<1x10x104x8xbf16, #tpu.memory_space<vmem>>, vector<1x1x80x8xbf16>
    %71 = vector.shape_cast %70 : vector<1x1x80x8xbf16> to vector<80x8xbf16>
    %c8 = arith.constant 8 : index
    %c0_55 = arith.constant 0 : index
    %c0_56 = arith.constant 0 : index
    %72 = vector.load %arg3[%c8, %c0_55, %c0_56] : memref<27x8x8xbf16, #tpu.memory_space<vmem>>, vector<1x8x8xbf16>
    %73 = vector.shape_cast %72 : vector<1x8x8xbf16> to vector<8x8xbf16>
    %cst_57 = arith.constant dense<0.000000e+00> : vector<80x8xf32>
    %74 = tpu.matmul %71, %73, %cst_57 {dimension_numbers = #tpu.dot_dimension_numbers<[1], [0], [0], [1], [0, 0, 1, 1], [], []>} : vector<80x8xbf16>, vector<8x8xbf16>, vector<80x8xf32> -> vector<80x8xf32>
    %75 = arith.addf %67, %74 : vector<80x8xf32>
    %c1_i32 = arith.constant 1 : i32
    %76 = arith.addi %arg1, %c1_i32 : i32
    %c0_58 = arith.constant 0 : index
    %77 = arith.index_cast %76 : i32 to index
    %c0_59 = arith.constant 0 : index
    %c0_60 = arith.constant 0 : index
    %78 = vector.load %arg2[%c0_58, %77, %c0_59, %c0_60] : memref<1x10x104x8xbf16, #tpu.memory_space<vmem>>, vector<1x1x80x8xbf16>
    %79 = vector.shape_cast %78 : vector<1x1x80x8xbf16> to vector<80x8xbf16>
    %c9 = arith.constant 9 : index
    %c0_61 = arith.constant 0 : index
    %c0_62 = arith.constant 0 : index
    %80 = vector.load %arg3[%c9, %c0_61, %c0_62] : memref<27x8x8xbf16, #tpu.memory_space<vmem>>, vector<1x8x8xbf16>
    %81 = vector.shape_cast %80 : vector<1x8x8xbf16> to vector<8x8xbf16>
    %cst_63 = arith.constant dense<0.000000e+00> : vector<80x8xf32>
    %82 = tpu.matmul %79, %81, %cst_63 {dimension_numbers = #tpu.dot_dimension_numbers<[1], [0], [0], [1], [0, 0, 1, 1], [], []>} : vector<80x8xbf16>, vector<8x8xbf16>, vector<80x8xf32> -> vector<80x8xf32>
    %83 = arith.addf %75, %82 : vector<80x8xf32>
    %c1_i32_64 = arith.constant 1 : i32
    %84 = arith.addi %arg1, %c1_i32_64 : i32
    %c0_65 = arith.constant 0 : index
    %85 = arith.index_cast %84 : i32 to index
    %c1_66 = arith.constant 1 : index
    %c0_67 = arith.constant 0 : index
    %86 = vector.load %arg2[%c0_65, %85, %c1_66, %c0_67] : memref<1x10x104x8xbf16, #tpu.memory_space<vmem>>, vector<1x1x80x8xbf16>
    %87 = vector.shape_cast %86 : vector<1x1x80x8xbf16> to vector<80x8xbf16>
    %c10_68 = arith.constant 10 : index
    %c0_69 = arith.constant 0 : index
    %c0_70 = arith.constant 0 : index
    %88 = vector.load %arg3[%c10_68, %c0_69, %c0_70] : memref<27x8x8xbf16, #tpu.memory_space<vmem>>, vector<1x8x8xbf16>
    %89 = vector.shape_cast %88 : vector<1x8x8xbf16> to vector<8x8xbf16>
    %cst_71 = arith.constant dense<0.000000e+00> : vector<80x8xf32>
    %90 = tpu.matmul %87, %89, %cst_71 {dimension_numbers = #tpu.dot_dimension_numbers<[1], [0], [0], [1], [0, 0, 1, 1], [], []>} : vector<80x8xbf16>, vector<8x8xbf16>, vector<80x8xf32> -> vector<80x8xf32>
    %91 = arith.addf %83, %90 : vector<80x8xf32>
    %c1_i32_72 = arith.constant 1 : i32
    %92 = arith.addi %arg1, %c1_i32_72 : i32
    %c0_73 = arith.constant 0 : index
    %93 = arith.index_cast %92 : i32 to index
    %c2_74 = arith.constant 2 : index
    %c0_75 = arith.constant 0 : index
    %94 = vector.load %arg2[%c0_73, %93, %c2_74, %c0_75] : memref<1x10x104x8xbf16, #tpu.memory_space<vmem>>, vector<1x1x80x8xbf16>
    %95 = vector.shape_cast %94 : vector<1x1x80x8xbf16> to vector<80x8xbf16>
    %c11_76 = arith.constant 11 : index
    %c0_77 = arith.constant 0 : index
    %c0_78 = arith.constant 0 : index
    %96 = vector.load %arg3[%c11_76, %c0_77, %c0_78] : memref<27x8x8xbf16, #tpu.memory_space<vmem>>, vector<1x8x8xbf16>
    %97 = vector.shape_cast %96 : vector<1x8x8xbf16> to vector<8x8xbf16>
    %cst_79 = arith.constant dense<0.000000e+00> : vector<80x8xf32>
    %98 = tpu.matmul %95, %97, %cst_79 {dimension_numbers = #tpu.dot_dimension_numbers<[1], [0], [0], [1], [0, 0, 1, 1], [], []>} : vector<80x8xbf16>, vector<8x8xbf16>, vector<80x8xf32> -> vector<80x8xf32>
    %99 = arith.addf %91, %98 : vector<80x8xf32>
    %c1_i32_80 = arith.constant 1 : i32
    %100 = arith.addi %arg1, %c1_i32_80 : i32
    %c0_81 = arith.constant 0 : index
    %101 = arith.index_cast %100 : i32 to index
    %c10_82 = arith.constant 10 : index
    %c0_83 = arith.constant 0 : index
    %102 = vector.load %arg2[%c0_81, %101, %c10_82, %c0_83] : memref<1x10x104x8xbf16, #tpu.memory_space<vmem>>, vector<1x1x80x8xbf16>
    %103 = vector.shape_cast %102 : vector<1x1x80x8xbf16> to vector<80x8xbf16>
    %c12_84 = arith.constant 12 : index
    %c0_85 = arith.constant 0 : index
    %c0_86 = arith.constant 0 : index
    %104 = vector.load %arg3[%c12_84, %c0_85, %c0_86] : memref<27x8x8xbf16, #tpu.memory_space<vmem>>, vector<1x8x8xbf16>
    %105 = vector.shape_cast %104 : vector<1x8x8xbf16> to vector<8x8xbf16>
    %cst_87 = arith.constant dense<0.000000e+00> : vector<80x8xf32>
    %106 = tpu.matmul %103, %105, %cst_87 {dimension_numbers = #tpu.dot_dimension_numbers<[1], [0], [0], [1], [0, 0, 1, 1], [], []>} : vector<80x8xbf16>, vector<8x8xbf16>, vector<80x8xf32> -> vector<80x8xf32>
    %107 = arith.addf %99, %106 : vector<80x8xf32>
    %c1_i32_88 = arith.constant 1 : i32
    %108 = arith.addi %arg1, %c1_i32_88 : i32
    %c0_89 = arith.constant 0 : index
    %109 = arith.index_cast %108 : i32 to index
    %c11_90 = arith.constant 11 : index
    %c0_91 = arith.constant 0 : index
    %110 = vector.load %arg2[%c0_89, %109, %c11_90, %c0_91] : memref<1x10x104x8xbf16, #tpu.memory_space<vmem>>, vector<1x1x80x8xbf16>
    %111 = vector.shape_cast %110 : vector<1x1x80x8xbf16> to vector<80x8xbf16>
    %c13 = arith.constant 13 : index
    %c0_92 = arith.constant 0 : index
    %c0_93 = arith.constant 0 : index
    %112 = vector.load %arg3[%c13, %c0_92, %c0_93] : memref<27x8x8xbf16, #tpu.memory_space<vmem>>, vector<1x8x8xbf16>
    %113 = vector.shape_cast %112 : vector<1x8x8xbf16> to vector<8x8xbf16>
    %cst_94 = arith.constant dense<0.000000e+00> : vector<80x8xf32>
    %114 = tpu.matmul %111, %113, %cst_94 {dimension_numbers = #tpu.dot_dimension_numbers<[1], [0], [0], [1], [0, 0, 1, 1], [], []>} : vector<80x8xbf16>, vector<8x8xbf16>, vector<80x8xf32> -> vector<80x8xf32>
    %115 = arith.addf %107, %114 : vector<80x8xf32>
    %c1_i32_95 = arith.constant 1 : i32
    %116 = arith.addi %arg1, %c1_i32_95 : i32
    %c0_96 = arith.constant 0 : index
    %117 = arith.index_cast %116 : i32 to index
    %c12_97 = arith.constant 12 : index
    %c0_98 = arith.constant 0 : index
    %118 = vector.load %arg2[%c0_96, %117, %c12_97, %c0_98] : memref<1x10x104x8xbf16, #tpu.memory_space<vmem>>, vector<1x1x80x8xbf16>
    %119 = vector.shape_cast %118 : vector<1x1x80x8xbf16> to vector<80x8xbf16>
    %c14 = arith.constant 14 : index
    %c0_99 = arith.constant 0 : index
    %c0_100 = arith.constant 0 : index
    %120 = vector.load %arg3[%c14, %c0_99, %c0_100] : memref<27x8x8xbf16, #tpu.memory_space<vmem>>, vector<1x8x8xbf16>
    %121 = vector.shape_cast %120 : vector<1x8x8xbf16> to vector<8x8xbf16>
    %cst_101 = arith.constant dense<0.000000e+00> : vector<80x8xf32>
    %122 = tpu.matmul %119, %121, %cst_101 {dimension_numbers = #tpu.dot_dimension_numbers<[1], [0], [0], [1], [0, 0, 1, 1], [], []>} : vector<80x8xbf16>, vector<8x8xbf16>, vector<80x8xf32> -> vector<80x8xf32>
    %123 = arith.addf %115, %122 : vector<80x8xf32>
    %c1_i32_102 = arith.constant 1 : i32
    %124 = arith.addi %arg1, %c1_i32_102 : i32
    %c0_103 = arith.constant 0 : index
    %125 = arith.index_cast %124 : i32 to index
    %c20_104 = arith.constant 20 : index
    %c0_105 = arith.constant 0 : index
    %126 = vector.load %arg2[%c0_103, %125, %c20_104, %c0_105] : memref<1x10x104x8xbf16, #tpu.memory_space<vmem>>, vector<1x1x80x8xbf16>
    %127 = vector.shape_cast %126 : vector<1x1x80x8xbf16> to vector<80x8xbf16>
    %c15 = arith.constant 15 : index
    %c0_106 = arith.constant 0 : index
    %c0_107 = arith.constant 0 : index
    %128 = vector.load %arg3[%c15, %c0_106, %c0_107] : memref<27x8x8xbf16, #tpu.memory_space<vmem>>, vector<1x8x8xbf16>
    %129 = vector.shape_cast %128 : vector<1x8x8xbf16> to vector<8x8xbf16>
    %cst_108 = arith.constant dense<0.000000e+00> : vector<80x8xf32>
    %130 = tpu.matmul %127, %129, %cst_108 {dimension_numbers = #tpu.dot_dimension_numbers<[1], [0], [0], [1], [0, 0, 1, 1], [], []>} : vector<80x8xbf16>, vector<8x8xbf16>, vector<80x8xf32> -> vector<80x8xf32>
    %131 = arith.addf %123, %130 : vector<80x8xf32>
    %c1_i32_109 = arith.constant 1 : i32
    %132 = arith.addi %arg1, %c1_i32_109 : i32
    %c0_110 = arith.constant 0 : index
    %133 = arith.index_cast %132 : i32 to index
    %c21_111 = arith.constant 21 : index
    %c0_112 = arith.constant 0 : index
    %134 = vector.load %arg2[%c0_110, %133, %c21_111, %c0_112] : memref<1x10x104x8xbf16, #tpu.memory_space<vmem>>, vector<1x1x80x8xbf16>
    %135 = vector.shape_cast %134 : vector<1x1x80x8xbf16> to vector<80x8xbf16>
    %c16 = arith.constant 16 : index
    %c0_113 = arith.constant 0 : index
    %c0_114 = arith.constant 0 : index
    %136 = vector.load %arg3[%c16, %c0_113, %c0_114] : memref<27x8x8xbf16, #tpu.memory_space<vmem>>, vector<1x8x8xbf16>
    %137 = vector.shape_cast %136 : vector<1x8x8xbf16> to vector<8x8xbf16>
    %cst_115 = arith.constant dense<0.000000e+00> : vector<80x8xf32>
    %138 = tpu.matmul %135, %137, %cst_115 {dimension_numbers = #tpu.dot_dimension_numbers<[1], [0], [0], [1], [0, 0, 1, 1], [], []>} : vector<80x8xbf16>, vector<8x8xbf16>, vector<80x8xf32> -> vector<80x8xf32>
    %139 = arith.addf %131, %138 : vector<80x8xf32>
    %c1_i32_116 = arith.constant 1 : i32
    %140 = arith.addi %arg1, %c1_i32_116 : i32
    %c0_117 = arith.constant 0 : index
    %141 = arith.index_cast %140 : i32 to index
    %c22_118 = arith.constant 22 : index
    %c0_119 = arith.constant 0 : index
    %142 = vector.load %arg2[%c0_117, %141, %c22_118, %c0_119] : memref<1x10x104x8xbf16, #tpu.memory_space<vmem>>, vector<1x1x80x8xbf16>
    %143 = vector.shape_cast %142 : vector<1x1x80x8xbf16> to vector<80x8xbf16>
    %c17 = arith.constant 17 : index
    %c0_120 = arith.constant 0 : index
    %c0_121 = arith.constant 0 : index
    %144 = vector.load %arg3[%c17, %c0_120, %c0_121] : memref<27x8x8xbf16, #tpu.memory_space<vmem>>, vector<1x8x8xbf16>
    %145 = vector.shape_cast %144 : vector<1x8x8xbf16> to vector<8x8xbf16>
    %cst_122 = arith.constant dense<0.000000e+00> : vector<80x8xf32>
    %146 = tpu.matmul %143, %145, %cst_122 {dimension_numbers = #tpu.dot_dimension_numbers<[1], [0], [0], [1], [0, 0, 1, 1], [], []>} : vector<80x8xbf16>, vector<8x8xbf16>, vector<80x8xf32> -> vector<80x8xf32>
    %147 = arith.addf %139, %146 : vector<80x8xf32>
    %c2_i32 = arith.constant 2 : i32
    %148 = arith.addi %arg1, %c2_i32 : i32
    %c0_123 = arith.constant 0 : index
    %149 = arith.index_cast %148 : i32 to index
    %c0_124 = arith.constant 0 : index
    %c0_125 = arith.constant 0 : index
    %150 = vector.load %arg2[%c0_123, %149, %c0_124, %c0_125] : memref<1x10x104x8xbf16, #tpu.memory_space<vmem>>, vector<1x1x80x8xbf16>
    %151 = vector.shape_cast %150 : vector<1x1x80x8xbf16> to vector<80x8xbf16>
    %c18 = arith.constant 18 : index
    %c0_126 = arith.constant 0 : index
    %c0_127 = arith.constant 0 : index
    %152 = vector.load %arg3[%c18, %c0_126, %c0_127] : memref<27x8x8xbf16, #tpu.memory_space<vmem>>, vector<1x8x8xbf16>
    %153 = vector.shape_cast %152 : vector<1x8x8xbf16> to vector<8x8xbf16>
    %cst_128 = arith.constant dense<0.000000e+00> : vector<80x8xf32>
    %154 = tpu.matmul %151, %153, %cst_128 {dimension_numbers = #tpu.dot_dimension_numbers<[1], [0], [0], [1], [0, 0, 1, 1], [], []>} : vector<80x8xbf16>, vector<8x8xbf16>, vector<80x8xf32> -> vector<80x8xf32>
    %155 = arith.addf %147, %154 : vector<80x8xf32>
    %c2_i32_129 = arith.constant 2 : i32
    %156 = arith.addi %arg1, %c2_i32_129 : i32
    %c0_130 = arith.constant 0 : index
    %157 = arith.index_cast %156 : i32 to index
    %c1_131 = arith.constant 1 : index
    %c0_132 = arith.constant 0 : index
    %158 = vector.load %arg2[%c0_130, %157, %c1_131, %c0_132] : memref<1x10x104x8xbf16, #tpu.memory_space<vmem>>, vector<1x1x80x8xbf16>
    %159 = vector.shape_cast %158 : vector<1x1x80x8xbf16> to vector<80x8xbf16>
    %c19 = arith.constant 19 : index
    %c0_133 = arith.constant 0 : index
    %c0_134 = arith.constant 0 : index
    %160 = vector.load %arg3[%c19, %c0_133, %c0_134] : memref<27x8x8xbf16, #tpu.memory_space<vmem>>, vector<1x8x8xbf16>
    %161 = vector.shape_cast %160 : vector<1x8x8xbf16> to vector<8x8xbf16>
    %cst_135 = arith.constant dense<0.000000e+00> : vector<80x8xf32>
    %162 = tpu.matmul %159, %161, %cst_135 {dimension_numbers = #tpu.dot_dimension_numbers<[1], [0], [0], [1], [0, 0, 1, 1], [], []>} : vector<80x8xbf16>, vector<8x8xbf16>, vector<80x8xf32> -> vector<80x8xf32>
    %163 = arith.addf %155, %162 : vector<80x8xf32>
    %c2_i32_136 = arith.constant 2 : i32
    %164 = arith.addi %arg1, %c2_i32_136 : i32
    %c0_137 = arith.constant 0 : index
    %165 = arith.index_cast %164 : i32 to index
    %c2_138 = arith.constant 2 : index
    %c0_139 = arith.constant 0 : index
    %166 = vector.load %arg2[%c0_137, %165, %c2_138, %c0_139] : memref<1x10x104x8xbf16, #tpu.memory_space<vmem>>, vector<1x1x80x8xbf16>
    %167 = vector.shape_cast %166 : vector<1x1x80x8xbf16> to vector<80x8xbf16>
    %c20_140 = arith.constant 20 : index
    %c0_141 = arith.constant 0 : index
    %c0_142 = arith.constant 0 : index
    %168 = vector.load %arg3[%c20_140, %c0_141, %c0_142] : memref<27x8x8xbf16, #tpu.memory_space<vmem>>, vector<1x8x8xbf16>
    %169 = vector.shape_cast %168 : vector<1x8x8xbf16> to vector<8x8xbf16>
    %cst_143 = arith.constant dense<0.000000e+00> : vector<80x8xf32>
    %170 = tpu.matmul %167, %169, %cst_143 {dimension_numbers = #tpu.dot_dimension_numbers<[1], [0], [0], [1], [0, 0, 1, 1], [], []>} : vector<80x8xbf16>, vector<8x8xbf16>, vector<80x8xf32> -> vector<80x8xf32>
    %171 = arith.addf %163, %170 : vector<80x8xf32>
    %c2_i32_144 = arith.constant 2 : i32
    %172 = arith.addi %arg1, %c2_i32_144 : i32
    %c0_145 = arith.constant 0 : index
    %173 = arith.index_cast %172 : i32 to index
    %c10_146 = arith.constant 10 : index
    %c0_147 = arith.constant 0 : index
    %174 = vector.load %arg2[%c0_145, %173, %c10_146, %c0_147] : memref<1x10x104x8xbf16, #tpu.memory_space<vmem>>, vector<1x1x80x8xbf16>
    %175 = vector.shape_cast %174 : vector<1x1x80x8xbf16> to vector<80x8xbf16>
    %c21_148 = arith.constant 21 : index
    %c0_149 = arith.constant 0 : index
    %c0_150 = arith.constant 0 : index
    %176 = vector.load %arg3[%c21_148, %c0_149, %c0_150] : memref<27x8x8xbf16, #tpu.memory_space<vmem>>, vector<1x8x8xbf16>
    %177 = vector.shape_cast %176 : vector<1x8x8xbf16> to vector<8x8xbf16>
    %cst_151 = arith.constant dense<0.000000e+00> : vector<80x8xf32>
    %178 = tpu.matmul %175, %177, %cst_151 {dimension_numbers = #tpu.dot_dimension_numbers<[1], [0], [0], [1], [0, 0, 1, 1], [], []>} : vector<80x8xbf16>, vector<8x8xbf16>, vector<80x8xf32> -> vector<80x8xf32>
    %179 = arith.addf %171, %178 : vector<80x8xf32>
    %c2_i32_152 = arith.constant 2 : i32
    %180 = arith.addi %arg1, %c2_i32_152 : i32
    %c0_153 = arith.constant 0 : index
    %181 = arith.index_cast %180 : i32 to index
    %c11_154 = arith.constant 11 : index
    %c0_155 = arith.constant 0 : index
    %182 = vector.load %arg2[%c0_153, %181, %c11_154, %c0_155] : memref<1x10x104x8xbf16, #tpu.memory_space<vmem>>, vector<1x1x80x8xbf16>
    %183 = vector.shape_cast %182 : vector<1x1x80x8xbf16> to vector<80x8xbf16>
    %c22_156 = arith.constant 22 : index
    %c0_157 = arith.constant 0 : index
    %c0_158 = arith.constant 0 : index
    %184 = vector.load %arg3[%c22_156, %c0_157, %c0_158] : memref<27x8x8xbf16, #tpu.memory_space<vmem>>, vector<1x8x8xbf16>
    %185 = vector.shape_cast %184 : vector<1x8x8xbf16> to vector<8x8xbf16>
    %cst_159 = arith.constant dense<0.000000e+00> : vector<80x8xf32>
    %186 = tpu.matmul %183, %185, %cst_159 {dimension_numbers = #tpu.dot_dimension_numbers<[1], [0], [0], [1], [0, 0, 1, 1], [], []>} : vector<80x8xbf16>, vector<8x8xbf16>, vector<80x8xf32> -> vector<80x8xf32>
    %187 = arith.addf %179, %186 : vector<80x8xf32>
    %c2_i32_160 = arith.constant 2 : i32
    %188 = arith.addi %arg1, %c2_i32_160 : i32
    %c0_161 = arith.constant 0 : index
    %189 = arith.index_cast %188 : i32 to index
    %c12_162 = arith.constant 12 : index
    %c0_163 = arith.constant 0 : index
    %190 = vector.load %arg2[%c0_161, %189, %c12_162, %c0_163] : memref<1x10x104x8xbf16, #tpu.memory_space<vmem>>, vector<1x1x80x8xbf16>
    %191 = vector.shape_cast %190 : vector<1x1x80x8xbf16> to vector<80x8xbf16>
    %c23 = arith.constant 23 : index
    %c0_164 = arith.constant 0 : index
    %c0_165 = arith.constant 0 : index
    %192 = vector.load %arg3[%c23, %c0_164, %c0_165] : memref<27x8x8xbf16, #tpu.memory_space<vmem>>, vector<1x8x8xbf16>
    %193 = vector.shape_cast %192 : vector<1x8x8xbf16> to vector<8x8xbf16>
    %cst_166 = arith.constant dense<0.000000e+00> : vector<80x8xf32>
    %194 = tpu.matmul %191, %193, %cst_166 {dimension_numbers = #tpu.dot_dimension_numbers<[1], [0], [0], [1], [0, 0, 1, 1], [], []>} : vector<80x8xbf16>, vector<8x8xbf16>, vector<80x8xf32> -> vector<80x8xf32>
    %195 = arith.addf %187, %194 : vector<80x8xf32>
    %c2_i32_167 = arith.constant 2 : i32
    %196 = arith.addi %arg1, %c2_i32_167 : i32
    %c0_168 = arith.constant 0 : index
    %197 = arith.index_cast %196 : i32 to index
    %c20_169 = arith.constant 20 : index
    %c0_170 = arith.constant 0 : index
    %198 = vector.load %arg2[%c0_168, %197, %c20_169, %c0_170] : memref<1x10x104x8xbf16, #tpu.memory_space<vmem>>, vector<1x1x80x8xbf16>
    %199 = vector.shape_cast %198 : vector<1x1x80x8xbf16> to vector<80x8xbf16>
    %c24 = arith.constant 24 : index
    %c0_171 = arith.constant 0 : index
    %c0_172 = arith.constant 0 : index
    %200 = vector.load %arg3[%c24, %c0_171, %c0_172] : memref<27x8x8xbf16, #tpu.memory_space<vmem>>, vector<1x8x8xbf16>
    %201 = vector.shape_cast %200 : vector<1x8x8xbf16> to vector<8x8xbf16>
    %cst_173 = arith.constant dense<0.000000e+00> : vector<80x8xf32>
    %202 = tpu.matmul %199, %201, %cst_173 {dimension_numbers = #tpu.dot_dimension_numbers<[1], [0], [0], [1], [0, 0, 1, 1], [], []>} : vector<80x8xbf16>, vector<8x8xbf16>, vector<80x8xf32> -> vector<80x8xf32>
    %203 = arith.addf %195, %202 : vector<80x8xf32>
    %c2_i32_174 = arith.constant 2 : i32
    %204 = arith.addi %arg1, %c2_i32_174 : i32
    %c0_175 = arith.constant 0 : index
    %205 = arith.index_cast %204 : i32 to index
    %c21_176 = arith.constant 21 : index
    %c0_177 = arith.constant 0 : index
    %206 = vector.load %arg2[%c0_175, %205, %c21_176, %c0_177] : memref<1x10x104x8xbf16, #tpu.memory_space<vmem>>, vector<1x1x80x8xbf16>
    %207 = vector.shape_cast %206 : vector<1x1x80x8xbf16> to vector<80x8xbf16>
    %c25 = arith.constant 25 : index
    %c0_178 = arith.constant 0 : index
    %c0_179 = arith.constant 0 : index
    %208 = vector.load %arg3[%c25, %c0_178, %c0_179] : memref<27x8x8xbf16, #tpu.memory_space<vmem>>, vector<1x8x8xbf16>
    %209 = vector.shape_cast %208 : vector<1x8x8xbf16> to vector<8x8xbf16>
    %cst_180 = arith.constant dense<0.000000e+00> : vector<80x8xf32>
    %210 = tpu.matmul %207, %209, %cst_180 {dimension_numbers = #tpu.dot_dimension_numbers<[1], [0], [0], [1], [0, 0, 1, 1], [], []>} : vector<80x8xbf16>, vector<8x8xbf16>, vector<80x8xf32> -> vector<80x8xf32>
    %211 = arith.addf %203, %210 : vector<80x8xf32>
    %c2_i32_181 = arith.constant 2 : i32
    %212 = arith.addi %arg1, %c2_i32_181 : i32
    %c0_182 = arith.constant 0 : index
    %213 = arith.index_cast %212 : i32 to index
    %c22_183 = arith.constant 22 : index
    %c0_184 = arith.constant 0 : index
    %214 = vector.load %arg2[%c0_182, %213, %c22_183, %c0_184] : memref<1x10x104x8xbf16, #tpu.memory_space<vmem>>, vector<1x1x80x8xbf16>
    %215 = vector.shape_cast %214 : vector<1x1x80x8xbf16> to vector<80x8xbf16>
    %c26 = arith.constant 26 : index
    %c0_185 = arith.constant 0 : index
    %c0_186 = arith.constant 0 : index
    %216 = vector.load %arg3[%c26, %c0_185, %c0_186] : memref<27x8x8xbf16, #tpu.memory_space<vmem>>, vector<1x8x8xbf16>
    %217 = vector.shape_cast %216 : vector<1x8x8xbf16> to vector<8x8xbf16>
    %cst_187 = arith.constant dense<0.000000e+00> : vector<80x8xf32>
    %218 = tpu.matmul %215, %217, %cst_187 {dimension_numbers = #tpu.dot_dimension_numbers<[1], [0], [0], [1], [0, 0, 1, 1], [], []>} : vector<80x8xbf16>, vector<8x8xbf16>, vector<80x8xf32> -> vector<80x8xf32>
    %219 = arith.addf %211, %218 : vector<80x8xf32>
    %220 = vector.shape_cast %219 : vector<80x8xf32> to vector<1x1x80x8xf32>
    %c0_188 = arith.constant 0 : index
    %c0_189 = arith.constant 0 : index
    %c0_190 = arith.constant 0 : index
    %c0_191 = arith.constant 0 : index
    %221 = vector.load %arg5[%c0_188, %c0_189, %c0_190, %c0_191] : memref<1x1x80x8xf32, #tpu.memory_space<vmem>>, vector<1x1x80x8xf32>
    tpu.vector_store %arg5[%c0_188, %c0_189, %c0_190, %c0_191], %220 {strides = array<i32>} : memref<1x1x80x8xf32, #tpu.memory_space<vmem>>, vector<1x1x80x8xf32>,
    %c0_192 = arith.constant 0 : index
    %c0_193 = arith.constant 0 : index
    %222 = vector.load %arg4[%c0_192, %c0_193] : memref<80x1xf32, #tpu.memory_space<vmem>>, vector<80x1xf32>
    %223 = vector.broadcast %222 : vector<80x1xf32> to vector<80x8xf32>
    %224 = arith.mulf %219, %223 : vector<80x8xf32>
    %c0_194 = arith.constant 0 : index
    %c0_195 = arith.constant 0 : index
    %c0_196 = arith.constant 0 : index
    %225 = vector.load %arg6[%c0_194, %c0_195, %c0_196] : memref<1x1x8xf32, #tpu.memory_space<vmem>>, vector<1x1x8xf32>
    %cst_197 = arith.constant dense<0.000000e+00> : vector<8xf32>
    %226 = vector.multi_reduction <add>, %224, %cst_197 [0] : vector<80x8xf32> to vector<8xf32>
    %227 = vector.shape_cast %226 : vector<8xf32> to vector<1x8xf32>
    %228 = vector.shape_cast %227 : vector<1x8xf32> to vector<1x1x8xf32>
    %229 = arith.addf %225, %228 : vector<1x1x8xf32>
    %c0_198 = arith.constant 0 : index
    %c0_199 = arith.constant 0 : index
    %c0_200 = arith.constant 0 : index
    %230 = vector.load %arg6[%c0_198, %c0_199, %c0_200] : memref<1x1x8xf32, #tpu.memory_space<vmem>>, vector<1x1x8xf32>
    tpu.vector_store %arg6[%c0_198, %c0_199, %c0_200], %229 {strides = array<i32>} : memref<1x1x8xf32, #tpu.memory_space<vmem>>, vector<1x1x8xf32>,
    %c0_201 = arith.constant 0 : index
    %c0_202 = arith.constant 0 : index
    %c0_203 = arith.constant 0 : index
    %231 = vector.load %arg7[%c0_201, %c0_202, %c0_203] : memref<1x1x8xf32, #tpu.memory_space<vmem>>, vector<1x1x8xf32>
    %232 = arith.mulf %224, %219 : vector<80x8xf32>
    %cst_204 = arith.constant dense<0.000000e+00> : vector<8xf32>
    %233 = vector.multi_reduction <add>, %232, %cst_204 [0] : vector<80x8xf32> to vector<8xf32>
    %234 = vector.shape_cast %233 : vector<8xf32> to vector<1x8xf32>
    %235 = vector.shape_cast %234 : vector<1x8xf32> to vector<1x1x8xf32>
    %236 = arith.addf %231, %235 : vector<1x1x8xf32>
    %c0_205 = arith.constant 0 : index
    %c0_206 = arith.constant 0 : index
    %c0_207 = arith.constant 0 : index
    %237 = vector.load %arg7[%c0_205, %c0_206, %c0_207] : memref<1x1x8xf32, #tpu.memory_space<vmem>>, vector<1x1x8xf32>
    tpu.vector_store %arg7[%c0_205, %c0_206, %c0_207], %236 {strides = array<i32>} : memref<1x1x8xf32, #tpu.memory_space<vmem>>, vector<1x1x8xf32>,
    return
  }
  func.func @transform_0(%arg0: i32, %arg1: i32) -> (i32, i32, i32, i32) {
    %c0_i32 = arith.constant 0 : i32
    %c0_i32_0 = arith.constant 0 : i32
    %c0_i32_1 = arith.constant 0 : i32
    %c0_i32_2 = arith.constant 0 : i32
    return %arg0, %c0_i32, %c0_i32_0, %c0_i32_1 : i32, i32, i32, i32
  }
  func.func @transform_1(%arg0: i32, %arg1: i32) -> (i32, i32, i32) {
    %c0_i32 = arith.constant 0 : i32
    %c0_i32_0 = arith.constant 0 : i32
    %c0_i32_1 = arith.constant 0 : i32
    %c0_i32_2 = arith.constant 0 : i32
    return %c0_i32, %c0_i32_0, %c0_i32_1 : i32, i32, i32
  }
  func.func @transform_2(%arg0: i32, %arg1: i32) -> (i32, i32) {
    %c0_i32 = arith.constant 0 : i32
    %c0_i32_0 = arith.constant 0 : i32
    %c0_i32_1 = arith.constant 0 : i32
    return %c0_i32, %c0_i32_0 : i32, i32
  }
  func.func @transform_3(%arg0: i32, %arg1: i32) -> (i32, i32, i32, i32) {
    %c0_i32 = arith.constant 0 : i32
    %c0_i32_0 = arith.constant 0 : i32
    %c0_i32_1 = arith.constant 0 : i32
    return %arg0, %arg1, %c0_i32, %c0_i32_0 : i32, i32, i32, i32
  }
  func.func @transform_4(%arg0: i32, %arg1: i32) -> (i32, i32, i32) {
    %c0_i32 = arith.constant 0 : i32
    %c0_i32_0 = arith.constant 0 : i32
    %c0_i32_1 = arith.constant 0 : i32
    return %arg0, %c0_i32, %c0_i32_0 : i32, i32, i32
  }
  func.func @transform_5(%arg0: i32, %arg1: i32) -> (i32, i32, i32) {
    %c0_i32 = arith.constant 0 : i32
    %c0_i32_0 = arith.constant 0 : i32
    %c0_i32_1 = arith.constant 0 : i32
    return %arg0, %c0_i32, %c0_i32_0 : i32, i32, i32
  }
}

module attributes {stable_mosaic.version = 11 : i64} {
  func.func @_bn_relu_add_skip_kernel(%arg0: i32, %arg1: memref<64x128xf32, #tpu.memory_space<vmem>>, %arg2: memref<64x128xf32, #tpu.memory_space<vmem>>, %arg3: memref<1x128xf32, #tpu.memory_space<vmem>>, %arg4: memref<1x128xf32, #tpu.memory_space<vmem>>, %arg5: memref<1x128xf32, #tpu.memory_space<vmem>>, %arg6: memref<64x128xf32, #tpu.memory_space<vmem>>) attributes {dimension_semantics = [#tpu.dimension_semantics<parallel>], iteration_bounds = array<i64: 1>, scalar_prefetch = 0 : i64, scratch_operands = 0 : i64, tpu.core_type = #tpu.core_type<tc>, window_params = [{transform_indices = @transform_0, window_bounds = array<i64: 64, 128>}, {transform_indices = @transform_1, window_bounds = array<i64: 64, 128>}, {pipeline_mode = #tpu.pipeline_mode<synchronous>, transform_indices = @transform_2, window_bounds = array<i64: 1, 128>}, {pipeline_mode = #tpu.pipeline_mode<synchronous>, transform_indices = @transform_3, window_bounds = array<i64: 1, 128>}, {pipeline_mode = #tpu.pipeline_mode<synchronous>, transform_indices = @transform_4, window_bounds = array<i64: 1, 128>}, {transform_indices = @transform_5, window_bounds = array<i64: 64, 128>}]} {
    %c0 = arith.constant 0 : index
    %c0_0 = arith.constant 0 : index
    %0 = vector.load %arg1[%c0, %c0_0] : memref<64x128xf32, #tpu.memory_space<vmem>>, vector<64x128xf32>
    %c0_1 = arith.constant 0 : index
    %c0_2 = arith.constant 0 : index
    %1 = vector.load %arg3[%c0_1, %c0_2] : memref<1x128xf32, #tpu.memory_space<vmem>>, vector<1x128xf32>
    %2 = vector.broadcast %1 : vector<1x128xf32> to vector<64x128xf32>
    %3 = arith.mulf %0, %2 : vector<64x128xf32>
    %c0_3 = arith.constant 0 : index
    %c0_4 = arith.constant 0 : index
    %4 = vector.load %arg4[%c0_3, %c0_4] : memref<1x128xf32, #tpu.memory_space<vmem>>, vector<1x128xf32>
    %5 = vector.broadcast %4 : vector<1x128xf32> to vector<64x128xf32>
    %6 = arith.addf %3, %5 : vector<64x128xf32>
    %cst = arith.constant 0.000000e+00 : f32
    %7 = vector.broadcast %cst : f32 to vector<64x128xf32>
    %8 = arith.maximumf %6, %7 : vector<64x128xf32>
    %c0_5 = arith.constant 0 : index
    %c0_6 = arith.constant 0 : index
    %9 = vector.load %arg2[%c0_5, %c0_6] : memref<64x128xf32, #tpu.memory_space<vmem>>, vector<64x128xf32>
    %10 = arith.addf %8, %9 : vector<64x128xf32>
    %c0_7 = arith.constant 0 : index
    %c0_8 = arith.constant 0 : index
    %11 = vector.load %arg5[%c0_7, %c0_8] : memref<1x128xf32, #tpu.memory_space<vmem>>, vector<1x128xf32>
    %12 = vector.broadcast %11 : vector<1x128xf32> to vector<64x128xf32>
    %13 = arith.addf %10, %12 : vector<64x128xf32>
    %c0_9 = arith.constant 0 : index
    %c0_10 = arith.constant 0 : index
    %14 = vector.load %arg6[%c0_9, %c0_10] : memref<64x128xf32, #tpu.memory_space<vmem>>, vector<64x128xf32>
    tpu.vector_store %arg6[%c0_9, %c0_10], %13 {strides = array<i32>} : memref<64x128xf32, #tpu.memory_space<vmem>>, vector<64x128xf32>,
    return
  }
  func.func @transform_0(%arg0: i32) -> (i32, i32) {
    %c0_i32 = arith.constant 0 : i32
    %c0_i32_0 = arith.constant 0 : i32
    return %arg0, %c0_i32 : i32, i32
  }
  func.func @transform_1(%arg0: i32) -> (i32, i32) {
    %c0_i32 = arith.constant 0 : i32
    %c0_i32_0 = arith.constant 0 : i32
    return %arg0, %c0_i32 : i32, i32
  }
  func.func @transform_2(%arg0: i32) -> (i32, i32) {
    %c0_i32 = arith.constant 0 : i32
    %c0_i32_0 = arith.constant 0 : i32
    %c0_i32_1 = arith.constant 0 : i32
    return %c0_i32, %c0_i32_0 : i32, i32
  }
  func.func @transform_3(%arg0: i32) -> (i32, i32) {
    %c0_i32 = arith.constant 0 : i32
    %c0_i32_0 = arith.constant 0 : i32
    %c0_i32_1 = arith.constant 0 : i32
    return %c0_i32, %c0_i32_0 : i32, i32
  }
  func.func @transform_4(%arg0: i32) -> (i32, i32) {
    %c0_i32 = arith.constant 0 : i32
    %c0_i32_0 = arith.constant 0 : i32
    %c0_i32_1 = arith.constant 0 : i32
    return %c0_i32, %c0_i32_0 : i32, i32
  }
  func.func @transform_5(%arg0: i32) -> (i32, i32) {
    %c0_i32 = arith.constant 0 : i32
    %c0_i32_0 = arith.constant 0 : i32
    return %arg0, %c0_i32 : i32, i32
  }
}

</mosaic_0001>

<llo_original>
// kernel: res_block_forward.3
$region0: #{res_block_forward.3}
  #allocation0 [shape = 'u32[]', space=smem, size = 0x4, offset = 0x4, fixed_abs, tag = 'smem constant byte address 0x4 - core index']
  #allocation1 [shape = 'u32[144,128]{1,0:T(1,128)}', space=vmem, size = 0x12000, scoped, tag = 'internal scratch']
  %s0 = inlined_call_operand.vmem [shape: bf16[2,10,104,4], index: 0, kind: input, shape index: {}]
  %s1 = inlined_call_operand.vmem [shape: bf16[27,4,16], index: 1, kind: input, shape index: {}]
  %s2 = inlined_call_operand.vmem [shape: f32[80,1], index: 2, kind: input, shape index: {}]
  %s3 = inlined_call_operand.vmem [shape: f32[2,8,80,16], index: 3, kind: output, shape index: {0}]
  %s4 = inlined_call_operand.vmem [shape: f32[2,1,16], index: 4, kind: output, shape index: {1}]
  %s5 = inlined_call_operand.vmem [shape: f32[2,1,16], index: 5, kind: output, shape index: {2}]
  %6 = xla_tuple %s3, %s4, %s5
  %s7 = sld [smem:[#allocation0]]
  $region65: #{res_block_forward.3} parent=0
    _
  %s9 = ssub.s32 1, %s7
  %s10 = scalar_select 0, %s9, %s7
  loop: start=0, step=1, limit=18
  $region2: #{res_block_forward.3} parent=0 // loop_pre_header
    _
  $region3: #{res_block_forward.3} parent=0 // loop_header
    %s12 = sphi 0, %s16
    %p13 = scmp.ge.s32.totalorder %s12, 18
    %s19 = sphi 0, %s31
    %s20 = sphi 0, %s27
    %s21 = sphi 0, %s19
    %s22 = sphi 0, %s20
    %s23 = sphi 0, %s21
    %s24 = sphi 0, %s22
    %s34 = sphi 0, %s36
    %s37 = sphi 0, %s34
    %s38 = sphi 0, %s37
    %s54 = sphi 0, %s38
    %s58 = sphi 0, %s58
    %s60 = sphi 0, %s58
    %s61 = sphi 0, %s60
    %s75 = sphi 0, %s61
    %s79 = sphi 0, %s79
    %s81 = sphi 0, %s79
    %s82 = sphi 0, %s81
    %s96 = sphi 0, %s82
    %s104 = sphi 0, %s106
    %s107 = sphi 0, %s104
    %s108 = sphi 0, %s107
    %s124 = sphi 0, %s108
    %s130 = sphi 0, %s132
    %s133 = sphi 0, %s130
    %s134 = sphi 0, %s133
    %s150 = sphi 0, %s134
    %s156 = sphi 0, %s158
    %s159 = sphi 0, %s156
    %s160 = sphi 0, %s159
    %s176 = sphi 0, %s160
  $region4: #{res_block_forward.3} parent=0 // loop_header_branch
    %15 = sbr.rel (%p13) target = $region8
  $region5: #{res_block_forward.3} parent=0 // loop_body
    %s17 = ssub.s32 %s12, 1
    %s18 = ssub.s32 %s12, 2
    %s25 = sadd.s32 1, %s20
    %p26 = scmp.ge.s32.totalorder %s25, 8
    %s27 = scalar_select %p26, 0, %s25
    %s28 = sadd.s32 1, %s19
    %s29 = scalar_select %p26, %s28, %s19
    %p30 = scmp.ge.s32.totalorder %s29, 2
    %s31 = scalar_select %p30, 0, %s29
    %s32 = ssub.s32 %s19, %s31
    %p33 = scmp.eq.s32.totalorder %s32, 0
    %s35 = sadd.s32 %s34, 1
    %s36 = scalar_select %p33, %s34, %s35
    %p39 = pneg %p33
    %p40 = scmp.eq.s32.totalorder %s12, 15
    %p41 = por %p39, %p40
    %p42 = scmp.ne.s32.totalorder %s34, %s37
    %p43 = scmp.eq.s32.totalorder %s12, 0
    %p44 = por %p42, %p43
    %p45 = scmp.ne.s32.totalorder %s34, %s37
    %p46 = scmp.eq.s32.totalorder %s17, 15
    %p47 = por %p45, %p46
    %p48 = scmp.ne.s32.totalorder %s37, %s38
    %p49 = scmp.eq.s32.totalorder %s17, 0
    %p50 = por %p48, %p49
    %p51 = scmp.ne.s32.totalorder %s37, %s38
    %p52 = scmp.eq.s32.totalorder %s18, 15
    %p53 = por %p51, %p52
    %p55 = scmp.ne.s32.totalorder %s38, %s54
    %p56 = scmp.eq.s32.totalorder %s18, 0
    %p57 = por %p55, %p56
    %s59 = sadd.s32 %s58, 1
    %p62 = scmp.eq.s32.totalorder %s12, 15
    %p63 = scmp.ne.s32.totalorder %s58, %s60
    %p64 = scmp.eq.s32.totalorder %s12, 0
    %p65 = por %p63, %p64
    %p66 = scmp.ne.s32.totalorder %s58, %s60
    %p67 = scmp.eq.s32.totalorder %s17, 15
    %p68 = por %p66, %p67
    %p69 = scmp.ne.s32.totalorder %s60, %s61
    %p70 = scmp.eq.s32.totalorder %s17, 0
    %p71 = por %p69, %p70
    %p72 = scmp.ne.s32.totalorder %s60, %s61
    %p73 = scmp.eq.s32.totalorder %s18, 15
    %p74 = por %p72, %p73
    %p76 = scmp.ne.s32.totalorder %s61, %s75
    %p77 = scmp.eq.s32.totalorder %s18, 0
    %p78 = por %p76, %p77
    %s80 = sadd.s32 %s79, 1
    %p83 = scmp.eq.s32.totalorder %s12, 15
    %p84 = scmp.ne.s32.totalorder %s79, %s81
    %p85 = scmp.eq.s32.totalorder %s12, 0
    %p86 = por %p84, %p85
    %p87 = scmp.ne.s32.totalorder %s79, %s81
    %p88 = scmp.eq.s32.totalorder %s17, 15
    %p89 = por %p87, %p88
    %p90 = scmp.ne.s32.totalorder %s81, %s82
    %p91 = scmp.eq.s32.totalorder %s17, 0
    %p92 = por %p90, %p91
    %p93 = scmp.ne.s32.totalorder %s81, %s82
    %p94 = scmp.eq.s32.totalorder %s18, 15
    %p95 = por %p93, %p94
    %p97 = scmp.ne.s32.totalorder %s82, %s96
    %p98 = scmp.eq.s32.totalorder %s18, 0
    %p99 = por %p97, %p98
    %s100 = ssub.s32 %s19, %s31
    %s101 = ssub.s32 %s20, %s27
    %s102 = sor.u32 %s100, %s101
    %p103 = scmp.eq.s32.totalorder %s102, 0
    %s105 = sadd.s32 %s104, 1
    %s106 = scalar_select %p103, %s104, %s105
    %p109 = pneg %p103
    %p110 = scmp.eq.s32.totalorder %s12, 15
    %p111 = por %p109, %p110
    %p112 = scmp.ne.s32.totalorder %s104, %s107
    %p113 = scmp.eq.s32.totalorder %s12, 0
    %p114 = por %p112, %p113
    %p115 = scmp.ne.s32.totalorder %s104, %s107
    %p116 = scmp.eq.s32.totalorder %s17, 15
    %p117 = por %p115, %p116
    %p118 = scmp.ne.s32.totalorder %s107, %s108
    %p119 = scmp.eq.s32.totalorder %s17, 0
    %p120 = por %p118, %p119
    %p121 = scmp.ne.s32.totalorder %s107, %s108
    %p122 = scmp.eq.s32.totalorder %s18, 15
    %p123 = por %p121, %p122
    %p125 = scmp.ne.s32.totalorder %s108, %s124
    %p126 = scmp.eq.s32.totalorder %s18, 0
    %p127 = por %p125, %p126
    %s128 = ssub.s32 %s19, %s31
    %p129 = scmp.eq.s32.totalorder %s128, 0
    %s131 = sadd.s32 %s130, 1
    %s132 = scalar_select %p129, %s130, %s131
    %p135 = pneg %p129
    %p136 = scmp.eq.s32.totalorder %s12, 15
    %p137 = por %p135, %p136
    %p138 = scmp.ne.s32.totalorder %s130, %s133
    %p139 = scmp.eq.s32.totalorder %s12, 0
    %p140 = por %p138, %p139
    %p141 = scmp.ne.s32.totalorder %s130, %s133
    %p142 = scmp.eq.s32.totalorder %s17, 15
    %p143 = por %p141, %p142
    %p144 = scmp.ne.s32.totalorder %s133, %s134
    %p145 = scmp.eq.s32.totalorder %s17, 0
    %p146 = por %p144, %p145
    %p147 = scmp.ne.s32.totalorder %s133, %s134
    %p148 = scmp.eq.s32.totalorder %s18, 15
    %p149 = por %p147, %p148
    %p151 = scmp.ne.s32.totalorder %s134, %s150
    %p152 = scmp.eq.s32.totalorder %s18, 0
    %p153 = por %p151, %p152
    %s154 = ssub.s32 %s19, %s31
    %p155 = scmp.eq.s32.totalorder %s154, 0
    %s157 = sadd.s32 %s156, 1
    %s158 = scalar_select %p155, %s156, %s157
    %p161 = pneg %p155
    %p162 = scmp.eq.s32.totalorder %s12, 15
    %p163 = por %p161, %p162
    %p164 = scmp.ne.s32.totalorder %s156, %s159
    %p165 = scmp.eq.s32.totalorder %s12, 0
    %p166 = por %p164, %p165
    %p167 = scmp.ne.s32.totalorder %s156, %s159
    %p168 = scmp.eq.s32.totalorder %s17, 15
    %p169 = por %p167, %p168
    %p170 = scmp.ne.s32.totalorder %s159, %s160
    %p171 = scmp.eq.s32.totalorder %s17, 0
    %p172 = por %p170, %p171
    %p173 = scmp.ne.s32.totalorder %s159, %s160
    %p174 = scmp.eq.s32.totalorder %s18, 15
    %p175 = por %p173, %p174
    %p177 = scmp.ne.s32.totalorder %s160, %s176
    %p178 = scmp.eq.s32.totalorder %s18, 0
    %p179 = por %p177, %p178
    %p180 = scmp.le.s32.totalorder 1, %s12
    %p181 = scmp.lt.s32.totalorder %s12, 17
    %p182 = pnand %p180, %p181
    %p183 = pneg %p182
    // Predicated region
    $region9: #{res_block_forward.3} parent=5 // pred_check
      _
    $region10: #{res_block_forward.3} parent=5 // pred_check_branch
      %185 = sbr.rel (%p182) target = $region12
    $region11: #{res_block_forward.3} parent=5 // pred_region
      %s186 = ssub.s32 %s12, 1
      // Predicated region
      $region13: #{res_block_forward.3} parent=11 // pred_check
        %p187 = pneg %p71
      $region14: #{res_block_forward.3} parent=11 // pred_check_branch
        %189 = sbr.rel (%p187) target = $region16
      $region15: #{res_block_forward.3} parent=11 // pred_region
        _
      $region16: #{res_block_forward.3} parent=11 // pred_fallthru
        _
      // Predicated region
      $region17: #{res_block_forward.3} parent=11 // pred_check
        %p190 = pneg %p92
      $region18: #{res_block_forward.3} parent=11 // pred_check_branch
        %192 = sbr.rel (%p190) target = $region20
      $region19: #{res_block_forward.3} parent=11 // pred_region
        _
      $region20: #{res_block_forward.3} parent=11 // pred_fallthru
        _
    $region12: #{res_block_forward.3} parent=5 // pred_fallthru
      _
    %p193 = scmp.lt.s32.totalorder %s12, 16
    // Predicated region
    $region21: #{res_block_forward.3} parent=5 // pred_check
      %p194 = pneg %p193
    $region22: #{res_block_forward.3} parent=5 // pred_check_branch
      %196 = sbr.rel (%p194) target = $region24
    $region23: #{res_block_forward.3} parent=5 // pred_region
      // Predicated region
      $region25: #{res_block_forward.3} parent=23 // pred_check
        %p197 = pneg %p44
      $region26: #{res_block_forward.3} parent=23 // pred_check_branch
        %199 = sbr.rel (%p197) target = $region28
      $region27: #{res_block_forward.3} parent=23 // pred_region
        %p200 = scmp.lt.s32.totalorder %s19, 1
        %s201 = scalar_select %p200, %s19, 1
        %s202 = smul.addr %s201, 130
        %s203 = smul.addr %s202, 4
        %s204 = scalar_lea.vmem %s0, %s203
      $region28: #{res_block_forward.3} parent=23 // pred_fallthru
        _
    $region24: #{res_block_forward.3} parent=5 // pred_fallthru
      _
    %p205 = scmp.le.s32.totalorder 1, %s12
    %p206 = scmp.lt.s32.totalorder %s12, 17
    %p207 = pnand %p205, %p206
    %p208 = pneg %p207
    // Predicated region
    $region29: #{res_block_forward.3} parent=5 // pred_check
      _
    $region30: #{res_block_forward.3} parent=5 // pred_check_branch
      %210 = sbr.rel (%p207) target = $region32
    $region31: #{res_block_forward.3} parent=5 // pred_region
      %s211 = ssub.s32 %s12, 1
      %p212 = scmp.lt.s32.totalorder %s21, 1
      %s213 = scalar_select %p212, %s21, 1
      %s214 = smul.addr %s213, 130
      %s215 = smul.addr %s214, 4
      %s216 = scalar_lea.vmem %s0, %s215
      %p217 = pneg %p50
      %p218 = pneg %p47
      %p219 = pneg %p71
      %p220 = pneg %p68
      %p221 = pneg %p92
      %p222 = pneg %p89
      %p223 = pneg %p120
      %p224 = pneg %p117
      %p225 = scmp.lt.s32.totalorder %s21, 1
      %s226 = scalar_select %p225, %s21, 1
      %p227 = scmp.lt.s32.totalorder %s22, 7
      %s228 = scalar_select %p227, %s22, 7
      %s229 = smul.addr %s228, 10
      %s230 = smul.addr %s226, 80
      %s231 = sadd.s32 %s229, %s230
      %s232 = smul.addr %s231, 8
      %s233 = scalar_lea.vmem %s3, %s232
      %p234 = pneg %p146
      %p235 = pneg %p143
      %p236 = scmp.lt.s32.totalorder %s21, 1
      %s237 = scalar_select %p236, %s21, 1
      %s238 = scalar_lea.vmem %s4, %s237
      %p239 = pneg %p172
      %p240 = pneg %p169
      %p241 = scmp.lt.s32.totalorder %s21, 1
      %s242 = scalar_select %p241, %s21, 1
      %s243 = scalar_lea.vmem %s5, %s242
      %p244 = scmp.lt.s32.totalorder %s21, 1
      %s245 = scalar_select %p244, %s21, 1
      %s246 = smul.addr %s245, 130
      %s247 = smul.addr %s246, 4
      %s248 = scalar_lea.vmem %s0, %s247
      %p249 = scmp.lt.s32.totalorder %s21, 1
      %s250 = scalar_select %p249, %s21, 1
      %p251 = scmp.lt.s32.totalorder %s22, 7
      %s252 = scalar_select %p251, %s22, 7
      %s253 = smul.addr %s252, 10
      %s254 = smul.addr %s250, 80
      %s255 = sadd.s32 %s253, %s254
      %s256 = smul.addr %s255, 8
      %s257 = scalar_lea.vmem %s3, %s256
      %p258 = scmp.lt.s32.totalorder %s21, 1
      %s259 = scalar_select %p258, %s21, 1
      %s260 = scalar_lea.vmem %s4, %s259
      %p261 = scmp.lt.s32.totalorder %s21, 1
      %s262 = scalar_select %p261, %s21, 1
      %s263 = scalar_lea.vmem %s5, %s262
      %p265 = scmp.eq.s32.totalorder %s22, 0
      // Predicated region
      $region33: #{res_block_forward.3} parent=31 // pred_check
        %p266 = pneg %p265
      $region34: #{res_block_forward.3} parent=31 // pred_check_branch
        %268 = sbr.rel (%p266) target = $region36
      $region35: #{res_block_forward.3} parent=31 // pred_region
        %vm269 = vcmask 122880
        %270 = vst.msk [vmem:[%s260] sm:$0x1] %vm269, 0.0
        %271 = vst.msk [vmem:[%s263] sm:$0x1] %vm269, 0.0
      $region36: #{res_block_forward.3} parent=31 // pred_fallthru
        _
      %s272 = smul.u32 %s22, 13
      %s273 = smul.addr %s272, 4
      %s274 = scalar_lea.vmem %s248, %s273
      %v275 = vld [vmem:[%s274] sm:$0xf]
      %v276 = vld [vmem:[%s274 + $0x4] sm:$0xf]
      %v277 = vld [vmem:[%s274 + $0x8] sm:$0xf]
      %v278 = vld [vmem:[%s274 + $0xc] sm:$0xf]
      %v279 = vld [vmem:[%s274 + $0x10] sm:$0xf]
      %v280 = vld [vmem:[%s274 + $0x14] sm:$0xf]
      %v281 = vld [vmem:[%s274 + $0x18] sm:$0xf]
      %v282 = vld [vmem:[%s274 + $0x1c] sm:$0xf]
      %v283 = vld [vmem:[%s274 + $0x20] sm:$0xf]
      %v284 = vld [vmem:[%s274 + $0x24] sm:$0xf]
      %v285 = vld [vmem:[%s1] sm:$0x3]
      %v286 = vld [vmem:[%s274 + $0x28] sm:$0x1]
      %s287 = scalar_lea.vmem %s1, 2
      %v288 = vld [vmem:[%s287] sm:$0x3]
      %v300 = vunpack.c.l.b16 %v275
      %v301 = vunpack.c.l.b16 %v276
      %v302 = vunpack.c.l.b16 %v277
      %v303 = vunpack.c.l.b16 %v278
      %v304 = vunpack.c.l.b16 %v279
      %v305 = vunpack.c.l.b16 %v280
      %v306 = vunpack.c.l.b16 %v281
      %v307 = vunpack.c.l.b16 %v282
      %v308 = vunpack.c.l.b16 %v283
      %v309 = vunpack.c.l.b16 %v284
      %v310 = vunpack.c.l.b16 %v286
      %v311 = vpack.c.b16 %v301, %v300
      %v312 = vpack.c.b16 %v303, %v302
      %v313 = vpack.c.b16 %v305, %v304
      %v314 = vpack.c.b16 %v307, %v306
      %v315 = vpack.c.b16 %v309, %v308
      %v316 = vpack.c.b16 %v310, %v310
      %vm317 = vsmask.f32 7424
      %v319 = vshrl.u32 %v311, 16
      %v321 = vshll.u32 %v311, 16
      %v323 = vrot.slane %v321, 1
      %v324 = vor.u32 %v319, %v323
      %v326 = vshll.u32 %v312, 16
      %v328 = vrot.slane %v326, 1
      %v329 = vsel %vm317, %v324, %v328
      %v330 = vshrl.u32 %v312, 16
      %v332 = vor.u32 %v330, %v328
      %v334 = vshll.u32 %v313, 16
      %v336 = vrot.slane %v334, 1
      %v337 = vsel %vm317, %v332, %v336
      %v338 = vshrl.u32 %v313, 16
      %v340 = vor.u32 %v338, %v336
      %v342 = vshll.u32 %v314, 16
      %v344 = vrot.slane %v342, 1
      %v345 = vsel %vm317, %v340, %v344
      %v346 = vshrl.u32 %v314, 16
      %v348 = vor.u32 %v346, %v344
      %v350 = vshll.u32 %v315, 16
      %v352 = vrot.slane %v350, 1
      %v353 = vsel %vm317, %v348, %v352
      %v354 = vshrl.u32 %v315, 16
      %v356 = vor.u32 %v354, %v352
      %v358 = vshll.u32 %v316, 16
      %v360 = vrot.slane %v358, 1
      %v361 = vsel %vm317, %v356, %v360
      %vm362 = vcmask 31744
      %v364 = vsel %vm362, %v329, 0
      %v367 = vsel %vm362, %v337, 0
      %v370 = vsel %vm362, %v345, 0
      %v373 = vsel %vm362, %v353, 0
      %v376 = vsel %vm362, %v361, 0
      %vm378 = vcmask 1041408
      %v380 = vsel %vm378, %v288, 0
      %382 = vmatprep.subr.bf16.mxu0 0
      %383 = vmatpush1.bf16.msra.mxu0 0
      %384 = vmatprep.subr.bf16.mxu0 0
      %385 = vmatpush1.bf16.msra.mxu0 0
      %386 = vmatprep.subr.bf16.mxu0 0
      %387 = vmatpush1.bf16.msra.mxu0 0
      %388 = vmatprep.subr.bf16.mxu0 0
      %389 = vmatpush1.bf16.msra.mxu0 0
      %390 = vmatprep.subr.bf16.mxu0 0
      %391 = vmatpush1.bf16.msra.mxu0 0
      %392 = vmatprep.subr.bf16.mxu0 0
      %393 = vmatpush1.bf16.msra.mxu0 0
      %394 = vmatprep.subr.bf16.mxu0 0
      %395 = vmatpush1.bf16.msra.mxu0 0
      %396 = vmatprep.subr.bf16.mxu0 0
      %397 = vmatpush1.bf16.msra.mxu0 %v380
      %398 = vmatprep.subr.bf16.mxu0 0
      %399 = vmatpush2.bf16.msra.mxu0 0
      %400 = vmatprep.subr.bf16.mxu0 0
      %401 = vmatpush2.bf16.msra.mxu0 0
      %402 = vmatprep.subr.bf16.mxu0 0
      %403 = vmatpush2.bf16.msra.mxu0 0
      %404 = vmatprep.subr.bf16.mxu0 0
      %405 = vmatpush2.bf16.msra.mxu0 0
      %406 = vmatprep.subr.bf16.mxu0 0
      %407 = vmatpush2.bf16.msra.mxu0 0
      %408 = vmatprep.subr.bf16.mxu0 0
      %409 = vmatpush2.bf16.msra.mxu0 0
      %410 = vmatprep.subr.bf16.mxu0 0
      %411 = vmatpush2.bf16.msra.mxu0 0
      %412 = vmatprep.subr.bf16.mxu0 0
      %413 = vmatpush2.bf16.msra.mxu0 0
      %414 = vmatprep.mubr.bf16.mxu0 0
      %415 = vmatmul.mubr.bf16.gmra.mxu0 %v364
      %v416 = vpop.f32.mrf.mxu0
      %v417 = vadd.f32 0.0, %v416
      %v418 = vpop.f32.mrf.mxu0
      %v419 = vpop.f32.mrf.mxu0
      %v420 = vadd.f32 0.0, %v419
      %v421 = vpop.f32.mrf.mxu0
      %422 = vmatprep.mubr.bf16.mxu0 0
      %423 = vmatmul.mubr.bf16.gmra.mxu0 %v367
      %v424 = vpop.f32.mrf.mxu0
      %v425 = vadd.f32 0.0, %v424
      %v426 = vpop.f32.mrf.mxu0
      %v427 = vpop.f32.mrf.mxu0
      %v428 = vadd.f32 0.0, %v427
      %v429 = vpop.f32.mrf.mxu0
      %430 = vmatprep.mubr.bf16.mxu0 0
      %431 = vmatmul.mubr.bf16.gmra.mxu0 %v370
      %v432 = vpop.f32.mrf.mxu0
      %v433 = vadd.f32 0.0, %v432
      %v434 = vpop.f32.mrf.mxu0
      %v435 = vpop.f32.mrf.mxu0
      %v436 = vadd.f32 0.0, %v435
      %v437 = vpop.f32.mrf.mxu0
      %438 = vmatprep.mubr.bf16.mxu0 0
      %439 = vmatmul.mubr.bf16.gmra.mxu0 %v373
      %v440 = vpop.f32.mrf.mxu0
      %v441 = vadd.f32 0.0, %v440
      %v442 = vpop.f32.mrf.mxu0
      %v443 = vpop.f32.mrf.mxu0
      %v444 = vadd.f32 0.0, %v443
      %v445 = vpop.f32.mrf.mxu0
      %446 = vmatprep.mubr.bf16.mxu0 0
      %447 = vmatmul.mubr.bf16.gmra.mxu0 %v376
      %v448 = vpop.f32.mrf.mxu0
      %v449 = vadd.f32 0.0, %v448
      %v450 = vpop.f32.mrf.mxu0
      %v451 = vpop.f32.mrf.mxu0
      %v452 = vadd.f32 0.0, %v451
      %v453 = vpop.f32.mrf.mxu0
      %454 = vdwg.mxu0
      %v455 = vsel %vm362, %v311, 0
      %v457 = vsel %vm362, %v312, 0
      %v459 = vsel %vm362, %v313, 0
      %v461 = vsel %vm362, %v314, 0
      %v463 = vsel %vm362, %v315, 0
      %v466 = vsel %vm378, %v285, 0
      %468 = vmatprep.subr.bf16.mxu0 0
      %469 = vmatpush1.bf16.msra.mxu0 0
      %470 = vmatprep.subr.bf16.mxu0 0
      %471 = vmatpush1.bf16.msra.mxu0 0
      %472 = vmatprep.subr.bf16.mxu0 0
      %473 = vmatpush1.bf16.msra.mxu0 0
      %474 = vmatprep.subr.bf16.mxu0 0
      %475 = vmatpush1.bf16.msra.mxu0 0
      %476 = vmatprep.subr.bf16.mxu0 0
      %477 = vmatpush1.bf16.msra.mxu0 0
      %478 = vmatprep.subr.bf16.mxu0 0
      %479 = vmatpush1.bf16.msra.mxu0 0
      %480 = vmatprep.subr.bf16.mxu0 0
      %481 = vmatpush1.bf16.msra.mxu0 0
      %482 = vmatprep.subr.bf16.mxu0 0
      %483 = vmatpush1.bf16.msra.mxu0 %v466
      %484 = vmatprep.subr.bf16.mxu0 0
      %485 = vmatpush2.bf16.msra.mxu0 0
      %486 = vmatprep.subr.bf16.mxu0 0
      %487 = vmatpush2.bf16.msra.mxu0 0
      %488 = vmatprep.subr.bf16.mxu0 0
      %489 = vmatpush2.bf16.msra.mxu0 0
      %490 = vmatprep.subr.bf16.mxu0 0
      %491 = vmatpush2.bf16.msra.mxu0 0
      %492 = vmatprep.subr.bf16.mxu0 0
      %493 = vmatpush2.bf16.msra.mxu0 0
      %494 = vmatprep.subr.bf16.mxu0 0
      %495 = vmatpush2.bf16.msra.mxu0 0
      %496 = vmatprep.subr.bf16.mxu0 0
      %497 = vmatpush2.bf16.msra.mxu0 0
      %498 = vmatprep.subr.bf16.mxu0 0
      %499 = vmatpush2.bf16.msra.mxu0 0
      %500 = vmatprep.mubr.bf16.mxu0 0
      %501 = vmatmul.mubr.bf16.gmra.mxu0 %v455
      %v502 = vpop.f32.mrf.mxu0
      %v503 = vadd.f32 %v417, %v502
      %v504 = vpop.f32.mrf.mxu0
      %v505 = vpop.f32.mrf.mxu0
      %v506 = vadd.f32 %v420, %v505
      %v507 = vpop.f32.mrf.mxu0
      %508 = vmatprep.mubr.bf16.mxu0 0
      %509 = vmatmul.mubr.bf16.gmra.mxu0 %v457
      %v510 = vpop.f32.mrf.mxu0
      %v511 = vadd.f32 %v425, %v510
      %v512 = vpop.f32.mrf.mxu0
      %v513 = vpop.f32.mrf.mxu0
      %v514 = vadd.f32 %v428, %v513
      %v515 = vpop.f32.mrf.mxu0
      %516 = vmatprep.mubr.bf16.mxu0 0
      %517 = vmatmul.mubr.bf16.gmra.mxu0 %v459
      %v518 = vpop.f32.mrf.mxu0
      %v519 = vadd.f32 %v433, %v518
      %v520 = vpop.f32.mrf.mxu0
      %v521 = vpop.f32.mrf.mxu0
      %v522 = vadd.f32 %v436, %v521
      %v523 = vpop.f32.mrf.mxu0
      %524 = vmatprep.mubr.bf16.mxu0 0
      %525 = vmatmul.mubr.bf16.gmra.mxu0 %v461
      %v526 = vpop.f32.mrf.mxu0
      %v527 = vadd.f32 %v441, %v526
      %v528 = vpop.f32.mrf.mxu0
      %v529 = vpop.f32.mrf.mxu0
      %v530 = vadd.f32 %v444, %v529
      %v531 = vpop.f32.mrf.mxu0
      %532 = vmatprep.mubr.bf16.mxu0 0
      %533 = vmatmul.mubr.bf16.gmra.mxu0 %v463
      %v534 = vpop.f32.mrf.mxu0
      %v535 = vadd.f32 %v449, %v534
      %v536 = vpop.f32.mrf.mxu0
      %v537 = vpop.f32.mrf.mxu0
      %v538 = vadd.f32 %v452, %v537
      %v539 = vpop.f32.mrf.mxu0
      %540 = vdwg.mxu0
      %v541 = vld [vmem:[%s274] sm:$0xe]
      %s542 = scalar_lea.vmem %s1, 4
      %v543 = vld [vmem:[%s542] sm:$0x3]
      %v545 = vunpack.c.l.b16 %v541
      %v546 = vpack.c.b16 %v301, %v545
      %vm547 = vcmask 1046528
      %v548 = vrot.slane %v546, 1
      %v549 = vrot.slane %v312, 1
      %v550 = vsel %vm547, %v548, %v549
      %v551 = vrot.slane %v313, 1
      %v552 = vsel %vm547, %v549, %v551
      %v553 = vrot.slane %v314, 1
      %v554 = vsel %vm547, %v551, %v553
      %v555 = vrot.slane %v315, 1
      %v556 = vsel %vm547, %v553, %v555
      %v557 = vrot.slane %v316, 1
      %v558 = vsel %vm547, %v555, %v557
      %v560 = vsel %vm362, %v550, 0
      %v563 = vsel %vm362, %v552, 0
      %v566 = vsel %vm362, %v554, 0
      %v569 = vsel %vm362, %v556, 0
      %v572 = vsel %vm362, %v558, 0
      %v575 = vsel %vm378, %v543, 0
      %577 = vmatprep.subr.bf16.mxu0 0
      %578 = vmatpush1.bf16.msra.mxu0 0
      %579 = vmatprep.subr.bf16.mxu0 0
      %580 = vmatpush1.bf16.msra.mxu0 0
      %581 = vmatprep.subr.bf16.mxu0 0
      %582 = vmatpush1.bf16.msra.mxu0 0
      %583 = vmatprep.subr.bf16.mxu0 0
      %584 = vmatpush1.bf16.msra.mxu0 0
      %585 = vmatprep.subr.bf16.mxu0 0
      %586 = vmatpush1.bf16.msra.mxu0 0
      %587 = vmatprep.subr.bf16.mxu0 0
      %588 = vmatpush1.bf16.msra.mxu0 0
      %589 = vmatprep.subr.bf16.mxu0 0
      %590 = vmatpush1.bf16.msra.mxu0 0
      %591 = vmatprep.subr.bf16.mxu0 0
      %592 = vmatpush1.bf16.msra.mxu0 %v575
      %593 = vmatprep.subr.bf16.mxu0 0
      %594 = vmatpush2.bf16.msra.mxu0 0
      %595 = vmatprep.subr.bf16.mxu0 0
      %596 = vmatpush2.bf16.msra.mxu0 0
      %597 = vmatprep.subr.bf16.mxu0 0
      %598 = vmatpush2.bf16.msra.mxu0 0
      %599 = vmatprep.subr.bf16.mxu0 0
      %600 = vmatpush2.bf16.msra.mxu0 0
      %601 = vmatprep.subr.bf16.mxu0 0
      %602 = vmatpush2.bf16.msra.mxu0 0
      %603 = vmatprep.subr.bf16.mxu0 0
      %604 = vmatpush2.bf16.msra.mxu0 0
      %605 = vmatprep.subr.bf16.mxu0 0
      %606 = vmatpush2.bf16.msra.mxu0 0
      %607 = vmatprep.subr.bf16.mxu0 0
      %608 = vmatpush2.bf16.msra.mxu0 0
      %609 = vmatprep.mubr.bf16.mxu0 0
      %610 = vmatmul.mubr.bf16.gmra.mxu0 %v560
      %v611 = vpop.f32.mrf.mxu0
      %v612 = vadd.f32 0.0, %v611
      %v613 = vpop.f32.mrf.mxu0
      %v614 = vpop.f32.mrf.mxu0
      %v615 = vadd.f32 0.0, %v614
      %v616 = vpop.f32.mrf.mxu0
      %617 = vmatprep.mubr.bf16.mxu0 0
      %618 = vmatmul.mubr.bf16.gmra.mxu0 %v563
      %v619 = vpop.f32.mrf.mxu0
      %v620 = vadd.f32 0.0, %v619
      %v621 = vpop.f32.mrf.mxu0
      %v622 = vpop.f32.mrf.mxu0
      %v623 = vadd.f32 0.0, %v622
      %v624 = vpop.f32.mrf.mxu0
      %625 = vmatprep.mubr.bf16.mxu0 0
      %626 = vmatmul.mubr.bf16.gmra.mxu0 %v566
      %v627 = vpop.f32.mrf.mxu0
      %v628 = vadd.f32 0.0, %v627
      %v629 = vpop.f32.mrf.mxu0
      %v630 = vpop.f32.mrf.mxu0
      %v631 = vadd.f32 0.0, %v630
      %v632 = vpop.f32.mrf.mxu0
      %633 = vmatprep.mubr.bf16.mxu0 0
      %634 = vmatmul.mubr.bf16.gmra.mxu0 %v569
      %v635 = vpop.f32.mrf.mxu0
      %v636 = vadd.f32 0.0, %v635
      %v637 = vpop.f32.mrf.mxu0
      %v638 = vpop.f32.mrf.mxu0
      %v639 = vadd.f32 0.0, %v638
      %v640 = vpop.f32.mrf.mxu0
      %641 = vmatprep.mubr.bf16.mxu0 0
      %642 = vmatmul.mubr.bf16.gmra.mxu0 %v572
      %v643 = vpop.f32.mrf.mxu0
      %v644 = vadd.f32 0.0, %v643
      %v645 = vpop.f32.mrf.mxu0
      %v646 = vpop.f32.mrf.mxu0
      %v647 = vadd.f32 0.0, %v646
      %v648 = vpop.f32.mrf.mxu0
      %649 = vdwg.mxu0
      %v650 = vadd.f32 %v503, %v612
      %v651 = vadd.f32 %v506, %v615
      %v652 = vadd.f32 %v511, %v620
      %v653 = vadd.f32 %v514, %v623
      %v654 = vadd.f32 %v519, %v628
      %v655 = vadd.f32 %v522, %v631
      %v656 = vadd.f32 %v527, %v636
      %v657 = vadd.f32 %v530, %v639
      %v658 = vadd.f32 %v535, %v644
      %v659 = vadd.f32 %v538, %v647
      %v660 = vld [vmem:[%s274 + $0x4] sm:$0xe]
      %v661 = vld [vmem:[%s274 + $0x8] sm:$0xf]
      %v662 = vld [vmem:[%s274 + $0xc] sm:$0xf]
      %v663 = vld [vmem:[%s274 + $0x10] sm:$0xf]
      %v664 = vld [vmem:[%s274 + $0x14] sm:$0xf]
      %v665 = vld [vmem:[%s274 + $0x18] sm:$0xf]
      %v666 = vld [vmem:[%s274 + $0x1c] sm:$0xf]
      %v667 = vld [vmem:[%s274 + $0x20] sm:$0xf]
      %v668 = vld [vmem:[%s274 + $0x24] sm:$0xf]
      %v669 = vld [vmem:[%s274 + $0x28] sm:$0xf]
      %v670 = vld [vmem:[%s274 + $0x2c] sm:$0x1]
      %s671 = scalar_lea.vmem %s1, 6
      %v672 = vld [vmem:[%s671] sm:$0x3]
      %v684 = vunpack.c.l.b16 %v660
      %v685 = vunpack.c.l.b16 %v661
      %v686 = vunpack.c.l.b16 %v662
      %v687 = vunpack.c.l.b16 %v663
      %v688 = vunpack.c.l.b16 %v664
      %v689 = vunpack.c.l.b16 %v665
      %v690 = vunpack.c.l.b16 %v666
      %v691 = vunpack.c.l.b16 %v667
      %v692 = vunpack.c.l.b16 %v668
      %v693 = vunpack.c.l.b16 %v669
      %v694 = vunpack.c.l.b16 %v670
      %v695 = vpack.c.b16 %v685, %v684
      %v696 = vpack.c.b16 %v687, %v686
      %v697 = vpack.c.b16 %v689, %v688
      %v698 = vpack.c.b16 %v691, %v690
      %v699 = vpack.c.b16 %v693, %v692
      %v700 = vpack.c.b16 %v694, %v694
      %v701 = vrot.slane %v695, 1
      %v702 = vrot.slane %v696, 1
      %v703 = vsel %vm547, %v701, %v702
      %v704 = vrot.slane %v697, 1
      %v705 = vsel %vm547, %v702, %v704
      %v706 = vrot.slane %v698, 1
      %v707 = vsel %vm547, %v704, %v706
      %v708 = vrot.slane %v699, 1
      %v709 = vsel %vm547, %v706, %v708
      %v710 = vrot.slane %v700, 1
      %v711 = vsel %vm547, %v708, %v710
      %v713 = vsel %vm362, %v703, 0
      %v716 = vsel %vm362, %v705, 0
      %v719 = vsel %vm362, %v707, 0
      %v722 = vsel %vm362, %v709, 0
      %v725 = vsel %vm362, %v711, 0
      %v728 = vsel %vm378, %v672, 0
      %730 = vmatprep.subr.bf16.mxu0 0
      %731 = vmatpush1.bf16.msra.mxu0 0
      %732 = vmatprep.subr.bf16.mxu0 0
      %733 = vmatpush1.bf16.msra.mxu0 0
      %734 = vmatprep.subr.bf16.mxu0 0
      %735 = vmatpush1.bf16.msra.mxu0 0
      %736 = vmatprep.subr.bf16.mxu0 0
      %737 = vmatpush1.bf16.msra.mxu0 0
      %738 = vmatprep.subr.bf16.mxu0 0
      %739 = vmatpush1.bf16.msra.mxu0 0
      %740 = vmatprep.subr.bf16.mxu0 0
      %741 = vmatpush1.bf16.msra.mxu0 0
      %742 = vmatprep.subr.bf16.mxu0 0
      %743 = vmatpush1.bf16.msra.mxu0 0
      %744 = vmatprep.subr.bf16.mxu0 0
      %745 = vmatpush1.bf16.msra.mxu0 %v728
      %746 = vmatprep.subr.bf16.mxu0 0
      %747 = vmatpush2.bf16.msra.mxu0 0
      %748 = vmatprep.subr.bf16.mxu0 0
      %749 = vmatpush2.bf16.msra.mxu0 0
      %750 = vmatprep.subr.bf16.mxu0 0
      %751 = vmatpush2.bf16.msra.mxu0 0
      %752 = vmatprep.subr.bf16.mxu0 0
      %753 = vmatpush2.bf16.msra.mxu0 0
      %754 = vmatprep.subr.bf16.mxu0 0
      %755 = vmatpush2.bf16.msra.mxu0 0
      %756 = vmatprep.subr.bf16.mxu0 0
      %757 = vmatpush2.bf16.msra.mxu0 0
      %758 = vmatprep.subr.bf16.mxu0 0
      %759 = vmatpush2.bf16.msra.mxu0 0
      %760 = vmatprep.subr.bf16.mxu0 0
      %761 = vmatpush2.bf16.msra.mxu0 0
      %762 = vmatprep.mubr.bf16.mxu0 0
      %763 = vmatmul.mubr.bf16.gmra.mxu0 %v713
      %v764 = vpop.f32.mrf.mxu0
      %v765 = vadd.f32 0.0, %v764
      %v766 = vpop.f32.mrf.mxu0
      %v767 = vpop.f32.mrf.mxu0
      %v768 = vadd.f32 0.0, %v767
      %v769 = vpop.f32.mrf.mxu0
      %770 = vmatprep.mubr.bf16.mxu0 0
      %771 = vmatmul.mubr.bf16.gmra.mxu0 %v716
      %v772 = vpop.f32.mrf.mxu0
      %v773 = vadd.f32 0.0, %v772
      %v774 = vpop.f32.mrf.mxu0
      %v775 = vpop.f32.mrf.mxu0
      %v776 = vadd.f32 0.0, %v775
      %v777 = vpop.f32.mrf.mxu0
      %778 = vmatprep.mubr.bf16.mxu0 0
      %779 = vmatmul.mubr.bf16.gmra.mxu0 %v719
      %v780 = vpop.f32.mrf.mxu0
      %v781 = vadd.f32 0.0, %v780
      %v782 = vpop.f32.mrf.mxu0
      %v783 = vpop.f32.mrf.mxu0
      %v784 = vadd.f32 0.0, %v783
      %v785 = vpop.f32.mrf.mxu0
      %786 = vmatprep.mubr.bf16.mxu0 0
      %787 = vmatmul.mubr.bf16.gmra.mxu0 %v722
      %v788 = vpop.f32.mrf.mxu0
      %v789 = vadd.f32 0.0, %v788
      %v790 = vpop.f32.mrf.mxu0
      %v791 = vpop.f32.mrf.mxu0
      %v792 = vadd.f32 0.0, %v791
      %v793 = vpop.f32.mrf.mxu0
      %794 = vmatprep.mubr.bf16.mxu0 0
      %795 = vmatmul.mubr.bf16.gmra.mxu0 %v725
      %v796 = vpop.f32.mrf.mxu0
      %v797 = vadd.f32 0.0, %v796
      %v798 = vpop.f32.mrf.mxu0
      %v799 = vpop.f32.mrf.mxu0
      %v800 = vadd.f32 0.0, %v799
      %v801 = vpop.f32.mrf.mxu0
      %802 = vdwg.mxu0
      %v803 = vadd.f32 %v650, %v765
      %v804 = vadd.f32 %v651, %v768
      %v805 = vadd.f32 %v652, %v773
      %v806 = vadd.f32 %v653, %v776
      %v807 = vadd.f32 %v654, %v781
      %v808 = vadd.f32 %v655, %v784
      %v809 = vadd.f32 %v656, %v789
      %v810 = vadd.f32 %v657, %v792
      %v811 = vadd.f32 %v658, %v797
      %v812 = vadd.f32 %v659, %v800
      %v813 = vld [vmem:[%s274 + $0x2c] sm:$0x3]
      %s814 = scalar_lea.vmem %s1, 8
      %v815 = vld [vmem:[%s814] sm:$0x3]
      %v817 = vunpack.c.l.b16 %v813
      %v818 = vpack.c.b16 %v817, %v817
      %vm819 = vsmask.f32 6400
      %v821 = vshrl.u32 %v695, 16
      %v823 = vrot.slane %v821, 1
      %v824 = vshll.u32 %v695, 16
      %v826 = vrot.slane %v824, 2
      %v827 = vor.u32 %v823, %v826
      %v829 = vshrl.u32 %v696, 16
      %v831 = vrot.slane %v829, 1
      %v832 = vshll.u32 %v696, 16
      %v834 = vrot.slane %v832, 2
      %v835 = vor.u32 %v831, %v834
      %v836 = vsel %vm819, %v827, %v835
      %v838 = vshrl.u32 %v697, 16
      %v840 = vrot.slane %v838, 1
      %v841 = vshll.u32 %v697, 16
      %v843 = vrot.slane %v841, 2
      %v844 = vor.u32 %v840, %v843
      %v845 = vsel %vm819, %v835, %v844
      %v847 = vshrl.u32 %v698, 16
      %v849 = vrot.slane %v847, 1
      %v850 = vshll.u32 %v698, 16
      %v852 = vrot.slane %v850, 2
      %v853 = vor.u32 %v849, %v852
      %v854 = vsel %vm819, %v844, %v853
      %v856 = vshrl.u32 %v699, 16
      %v858 = vrot.slane %v856, 1
      %v859 = vshll.u32 %v699, 16
      %v861 = vrot.slane %v859, 2
      %v862 = vor.u32 %v858, %v861
      %v863 = vsel %vm819, %v853, %v862
      %v865 = vshrl.u32 %v818, 16
      %v867 = vrot.slane %v865, 1
      %v868 = vshll.u32 %v818, 16
      %v870 = vrot.slane %v868, 2
      %v871 = vor.u32 %v867, %v870
      %v872 = vsel %vm819, %v862, %v871
      %v874 = vsel %vm362, %v836, 0
      %v877 = vsel %vm362, %v845, 0
      %v880 = vsel %vm362, %v854, 0
      %v883 = vsel %vm362, %v863, 0
      %v886 = vsel %vm362, %v872, 0
      %v889 = vsel %vm378, %v815, 0
      %891 = vmatprep.subr.bf16.mxu0 0
      %892 = vmatpush1.bf16.msra.mxu0 0
      %893 = vmatprep.subr.bf16.mxu0 0
      %894 = vmatpush1.bf16.msra.mxu0 0
      %895 = vmatprep.subr.bf16.mxu0 0
      %896 = vmatpush1.bf16.msra.mxu0 0
      %897 = vmatprep.subr.bf16.mxu0 0
      %898 = vmatpush1.bf16.msra.mxu0 0
      %899 = vmatprep.subr.bf16.mxu0 0
      %900 = vmatpush1.bf16.msra.mxu0 0
      %901 = vmatprep.subr.bf16.mxu0 0
      %902 = vmatpush1.bf16.msra.mxu0 0
      %903 = vmatprep.subr.bf16.mxu0 0
      %904 = vmatpush1.bf16.msra.mxu0 0
      %905 = vmatprep.subr.bf16.mxu0 0
      %906 = vmatpush1.bf16.msra.mxu0 %v889
      %907 = vmatprep.subr.bf16.mxu0 0
      %908 = vmatpush2.bf16.msra.mxu0 0
      %909 = vmatprep.subr.bf16.mxu0 0
      %910 = vmatpush2.bf16.msra.mxu0 0
      %911 = vmatprep.subr.bf16.mxu0 0
      %912 = vmatpush2.bf16.msra.mxu0 0
      %913 = vmatprep.subr.bf16.mxu0 0
      %914 = vmatpush2.bf16.msra.mxu0 0
      %915 = vmatprep.subr.bf16.mxu0 0
      %916 = vmatpush2.bf16.msra.mxu0 0
      %917 = vmatprep.subr.bf16.mxu0 0
      %918 = vmatpush2.bf16.msra.mxu0 0
      %919 = vmatprep.subr.bf16.mxu0 0
      %920 = vmatpush2.bf16.msra.mxu0 0
      %921 = vmatprep.subr.bf16.mxu0 0
      %922 = vmatpush2.bf16.msra.mxu0 0
      %923 = vmatprep.mubr.bf16.mxu0 0
      %924 = vmatmul.mubr.bf16.gmra.mxu0 %v874
      %v925 = vpop.f32.mrf.mxu0
      %v926 = vadd.f32 0.0, %v925
      %v927 = vpop.f32.mrf.mxu0
      %v928 = vpop.f32.mrf.mxu0
      %v929 = vadd.f32 0.0, %v928
      %v930 = vpop.f32.mrf.mxu0
      %931 = vmatprep.mubr.bf16.mxu0 0
      %932 = vmatmul.mubr.bf16.gmra.mxu0 %v877
      %v933 = vpop.f32.mrf.mxu0
      %v934 = vadd.f32 0.0, %v933
      %v935 = vpop.f32.mrf.mxu0
      %v936 = vpop.f32.mrf.mxu0
      %v937 = vadd.f32 0.0, %v936
      %v938 = vpop.f32.mrf.mxu0
      %939 = vmatprep.mubr.bf16.mxu0 0
      %940 = vmatmul.mubr.bf16.gmra.mxu0 %v880
      %v941 = vpop.f32.mrf.mxu0
      %v942 = vadd.f32 0.0, %v941
      %v943 = vpop.f32.mrf.mxu0
      %v944 = vpop.f32.mrf.mxu0
      %v945 = vadd.f32 0.0, %v944
      %v946 = vpop.f32.mrf.mxu0
      %947 = vmatprep.mubr.bf16.mxu0 0
      %948 = vmatmul.mubr.bf16.gmra.mxu0 %v883
      %v949 = vpop.f32.mrf.mxu0
      %v950 = vadd.f32 0.0, %v949
      %v951 = vpop.f32.mrf.mxu0
      %v952 = vpop.f32.mrf.mxu0
      %v953 = vadd.f32 0.0, %v952
      %v954 = vpop.f32.mrf.mxu0
      %955 = vmatprep.mubr.bf16.mxu0 0
      %956 = vmatmul.mubr.bf16.gmra.mxu0 %v886
      %v957 = vpop.f32.mrf.mxu0
      %v958 = vadd.f32 0.0, %v957
      %v959 = vpop.f32.mrf.mxu0
      %v960 = vpop.f32.mrf.mxu0
      %v961 = vadd.f32 0.0, %v960
      %v962 = vpop.f32.mrf.mxu0
      %963 = vdwg.mxu0
      %v964 = vadd.f32 %v803, %v926
      %v965 = vadd.f32 %v804, %v929
      %v966 = vadd.f32 %v805, %v934
      %v967 = vadd.f32 %v806, %v937
      %v968 = vadd.f32 %v807, %v942
      %v969 = vadd.f32 %v808, %v945
      %v970 = vadd.f32 %v809, %v950
      %v971 = vadd.f32 %v810, %v953
      %v972 = vadd.f32 %v811, %v958
      %v973 = vadd.f32 %v812, %v961
      %v974 = vld [vmem:[%s274 + $0x4] sm:$0xc]
      %s975 = scalar_lea.vmem %s1, 10
      %v976 = vld [vmem:[%s975] sm:$0x3]
      %v978 = vunpack.c.l.b16 %v974
      %v979 = vpack.c.b16 %v685, %v978
      %vm980 = vcmask 1045504
      %v981 = vrot.slane %v979, 2
      %v982 = vrot.slane %v696, 2
      %v983 = vsel %vm980, %v981, %v982
      %v984 = vrot.slane %v697, 2
      %v985 = vsel %vm980, %v982, %v984
      %v986 = vrot.slane %v698, 2
      %v987 = vsel %vm980, %v984, %v986
      %v988 = vrot.slane %v699, 2
      %v989 = vsel %vm980, %v986, %v988
      %v990 = vrot.slane %v818, 2
      %v991 = vsel %vm980, %v988, %v990
      %v993 = vsel %vm362, %v983, 0
      %v996 = vsel %vm362, %v985, 0
      %v999 = vsel %vm362, %v987, 0
      %v1002 = vsel %vm362, %v989, 0
      %v1005 = vsel %vm362, %v991, 0
      %v1008 = vsel %vm378, %v976, 0
      %1010 = vmatprep.subr.bf16.mxu0 0
      %1011 = vmatpush1.bf16.msra.mxu0 0
      %1012 = vmatprep.subr.bf16.mxu0 0
      %1013 = vmatpush1.bf16.msra.mxu0 0
      %1014 = vmatprep.subr.bf16.mxu0 0
      %1015 = vmatpush1.bf16.msra.mxu0 0
      %1016 = vmatprep.subr.bf16.mxu0 0
      %1017 = vmatpush1.bf16.msra.mxu0 0
      %1018 = vmatprep.subr.bf16.mxu0 0
      %1019 = vmatpush1.bf16.msra.mxu0 0
      %1020 = vmatprep.subr.bf16.mxu0 0
      %1021 = vmatpush1.bf16.msra.mxu0 0
      %1022 = vmatprep.subr.bf16.mxu0 0
      %1023 = vmatpush1.bf16.msra.mxu0 0
      %1024 = vmatprep.subr.bf16.mxu0 0
      %1025 = vmatpush1.bf16.msra.mxu0 %v1008
      %1026 = vmatprep.subr.bf16.mxu0 0
      %1027 = vmatpush2.bf16.msra.mxu0 0
      %1028 = vmatprep.subr.bf16.mxu0 0
      %1029 = vmatpush2.bf16.msra.mxu0 0
      %1030 = vmatprep.subr.bf16.mxu0 0
      %1031 = vmatpush2.bf16.msra.mxu0 0
      %1032 = vmatprep.subr.bf16.mxu0 0
      %1033 = vmatpush2.bf16.msra.mxu0 0
      %1034 = vmatprep.subr.bf16.mxu0 0
      %1035 = vmatpush2.bf16.msra.mxu0 0
      %1036 = vmatprep.subr.bf16.mxu0 0
      %1037 = vmatpush2.bf16.msra.mxu0 0
      %1038 = vmatprep.subr.bf16.mxu0 0
      %1039 = vmatpush2.bf16.msra.mxu0 0
      %1040 = vmatprep.subr.bf16.mxu0 0
      %1041 = vmatpush2.bf16.msra.mxu0 0
      %1042 = vmatprep.mubr.bf16.mxu0 0
      %1043 = vmatmul.mubr.bf16.gmra.mxu0 %v993
      %v1044 = vpop.f32.mrf.mxu0
      %v1045 = vadd.f32 0.0, %v1044
      %v1046 = vpop.f32.mrf.mxu0
      %v1047 = vpop.f32.mrf.mxu0
      %v1048 = vadd.f32 0.0, %v1047
      %v1049 = vpop.f32.mrf.mxu0
      %1050 = vmatprep.mubr.bf16.mxu0 0
      %1051 = vmatmul.mubr.bf16.gmra.mxu0 %v996
      %v1052 = vpop.f32.mrf.mxu0
      %v1053 = vadd.f32 0.0, %v1052
      %v1054 = vpop.f32.mrf.mxu0
      %v1055 = vpop.f32.mrf.mxu0
      %v1056 = vadd.f32 0.0, %v1055
      %v1057 = vpop.f32.mrf.mxu0
      %1058 = vmatprep.mubr.bf16.mxu0 0
      %1059 = vmatmul.mubr.bf16.gmra.mxu0 %v999
      %v1060 = vpop.f32.mrf.mxu0
      %v1061 = vadd.f32 0.0, %v1060
      %v1062 = vpop.f32.mrf.mxu0
      %v1063 = vpop.f32.mrf.mxu0
      %v1064 = vadd.f32 0.0, %v1063
      %v1065 = vpop.f32.mrf.mxu0
      %1066 = vmatprep.mubr.bf16.mxu0 0
      %1067 = vmatmul.mubr.bf16.gmra.mxu0 %v1002
      %v1068 = vpop.f32.mrf.mxu0
      %v1069 = vadd.f32 0.0, %v1068
      %v1070 = vpop.f32.mrf.mxu0
      %v1071 = vpop.f32.mrf.mxu0
      %v1072 = vadd.f32 0.0, %v1071
      %v1073 = vpop.f32.mrf.mxu0
      %1074 = vmatprep.mubr.bf16.mxu0 0
      %1075 = vmatmul.mubr.bf16.gmra.mxu0 %v1005
      %v1076 = vpop.f32.mrf.mxu0
      %v1077 = vadd.f32 0.0, %v1076
      %v1078 = vpop.f32.mrf.mxu0
      %v1079 = vpop.f32.mrf.mxu0
      %v1080 = vadd.f32 0.0, %v1079
      %v1081 = vpop.f32.mrf.mxu0
      %1082 = vdwg.mxu0
      %v1083 = vadd.f32 %v964, %v1045
      %v1084 = vadd.f32 %v965, %v1048
      %v1085 = vadd.f32 %v966, %v1053
      %v1086 = vadd.f32 %v967, %v1056
      %v1087 = vadd.f32 %v968, %v1061
      %v1088 = vadd.f32 %v969, %v1064
      %v1089 = vadd.f32 %v970, %v1069
      %v1090 = vadd.f32 %v971, %v1072
      %v1091 = vadd.f32 %v972, %v1077
      %v1092 = vadd.f32 %v973, %v1080
      %v1093 = vld [vmem:[%s274 + $0x8] sm:$0xc]
      %v1094 = vld [vmem:[%s274 + $0xc] sm:$0xf]
      %v1095 = vld [vmem:[%s274 + $0x10] sm:$0xf]
      %v1096 = vld [vmem:[%s274 + $0x14] sm:$0xf]
      %v1097 = vld [vmem:[%s274 + $0x18] sm:$0xf]
      %v1098 = vld [vmem:[%s274 + $0x1c] sm:$0xf]
      %v1099 = vld [vmem:[%s274 + $0x20] sm:$0xf]
      %v1100 = vld [vmem:[%s274 + $0x24] sm:$0xf]
      %v1101 = vld [vmem:[%s274 + $0x28] sm:$0xf]
      %v1102 = vld [vmem:[%s274 + $0x2c] sm:$0xf]
      %v1103 = vld [vmem:[%s274 + $0x30] sm:$0x3]
      %s1104 = scalar_lea.vmem %s1, 12
      %v1105 = vld [vmem:[%s1104] sm:$0x3]
      %v1117 = vunpack.c.l.b16 %v1093
      %v1118 = vunpack.c.l.b16 %v1094
      %v1119 = vunpack.c.l.b16 %v1095
      %v1120 = vunpack.c.l.b16 %v1096
      %v1121 = vunpack.c.l.b16 %v1097
      %v1122 = vunpack.c.l.b16 %v1098
      %v1123 = vunpack.c.l.b16 %v1099
      %v1124 = vunpack.c.l.b16 %v1100
      %v1125 = vunpack.c.l.b16 %v1101
      %v1126 = vunpack.c.l.b16 %v1102
      %v1127 = vunpack.c.l.b16 %v1103
      %v1128 = vpack.c.b16 %v1118, %v1117
      %v1129 = vpack.c.b16 %v1120, %v1119
      %v1130 = vpack.c.b16 %v1122, %v1121
      %v1131 = vpack.c.b16 %v1124, %v1123
      %v1132 = vpack.c.b16 %v1126, %v1125
      %v1133 = vpack.c.b16 %v1127, %v1127
      %v1134 = vrot.slane %v1128, 2
      %v1135 = vrot.slane %v1129, 2
      %v1136 = vsel %vm980, %v1134, %v1135
      %v1137 = vrot.slane %v1130, 2
      %v1138 = vsel %vm980, %v1135, %v1137
      %v1139 = vrot.slane %v1131, 2
      %v1140 = vsel %vm980, %v1137, %v1139
      %v1141 = vrot.slane %v1132, 2
      %v1142 = vsel %vm980, %v1139, %v1141
      %v1143 = vrot.slane %v1133, 2
      %v1144 = vsel %vm980, %v1141, %v1143
      %v1146 = vsel %vm362, %v1136, 0
      %v1149 = vsel %vm362, %v1138, 0
      %v1152 = vsel %vm362, %v1140, 0
      %v1155 = vsel %vm362, %v1142, 0
      %v1158 = vsel %vm362, %v1144, 0
      %v1161 = vsel %vm378, %v1105, 0
      %1163 = vmatprep.subr.bf16.mxu0 0
      %1164 = vmatpush1.bf16.msra.mxu0 0
      %1165 = vmatprep.subr.bf16.mxu0 0
      %1166 = vmatpush1.bf16.msra.mxu0 0
      %1167 = vmatprep.subr.bf16.mxu0 0
      %1168 = vmatpush1.bf16.msra.mxu0 0
      %1169 = vmatprep.subr.bf16.mxu0 0
      %1170 = vmatpush1.bf16.msra.mxu0 0
      %1171 = vmatprep.subr.bf16.mxu0 0
      %1172 = vmatpush1.bf16.msra.mxu0 0
      %1173 = vmatprep.subr.bf16.mxu0 0
      %1174 = vmatpush1.bf16.msra.mxu0 0
      %1175 = vmatprep.subr.bf16.mxu0 0
      %1176 = vmatpush1.bf16.msra.mxu0 0
      %1177 = vmatprep.subr.bf16.mxu0 0
      %1178 = vmatpush1.bf16.msra.mxu0 %v1161
      %1179 = vmatprep.subr.bf16.mxu0 0
      %1180 = vmatpush2.bf16.msra.mxu0 0
      %1181 = vmatprep.subr.bf16.mxu0 0
      %1182 = vmatpush2.bf16.msra.mxu0 0
      %1183 = vmatprep.subr.bf16.mxu0 0
      %1184 = vmatpush2.bf16.msra.mxu0 0
      %1185 = vmatprep.subr.bf16.mxu0 0
      %1186 = vmatpush2.bf16.msra.mxu0 0
      %1187 = vmatprep.subr.bf16.mxu0 0
      %1188 = vmatpush2.bf16.msra.mxu0 0
      %1189 = vmatprep.subr.bf16.mxu0 0
      %1190 = vmatpush2.bf16.msra.mxu0 0
      %1191 = vmatprep.subr.bf16.mxu0 0
      %1192 = vmatpush2.bf16.msra.mxu0 0
      %1193 = vmatprep.subr.bf16.mxu0 0
      %1194 = vmatpush2.bf16.msra.mxu0 0
      %1195 = vmatprep.mubr.bf16.mxu0 0
      %1196 = vmatmul.mubr.bf16.gmra.mxu0 %v1146
      %v1197 = vpop.f32.mrf.mxu0
      %v1198 = vadd.f32 0.0, %v1197
      %v1199 = vpop.f32.mrf.mxu0
      %v1200 = vpop.f32.mrf.mxu0
      %v1201 = vadd.f32 0.0, %v1200
      %v1202 = vpop.f32.mrf.mxu0
      %1203 = vmatprep.mubr.bf16.mxu0 0
      %1204 = vmatmul.mubr.bf16.gmra.mxu0 %v1149
      %v1205 = vpop.f32.mrf.mxu0
      %v1206 = vadd.f32 0.0, %v1205
      %v1207 = vpop.f32.mrf.mxu0
      %v1208 = vpop.f32.mrf.mxu0
      %v1209 = vadd.f32 0.0, %v1208
      %v1210 = vpop.f32.mrf.mxu0
      %1211 = vmatprep.mubr.bf16.mxu0 0
      %1212 = vmatmul.mubr.bf16.gmra.mxu0 %v1152
      %v1213 = vpop.f32.mrf.mxu0
      %v1214 = vadd.f32 0.0, %v1213
      %v1215 = vpop.f32.mrf.mxu0
      %v1216 = vpop.f32.mrf.mxu0
      %v1217 = vadd.f32 0.0, %v1216
      %v1218 = vpop.f32.mrf.mxu0
      %1219 = vmatprep.mubr.bf16.mxu0 0
      %1220 = vmatmul.mubr.bf16.gmra.mxu0 %v1155
      %v1221 = vpop.f32.mrf.mxu0
      %v1222 = vadd.f32 0.0, %v1221
      %v1223 = vpop.f32.mrf.mxu0
      %v1224 = vpop.f32.mrf.mxu0
      %v1225 = vadd.f32 0.0, %v1224
      %v1226 = vpop.f32.mrf.mxu0
      %1227 = vmatprep.mubr.bf16.mxu0 0
      %1228 = vmatmul.mubr.bf16.gmra.mxu0 %v1158
      %v1229 = vpop.f32.mrf.mxu0
      %v1230 = vadd.f32 0.0, %v1229
      %v1231 = vpop.f32.mrf.mxu0
      %v1232 = vpop.f32.mrf.mxu0
      %v1233 = vadd.f32 0.0, %v1232
      %v1234 = vpop.f32.mrf.mxu0
      %1235 = vdwg.mxu0
      %v1236 = vadd.f32 %v1083, %v1198
      %v1237 = vadd.f32 %v1084, %v1201
      %v1238 = vadd.f32 %v1085, %v1206
      %v1239 = vadd.f32 %v1086, %v1209
      %v1240 = vadd.f32 %v1087, %v1214
      %v1241 = vadd.f32 %v1088, %v1217
      %v1242 = vadd.f32 %v1089, %v1222
      %v1243 = vadd.f32 %v1090, %v1225
      %v1244 = vadd.f32 %v1091, %v1230
      %v1245 = vadd.f32 %v1092, %v1233
      %v1246 = vld [vmem:[%s274 + $0x30] sm:$0x7]
      %s1247 = scalar_lea.vmem %s1, 14
      %v1248 = vld [vmem:[%s1247] sm:$0x3]
      %v1250 = vunpack.c.l.b16 %v1246
      %v1251 = vpack.c.b16 %v1250, %v1250
      %vm1252 = vsmask.f32 5376
      %v1254 = vshrl.u32 %v1128, 16
      %v1256 = vrot.slane %v1254, 2
      %v1257 = vshll.u32 %v1128, 16
      %v1259 = vrot.slane %v1257, 3
      %v1260 = vor.u32 %v1256, %v1259
      %v1262 = vshrl.u32 %v1129, 16
      %v1264 = vrot.slane %v1262, 2
      %v1265 = vshll.u32 %v1129, 16
      %v1267 = vrot.slane %v1265, 3
      %v1268 = vor.u32 %v1264, %v1267
      %v1269 = vsel %vm1252, %v1260, %v1268
      %v1271 = vshrl.u32 %v1130, 16
      %v1273 = vrot.slane %v1271, 2
      %v1274 = vshll.u32 %v1130, 16
      %v1276 = vrot.slane %v1274, 3
      %v1277 = vor.u32 %v1273, %v1276
      %v1278 = vsel %vm1252, %v1268, %v1277
      %v1280 = vshrl.u32 %v1131, 16
      %v1282 = vrot.slane %v1280, 2
      %v1283 = vshll.u32 %v1131, 16
      %v1285 = vrot.slane %v1283, 3
      %v1286 = vor.u32 %v1282, %v1285
      %v1287 = vsel %vm1252, %v1277, %v1286
      %v1289 = vshrl.u32 %v1132, 16
      %v1291 = vrot.slane %v1289, 2
      %v1292 = vshll.u32 %v1132, 16
      %v1294 = vrot.slane %v1292, 3
      %v1295 = vor.u32 %v1291, %v1294
      %v1296 = vsel %vm1252, %v1286, %v1295
      %v1298 = vshrl.u32 %v1251, 16
      %v1300 = vrot.slane %v1298, 2
      %v1301 = vshll.u32 %v1251, 16
      %v1303 = vrot.slane %v1301, 3
      %v1304 = vor.u32 %v1300, %v1303
      %v1305 = vsel %vm1252, %v1295, %v1304
      %v1307 = vsel %vm362, %v1269, 0
      %v1310 = vsel %vm362, %v1278, 0
      %v1313 = vsel %vm362, %v1287, 0
      %v1316 = vsel %vm362, %v1296, 0
      %v1319 = vsel %vm362, %v1305, 0
      %v1322 = vsel %vm378, %v1248, 0
      %1324 = vmatprep.subr.bf16.mxu0 0
      %1325 = vmatpush1.bf16.msra.mxu0 0
      %1326 = vmatprep.subr.bf16.mxu0 0
      %1327 = vmatpush1.bf16.msra.mxu0 0
      %1328 = vmatprep.subr.bf16.mxu0 0
      %1329 = vmatpush1.bf16.msra.mxu0 0
      %1330 = vmatprep.subr.bf16.mxu0 0
      %1331 = vmatpush1.bf16.msra.mxu0 0
      %1332 = vmatprep.subr.bf16.mxu0 0
      %1333 = vmatpush1.bf16.msra.mxu0 0
      %1334 = vmatprep.subr.bf16.mxu0 0
      %1335 = vmatpush1.bf16.msra.mxu0 0
      %1336 = vmatprep.subr.bf16.mxu0 0
      %1337 = vmatpush1.bf16.msra.mxu0 0
      %1338 = vmatprep.subr.bf16.mxu0 0
      %1339 = vmatpush1.bf16.msra.mxu0 %v1322
      %1340 = vmatprep.subr.bf16.mxu0 0
      %1341 = vmatpush2.bf16.msra.mxu0 0
      %1342 = vmatprep.subr.bf16.mxu0 0
      %1343 = vmatpush2.bf16.msra.mxu0 0
      %1344 = vmatprep.subr.bf16.mxu0 0
      %1345 = vmatpush2.bf16.msra.mxu0 0
      %1346 = vmatprep.subr.bf16.mxu0 0
      %1347 = vmatpush2.bf16.msra.mxu0 0
      %1348 = vmatprep.subr.bf16.mxu0 0
      %1349 = vmatpush2.bf16.msra.mxu0 0
      %1350 = vmatprep.subr.bf16.mxu0 0
      %1351 = vmatpush2.bf16.msra.mxu0 0
      %1352 = vmatprep.subr.bf16.mxu0 0
      %1353 = vmatpush2.bf16.msra.mxu0 0
      %1354 = vmatprep.subr.bf16.mxu0 0
      %1355 = vmatpush2.bf16.msra.mxu0 0
      %1356 = vmatprep.mubr.bf16.mxu0 0
      %1357 = vmatmul.mubr.bf16.gmra.mxu0 %v1307
      %v1358 = vpop.f32.mrf.mxu0
      %v1359 = vadd.f32 0.0, %v1358
      %v1360 = vpop.f32.mrf.mxu0
      %v1361 = vpop.f32.mrf.mxu0
      %v1362 = vadd.f32 0.0, %v1361
      %v1363 = vpop.f32.mrf.mxu0
      %1364 = vmatprep.mubr.bf16.mxu0 0
      %1365 = vmatmul.mubr.bf16.gmra.mxu0 %v1310
      %v1366 = vpop.f32.mrf.mxu0
      %v1367 = vadd.f32 0.0, %v1366
      %v1368 = vpop.f32.mrf.mxu0
      %v1369 = vpop.f32.mrf.mxu0
      %v1370 = vadd.f32 0.0, %v1369
      %v1371 = vpop.f32.mrf.mxu0
      %1372 = vmatprep.mubr.bf16.mxu0 0
      %1373 = vmatmul.mubr.bf16.gmra.mxu0 %v1313
      %v1374 = vpop.f32.mrf.mxu0
      %v1375 = vadd.f32 0.0, %v1374
      %v1376 = vpop.f32.mrf.mxu0
      %v1377 = vpop.f32.mrf.mxu0
      %v1378 = vadd.f32 0.0, %v1377
      %v1379 = vpop.f32.mrf.mxu0
      %1380 = vmatprep.mubr.bf16.mxu0 0
      %1381 = vmatmul.mubr.bf16.gmra.mxu0 %v1316
      %v1382 = vpop.f32.mrf.mxu0
      %v1383 = vadd.f32 0.0, %v1382
      %v1384 = vpop.f32.mrf.mxu0
      %v1385 = vpop.f32.mrf.mxu0
      %v1386 = vadd.f32 0.0, %v1385
      %v1387 = vpop.f32.mrf.mxu0
      %1388 = vmatprep.mubr.bf16.mxu0 0
      %1389 = vmatmul.mubr.bf16.gmra.mxu0 %v1319
      %v1390 = vpop.f32.mrf.mxu0
      %v1391 = vadd.f32 0.0, %v1390
      %v1392 = vpop.f32.mrf.mxu0
      %v1393 = vpop.f32.mrf.mxu0
      %v1394 = vadd.f32 0.0, %v1393
      %v1395 = vpop.f32.mrf.mxu0
      %1396 = vdwg.mxu0
      %v1397 = vadd.f32 %v1236, %v1359
      %v1398 = vadd.f32 %v1237, %v1362
      %v1399 = vadd.f32 %v1238, %v1367
      %v1400 = vadd.f32 %v1239, %v1370
      %v1401 = vadd.f32 %v1240, %v1375
      %v1402 = vadd.f32 %v1241, %v1378
      %v1403 = vadd.f32 %v1242, %v1383
      %v1404 = vadd.f32 %v1243, %v1386
      %v1405 = vadd.f32 %v1244, %v1391
      %v1406 = vadd.f32 %v1245, %v1394
      %v1407 = vld [vmem:[%s274 + $0x8] sm:$0x8]
      %s1408 = scalar_lea.vmem %s1, 16
      %v1409 = vld [vmem:[%s1408] sm:$0x3]
      %v1411 = vunpack.c.l.b16 %v1407
      %v1412 = vpack.c.b16 %v1118, %v1411
      %vm1413 = vcmask 1044480
      %v1414 = vrot.slane %v1412, 3
      %v1415 = vrot.slane %v1129, 3
      %v1416 = vsel %vm1413, %v1414, %v1415
      %v1417 = vrot.slane %v1130, 3
      %v1418 = vsel %vm1413, %v1415, %v1417
      %v1419 = vrot.slane %v1131, 3
      %v1420 = vsel %vm1413, %v1417, %v1419
      %v1421 = vrot.slane %v1132, 3
      %v1422 = vsel %vm1413, %v1419, %v1421
      %v1423 = vrot.slane %v1251, 3
      %v1424 = vsel %vm1413, %v1421, %v1423
      %v1426 = vsel %vm362, %v1416, 0
      %v1429 = vsel %vm362, %v1418, 0
      %v1432 = vsel %vm362, %v1420, 0
      %v1435 = vsel %vm362, %v1422, 0
      %v1438 = vsel %vm362, %v1424, 0
      %v1441 = vsel %vm378, %v1409, 0
      %1443 = vmatprep.subr.bf16.mxu0 0
      %1444 = vmatpush1.bf16.msra.mxu0 0
      %1445 = vmatprep.subr.bf16.mxu0 0
      %1446 = vmatpush1.bf16.msra.mxu0 0
      %1447 = vmatprep.subr.bf16.mxu0 0
      %1448 = vmatpush1.bf16.msra.mxu0 0
      %1449 = vmatprep.subr.bf16.mxu0 0
      %1450 = vmatpush1.bf16.msra.mxu0 0
      %1451 = vmatprep.subr.bf16.mxu0 0
      %1452 = vmatpush1.bf16.msra.mxu0 0
      %1453 = vmatprep.subr.bf16.mxu0 0
      %1454 = vmatpush1.bf16.msra.mxu0 0
      %1455 = vmatprep.subr.bf16.mxu0 0
      %1456 = vmatpush1.bf16.msra.mxu0 0
      %1457 = vmatprep.subr.bf16.mxu0 0
      %1458 = vmatpush1.bf16.msra.mxu0 %v1441
      %1459 = vmatprep.subr.bf16.mxu0 0
      %1460 = vmatpush2.bf16.msra.mxu0 0
      %1461 = vmatprep.subr.bf16.mxu0 0
      %1462 = vmatpush2.bf16.msra.mxu0 0
      %1463 = vmatprep.subr.bf16.mxu0 0
      %1464 = vmatpush2.bf16.msra.mxu0 0
      %1465 = vmatprep.subr.bf16.mxu0 0
      %1466 = vmatpush2.bf16.msra.mxu0 0
      %1467 = vmatprep.subr.bf16.mxu0 0
      %1468 = vmatpush2.bf16.msra.mxu0 0
      %1469 = vmatprep.subr.bf16.mxu0 0
      %1470 = vmatpush2.bf16.msra.mxu0 0
      %1471 = vmatprep.subr.bf16.mxu0 0
      %1472 = vmatpush2.bf16.msra.mxu0 0
      %1473 = vmatprep.subr.bf16.mxu0 0
      %1474 = vmatpush2.bf16.msra.mxu0 0
      %1475 = vmatprep.mubr.bf16.mxu0 0
      %1476 = vmatmul.mubr.bf16.gmra.mxu0 %v1426
      %v1477 = vpop.f32.mrf.mxu0
      %v1478 = vadd.f32 0.0, %v1477
      %v1479 = vpop.f32.mrf.mxu0
      %v1480 = vpop.f32.mrf.mxu0
      %v1481 = vadd.f32 0.0, %v1480
      %v1482 = vpop.f32.mrf.mxu0
      %1483 = vmatprep.mubr.bf16.mxu0 0
      %1484 = vmatmul.mubr.bf16.gmra.mxu0 %v1429
      %v1485 = vpop.f32.mrf.mxu0
      %v1486 = vadd.f32 0.0, %v1485
      %v1487 = vpop.f32.mrf.mxu0
      %v1488 = vpop.f32.mrf.mxu0
      %v1489 = vadd.f32 0.0, %v1488
      %v1490 = vpop.f32.mrf.mxu0
      %1491 = vmatprep.mubr.bf16.mxu0 0
      %1492 = vmatmul.mubr.bf16.gmra.mxu0 %v1432
      %v1493 = vpop.f32.mrf.mxu0
      %v1494 = vadd.f32 0.0, %v1493
      %v1495 = vpop.f32.mrf.mxu0
      %v1496 = vpop.f32.mrf.mxu0
      %v1497 = vadd.f32 0.0, %v1496
      %v1498 = vpop.f32.mrf.mxu0
      %1499 = vmatprep.mubr.bf16.mxu0 0
      %1500 = vmatmul.mubr.bf16.gmra.mxu0 %v1435
      %v1501 = vpop.f32.mrf.mxu0
      %v1502 = vadd.f32 0.0, %v1501
      %v1503 = vpop.f32.mrf.mxu0
      %v1504 = vpop.f32.mrf.mxu0
      %v1505 = vadd.f32 0.0, %v1504
      %v1506 = vpop.f32.mrf.mxu0
      %1507 = vmatprep.mubr.bf16.mxu0 0
      %1508 = vmatmul.mubr.bf16.gmra.mxu0 %v1438
      %v1509 = vpop.f32.mrf.mxu0
      %v1510 = vadd.f32 0.0, %v1509
      %v1511 = vpop.f32.mrf.mxu0
      %v1512 = vpop.f32.mrf.mxu0
      %v1513 = vadd.f32 0.0, %v1512
      %v1514 = vpop.f32.mrf.mxu0
      %1515 = vdwg.mxu0
      %v1516 = vadd.f32 %v1397, %v1478
      %v1517 = vadd.f32 %v1398, %v1481
      %v1518 = vadd.f32 %v1399, %v1486
      %v1519 = vadd.f32 %v1400, %v1489
      %v1520 = vadd.f32 %v1401, %v1494
      %v1521 = vadd.f32 %v1402, %v1497
      %v1522 = vadd.f32 %v1403, %v1502
      %v1523 = vadd.f32 %v1404, %v1505
      %v1524 = vadd.f32 %v1405, %v1510
      %v1525 = vadd.f32 %v1406, %v1513
      %s1526 = sadd.s32 %s22, 1
      %s1527 = smul.u32 %s1526, 13
      %s1528 = smul.addr %s1527, 4
      %s1529 = scalar_lea.vmem %s248, %s1528
      %v1530 = vld [vmem:[%s1529] sm:$0xf]
      %v1531 = vld [vmem:[%s1529 + $0x4] sm:$0xf]
      %v1532 = vld [vmem:[%s1529 + $0x8] sm:$0xf]
      %v1533 = vld [vmem:[%s1529 + $0xc] sm:$0xf]
      %v1534 = vld [vmem:[%s1529 + $0x10] sm:$0xf]
      %v1535 = vld [vmem:[%s1529 + $0x14] sm:$0xf]
      %v1536 = vld [vmem:[%s1529 + $0x18] sm:$0xf]
      %v1537 = vld [vmem:[%s1529 + $0x1c] sm:$0xf]
      %v1538 = vld [vmem:[%s1529 + $0x20] sm:$0xf]
      %v1539 = vld [vmem:[%s1529 + $0x24] sm:$0xf]
      %s1540 = scalar_lea.vmem %s1, 18
      %v1541 = vld [vmem:[%s1540] sm:$0x3]
      %v1552 = vunpack.c.l.b16 %v1530
      %v1553 = vunpack.c.l.b16 %v1531
      %v1554 = vunpack.c.l.b16 %v1532
      %v1555 = vunpack.c.l.b16 %v1533
      %v1556 = vunpack.c.l.b16 %v1534
      %v1557 = vunpack.c.l.b16 %v1535
      %v1558 = vunpack.c.l.b16 %v1536
      %v1559 = vunpack.c.l.b16 %v1537
      %v1560 = vunpack.c.l.b16 %v1538
      %v1561 = vunpack.c.l.b16 %v1539
      %v1562 = vpack.c.b16 %v1553, %v1552
      %v1563 = vpack.c.b16 %v1555, %v1554
      %v1564 = vpack.c.b16 %v1557, %v1556
      %v1565 = vpack.c.b16 %v1559, %v1558
      %v1566 = vpack.c.b16 %v1561, %v1560
      %v1568 = vsel %vm362, %v1562, 0
      %v1571 = vsel %vm362, %v1563, 0
      %v1574 = vsel %vm362, %v1564, 0
      %v1577 = vsel %vm362, %v1565, 0
      %v1580 = vsel %vm362, %v1566, 0
      %v1583 = vsel %vm378, %v1541, 0
      %1585 = vmatprep.subr.bf16.mxu0 0
      %1586 = vmatpush1.bf16.msra.mxu0 0
      %1587 = vmatprep.subr.bf16.mxu0 0
      %1588 = vmatpush1.bf16.msra.mxu0 0
      %1589 = vmatprep.subr.bf16.mxu0 0
      %1590 = vmatpush1.bf16.msra.mxu0 0
      %1591 = vmatprep.subr.bf16.mxu0 0
      %1592 = vmatpush1.bf16.msra.mxu0 0
      %1593 = vmatprep.subr.bf16.mxu0 0
      %1594 = vmatpush1.bf16.msra.mxu0 0
      %1595 = vmatprep.subr.bf16.mxu0 0
      %1596 = vmatpush1.bf16.msra.mxu0 0
      %1597 = vmatprep.subr.bf16.mxu0 0
      %1598 = vmatpush1.bf16.msra.mxu0 0
      %1599 = vmatprep.subr.bf16.mxu0 0
      %1600 = vmatpush1.bf16.msra.mxu0 %v1583
      %1601 = vmatprep.subr.bf16.mxu0 0
      %1602 = vmatpush2.bf16.msra.mxu0 0
      %1603 = vmatprep.subr.bf16.mxu0 0
      %1604 = vmatpush2.bf16.msra.mxu0 0
      %1605 = vmatprep.subr.bf16.mxu0 0
      %1606 = vmatpush2.bf16.msra.mxu0 0
      %1607 = vmatprep.subr.bf16.mxu0 0
      %1608 = vmatpush2.bf16.msra.mxu0 0
      %1609 = vmatprep.subr.bf16.mxu0 0
      %1610 = vmatpush2.bf16.msra.mxu0 0
      %1611 = vmatprep.subr.bf16.mxu0 0
      %1612 = vmatpush2.bf16.msra.mxu0 0
      %1613 = vmatprep.subr.bf16.mxu0 0
      %1614 = vmatpush2.bf16.msra.mxu0 0
      %1615 = vmatprep.subr.bf16.mxu0 0
      %1616 = vmatpush2.bf16.msra.mxu0 0
      %1617 = vmatprep.mubr.bf16.mxu0 0
      %1618 = vmatmul.mubr.bf16.gmra.mxu0 %v1568
      %v1619 = vpop.f32.mrf.mxu0
      %v1620 = vadd.f32 0.0, %v1619
      %v1621 = vpop.f32.mrf.mxu0
      %v1622 = vpop.f32.mrf.mxu0
      %v1623 = vadd.f32 0.0, %v1622
      %v1624 = vpop.f32.mrf.mxu0
      %1625 = vmatprep.mubr.bf16.mxu0 0
      %1626 = vmatmul.mubr.bf16.gmra.mxu0 %v1571
      %v1627 = vpop.f32.mrf.mxu0
      %v1628 = vadd.f32 0.0, %v1627
      %v1629 = vpop.f32.mrf.mxu0
      %v1630 = vpop.f32.mrf.mxu0
      %v1631 = vadd.f32 0.0, %v1630
      %v1632 = vpop.f32.mrf.mxu0
      %1633 = vmatprep.mubr.bf16.mxu0 0
      %1634 = vmatmul.mubr.bf16.gmra.mxu0 %v1574
      %v1635 = vpop.f32.mrf.mxu0
      %v1636 = vadd.f32 0.0, %v1635
      %v1637 = vpop.f32.mrf.mxu0
      %v1638 = vpop.f32.mrf.mxu0
      %v1639 = vadd.f32 0.0, %v1638
      %v1640 = vpop.f32.mrf.mxu0
      %1641 = vmatprep.mubr.bf16.mxu0 0
      %1642 = vmatmul.mubr.bf16.gmra.mxu0 %v1577
      %v1643 = vpop.f32.mrf.mxu0
      %v1644 = vadd.f32 0.0, %v1643
      %v1645 = vpop.f32.mrf.mxu0
      %v1646 = vpop.f32.mrf.mxu0
      %v1647 = vadd.f32 0.0, %v1646
      %v1648 = vpop.f32.mrf.mxu0
      %1649 = vmatprep.mubr.bf16.mxu0 0
      %1650 = vmatmul.mubr.bf16.gmra.mxu0 %v1580
      %v1651 = vpop.f32.mrf.mxu0
      %v1652 = vadd.f32 0.0, %v1651
      %v1653 = vpop.f32.mrf.mxu0
      %v1654 = vpop.f32.mrf.mxu0
      %v1655 = vadd.f32 0.0, %v1654
      %v1656 = vpop.f32.mrf.mxu0
      %1657 = vdwg.mxu0
      %v1658 = vadd.f32 %v1516, %v1620
      %v1659 = vadd.f32 %v1517, %v1623
      %v1660 = vadd.f32 %v1518, %v1628
      %v1661 = vadd.f32 %v1519, %v1631
      %v1662 = vadd.f32 %v1520, %v1636
      %v1663 = vadd.f32 %v1521, %v1639
      %v1664 = vadd.f32 %v1522, %v1644
      %v1665 = vadd.f32 %v1523, %v1647
      %v1666 = vadd.f32 %v1524, %v1652
      %v1667 = vadd.f32 %v1525, %v1655
      %v1668 = vld [vmem:[%s1529] sm:$0xf]
      %v1669 = vld [vmem:[%s1529 + $0x4] sm:$0xf]
      %v1670 = vld [vmem:[%s1529 + $0x8] sm:$0xf]
      %v1671 = vld [vmem:[%s1529 + $0xc] sm:$0xf]
      %v1672 = vld [vmem:[%s1529 + $0x10] sm:$0xf]
      %v1673 = vld [vmem:[%s1529 + $0x14] sm:$0xf]
      %v1674 = vld [vmem:[%s1529 + $0x18] sm:$0xf]
      %v1675 = vld [vmem:[%s1529 + $0x1c] sm:$0xf]
      %v1676 = vld [vmem:[%s1529 + $0x20] sm:$0xf]
      %v1677 = vld [vmem:[%s1529 + $0x24] sm:$0xf]
      %v1678 = vld [vmem:[%s1529 + $0x28] sm:$0x1]
      %s1679 = scalar_lea.vmem %s1, 20
      %v1680 = vld [vmem:[%s1679] sm:$0x3]
      %v1692 = vunpack.c.l.b16 %v1668
      %v1693 = vunpack.c.l.b16 %v1669
      %v1694 = vunpack.c.l.b16 %v1670
      %v1695 = vunpack.c.l.b16 %v1671
      %v1696 = vunpack.c.l.b16 %v1672
      %v1697 = vunpack.c.l.b16 %v1673
      %v1698 = vunpack.c.l.b16 %v1674
      %v1699 = vunpack.c.l.b16 %v1675
      %v1700 = vunpack.c.l.b16 %v1676
      %v1701 = vunpack.c.l.b16 %v1677
      %v1702 = vunpack.c.l.b16 %v1678
      %v1703 = vpack.c.b16 %v1693, %v1692
      %v1704 = vpack.c.b16 %v1695, %v1694
      %v1705 = vpack.c.b16 %v1697, %v1696
      %v1706 = vpack.c.b16 %v1699, %v1698
      %v1707 = vpack.c.b16 %v1701, %v1700
      %v1708 = vpack.c.b16 %v1702, %v1702
      %v1710 = vshrl.u32 %v1703, 16
      %v1712 = vshll.u32 %v1703, 16
      %v1714 = vrot.slane %v1712, 1
      %v1715 = vor.u32 %v1710, %v1714
      %v1717 = vshll.u32 %v1704, 16
      %v1719 = vrot.slane %v1717, 1
      %v1720 = vsel %vm317, %v1715, %v1719
      %v1721 = vshrl.u32 %v1704, 16
      %v1723 = vor.u32 %v1721, %v1719
      %v1725 = vshll.u32 %v1705, 16
      %v1727 = vrot.slane %v1725, 1
      %v1728 = vsel %vm317, %v1723, %v1727
      %v1729 = vshrl.u32 %v1705, 16
      %v1731 = vor.u32 %v1729, %v1727
      %v1733 = vshll.u32 %v1706, 16
      %v1735 = vrot.slane %v1733, 1
      %v1736 = vsel %vm317, %v1731, %v1735
      %v1737 = vshrl.u32 %v1706, 16
      %v1739 = vor.u32 %v1737, %v1735
      %v1741 = vshll.u32 %v1707, 16
      %v1743 = vrot.slane %v1741, 1
      %v1744 = vsel %vm317, %v1739, %v1743
      %v1745 = vshrl.u32 %v1707, 16
      %v1747 = vor.u32 %v1745, %v1743
      %v1749 = vshll.u32 %v1708, 16
      %v1751 = vrot.slane %v1749, 1
      %v1752 = vsel %vm317, %v1747, %v1751
      %v1754 = vsel %vm362, %v1720, 0
      %v1757 = vsel %vm362, %v1728, 0
      %v1760 = vsel %vm362, %v1736, 0
      %v1763 = vsel %vm362, %v1744, 0
      %v1766 = vsel %vm362, %v1752, 0
      %v1769 = vsel %vm378, %v1680, 0
      %1771 = vmatprep.subr.bf16.mxu0 0
      %1772 = vmatpush1.bf16.msra.mxu0 0
      %1773 = vmatprep.subr.bf16.mxu0 0
      %1774 = vmatpush1.bf16.msra.mxu0 0
      %1775 = vmatprep.subr.bf16.mxu0 0
      %1776 = vmatpush1.bf16.msra.mxu0 0
      %1777 = vmatprep.subr.bf16.mxu0 0
      %1778 = vmatpush1.bf16.msra.mxu0 0
      %1779 = vmatprep.subr.bf16.mxu0 0
      %1780 = vmatpush1.bf16.msra.mxu0 0
      %1781 = vmatprep.subr.bf16.mxu0 0
      %1782 = vmatpush1.bf16.msra.mxu0 0
      %1783 = vmatprep.subr.bf16.mxu0 0
      %1784 = vmatpush1.bf16.msra.mxu0 0
      %1785 = vmatprep.subr.bf16.mxu0 0
      %1786 = vmatpush1.bf16.msra.mxu0 %v1769
      %1787 = vmatprep.subr.bf16.mxu0 0
      %1788 = vmatpush2.bf16.msra.mxu0 0
      %1789 = vmatprep.subr.bf16.mxu0 0
      %1790 = vmatpush2.bf16.msra.mxu0 0
      %1791 = vmatprep.subr.bf16.mxu0 0
      %1792 = vmatpush2.bf16.msra.mxu0 0
      %1793 = vmatprep.subr.bf16.mxu0 0
      %1794 = vmatpush2.bf16.msra.mxu0 0
      %1795 = vmatprep.subr.bf16.mxu0 0
      %1796 = vmatpush2.bf16.msra.mxu0 0
      %1797 = vmatprep.subr.bf16.mxu0 0
      %1798 = vmatpush2.bf16.msra.mxu0 0
      %1799 = vmatprep.subr.bf16.mxu0 0
      %1800 = vmatpush2.bf16.msra.mxu0 0
      %1801 = vmatprep.subr.bf16.mxu0 0
      %1802 = vmatpush2.bf16.msra.mxu0 0
      %1803 = vmatprep.mubr.bf16.mxu0 0
      %1804 = vmatmul.mubr.bf16.gmra.mxu0 %v1754
      %v1805 = vpop.f32.mrf.mxu0
      %v1806 = vadd.f32 0.0, %v1805
      %v1807 = vpop.f32.mrf.mxu0
      %v1808 = vpop.f32.mrf.mxu0
      %v1809 = vadd.f32 0.0, %v1808
      %v1810 = vpop.f32.mrf.mxu0
      %1811 = vmatprep.mubr.bf16.mxu0 0
      %1812 = vmatmul.mubr.bf16.gmra.mxu0 %v1757
      %v1813 = vpop.f32.mrf.mxu0
      %v1814 = vadd.f32 0.0, %v1813
      %v1815 = vpop.f32.mrf.mxu0
      %v1816 = vpop.f32.mrf.mxu0
      %v1817 = vadd.f32 0.0, %v1816
      %v1818 = vpop.f32.mrf.mxu0
      %1819 = vmatprep.mubr.bf16.mxu0 0
      %1820 = vmatmul.mubr.bf16.gmra.mxu0 %v1760
      %v1821 = vpop.f32.mrf.mxu0
      %v1822 = vadd.f32 0.0, %v1821
      %v1823 = vpop.f32.mrf.mxu0
      %v1824 = vpop.f32.mrf.mxu0
      %v1825 = vadd.f32 0.0, %v1824
      %v1826 = vpop.f32.mrf.mxu0
      %1827 = vmatprep.mubr.bf16.mxu0 0
      %1828 = vmatmul.mubr.bf16.gmra.mxu0 %v1763
      %v1829 = vpop.f32.mrf.mxu0
      %v1830 = vadd.f32 0.0, %v1829
      %v1831 = vpop.f32.mrf.mxu0
      %v1832 = vpop.f32.mrf.mxu0
      %v1833 = vadd.f32 0.0, %v1832
      %v1834 = vpop.f32.mrf.mxu0
      %1835 = vmatprep.mubr.bf16.mxu0 0
      %1836 = vmatmul.mubr.bf16.gmra.mxu0 %v1766
      %v1837 = vpop.f32.mrf.mxu0
      %v1838 = vadd.f32 0.0, %v1837
      %v1839 = vpop.f32.mrf.mxu0
      %v1840 = vpop.f32.mrf.mxu0
      %v1841 = vadd.f32 0.0, %v1840
      %v1842 = vpop.f32.mrf.mxu0
      %1843 = vdwg.mxu0
      %v1844 = vadd.f32 %v1658, %v1806
      %v1845 = vadd.f32 %v1659, %v1809
      %v1846 = vadd.f32 %v1660, %v1814
      %v1847 = vadd.f32 %v1661, %v1817
      %v1848 = vadd.f32 %v1662, %v1822
      %v1849 = vadd.f32 %v1663, %v1825
      %v1850 = vadd.f32 %v1664, %v1830
      %v1851 = vadd.f32 %v1665, %v1833
      %v1852 = vadd.f32 %v1666, %v1838
      %v1853 = vadd.f32 %v1667, %v1841
      %v1854 = vld [vmem:[%s1529] sm:$0xe]
      %s1855 = scalar_lea.vmem %s1, 22
      %v1856 = vld [vmem:[%s1855] sm:$0x3]
      %v1858 = vunpack.c.l.b16 %v1854
      %v1859 = vpack.c.b16 %v1693, %v1858
      %v1860 = vrot.slane %v1859, 1
      %v1861 = vrot.slane %v1704, 1
      %v1862 = vsel %vm547, %v1860, %v1861
      %v1863 = vrot.slane %v1705, 1
      %v1864 = vsel %vm547, %v1861, %v1863
      %v1865 = vrot.slane %v1706, 1
      %v1866 = vsel %vm547, %v1863, %v1865
      %v1867 = vrot.slane %v1707, 1
      %v1868 = vsel %vm547, %v1865, %v1867
      %v1869 = vrot.slane %v1708, 1
      %v1870 = vsel %vm547, %v1867, %v1869
      %v1872 = vsel %vm362, %v1862, 0
      %v1875 = vsel %vm362, %v1864, 0
      %v1878 = vsel %vm362, %v1866, 0
      %v1881 = vsel %vm362, %v1868, 0
      %v1884 = vsel %vm362, %v1870, 0
      %v1887 = vsel %vm378, %v1856, 0
      %1889 = vmatprep.subr.bf16.mxu0 0
      %1890 = vmatpush1.bf16.msra.mxu0 0
      %1891 = vmatprep.subr.bf16.mxu0 0
      %1892 = vmatpush1.bf16.msra.mxu0 0
      %1893 = vmatprep.subr.bf16.mxu0 0
      %1894 = vmatpush1.bf16.msra.mxu0 0
      %1895 = vmatprep.subr.bf16.mxu0 0
      %1896 = vmatpush1.bf16.msra.mxu0 0
      %1897 = vmatprep.subr.bf16.mxu0 0
      %1898 = vmatpush1.bf16.msra.mxu0 0
      %1899 = vmatprep.subr.bf16.mxu0 0
      %1900 = vmatpush1.bf16.msra.mxu0 0
      %1901 = vmatprep.subr.bf16.mxu0 0
      %1902 = vmatpush1.bf16.msra.mxu0 0
      %1903 = vmatprep.subr.bf16.mxu0 0
      %1904 = vmatpush1.bf16.msra.mxu0 %v1887
      %1905 = vmatprep.subr.bf16.mxu0 0
      %1906 = vmatpush2.bf16.msra.mxu0 0
      %1907 = vmatprep.subr.bf16.mxu0 0
      %1908 = vmatpush2.bf16.msra.mxu0 0
      %1909 = vmatprep.subr.bf16.mxu0 0
      %1910 = vmatpush2.bf16.msra.mxu0 0
      %1911 = vmatprep.subr.bf16.mxu0 0
      %1912 = vmatpush2.bf16.msra.mxu0 0
      %1913 = vmatprep.subr.bf16.mxu0 0
      %1914 = vmatpush2.bf16.msra.mxu0 0
      %1915 = vmatprep.subr.bf16.mxu0 0
      %1916 = vmatpush2.bf16.msra.mxu0 0
      %1917 = vmatprep.subr.bf16.mxu0 0
      %1918 = vmatpush2.bf16.msra.mxu0 0
      %1919 = vmatprep.subr.bf16.mxu0 0
      %1920 = vmatpush2.bf16.msra.mxu0 0
      %1921 = vmatprep.mubr.bf16.mxu0 0
      %1922 = vmatmul.mubr.bf16.gmra.mxu0 %v1872
      %v1923 = vpop.f32.mrf.mxu0
      %v1924 = vadd.f32 0.0, %v1923
      %v1925 = vpop.f32.mrf.mxu0
      %v1926 = vpop.f32.mrf.mxu0
      %v1927 = vadd.f32 0.0, %v1926
      %v1928 = vpop.f32.mrf.mxu0
      %1929 = vmatprep.mubr.bf16.mxu0 0
      %1930 = vmatmul.mubr.bf16.gmra.mxu0 %v1875
      %v1931 = vpop.f32.mrf.mxu0
      %v1932 = vadd.f32 0.0, %v1931
      %v1933 = vpop.f32.mrf.mxu0
      %v1934 = vpop.f32.mrf.mxu0
      %v1935 = vadd.f32 0.0, %v1934
      %v1936 = vpop.f32.mrf.mxu0
      %1937 = vmatprep.mubr.bf16.mxu0 0
      %1938 = vmatmul.mubr.bf16.gmra.mxu0 %v1878
      %v1939 = vpop.f32.mrf.mxu0
      %v1940 = vadd.f32 0.0, %v1939
      %v1941 = vpop.f32.mrf.mxu0
      %v1942 = vpop.f32.mrf.mxu0
      %v1943 = vadd.f32 0.0, %v1942
      %v1944 = vpop.f32.mrf.mxu0
      %1945 = vmatprep.mubr.bf16.mxu0 0
      %1946 = vmatmul.mubr.bf16.gmra.mxu0 %v1881
      %v1947 = vpop.f32.mrf.mxu0
      %v1948 = vadd.f32 0.0, %v1947
      %v1949 = vpop.f32.mrf.mxu0
      %v1950 = vpop.f32.mrf.mxu0
      %v1951 = vadd.f32 0.0, %v1950
      %v1952 = vpop.f32.mrf.mxu0
      %1953 = vmatprep.mubr.bf16.mxu0 0
      %1954 = vmatmul.mubr.bf16.gmra.mxu0 %v1884
      %v1955 = vpop.f32.mrf.mxu0
      %v1956 = vadd.f32 0.0, %v1955
      %v1957 = vpop.f32.mrf.mxu0
      %v1958 = vpop.f32.mrf.mxu0
      %v1959 = vadd.f32 0.0, %v1958
      %v1960 = vpop.f32.mrf.mxu0
      %1961 = vdwg.mxu0
      %v1962 = vadd.f32 %v1844, %v1924
      %v1963 = vadd.f32 %v1845, %v1927
      %v1964 = vadd.f32 %v1846, %v1932
      %v1965 = vadd.f32 %v1847, %v1935
      %v1966 = vadd.f32 %v1848, %v1940
      %v1967 = vadd.f32 %v1849, %v1943
      %v1968 = vadd.f32 %v1850, %v1948
      %v1969 = vadd.f32 %v1851, %v1951
      %v1970 = vadd.f32 %v1852, %v1956
      %v1971 = vadd.f32 %v1853, %v1959
      %v1972 = vld [vmem:[%s1529 + $0x4] sm:$0xe]
      %v1973 = vld [vmem:[%s1529 + $0x8] sm:$0xf]
      %v1974 = vld [vmem:[%s1529 + $0xc] sm:$0xf]
      %v1975 = vld [vmem:[%s1529 + $0x10] sm:$0xf]
      %v1976 = vld [vmem:[%s1529 + $0x14] sm:$0xf]
      %v1977 = vld [vmem:[%s1529 + $0x18] sm:$0xf]
      %v1978 = vld [vmem:[%s1529 + $0x1c] sm:$0xf]
      %v1979 = vld [vmem:[%s1529 + $0x20] sm:$0xf]
      %v1980 = vld [vmem:[%s1529 + $0x24] sm:$0xf]
      %v1981 = vld [vmem:[%s1529 + $0x28] sm:$0xf]
      %v1982 = vld [vmem:[%s1529 + $0x2c] sm:$0x1]
      %s1983 = scalar_lea.vmem %s1, 24
      %v1984 = vld [vmem:[%s1983] sm:$0x3]
      %v1996 = vunpack.c.l.b16 %v1972
      %v1997 = vunpack.c.l.b16 %v1973
      %v1998 = vunpack.c.l.b16 %v1974
      %v1999 = vunpack.c.l.b16 %v1975
      %v2000 = vunpack.c.l.b16 %v1976
      %v2001 = vunpack.c.l.b16 %v1977
      %v2002 = vunpack.c.l.b16 %v1978
      %v2003 = vunpack.c.l.b16 %v1979
      %v2004 = vunpack.c.l.b16 %v1980
      %v2005 = vunpack.c.l.b16 %v1981
      %v2006 = vunpack.c.l.b16 %v1982
      %v2007 = vpack.c.b16 %v1997, %v1996
      %v2008 = vpack.c.b16 %v1999, %v1998
      %v2009 = vpack.c.b16 %v2001, %v2000
      %v2010 = vpack.c.b16 %v2003, %v2002
      %v2011 = vpack.c.b16 %v2005, %v2004
      %v2012 = vpack.c.b16 %v2006, %v2006
      %v2013 = vrot.slane %v2007, 1
      %v2014 = vrot.slane %v2008, 1
      %v2015 = vsel %vm547, %v2013, %v2014
      %v2016 = vrot.slane %v2009, 1
      %v2017 = vsel %vm547, %v2014, %v2016
      %v2018 = vrot.slane %v2010, 1
      %v2019 = vsel %vm547, %v2016, %v2018
      %v2020 = vrot.slane %v2011, 1
      %v2021 = vsel %vm547, %v2018, %v2020
      %v2022 = vrot.slane %v2012, 1
      %v2023 = vsel %vm547, %v2020, %v2022
      %v2025 = vsel %vm362, %v2015, 0
      %v2028 = vsel %vm362, %v2017, 0
      %v2031 = vsel %vm362, %v2019, 0
      %v2034 = vsel %vm362, %v2021, 0
      %v2037 = vsel %vm362, %v2023, 0
      %v2040 = vsel %vm378, %v1984, 0
      %2042 = vmatprep.subr.bf16.mxu0 0
      %2043 = vmatpush1.bf16.msra.mxu0 0
      %2044 = vmatprep.subr.bf16.mxu0 0
      %2045 = vmatpush1.bf16.msra.mxu0 0
      %2046 = vmatprep.subr.bf16.mxu0 0
      %2047 = vmatpush1.bf16.msra.mxu0 0
      %2048 = vmatprep.subr.bf16.mxu0 0
      %2049 = vmatpush1.bf16.msra.mxu0 0
      %2050 = vmatprep.subr.bf16.mxu0 0
      %2051 = vmatpush1.bf16.msra.mxu0 0
      %2052 = vmatprep.subr.bf16.mxu0 0
      %2053 = vmatpush1.bf16.msra.mxu0 0
      %2054 = vmatprep.subr.bf16.mxu0 0
      %2055 = vmatpush1.bf16.msra.mxu0 0
      %2056 = vmatprep.subr.bf16.mxu0 0
      %2057 = vmatpush1.bf16.msra.mxu0 %v2040
      %2058 = vmatprep.subr.bf16.mxu0 0
      %2059 = vmatpush2.bf16.msra.mxu0 0
      %2060 = vmatprep.subr.bf16.mxu0 0
      %2061 = vmatpush2.bf16.msra.mxu0 0
      %2062 = vmatprep.subr.bf16.mxu0 0
      %2063 = vmatpush2.bf16.msra.mxu0 0
      %2064 = vmatprep.subr.bf16.mxu0 0
      %2065 = vmatpush2.bf16.msra.mxu0 0
      %2066 = vmatprep.subr.bf16.mxu0 0
      %2067 = vmatpush2.bf16.msra.mxu0 0
      %2068 = vmatprep.subr.bf16.mxu0 0
      %2069 = vmatpush2.bf16.msra.mxu0 0
      %2070 = vmatprep.subr.bf16.mxu0 0
      %2071 = vmatpush2.bf16.msra.mxu0 0
      %2072 = vmatprep.subr.bf16.mxu0 0
      %2073 = vmatpush2.bf16.msra.mxu0 0
      %2074 = vmatprep.mubr.bf16.mxu0 0
      %2075 = vmatmul.mubr.bf16.gmra.mxu0 %v2025
      %v2076 = vpop.f32.mrf.mxu0
      %v2077 = vadd.f32 0.0, %v2076
      %v2078 = vpop.f32.mrf.mxu0
      %v2079 = vpop.f32.mrf.mxu0
      %v2080 = vadd.f32 0.0, %v2079
      %v2081 = vpop.f32.mrf.mxu0
      %2082 = vmatprep.mubr.bf16.mxu0 0
      %2083 = vmatmul.mubr.bf16.gmra.mxu0 %v2028
      %v2084 = vpop.f32.mrf.mxu0
      %v2085 = vadd.f32 0.0, %v2084
      %v2086 = vpop.f32.mrf.mxu0
      %v2087 = vpop.f32.mrf.mxu0
      %v2088 = vadd.f32 0.0, %v2087
      %v2089 = vpop.f32.mrf.mxu0
      %2090 = vmatprep.mubr.bf16.mxu0 0
      %2091 = vmatmul.mubr.bf16.gmra.mxu0 %v2031
      %v2092 = vpop.f32.mrf.mxu0
      %v2093 = vadd.f32 0.0, %v2092
      %v2094 = vpop.f32.mrf.mxu0
      %v2095 = vpop.f32.mrf.mxu0
      %v2096 = vadd.f32 0.0, %v2095
      %v2097 = vpop.f32.mrf.mxu0
      %2098 = vmatprep.mubr.bf16.mxu0 0
      %2099 = vmatmul.mubr.bf16.gmra.mxu0 %v2034
      %v2100 = vpop.f32.mrf.mxu0
      %v2101 = vadd.f32 0.0, %v2100
      %v2102 = vpop.f32.mrf.mxu0
      %v2103 = vpop.f32.mrf.mxu0
      %v2104 = vadd.f32 0.0, %v2103
      %v2105 = vpop.f32.mrf.mxu0
      %2106 = vmatprep.mubr.bf16.mxu0 0
      %2107 = vmatmul.mubr.bf16.gmra.mxu0 %v2037
      %v2108 = vpop.f32.mrf.mxu0
      %v2109 = vadd.f32 0.0, %v2108
      %v2110 = vpop.f32.mrf.mxu0
      %v2111 = vpop.f32.mrf.mxu0
      %v2112 = vadd.f32 0.0, %v2111
      %v2113 = vpop.f32.mrf.mxu0
      %2114 = vdwg.mxu0
      %v2115 = vadd.f32 %v1962, %v2077
      %v2116 = vadd.f32 %v1963, %v2080
      %v2117 = vadd.f32 %v1964, %v2085
      %v2118 = vadd.f32 %v1965, %v2088
      %v2119 = vadd.f32 %v1966, %v2093
      %v2120 = vadd.f32 %v1967, %v2096
      %v2121 = vadd.f32 %v1968, %v2101
      %v2122 = vadd.f32 %v1969, %v2104
      %v2123 = vadd.f32 %v1970, %v2109
      %v2124 = vadd.f32 %v1971, %v2112
      %v2125 = vld [vmem:[%s1529 + $0x2c] sm:$0x3]
      %s2126 = scalar_lea.vmem %s1, 26
      %v2127 = vld [vmem:[%s2126] sm:$0x3]
      %v2129 = vunpack.c.l.b16 %v2125
      %v2130 = vpack.c.b16 %v2129, %v2129
      %v2132 = vshrl.u32 %v2007, 16
      %v2134 = vrot.slane %v2132, 1
      %v2135 = vshll.u32 %v2007, 16
      %v2137 = vrot.slane %v2135, 2
      %v2138 = vor.u32 %v2134, %v2137
      %v2140 = vshrl.u32 %v2008, 16
      %v2142 = vrot.slane %v2140, 1
      %v2143 = vshll.u32 %v2008, 16
      %v2145 = vrot.slane %v2143, 2
      %v2146 = vor.u32 %v2142, %v2145
      %v2147 = vsel %vm819, %v2138, %v2146
      %v2149 = vshrl.u32 %v2009, 16
      %v2151 = vrot.slane %v2149, 1
      %v2152 = vshll.u32 %v2009, 16
      %v2154 = vrot.slane %v2152, 2
      %v2155 = vor.u32 %v2151, %v2154
      %v2156 = vsel %vm819, %v2146, %v2155
      %v2158 = vshrl.u32 %v2010, 16
      %v2160 = vrot.slane %v2158, 1
      %v2161 = vshll.u32 %v2010, 16
      %v2163 = vrot.slane %v2161, 2
      %v2164 = vor.u32 %v2160, %v2163
      %v2165 = vsel %vm819, %v2155, %v2164
      %v2167 = vshrl.u32 %v2011, 16
      %v2169 = vrot.slane %v2167, 1
      %v2170 = vshll.u32 %v2011, 16
      %v2172 = vrot.slane %v2170, 2
      %v2173 = vor.u32 %v2169, %v2172
      %v2174 = vsel %vm819, %v2164, %v2173
      %v2176 = vshrl.u32 %v2130, 16
      %v2178 = vrot.slane %v2176, 1
      %v2179 = vshll.u32 %v2130, 16
      %v2181 = vrot.slane %v2179, 2
      %v2182 = vor.u32 %v2178, %v2181
      %v2183 = vsel %vm819, %v2173, %v2182
      %v2185 = vsel %vm362, %v2147, 0
      %v2188 = vsel %vm362, %v2156, 0
      %v2191 = vsel %vm362, %v2165, 0
      %v2194 = vsel %vm362, %v2174, 0
      %v2197 = vsel %vm362, %v2183, 0
      %v2200 = vsel %vm378, %v2127, 0
      %2202 = vmatprep.subr.bf16.mxu0 0
      %2203 = vmatpush1.bf16.msra.mxu0 0
      %2204 = vmatprep.subr.bf16.mxu0 0
      %2205 = vmatpush1.bf16.msra.mxu0 0
      %2206 = vmatprep.subr.bf16.mxu0 0
      %2207 = vmatpush1.bf16.msra.mxu0 0
      %2208 = vmatprep.subr.bf16.mxu0 0
      %2209 = vmatpush1.bf16.msra.mxu0 0
      %2210 = vmatprep.subr.bf16.mxu0 0
      %2211 = vmatpush1.bf16.msra.mxu0 0
      %2212 = vmatprep.subr.bf16.mxu0 0
      %2213 = vmatpush1.bf16.msra.mxu0 0
      %2214 = vmatprep.subr.bf16.mxu0 0
      %2215 = vmatpush1.bf16.msra.mxu0 0
      %2216 = vmatprep.subr.bf16.mxu0 0
      %2217 = vmatpush1.bf16.msra.mxu0 %v2200
      %2218 = vmatprep.subr.bf16.mxu0 0
      %2219 = vmatpush2.bf16.msra.mxu0 0
      %2220 = vmatprep.subr.bf16.mxu0 0
      %2221 = vmatpush2.bf16.msra.mxu0 0
      %2222 = vmatprep.subr.bf16.mxu0 0
      %2223 = vmatpush2.bf16.msra.mxu0 0
      %2224 = vmatprep.subr.bf16.mxu0 0
      %2225 = vmatpush2.bf16.msra.mxu0 0
      %2226 = vmatprep.subr.bf16.mxu0 0
      %2227 = vmatpush2.bf16.msra.mxu0 0
      %2228 = vmatprep.subr.bf16.mxu0 0
      %2229 = vmatpush2.bf16.msra.mxu0 0
      %2230 = vmatprep.subr.bf16.mxu0 0
      %2231 = vmatpush2.bf16.msra.mxu0 0
      %2232 = vmatprep.subr.bf16.mxu0 0
      %2233 = vmatpush2.bf16.msra.mxu0 0
      %2234 = vmatprep.mubr.bf16.mxu0 0
      %2235 = vmatmul.mubr.bf16.gmra.mxu0 %v2185
      %v2236 = vpop.f32.mrf.mxu0
      %v2237 = vadd.f32 0.0, %v2236
      %v2238 = vpop.f32.mrf.mxu0
      %v2239 = vpop.f32.mrf.mxu0
      %v2240 = vadd.f32 0.0, %v2239
      %v2241 = vpop.f32.mrf.mxu0
      %2242 = vmatprep.mubr.bf16.mxu0 0
      %2243 = vmatmul.mubr.bf16.gmra.mxu0 %v2188
      %v2244 = vpop.f32.mrf.mxu0
      %v2245 = vadd.f32 0.0, %v2244
      %v2246 = vpop.f32.mrf.mxu0
      %v2247 = vpop.f32.mrf.mxu0
      %v2248 = vadd.f32 0.0, %v2247
      %v2249 = vpop.f32.mrf.mxu0
      %2250 = vmatprep.mubr.bf16.mxu0 0
      %2251 = vmatmul.mubr.bf16.gmra.mxu0 %v2191
      %v2252 = vpop.f32.mrf.mxu0
      %v2253 = vadd.f32 0.0, %v2252
      %v2254 = vpop.f32.mrf.mxu0
      %v2255 = vpop.f32.mrf.mxu0
      %v2256 = vadd.f32 0.0, %v2255
      %v2257 = vpop.f32.mrf.mxu0
      %2258 = vmatprep.mubr.bf16.mxu0 0
      %2259 = vmatmul.mubr.bf16.gmra.mxu0 %v2194
      %v2260 = vpop.f32.mrf.mxu0
      %v2261 = vadd.f32 0.0, %v2260
      %v2262 = vpop.f32.mrf.mxu0
      %v2263 = vpop.f32.mrf.mxu0
      %v2264 = vadd.f32 0.0, %v2263
      %v2265 = vpop.f32.mrf.mxu0
      %2266 = vmatprep.mubr.bf16.mxu0 0
      %2267 = vmatmul.mubr.bf16.gmra.mxu0 %v2197
      %v2268 = vpop.f32.mrf.mxu0
      %v2269 = vadd.f32 0.0, %v2268
      %v2270 = vpop.f32.mrf.mxu0
      %v2271 = vpop.f32.mrf.mxu0
      %v2272 = vadd.f32 0.0, %v2271
      %v2273 = vpop.f32.mrf.mxu0
      %2274 = vdwg.mxu0
      %v2275 = vadd.f32 %v2115, %v2237
      %v2276 = vadd.f32 %v2116, %v2240
      %v2277 = vadd.f32 %v2117, %v2245
      %v2278 = vadd.f32 %v2118, %v2248
      %v2279 = vadd.f32 %v2119, %v2253
      %v2280 = vadd.f32 %v2120, %v2256
      %v2281 = vadd.f32 %v2121, %v2261
      %v2282 = vadd.f32 %v2122, %v2264
      %v2283 = vadd.f32 %v2123, %v2269
      %v2284 = vadd.f32 %v2124, %v2272
      %v2285 = vld [vmem:[%s1529 + $0x4] sm:$0xc]
      %s2286 = scalar_lea.vmem %s1, 28
      %v2287 = vld [vmem:[%s2286] sm:$0x3]
      %v2289 = vunpack.c.l.b16 %v2285
      %v2290 = vpack.c.b16 %v1997, %v2289
      %v2291 = vrot.slane %v2290, 2
      %v2292 = vrot.slane %v2008, 2
      %v2293 = vsel %vm980, %v2291, %v2292
      %v2294 = vrot.slane %v2009, 2
      %v2295 = vsel %vm980, %v2292, %v2294
      %v2296 = vrot.slane %v2010, 2
      %v2297 = vsel %vm980, %v2294, %v2296
      %v2298 = vrot.slane %v2011, 2
      %v2299 = vsel %vm980, %v2296, %v2298
      %v2300 = vrot.slane %v2130, 2
      %v2301 = vsel %vm980, %v2298, %v2300
      %v2303 = vsel %vm362, %v2293, 0
      %v2306 = vsel %vm362, %v2295, 0
      %v2309 = vsel %vm362, %v2297, 0
      %v2312 = vsel %vm362, %v2299, 0
      %v2315 = vsel %vm362, %v2301, 0
      %v2318 = vsel %vm378, %v2287, 0
      %2320 = vmatprep.subr.bf16.mxu0 0
      %2321 = vmatpush1.bf16.msra.mxu0 0
      %2322 = vmatprep.subr.bf16.mxu0 0
      %2323 = vmatpush1.bf16.msra.mxu0 0
      %2324 = vmatprep.subr.bf16.mxu0 0
      %2325 = vmatpush1.bf16.msra.mxu0 0
      %2326 = vmatprep.subr.bf16.mxu0 0
      %2327 = vmatpush1.bf16.msra.mxu0 0
      %2328 = vmatprep.subr.bf16.mxu0 0
      %2329 = vmatpush1.bf16.msra.mxu0 0
      %2330 = vmatprep.subr.bf16.mxu0 0
      %2331 = vmatpush1.bf16.msra.mxu0 0
      %2332 = vmatprep.subr.bf16.mxu0 0
      %2333 = vmatpush1.bf16.msra.mxu0 0
      %2334 = vmatprep.subr.bf16.mxu0 0
      %2335 = vmatpush1.bf16.msra.mxu0 %v2318
      %2336 = vmatprep.subr.bf16.mxu0 0
      %2337 = vmatpush2.bf16.msra.mxu0 0
      %2338 = vmatprep.subr.bf16.mxu0 0
      %2339 = vmatpush2.bf16.msra.mxu0 0
      %2340 = vmatprep.subr.bf16.mxu0 0
      %2341 = vmatpush2.bf16.msra.mxu0 0
      %2342 = vmatprep.subr.bf16.mxu0 0
      %2343 = vmatpush2.bf16.msra.mxu0 0
      %2344 = vmatprep.subr.bf16.mxu0 0
      %2345 = vmatpush2.bf16.msra.mxu0 0
      %2346 = vmatprep.subr.bf16.mxu0 0
      %2347 = vmatpush2.bf16.msra.mxu0 0
      %2348 = vmatprep.subr.bf16.mxu0 0
      %2349 = vmatpush2.bf16.msra.mxu0 0
      %2350 = vmatprep.subr.bf16.mxu0 0
      %2351 = vmatpush2.bf16.msra.mxu0 0
      %2352 = vmatprep.mubr.bf16.mxu0 0
      %2353 = vmatmul.mubr.bf16.gmra.mxu0 %v2303
      %v2354 = vpop.f32.mrf.mxu0
      %v2355 = vadd.f32 0.0, %v2354
      %v2356 = vpop.f32.mrf.mxu0
      %v2357 = vpop.f32.mrf.mxu0
      %v2358 = vadd.f32 0.0, %v2357
      %v2359 = vpop.f32.mrf.mxu0
      %2360 = vmatprep.mubr.bf16.mxu0 0
      %2361 = vmatmul.mubr.bf16.gmra.mxu0 %v2306
      %v2362 = vpop.f32.mrf.mxu0
      %v2363 = vadd.f32 0.0, %v2362
      %v2364 = vpop.f32.mrf.mxu0
      %v2365 = vpop.f32.mrf.mxu0
      %v2366 = vadd.f32 0.0, %v2365
      %v2367 = vpop.f32.mrf.mxu0
      %2368 = vmatprep.mubr.bf16.mxu0 0
      %2369 = vmatmul.mubr.bf16.gmra.mxu0 %v2309
      %v2370 = vpop.f32.mrf.mxu0
      %v2371 = vadd.f32 0.0, %v2370
      %v2372 = vpop.f32.mrf.mxu0
      %v2373 = vpop.f32.mrf.mxu0
      %v2374 = vadd.f32 0.0, %v2373
      %v2375 = vpop.f32.mrf.mxu0
      %2376 = vmatprep.mubr.bf16.mxu0 0
      %2377 = vmatmul.mubr.bf16.gmra.mxu0 %v2312
      %v2378 = vpop.f32.mrf.mxu0
      %v2379 = vadd.f32 0.0, %v2378
      %v2380 = vpop.f32.mrf.mxu0
      %v2381 = vpop.f32.mrf.mxu0
      %v2382 = vadd.f32 0.0, %v2381
      %v2383 = vpop.f32.mrf.mxu0
      %2384 = vmatprep.mubr.bf16.mxu0 0
      %2385 = vmatmul.mubr.bf16.gmra.mxu0 %v2315
      %v2386 = vpop.f32.mrf.mxu0
      %v2387 = vadd.f32 0.0, %v2386
      %v2388 = vpop.f32.mrf.mxu0
      %v2389 = vpop.f32.mrf.mxu0
      %v2390 = vadd.f32 0.0, %v2389
      %v2391 = vpop.f32.mrf.mxu0
      %2392 = vdwg.mxu0
      %v2393 = vadd.f32 %v2275, %v2355
      %v2394 = vadd.f32 %v2276, %v2358
      %v2395 = vadd.f32 %v2277, %v2363
      %v2396 = vadd.f32 %v2278, %v2366
      %v2397 = vadd.f32 %v2279, %v2371
      %v2398 = vadd.f32 %v2280, %v2374
      %v2399 = vadd.f32 %v2281, %v2379
      %v2400 = vadd.f32 %v2282, %v2382
      %v2401 = vadd.f32 %v2283, %v2387
      %v2402 = vadd.f32 %v2284, %v2390
      %v2403 = vld [vmem:[%s1529 + $0x8] sm:$0xc]
      %v2404 = vld [vmem:[%s1529 + $0xc] sm:$0xf]
      %v2405 = vld [vmem:[%s1529 + $0x10] sm:$0xf]
      %v2406 = vld [vmem:[%s1529 + $0x14] sm:$0xf]
      %v2407 = vld [vmem:[%s1529 + $0x18] sm:$0xf]
      %v2408 = vld [vmem:[%s1529 + $0x1c] sm:$0xf]
      %v2409 = vld [vmem:[%s1529 + $0x20] sm:$0xf]
      %v2410 = vld [vmem:[%s1529 + $0x24] sm:$0xf]
      %v2411 = vld [vmem:[%s1529 + $0x28] sm:$0xf]
      %v2412 = vld [vmem:[%s1529 + $0x2c] sm:$0xf]
      %v2413 = vld [vmem:[%s1529 + $0x30] sm:$0x3]
      %s2414 = scalar_lea.vmem %s1, 30
      %v2415 = vld [vmem:[%s2414] sm:$0x3]
      %v2427 = vunpack.c.l.b16 %v2403
      %v2428 = vunpack.c.l.b16 %v2404
      %v2429 = vunpack.c.l.b16 %v2405
      %v2430 = vunpack.c.l.b16 %v2406
      %v2431 = vunpack.c.l.b16 %v2407
      %v2432 = vunpack.c.l.b16 %v2408
      %v2433 = vunpack.c.l.b16 %v2409
      %v2434 = vunpack.c.l.b16 %v2410
      %v2435 = vunpack.c.l.b16 %v2411
      %v2436 = vunpack.c.l.b16 %v2412
      %v2437 = vunpack.c.l.b16 %v2413
      %v2438 = vpack.c.b16 %v2428, %v2427
      %v2439 = vpack.c.b16 %v2430, %v2429
      %v2440 = vpack.c.b16 %v2432, %v2431
      %v2441 = vpack.c.b16 %v2434, %v2433
      %v2442 = vpack.c.b16 %v2436, %v2435
      %v2443 = vpack.c.b16 %v2437, %v2437
      %v2444 = vrot.slane %v2438, 2
      %v2445 = vrot.slane %v2439, 2
      %v2446 = vsel %vm980, %v2444, %v2445
      %v2447 = vrot.slane %v2440, 2
      %v2448 = vsel %vm980, %v2445, %v2447
      %v2449 = vrot.slane %v2441, 2
      %v2450 = vsel %vm980, %v2447, %v2449
      %v2451 = vrot.slane %v2442, 2
      %v2452 = vsel %vm980, %v2449, %v2451
      %v2453 = vrot.slane %v2443, 2
      %v2454 = vsel %vm980, %v2451, %v2453
      %v2456 = vsel %vm362, %v2446, 0
      %v2459 = vsel %vm362, %v2448, 0
      %v2462 = vsel %vm362, %v2450, 0
      %v2465 = vsel %vm362, %v2452, 0
      %v2468 = vsel %vm362, %v2454, 0
      %v2471 = vsel %vm378, %v2415, 0
      %2473 = vmatprep.subr.bf16.mxu0 0
      %2474 = vmatpush1.bf16.msra.mxu0 0
      %2475 = vmatprep.subr.bf16.mxu0 0
      %2476 = vmatpush1.bf16.msra.mxu0 0
      %2477 = vmatprep.subr.bf16.mxu0 0
      %2478 = vmatpush1.bf16.msra.mxu0 0
      %2479 = vmatprep.subr.bf16.mxu0 0
      %2480 = vmatpush1.bf16.msra.mxu0 0
      %2481 = vmatprep.subr.bf16.mxu0 0
      %2482 = vmatpush1.bf16.msra.mxu0 0
      %2483 = vmatprep.subr.bf16.mxu0 0
      %2484 = vmatpush1.bf16.msra.mxu0 0
      %2485 = vmatprep.subr.bf16.mxu0 0
      %2486 = vmatpush1.bf16.msra.mxu0 0
      %2487 = vmatprep.subr.bf16.mxu0 0
      %2488 = vmatpush1.bf16.msra.mxu0 %v2471
      %2489 = vmatprep.subr.bf16.mxu0 0
      %2490 = vmatpush2.bf16.msra.mxu0 0
      %2491 = vmatprep.subr.bf16.mxu0 0
      %2492 = vmatpush2.bf16.msra.mxu0 0
      %2493 = vmatprep.subr.bf16.mxu0 0
      %2494 = vmatpush2.bf16.msra.mxu0 0
      %2495 = vmatprep.subr.bf16.mxu0 0
      %2496 = vmatpush2.bf16.msra.mxu0 0
      %2497 = vmatprep.subr.bf16.mxu0 0
      %2498 = vmatpush2.bf16.msra.mxu0 0
      %2499 = vmatprep.subr.bf16.mxu0 0
      %2500 = vmatpush2.bf16.msra.mxu0 0
      %2501 = vmatprep.subr.bf16.mxu0 0
      %2502 = vmatpush2.bf16.msra.mxu0 0
      %2503 = vmatprep.subr.bf16.mxu0 0
      %2504 = vmatpush2.bf16.msra.mxu0 0
      %2505 = vmatprep.mubr.bf16.mxu0 0
      %2506 = vmatmul.mubr.bf16.gmra.mxu0 %v2456
      %v2507 = vpop.f32.mrf.mxu0
      %v2508 = vadd.f32 0.0, %v2507
      %v2509 = vpop.f32.mrf.mxu0
      %v2510 = vpop.f32.mrf.mxu0
      %v2511 = vadd.f32 0.0, %v2510
      %v2512 = vpop.f32.mrf.mxu0
      %2513 = vmatprep.mubr.bf16.mxu0 0
      %2514 = vmatmul.mubr.bf16.gmra.mxu0 %v2459
      %v2515 = vpop.f32.mrf.mxu0
      %v2516 = vadd.f32 0.0, %v2515
      %v2517 = vpop.f32.mrf.mxu0
      %v2518 = vpop.f32.mrf.mxu0
      %v2519 = vadd.f32 0.0, %v2518
      %v2520 = vpop.f32.mrf.mxu0
      %2521 = vmatprep.mubr.bf16.mxu0 0
      %2522 = vmatmul.mubr.bf16.gmra.mxu0 %v2462
      %v2523 = vpop.f32.mrf.mxu0
      %v2524 = vadd.f32 0.0, %v2523
      %v2525 = vpop.f32.mrf.mxu0
      %v2526 = vpop.f32.mrf.mxu0
      %v2527 = vadd.f32 0.0, %v2526
      %v2528 = vpop.f32.mrf.mxu0
      %2529 = vmatprep.mubr.bf16.mxu0 0
      %2530 = vmatmul.mubr.bf16.gmra.mxu0 %v2465
      %v2531 = vpop.f32.mrf.mxu0
      %v2532 = vadd.f32 0.0, %v2531
      %v2533 = vpop.f32.mrf.mxu0
      %v2534 = vpop.f32.mrf.mxu0
      %v2535 = vadd.f32 0.0, %v2534
      %v2536 = vpop.f32.mrf.mxu0
      %2537 = vmatprep.mubr.bf16.mxu0 0
      %2538 = vmatmul.mubr.bf16.gmra.mxu0 %v2468
      %v2539 = vpop.f32.mrf.mxu0
      %v2540 = vadd.f32 0.0, %v2539
      %v2541 = vpop.f32.mrf.mxu0
      %v2542 = vpop.f32.mrf.mxu0
      %v2543 = vadd.f32 0.0, %v2542
      %v2544 = vpop.f32.mrf.mxu0
      %2545 = vdwg.mxu0
      %v2546 = vadd.f32 %v2393, %v2508
      %v2547 = vadd.f32 %v2394, %v2511
      %v2548 = vadd.f32 %v2395, %v2516
      %v2549 = vadd.f32 %v2396, %v2519
      %v2550 = vadd.f32 %v2397, %v2524
      %v2551 = vadd.f32 %v2398, %v2527
      %v2552 = vadd.f32 %v2399, %v2532
      %v2553 = vadd.f32 %v2400, %v2535
      %v2554 = vadd.f32 %v2401, %v2540
      %v2555 = vadd.f32 %v2402, %v2543
      %v2556 = vld [vmem:[%s1529 + $0x30] sm:$0x7]
      %s2557 = scalar_lea.vmem %s1, 32
      %v2558 = vld [vmem:[%s2557] sm:$0x3]
      %v2560 = vunpack.c.l.b16 %v2556
      %v2561 = vpack.c.b16 %v2560, %v2560
      %v2563 = vshrl.u32 %v2438, 16
      %v2565 = vrot.slane %v2563, 2
      %v2566 = vshll.u32 %v2438, 16
      %v2568 = vrot.slane %v2566, 3
      %v2569 = vor.u32 %v2565, %v2568
      %v2571 = vshrl.u32 %v2439, 16
      %v2573 = vrot.slane %v2571, 2
      %v2574 = vshll.u32 %v2439, 16
      %v2576 = vrot.slane %v2574, 3
      %v2577 = vor.u32 %v2573, %v2576
      %v2578 = vsel %vm1252, %v2569, %v2577
      %v2580 = vshrl.u32 %v2440, 16
      %v2582 = vrot.slane %v2580, 2
      %v2583 = vshll.u32 %v2440, 16
      %v2585 = vrot.slane %v2583, 3
      %v2586 = vor.u32 %v2582, %v2585
      %v2587 = vsel %vm1252, %v2577, %v2586
      %v2589 = vshrl.u32 %v2441, 16
      %v2591 = vrot.slane %v2589, 2
      %v2592 = vshll.u32 %v2441, 16
      %v2594 = vrot.slane %v2592, 3
      %v2595 = vor.u32 %v2591, %v2594
      %v2596 = vsel %vm1252, %v2586, %v2595
      %v2598 = vshrl.u32 %v2442, 16
      %v2600 = vrot.slane %v2598, 2
      %v2601 = vshll.u32 %v2442, 16
      %v2603 = vrot.slane %v2601, 3
      %v2604 = vor.u32 %v2600, %v2603
      %v2605 = vsel %vm1252, %v2595, %v2604
      %v2607 = vshrl.u32 %v2561, 16
      %v2609 = vrot.slane %v2607, 2
      %v2610 = vshll.u32 %v2561, 16
      %v2612 = vrot.slane %v2610, 3
      %v2613 = vor.u32 %v2609, %v2612
      %v2614 = vsel %vm1252, %v2604, %v2613
      %v2616 = vsel %vm362, %v2578, 0
      %v2619 = vsel %vm362, %v2587, 0
      %v2622 = vsel %vm362, %v2596, 0
      %v2625 = vsel %vm362, %v2605, 0
      %v2628 = vsel %vm362, %v2614, 0
      %v2631 = vsel %vm378, %v2558, 0
      %2633 = vmatprep.subr.bf16.mxu0 0
      %2634 = vmatpush1.bf16.msra.mxu0 0
      %2635 = vmatprep.subr.bf16.mxu0 0
      %2636 = vmatpush1.bf16.msra.mxu0 0
      %2637 = vmatprep.subr.bf16.mxu0 0
      %2638 = vmatpush1.bf16.msra.mxu0 0
      %2639 = vmatprep.subr.bf16.mxu0 0
      %2640 = vmatpush1.bf16.msra.mxu0 0
      %2641 = vmatprep.subr.bf16.mxu0 0
      %2642 = vmatpush1.bf16.msra.mxu0 0
      %2643 = vmatprep.subr.bf16.mxu0 0
      %2644 = vmatpush1.bf16.msra.mxu0 0
      %2645 = vmatprep.subr.bf16.mxu0 0
      %2646 = vmatpush1.bf16.msra.mxu0 0
      %2647 = vmatprep.subr.bf16.mxu0 0
      %2648 = vmatpush1.bf16.msra.mxu0 %v2631
      %2649 = vmatprep.subr.bf16.mxu0 0
      %2650 = vmatpush2.bf16.msra.mxu0 0
      %2651 = vmatprep.subr.bf16.mxu0 0
      %2652 = vmatpush2.bf16.msra.mxu0 0
      %2653 = vmatprep.subr.bf16.mxu0 0
      %2654 = vmatpush2.bf16.msra.mxu0 0
      %2655 = vmatprep.subr.bf16.mxu0 0
      %2656 = vmatpush2.bf16.msra.mxu0 0
      %2657 = vmatprep.subr.bf16.mxu0 0
      %2658 = vmatpush2.bf16.msra.mxu0 0
      %2659 = vmatprep.subr.bf16.mxu0 0
      %2660 = vmatpush2.bf16.msra.mxu0 0
      %2661 = vmatprep.subr.bf16.mxu0 0
      %2662 = vmatpush2.bf16.msra.mxu0 0
      %2663 = vmatprep.subr.bf16.mxu0 0
      %2664 = vmatpush2.bf16.msra.mxu0 0
      %2665 = vmatprep.mubr.bf16.mxu0 0
      %2666 = vmatmul.mubr.bf16.gmra.mxu0 %v2616
      %v2667 = vpop.f32.mrf.mxu0
      %v2668 = vadd.f32 0.0, %v2667
      %v2669 = vpop.f32.mrf.mxu0
      %v2670 = vpop.f32.mrf.mxu0
      %v2671 = vadd.f32 0.0, %v2670
      %v2672 = vpop.f32.mrf.mxu0
      %2673 = vmatprep.mubr.bf16.mxu0 0
      %2674 = vmatmul.mubr.bf16.gmra.mxu0 %v2619
      %v2675 = vpop.f32.mrf.mxu0
      %v2676 = vadd.f32 0.0, %v2675
      %v2677 = vpop.f32.mrf.mxu0
      %v2678 = vpop.f32.mrf.mxu0
      %v2679 = vadd.f32 0.0, %v2678
      %v2680 = vpop.f32.mrf.mxu0
      %2681 = vmatprep.mubr.bf16.mxu0 0
      %2682 = vmatmul.mubr.bf16.gmra.mxu0 %v2622
      %v2683 = vpop.f32.mrf.mxu0
      %v2684 = vadd.f32 0.0, %v2683
      %v2685 = vpop.f32.mrf.mxu0
      %v2686 = vpop.f32.mrf.mxu0
      %v2687 = vadd.f32 0.0, %v2686
      %v2688 = vpop.f32.mrf.mxu0
      %2689 = vmatprep.mubr.bf16.mxu0 0
      %2690 = vmatmul.mubr.bf16.gmra.mxu0 %v2625
      %v2691 = vpop.f32.mrf.mxu0
      %v2692 = vadd.f32 0.0, %v2691
      %v2693 = vpop.f32.mrf.mxu0
      %v2694 = vpop.f32.mrf.mxu0
      %v2695 = vadd.f32 0.0, %v2694
      %v2696 = vpop.f32.mrf.mxu0
      %2697 = vmatprep.mubr.bf16.mxu0 0
      %2698 = vmatmul.mubr.bf16.gmra.mxu0 %v2628
      %v2699 = vpop.f32.mrf.mxu0
      %v2700 = vadd.f32 0.0, %v2699
      %v2701 = vpop.f32.mrf.mxu0
      %v2702 = vpop.f32.mrf.mxu0
      %v2703 = vadd.f32 0.0, %v2702
      %v2704 = vpop.f32.mrf.mxu0
      %2705 = vdwg.mxu0
      %v2706 = vadd.f32 %v2546, %v2668
      %v2707 = vadd.f32 %v2547, %v2671
      %v2708 = vadd.f32 %v2548, %v2676
      %v2709 = vadd.f32 %v2549, %v2679
      %v2710 = vadd.f32 %v2550, %v2684
      %v2711 = vadd.f32 %v2551, %v2687
      %v2712 = vadd.f32 %v2552, %v2692
      %v2713 = vadd.f32 %v2553, %v2695
      %v2714 = vadd.f32 %v2554, %v2700
      %v2715 = vadd.f32 %v2555, %v2703
      %v2716 = vld [vmem:[%s1529 + $0x8] sm:$0x8]
      %s2717 = scalar_lea.vmem %s1, 34
      %v2718 = vld [vmem:[%s2717] sm:$0x3]
      %v2720 = vunpack.c.l.b16 %v2716
      %v2721 = vpack.c.b16 %v2428, %v2720
      %v2722 = vrot.slane %v2721, 3
      %v2723 = vrot.slane %v2439, 3
      %v2724 = vsel %vm1413, %v2722, %v2723
      %v2725 = vrot.slane %v2440, 3
      %v2726 = vsel %vm1413, %v2723, %v2725
      %v2727 = vrot.slane %v2441, 3
      %v2728 = vsel %vm1413, %v2725, %v2727
      %v2729 = vrot.slane %v2442, 3
      %v2730 = vsel %vm1413, %v2727, %v2729
      %v2731 = vrot.slane %v2561, 3
      %v2732 = vsel %vm1413, %v2729, %v2731
      %v2734 = vsel %vm362, %v2724, 0
      %v2737 = vsel %vm362, %v2726, 0
      %v2740 = vsel %vm362, %v2728, 0
      %v2743 = vsel %vm362, %v2730, 0
      %v2746 = vsel %vm362, %v2732, 0
      %v2749 = vsel %vm378, %v2718, 0
      %2751 = vmatprep.subr.bf16.mxu0 0
      %2752 = vmatpush1.bf16.msra.mxu0 0
      %2753 = vmatprep.subr.bf16.mxu0 0
      %2754 = vmatpush1.bf16.msra.mxu0 0
      %2755 = vmatprep.subr.bf16.mxu0 0
      %2756 = vmatpush1.bf16.msra.mxu0 0
      %2757 = vmatprep.subr.bf16.mxu0 0
      %2758 = vmatpush1.bf16.msra.mxu0 0
      %2759 = vmatprep.subr.bf16.mxu0 0
      %2760 = vmatpush1.bf16.msra.mxu0 0
      %2761 = vmatprep.subr.bf16.mxu0 0
      %2762 = vmatpush1.bf16.msra.mxu0 0
      %2763 = vmatprep.subr.bf16.mxu0 0
      %2764 = vmatpush1.bf16.msra.mxu0 0
      %2765 = vmatprep.subr.bf16.mxu0 0
      %2766 = vmatpush1.bf16.msra.mxu0 %v2749
      %2767 = vmatprep.subr.bf16.mxu0 0
      %2768 = vmatpush2.bf16.msra.mxu0 0
      %2769 = vmatprep.subr.bf16.mxu0 0
      %2770 = vmatpush2.bf16.msra.mxu0 0
      %2771 = vmatprep.subr.bf16.mxu0 0
      %2772 = vmatpush2.bf16.msra.mxu0 0
      %2773 = vmatprep.subr.bf16.mxu0 0
      %2774 = vmatpush2.bf16.msra.mxu0 0
      %2775 = vmatprep.subr.bf16.mxu0 0
      %2776 = vmatpush2.bf16.msra.mxu0 0
      %2777 = vmatprep.subr.bf16.mxu0 0
      %2778 = vmatpush2.bf16.msra.mxu0 0
      %2779 = vmatprep.subr.bf16.mxu0 0
      %2780 = vmatpush2.bf16.msra.mxu0 0
      %2781 = vmatprep.subr.bf16.mxu0 0
      %2782 = vmatpush2.bf16.msra.mxu0 0
      %2783 = vmatprep.mubr.bf16.mxu0 0
      %2784 = vmatmul.mubr.bf16.gmra.mxu0 %v2734
      %v2785 = vpop.f32.mrf.mxu0
      %v2786 = vadd.f32 0.0, %v2785
      %v2787 = vpop.f32.mrf.mxu0
      %v2788 = vpop.f32.mrf.mxu0
      %v2789 = vadd.f32 0.0, %v2788
      %v2790 = vpop.f32.mrf.mxu0
      %2791 = vmatprep.mubr.bf16.mxu0 0
      %2792 = vmatmul.mubr.bf16.gmra.mxu0 %v2737
      %v2793 = vpop.f32.mrf.mxu0
      %v2794 = vadd.f32 0.0, %v2793
      %v2795 = vpop.f32.mrf.mxu0
      %v2796 = vpop.f32.mrf.mxu0
      %v2797 = vadd.f32 0.0, %v2796
      %v2798 = vpop.f32.mrf.mxu0
      %2799 = vmatprep.mubr.bf16.mxu0 0
      %2800 = vmatmul.mubr.bf16.gmra.mxu0 %v2740
      %v2801 = vpop.f32.mrf.mxu0
      %v2802 = vadd.f32 0.0, %v2801
      %v2803 = vpop.f32.mrf.mxu0
      %v2804 = vpop.f32.mrf.mxu0
      %v2805 = vadd.f32 0.0, %v2804
      %v2806 = vpop.f32.mrf.mxu0
      %2807 = vmatprep.mubr.bf16.mxu0 0
      %2808 = vmatmul.mubr.bf16.gmra.mxu0 %v2743
      %v2809 = vpop.f32.mrf.mxu0
      %v2810 = vadd.f32 0.0, %v2809
      %v2811 = vpop.f32.mrf.mxu0
      %v2812 = vpop.f32.mrf.mxu0
      %v2813 = vadd.f32 0.0, %v2812
      %v2814 = vpop.f32.mrf.mxu0
      %2815 = vmatprep.mubr.bf16.mxu0 0
      %2816 = vmatmul.mubr.bf16.gmra.mxu0 %v2746
      %v2817 = vpop.f32.mrf.mxu0
      %v2818 = vadd.f32 0.0, %v2817
      %v2819 = vpop.f32.mrf.mxu0
      %v2820 = vpop.f32.mrf.mxu0
      %v2821 = vadd.f32 0.0, %v2820
      %v2822 = vpop.f32.mrf.mxu0
      %2823 = vdwg.mxu0
      %v2824 = vadd.f32 %v2706, %v2786
      %v2825 = vadd.f32 %v2707, %v2789
      %v2826 = vadd.f32 %v2708, %v2794
      %v2827 = vadd.f32 %v2709, %v2797
      %v2828 = vadd.f32 %v2710, %v2802
      %v2829 = vadd.f32 %v2711, %v2805
      %v2830 = vadd.f32 %v2712, %v2810
      %v2831 = vadd.f32 %v2713, %v2813
      %v2832 = vadd.f32 %v2714, %v2818
      %v2833 = vadd.f32 %v2715, %v2821
      %s2834 = sadd.s32 %s22, 2
      %s2835 = smul.u32 %s2834, 13
      %s2836 = smul.addr %s2835, 4
      %s2837 = scalar_lea.vmem %s248, %s2836
      %v2838 = vld [vmem:[%s2837] sm:$0xf]
      %v2839 = vld [vmem:[%s2837 + $0x4] sm:$0xf]
      %v2840 = vld [vmem:[%s2837 + $0x8] sm:$0xf]
      %v2841 = vld [vmem:[%s2837 + $0xc] sm:$0xf]
      %v2842 = vld [vmem:[%s2837 + $0x10] sm:$0xf]
      %v2843 = vld [vmem:[%s2837 + $0x14] sm:$0xf]
      %v2844 = vld [vmem:[%s2837 + $0x18] sm:$0xf]
      %v2845 = vld [vmem:[%s2837 + $0x1c] sm:$0xf]
      %v2846 = vld [vmem:[%s2837 + $0x20] sm:$0xf]
      %v2847 = vld [vmem:[%s2837 + $0x24] sm:$0xf]
      %s2848 = scalar_lea.vmem %s1, 36
      %v2849 = vld [vmem:[%s2848] sm:$0x3]
      %v2860 = vunpack.c.l.b16 %v2838
      %v2861 = vunpack.c.l.b16 %v2839
      %v2862 = vunpack.c.l.b16 %v2840
      %v2863 = vunpack.c.l.b16 %v2841
      %v2864 = vunpack.c.l.b16 %v2842
      %v2865 = vunpack.c.l.b16 %v2843
      %v2866 = vunpack.c.l.b16 %v2844
      %v2867 = vunpack.c.l.b16 %v2845
      %v2868 = vunpack.c.l.b16 %v2846
      %v2869 = vunpack.c.l.b16 %v2847
      %v2870 = vpack.c.b16 %v2861, %v2860
      %v2871 = vpack.c.b16 %v2863, %v2862
      %v2872 = vpack.c.b16 %v2865, %v2864
      %v2873 = vpack.c.b16 %v2867, %v2866
      %v2874 = vpack.c.b16 %v2869, %v2868
      %v2876 = vsel %vm362, %v2870, 0
      %v2879 = vsel %vm362, %v2871, 0
      %v2882 = vsel %vm362, %v2872, 0
      %v2885 = vsel %vm362, %v2873, 0
      %v2888 = vsel %vm362, %v2874, 0
      %v2891 = vsel %vm378, %v2849, 0
      %2893 = vmatprep.subr.bf16.mxu0 0
      %2894 = vmatpush1.bf16.msra.mxu0 0
      %2895 = vmatprep.subr.bf16.mxu0 0
      %2896 = vmatpush1.bf16.msra.mxu0 0
      %2897 = vmatprep.subr.bf16.mxu0 0
      %2898 = vmatpush1.bf16.msra.mxu0 0
      %2899 = vmatprep.subr.bf16.mxu0 0
      %2900 = vmatpush1.bf16.msra.mxu0 0
      %2901 = vmatprep.subr.bf16.mxu0 0
      %2902 = vmatpush1.bf16.msra.mxu0 0
      %2903 = vmatprep.subr.bf16.mxu0 0
      %2904 = vmatpush1.bf16.msra.mxu0 0
      %2905 = vmatprep.subr.bf16.mxu0 0
      %2906 = vmatpush1.bf16.msra.mxu0 0
      %2907 = vmatprep.subr.bf16.mxu0 0
      %2908 = vmatpush1.bf16.msra.mxu0 %v2891
      %2909 = vmatprep.subr.bf16.mxu0 0
      %2910 = vmatpush2.bf16.msra.mxu0 0
      %2911 = vmatprep.subr.bf16.mxu0 0
      %2912 = vmatpush2.bf16.msra.mxu0 0
      %2913 = vmatprep.subr.bf16.mxu0 0
      %2914 = vmatpush2.bf16.msra.mxu0 0
      %2915 = vmatprep.subr.bf16.mxu0 0
      %2916 = vmatpush2.bf16.msra.mxu0 0
      %2917 = vmatprep.subr.bf16.mxu0 0
      %2918 = vmatpush2.bf16.msra.mxu0 0
      %2919 = vmatprep.subr.bf16.mxu0 0
      %2920 = vmatpush2.bf16.msra.mxu0 0
      %2921 = vmatprep.subr.bf16.mxu0 0
      %2922 = vmatpush2.bf16.msra.mxu0 0
      %2923 = vmatprep.subr.bf16.mxu0 0
      %2924 = vmatpush2.bf16.msra.mxu0 0
      %2925 = vmatprep.mubr.bf16.mxu0 0
      %2926 = vmatmul.mubr.bf16.gmra.mxu0 %v2876
      %v2927 = vpop.f32.mrf.mxu0
      %v2928 = vadd.f32 0.0, %v2927
      %v2929 = vpop.f32.mrf.mxu0
      %v2930 = vpop.f32.mrf.mxu0
      %v2931 = vadd.f32 0.0, %v2930
      %v2932 = vpop.f32.mrf.mxu0
      %2933 = vmatprep.mubr.bf16.mxu0 0
      %2934 = vmatmul.mubr.bf16.gmra.mxu0 %v2879
      %v2935 = vpop.f32.mrf.mxu0
      %v2936 = vadd.f32 0.0, %v2935
      %v2937 = vpop.f32.mrf.mxu0
      %v2938 = vpop.f32.mrf.mxu0
      %v2939 = vadd.f32 0.0, %v2938
      %v2940 = vpop.f32.mrf.mxu0
      %2941 = vmatprep.mubr.bf16.mxu0 0
      %2942 = vmatmul.mubr.bf16.gmra.mxu0 %v2882
      %v2943 = vpop.f32.mrf.mxu0
      %v2944 = vadd.f32 0.0, %v2943
      %v2945 = vpop.f32.mrf.mxu0
      %v2946 = vpop.f32.mrf.mxu0
      %v2947 = vadd.f32 0.0, %v2946
      %v2948 = vpop.f32.mrf.mxu0
      %2949 = vmatprep.mubr.bf16.mxu0 0
      %2950 = vmatmul.mubr.bf16.gmra.mxu0 %v2885
      %v2951 = vpop.f32.mrf.mxu0
      %v2952 = vadd.f32 0.0, %v2951
      %v2953 = vpop.f32.mrf.mxu0
      %v2954 = vpop.f32.mrf.mxu0
      %v2955 = vadd.f32 0.0, %v2954
      %v2956 = vpop.f32.mrf.mxu0
      %2957 = vmatprep.mubr.bf16.mxu0 0
      %2958 = vmatmul.mubr.bf16.gmra.mxu0 %v2888
      %v2959 = vpop.f32.mrf.mxu0
      %v2960 = vadd.f32 0.0, %v2959
      %v2961 = vpop.f32.mrf.mxu0
      %v2962 = vpop.f32.mrf.mxu0
      %v2963 = vadd.f32 0.0, %v2962
      %v2964 = vpop.f32.mrf.mxu0
      %2965 = vdwg.mxu0
      %v2966 = vadd.f32 %v2824, %v2928
      %v2967 = vadd.f32 %v2825, %v2931
      %v2968 = vadd.f32 %v2826, %v2936
      %v2969 = vadd.f32 %v2827, %v2939
      %v2970 = vadd.f32 %v2828, %v2944
      %v2971 = vadd.f32 %v2829, %v2947
      %v2972 = vadd.f32 %v2830, %v2952
      %v2973 = vadd.f32 %v2831, %v2955
      %v2974 = vadd.f32 %v2832, %v2960
      %v2975 = vadd.f32 %v2833, %v2963
      %v2976 = vld [vmem:[%s2837] sm:$0xf]
      %v2977 = vld [vmem:[%s2837 + $0x4] sm:$0xf]
      %v2978 = vld [vmem:[%s2837 + $0x8] sm:$0xf]
      %v2979 = vld [vmem:[%s2837 + $0xc] sm:$0xf]
      %v2980 = vld [vmem:[%s2837 + $0x10] sm:$0xf]
      %v2981 = vld [vmem:[%s2837 + $0x14] sm:$0xf]
      %v2982 = vld [vmem:[%s2837 + $0x18] sm:$0xf]
      %v2983 = vld [vmem:[%s2837 + $0x1c] sm:$0xf]
      %v2984 = vld [vmem:[%s2837 + $0x20] sm:$0xf]
      %v2985 = vld [vmem:[%s2837 + $0x24] sm:$0xf]
      %v2986 = vld [vmem:[%s2837 + $0x28] sm:$0x1]
      %s2987 = scalar_lea.vmem %s1, 38
      %v2988 = vld [vmem:[%s2987] sm:$0x3]
      %v3000 = vunpack.c.l.b16 %v2976
      %v3001 = vunpack.c.l.b16 %v2977
      %v3002 = vunpack.c.l.b16 %v2978
      %v3003 = vunpack.c.l.b16 %v2979
      %v3004 = vunpack.c.l.b16 %v2980
      %v3005 = vunpack.c.l.b16 %v2981
      %v3006 = vunpack.c.l.b16 %v2982
      %v3007 = vunpack.c.l.b16 %v2983
      %v3008 = vunpack.c.l.b16 %v2984
      %v3009 = vunpack.c.l.b16 %v2985
      %v3010 = vunpack.c.l.b16 %v2986
      %v3011 = vpack.c.b16 %v3001, %v3000
      %v3012 = vpack.c.b16 %v3003, %v3002
      %v3013 = vpack.c.b16 %v3005, %v3004
      %v3014 = vpack.c.b16 %v3007, %v3006
      %v3015 = vpack.c.b16 %v3009, %v3008
      %v3016 = vpack.c.b16 %v3010, %v3010
      %v3018 = vshrl.u32 %v3011, 16
      %v3020 = vshll.u32 %v3011, 16
      %v3022 = vrot.slane %v3020, 1
      %v3023 = vor.u32 %v3018, %v3022
      %v3025 = vshll.u32 %v3012, 16
      %v3027 = vrot.slane %v3025, 1
      %v3028 = vsel %vm317, %v3023, %v3027
      %v3029 = vshrl.u32 %v3012, 16
      %v3031 = vor.u32 %v3029, %v3027
      %v3033 = vshll.u32 %v3013, 16
      %v3035 = vrot.slane %v3033, 1
      %v3036 = vsel %vm317, %v3031, %v3035
      %v3037 = vshrl.u32 %v3013, 16
      %v3039 = vor.u32 %v3037, %v3035
      %v3041 = vshll.u32 %v3014, 16
      %v3043 = vrot.slane %v3041, 1
      %v3044 = vsel %vm317, %v3039, %v3043
      %v3045 = vshrl.u32 %v3014, 16
      %v3047 = vor.u32 %v3045, %v3043
      %v3049 = vshll.u32 %v3015, 16
      %v3051 = vrot.slane %v3049, 1
      %v3052 = vsel %vm317, %v3047, %v3051
      %v3053 = vshrl.u32 %v3015, 16
      %v3055 = vor.u32 %v3053, %v3051
      %v3057 = vshll.u32 %v3016, 16
      %v3059 = vrot.slane %v3057, 1
      %v3060 = vsel %vm317, %v3055, %v3059
      %v3062 = vsel %vm362, %v3028, 0
      %v3065 = vsel %vm362, %v3036, 0
      %v3068 = vsel %vm362, %v3044, 0
      %v3071 = vsel %vm362, %v3052, 0
      %v3074 = vsel %vm362, %v3060, 0
      %v3077 = vsel %vm378, %v2988, 0
      %3079 = vmatprep.subr.bf16.mxu0 0
      %3080 = vmatpush1.bf16.msra.mxu0 0
      %3081 = vmatprep.subr.bf16.mxu0 0
      %3082 = vmatpush1.bf16.msra.mxu0 0
      %3083 = vmatprep.subr.bf16.mxu0 0
      %3084 = vmatpush1.bf16.msra.mxu0 0
      %3085 = vmatprep.subr.bf16.mxu0 0
      %3086 = vmatpush1.bf16.msra.mxu0 0
      %3087 = vmatprep.subr.bf16.mxu0 0
      %3088 = vmatpush1.bf16.msra.mxu0 0
      %3089 = vmatprep.subr.bf16.mxu0 0
      %3090 = vmatpush1.bf16.msra.mxu0 0
      %3091 = vmatprep.subr.bf16.mxu0 0
      %3092 = vmatpush1.bf16.msra.mxu0 0
      %3093 = vmatprep.subr.bf16.mxu0 0
      %3094 = vmatpush1.bf16.msra.mxu0 %v3077
      %3095 = vmatprep.subr.bf16.mxu0 0
      %3096 = vmatpush2.bf16.msra.mxu0 0
      %3097 = vmatprep.subr.bf16.mxu0 0
      %3098 = vmatpush2.bf16.msra.mxu0 0
      %3099 = vmatprep.subr.bf16.mxu0 0
      %3100 = vmatpush2.bf16.msra.mxu0 0
      %3101 = vmatprep.subr.bf16.mxu0 0
      %3102 = vmatpush2.bf16.msra.mxu0 0
      %3103 = vmatprep.subr.bf16.mxu0 0
      %3104 = vmatpush2.bf16.msra.mxu0 0
      %3105 = vmatprep.subr.bf16.mxu0 0
      %3106 = vmatpush2.bf16.msra.mxu0 0
      %3107 = vmatprep.subr.bf16.mxu0 0
      %3108 = vmatpush2.bf16.msra.mxu0 0
      %3109 = vmatprep.subr.bf16.mxu0 0
      %3110 = vmatpush2.bf16.msra.mxu0 0
      %3111 = vmatprep.mubr.bf16.mxu0 0
      %3112 = vmatmul.mubr.bf16.gmra.mxu0 %v3062
      %v3113 = vpop.f32.mrf.mxu0
      %v3114 = vadd.f32 0.0, %v3113
      %v3115 = vpop.f32.mrf.mxu0
      %v3116 = vpop.f32.mrf.mxu0
      %v3117 = vadd.f32 0.0, %v3116
      %v3118 = vpop.f32.mrf.mxu0
      %3119 = vmatprep.mubr.bf16.mxu0 0
      %3120 = vmatmul.mubr.bf16.gmra.mxu0 %v3065
      %v3121 = vpop.f32.mrf.mxu0
      %v3122 = vadd.f32 0.0, %v3121
      %v3123 = vpop.f32.mrf.mxu0
      %v3124 = vpop.f32.mrf.mxu0
      %v3125 = vadd.f32 0.0, %v3124
      %v3126 = vpop.f32.mrf.mxu0
      %3127 = vmatprep.mubr.bf16.mxu0 0
      %3128 = vmatmul.mubr.bf16.gmra.mxu0 %v3068
      %v3129 = vpop.f32.mrf.mxu0
      %v3130 = vadd.f32 0.0, %v3129
      %v3131 = vpop.f32.mrf.mxu0
      %v3132 = vpop.f32.mrf.mxu0
      %v3133 = vadd.f32 0.0, %v3132
      %v3134 = vpop.f32.mrf.mxu0
      %3135 = vmatprep.mubr.bf16.mxu0 0
      %3136 = vmatmul.mubr.bf16.gmra.mxu0 %v3071
      %v3137 = vpop.f32.mrf.mxu0
      %v3138 = vadd.f32 0.0, %v3137
      %v3139 = vpop.f32.mrf.mxu0
      %v3140 = vpop.f32.mrf.mxu0
      %v3141 = vadd.f32 0.0, %v3140
      %v3142 = vpop.f32.mrf.mxu0
      %3143 = vmatprep.mubr.bf16.mxu0 0
      %3144 = vmatmul.mubr.bf16.gmra.mxu0 %v3074
      %v3145 = vpop.f32.mrf.mxu0
      %v3146 = vadd.f32 0.0, %v3145
      %v3147 = vpop.f32.mrf.mxu0
      %v3148 = vpop.f32.mrf.mxu0
      %v3149 = vadd.f32 0.0, %v3148
      %v3150 = vpop.f32.mrf.mxu0
      %3151 = vdwg.mxu0
      %v3152 = vadd.f32 %v2966, %v3114
      %v3153 = vadd.f32 %v2967, %v3117
      %v3154 = vadd.f32 %v2968, %v3122
      %v3155 = vadd.f32 %v2969, %v3125
      %v3156 = vadd.f32 %v2970, %v3130
      %v3157 = vadd.f32 %v2971, %v3133
      %v3158 = vadd.f32 %v2972, %v3138
      %v3159 = vadd.f32 %v2973, %v3141
      %v3160 = vadd.f32 %v2974, %v3146
      %v3161 = vadd.f32 %v2975, %v3149
      %v3162 = vld [vmem:[%s2837] sm:$0xe]
      %s3163 = scalar_lea.vmem %s1, 40
      %v3164 = vld [vmem:[%s3163] sm:$0x3]
      %v3166 = vunpack.c.l.b16 %v3162
      %v3167 = vpack.c.b16 %v3001, %v3166
      %v3168 = vrot.slane %v3167, 1
      %v3169 = vrot.slane %v3012, 1
      %v3170 = vsel %vm547, %v3168, %v3169
      %v3171 = vrot.slane %v3013, 1
      %v3172 = vsel %vm547, %v3169, %v3171
      %v3173 = vrot.slane %v3014, 1
      %v3174 = vsel %vm547, %v3171, %v3173
      %v3175 = vrot.slane %v3015, 1
      %v3176 = vsel %vm547, %v3173, %v3175
      %v3177 = vrot.slane %v3016, 1
      %v3178 = vsel %vm547, %v3175, %v3177
      %v3180 = vsel %vm362, %v3170, 0
      %v3183 = vsel %vm362, %v3172, 0
      %v3186 = vsel %vm362, %v3174, 0
      %v3189 = vsel %vm362, %v3176, 0
      %v3192 = vsel %vm362, %v3178, 0
      %v3195 = vsel %vm378, %v3164, 0
      %3197 = vmatprep.subr.bf16.mxu0 0
      %3198 = vmatpush1.bf16.msra.mxu0 0
      %3199 = vmatprep.subr.bf16.mxu0 0
      %3200 = vmatpush1.bf16.msra.mxu0 0
      %3201 = vmatprep.subr.bf16.mxu0 0
      %3202 = vmatpush1.bf16.msra.mxu0 0
      %3203 = vmatprep.subr.bf16.mxu0 0
      %3204 = vmatpush1.bf16.msra.mxu0 0
      %3205 = vmatprep.subr.bf16.mxu0 0
      %3206 = vmatpush1.bf16.msra.mxu0 0
      %3207 = vmatprep.subr.bf16.mxu0 0
      %3208 = vmatpush1.bf16.msra.mxu0 0
      %3209 = vmatprep.subr.bf16.mxu0 0
      %3210 = vmatpush1.bf16.msra.mxu0 0
      %3211 = vmatprep.subr.bf16.mxu0 0
      %3212 = vmatpush1.bf16.msra.mxu0 %v3195
      %3213 = vmatprep.subr.bf16.mxu0 0
      %3214 = vmatpush2.bf16.msra.mxu0 0
      %3215 = vmatprep.subr.bf16.mxu0 0
      %3216 = vmatpush2.bf16.msra.mxu0 0
      %3217 = vmatprep.subr.bf16.mxu0 0
      %3218 = vmatpush2.bf16.msra.mxu0 0
      %3219 = vmatprep.subr.bf16.mxu0 0
      %3220 = vmatpush2.bf16.msra.mxu0 0
      %3221 = vmatprep.subr.bf16.mxu0 0
      %3222 = vmatpush2.bf16.msra.mxu0 0
      %3223 = vmatprep.subr.bf16.mxu0 0
      %3224 = vmatpush2.bf16.msra.mxu0 0
      %3225 = vmatprep.subr.bf16.mxu0 0
      %3226 = vmatpush2.bf16.msra.mxu0 0
      %3227 = vmatprep.subr.bf16.mxu0 0
      %3228 = vmatpush2.bf16.msra.mxu0 0
      %3229 = vmatprep.mubr.bf16.mxu0 0
      %3230 = vmatmul.mubr.bf16.gmra.mxu0 %v3180
      %v3231 = vpop.f32.mrf.mxu0
      %v3232 = vadd.f32 0.0, %v3231
      %v3233 = vpop.f32.mrf.mxu0
      %v3234 = vpop.f32.mrf.mxu0
      %v3235 = vadd.f32 0.0, %v3234
      %v3236 = vpop.f32.mrf.mxu0
      %3237 = vmatprep.mubr.bf16.mxu0 0
      %3238 = vmatmul.mubr.bf16.gmra.mxu0 %v3183
      %v3239 = vpop.f32.mrf.mxu0
      %v3240 = vadd.f32 0.0, %v3239
      %v3241 = vpop.f32.mrf.mxu0
      %v3242 = vpop.f32.mrf.mxu0
      %v3243 = vadd.f32 0.0, %v3242
      %v3244 = vpop.f32.mrf.mxu0
      %3245 = vmatprep.mubr.bf16.mxu0 0
      %3246 = vmatmul.mubr.bf16.gmra.mxu0 %v3186
      %v3247 = vpop.f32.mrf.mxu0
      %v3248 = vadd.f32 0.0, %v3247
      %v3249 = vpop.f32.mrf.mxu0
      %v3250 = vpop.f32.mrf.mxu0
      %v3251 = vadd.f32 0.0, %v3250
      %v3252 = vpop.f32.mrf.mxu0
      %3253 = vmatprep.mubr.bf16.mxu0 0
      %3254 = vmatmul.mubr.bf16.gmra.mxu0 %v3189
      %v3255 = vpop.f32.mrf.mxu0
      %v3256 = vadd.f32 0.0, %v3255
      %v3257 = vpop.f32.mrf.mxu0
      %v3258 = vpop.f32.mrf.mxu0
      %v3259 = vadd.f32 0.0, %v3258
      %v3260 = vpop.f32.mrf.mxu0
      %3261 = vmatprep.mubr.bf16.mxu0 0
      %3262 = vmatmul.mubr.bf16.gmra.mxu0 %v3192
      %v3263 = vpop.f32.mrf.mxu0
      %v3264 = vadd.f32 0.0, %v3263
      %v3265 = vpop.f32.mrf.mxu0
      %v3266 = vpop.f32.mrf.mxu0
      %v3267 = vadd.f32 0.0, %v3266
      %v3268 = vpop.f32.mrf.mxu0
      %3269 = vdwg.mxu0
      %v3270 = vadd.f32 %v3152, %v3232
      %v3271 = vadd.f32 %v3153, %v3235
      %v3272 = vadd.f32 %v3154, %v3240
      %v3273 = vadd.f32 %v3155, %v3243
      %v3274 = vadd.f32 %v3156, %v3248
      %v3275 = vadd.f32 %v3157, %v3251
      %v3276 = vadd.f32 %v3158, %v3256
      %v3277 = vadd.f32 %v3159, %v3259
      %v3278 = vadd.f32 %v3160, %v3264
      %v3279 = vadd.f32 %v3161, %v3267
      %v3280 = vld [vmem:[%s2837 + $0x4] sm:$0xe]
      %v3281 = vld [vmem:[%s2837 + $0x8] sm:$0xf]
      %v3282 = vld [vmem:[%s2837 + $0xc] sm:$0xf]
      %v3283 = vld [vmem:[%s2837 + $0x10] sm:$0xf]
      %v3284 = vld [vmem:[%s2837 + $0x14] sm:$0xf]
      %v3285 = vld [vmem:[%s2837 + $0x18] sm:$0xf]
      %v3286 = vld [vmem:[%s2837 + $0x1c] sm:$0xf]
      %v3287 = vld [vmem:[%s2837 + $0x20] sm:$0xf]
      %v3288 = vld [vmem:[%s2837 + $0x24] sm:$0xf]
      %v3289 = vld [vmem:[%s2837 + $0x28] sm:$0xf]
      %v3290 = vld [vmem:[%s2837 + $0x2c] sm:$0x1]
      %s3291 = scalar_lea.vmem %s1, 42
      %v3292 = vld [vmem:[%s3291] sm:$0x3]
      %v3304 = vunpack.c.l.b16 %v3280
      %v3305 = vunpack.c.l.b16 %v3281
      %v3306 = vunpack.c.l.b16 %v3282
      %v3307 = vunpack.c.l.b16 %v3283
      %v3308 = vunpack.c.l.b16 %v3284
      %v3309 = vunpack.c.l.b16 %v3285
      %v3310 = vunpack.c.l.b16 %v3286
      %v3311 = vunpack.c.l.b16 %v3287
      %v3312 = vunpack.c.l.b16 %v3288
      %v3313 = vunpack.c.l.b16 %v3289
      %v3314 = vunpack.c.l.b16 %v3290
      %v3315 = vpack.c.b16 %v3305, %v3304
      %v3316 = vpack.c.b16 %v3307, %v3306
      %v3317 = vpack.c.b16 %v3309, %v3308
      %v3318 = vpack.c.b16 %v3311, %v3310
      %v3319 = vpack.c.b16 %v3313, %v3312
      %v3320 = vpack.c.b16 %v3314, %v3314
      %v3321 = vrot.slane %v3315, 1
      %v3322 = vrot.slane %v3316, 1
      %v3323 = vsel %vm547, %v3321, %v3322
      %v3324 = vrot.slane %v3317, 1
      %v3325 = vsel %vm547, %v3322, %v3324
      %v3326 = vrot.slane %v3318, 1
      %v3327 = vsel %vm547, %v3324, %v3326
      %v3328 = vrot.slane %v3319, 1
      %v3329 = vsel %vm547, %v3326, %v3328
      %v3330 = vrot.slane %v3320, 1
      %v3331 = vsel %vm547, %v3328, %v3330
      %v3333 = vsel %vm362, %v3323, 0
      %v3336 = vsel %vm362, %v3325, 0
      %v3339 = vsel %vm362, %v3327, 0
      %v3342 = vsel %vm362, %v3329, 0
      %v3345 = vsel %vm362, %v3331, 0
      %v3348 = vsel %vm378, %v3292, 0
      %3350 = vmatprep.subr.bf16.mxu0 0
      %3351 = vmatpush1.bf16.msra.mxu0 0
      %3352 = vmatprep.subr.bf16.mxu0 0
      %3353 = vmatpush1.bf16.msra.mxu0 0
      %3354 = vmatprep.subr.bf16.mxu0 0
      %3355 = vmatpush1.bf16.msra.mxu0 0
      %3356 = vmatprep.subr.bf16.mxu0 0
      %3357 = vmatpush1.bf16.msra.mxu0 0
      %3358 = vmatprep.subr.bf16.mxu0 0
      %3359 = vmatpush1.bf16.msra.mxu0 0
      %3360 = vmatprep.subr.bf16.mxu0 0
      %3361 = vmatpush1.bf16.msra.mxu0 0
      %3362 = vmatprep.subr.bf16.mxu0 0
      %3363 = vmatpush1.bf16.msra.mxu0 0
      %3364 = vmatprep.subr.bf16.mxu0 0
      %3365 = vmatpush1.bf16.msra.mxu0 %v3348
      %3366 = vmatprep.subr.bf16.mxu0 0
      %3367 = vmatpush2.bf16.msra.mxu0 0
      %3368 = vmatprep.subr.bf16.mxu0 0
      %3369 = vmatpush2.bf16.msra.mxu0 0
      %3370 = vmatprep.subr.bf16.mxu0 0
      %3371 = vmatpush2.bf16.msra.mxu0 0
      %3372 = vmatprep.subr.bf16.mxu0 0
      %3373 = vmatpush2.bf16.msra.mxu0 0
      %3374 = vmatprep.subr.bf16.mxu0 0
      %3375 = vmatpush2.bf16.msra.mxu0 0
      %3376 = vmatprep.subr.bf16.mxu0 0
      %3377 = vmatpush2.bf16.msra.mxu0 0
      %3378 = vmatprep.subr.bf16.mxu0 0
      %3379 = vmatpush2.bf16.msra.mxu0 0
      %3380 = vmatprep.subr.bf16.mxu0 0
      %3381 = vmatpush2.bf16.msra.mxu0 0
      %3382 = vmatprep.mubr.bf16.mxu0 0
      %3383 = vmatmul.mubr.bf16.gmra.mxu0 %v3333
      %v3384 = vpop.f32.mrf.mxu0
      %v3385 = vadd.f32 0.0, %v3384
      %v3386 = vpop.f32.mrf.mxu0
      %v3387 = vpop.f32.mrf.mxu0
      %v3388 = vadd.f32 0.0, %v3387
      %v3389 = vpop.f32.mrf.mxu0
      %3390 = vmatprep.mubr.bf16.mxu0 0
      %3391 = vmatmul.mubr.bf16.gmra.mxu0 %v3336
      %v3392 = vpop.f32.mrf.mxu0
      %v3393 = vadd.f32 0.0, %v3392
      %v3394 = vpop.f32.mrf.mxu0
      %v3395 = vpop.f32.mrf.mxu0
      %v3396 = vadd.f32 0.0, %v3395
      %v3397 = vpop.f32.mrf.mxu0
      %3398 = vmatprep.mubr.bf16.mxu0 0
      %3399 = vmatmul.mubr.bf16.gmra.mxu0 %v3339
      %v3400 = vpop.f32.mrf.mxu0
      %v3401 = vadd.f32 0.0, %v3400
      %v3402 = vpop.f32.mrf.mxu0
      %v3403 = vpop.f32.mrf.mxu0
      %v3404 = vadd.f32 0.0, %v3403
      %v3405 = vpop.f32.mrf.mxu0
      %3406 = vmatprep.mubr.bf16.mxu0 0
      %3407 = vmatmul.mubr.bf16.gmra.mxu0 %v3342
      %v3408 = vpop.f32.mrf.mxu0
      %v3409 = vadd.f32 0.0, %v3408
      %v3410 = vpop.f32.mrf.mxu0
      %v3411 = vpop.f32.mrf.mxu0
      %v3412 = vadd.f32 0.0, %v3411
      %v3413 = vpop.f32.mrf.mxu0
      %3414 = vmatprep.mubr.bf16.mxu0 0
      %3415 = vmatmul.mubr.bf16.gmra.mxu0 %v3345
      %v3416 = vpop.f32.mrf.mxu0
      %v3417 = vadd.f32 0.0, %v3416
      %v3418 = vpop.f32.mrf.mxu0
      %v3419 = vpop.f32.mrf.mxu0
      %v3420 = vadd.f32 0.0, %v3419
      %v3421 = vpop.f32.mrf.mxu0
      %3422 = vdwg.mxu0
      %v3423 = vadd.f32 %v3270, %v3385
      %v3424 = vadd.f32 %v3271, %v3388
      %v3425 = vadd.f32 %v3272, %v3393
      %v3426 = vadd.f32 %v3273, %v3396
      %v3427 = vadd.f32 %v3274, %v3401
      %v3428 = vadd.f32 %v3275, %v3404
      %v3429 = vadd.f32 %v3276, %v3409
      %v3430 = vadd.f32 %v3277, %v3412
      %v3431 = vadd.f32 %v3278, %v3417
      %v3432 = vadd.f32 %v3279, %v3420
      %v3433 = vld [vmem:[%s2837 + $0x2c] sm:$0x3]
      %s3434 = scalar_lea.vmem %s1, 44
      %v3435 = vld [vmem:[%s3434] sm:$0x3]
      %v3437 = vunpack.c.l.b16 %v3433
      %v3438 = vpack.c.b16 %v3437, %v3437
      %v3440 = vshrl.u32 %v3315, 16
      %v3442 = vrot.slane %v3440, 1
      %v3443 = vshll.u32 %v3315, 16
      %v3445 = vrot.slane %v3443, 2
      %v3446 = vor.u32 %v3442, %v3445
      %v3448 = vshrl.u32 %v3316, 16
      %v3450 = vrot.slane %v3448, 1
      %v3451 = vshll.u32 %v3316, 16
      %v3453 = vrot.slane %v3451, 2
      %v3454 = vor.u32 %v3450, %v3453
      %v3455 = vsel %vm819, %v3446, %v3454
      %v3457 = vshrl.u32 %v3317, 16
      %v3459 = vrot.slane %v3457, 1
      %v3460 = vshll.u32 %v3317, 16
      %v3462 = vrot.slane %v3460, 2
      %v3463 = vor.u32 %v3459, %v3462
      %v3464 = vsel %vm819, %v3454, %v3463
      %v3466 = vshrl.u32 %v3318, 16
      %v3468 = vrot.slane %v3466, 1
      %v3469 = vshll.u32 %v3318, 16
      %v3471 = vrot.slane %v3469, 2
      %v3472 = vor.u32 %v3468, %v3471
      %v3473 = vsel %vm819, %v3463, %v3472
      %v3475 = vshrl.u32 %v3319, 16
      %v3477 = vrot.slane %v3475, 1
      %v3478 = vshll.u32 %v3319, 16
      %v3480 = vrot.slane %v3478, 2
      %v3481 = vor.u32 %v3477, %v3480
      %v3482 = vsel %vm819, %v3472, %v3481
      %v3484 = vshrl.u32 %v3438, 16
      %v3486 = vrot.slane %v3484, 1
      %v3487 = vshll.u32 %v3438, 16
      %v3489 = vrot.slane %v3487, 2
      %v3490 = vor.u32 %v3486, %v3489
      %v3491 = vsel %vm819, %v3481, %v3490
      %v3493 = vsel %vm362, %v3455, 0
      %v3496 = vsel %vm362, %v3464, 0
      %v3499 = vsel %vm362, %v3473, 0
      %v3502 = vsel %vm362, %v3482, 0
      %v3505 = vsel %vm362, %v3491, 0
      %v3508 = vsel %vm378, %v3435, 0
      %3510 = vmatprep.subr.bf16.mxu0 0
      %3511 = vmatpush1.bf16.msra.mxu0 0
      %3512 = vmatprep.subr.bf16.mxu0 0
      %3513 = vmatpush1.bf16.msra.mxu0 0
      %3514 = vmatprep.subr.bf16.mxu0 0
      %3515 = vmatpush1.bf16.msra.mxu0 0
      %3516 = vmatprep.subr.bf16.mxu0 0
      %3517 = vmatpush1.bf16.msra.mxu0 0
      %3518 = vmatprep.subr.bf16.mxu0 0
      %3519 = vmatpush1.bf16.msra.mxu0 0
      %3520 = vmatprep.subr.bf16.mxu0 0
      %3521 = vmatpush1.bf16.msra.mxu0 0
      %3522 = vmatprep.subr.bf16.mxu0 0
      %3523 = vmatpush1.bf16.msra.mxu0 0
      %3524 = vmatprep.subr.bf16.mxu0 0
      %3525 = vmatpush1.bf16.msra.mxu0 %v3508
      %3526 = vmatprep.subr.bf16.mxu0 0
      %3527 = vmatpush2.bf16.msra.mxu0 0
      %3528 = vmatprep.subr.bf16.mxu0 0
      %3529 = vmatpush2.bf16.msra.mxu0 0
      %3530 = vmatprep.subr.bf16.mxu0 0
      %3531 = vmatpush2.bf16.msra.mxu0 0
      %3532 = vmatprep.subr.bf16.mxu0 0
      %3533 = vmatpush2.bf16.msra.mxu0 0
      %3534 = vmatprep.subr.bf16.mxu0 0
      %3535 = vmatpush2.bf16.msra.mxu0 0
      %3536 = vmatprep.subr.bf16.mxu0 0
      %3537 = vmatpush2.bf16.msra.mxu0 0
      %3538 = vmatprep.subr.bf16.mxu0 0
      %3539 = vmatpush2.bf16.msra.mxu0 0
      %3540 = vmatprep.subr.bf16.mxu0 0
      %3541 = vmatpush2.bf16.msra.mxu0 0
      %3542 = vmatprep.mubr.bf16.mxu0 0
      %3543 = vmatmul.mubr.bf16.gmra.mxu0 %v3493
      %v3544 = vpop.f32.mrf.mxu0
      %v3545 = vadd.f32 0.0, %v3544
      %v3546 = vpop.f32.mrf.mxu0
      %v3547 = vpop.f32.mrf.mxu0
      %v3548 = vadd.f32 0.0, %v3547
      %v3549 = vpop.f32.mrf.mxu0
      %3550 = vmatprep.mubr.bf16.mxu0 0
      %3551 = vmatmul.mubr.bf16.gmra.mxu0 %v3496
      %v3552 = vpop.f32.mrf.mxu0
      %v3553 = vadd.f32 0.0, %v3552
      %v3554 = vpop.f32.mrf.mxu0
      %v3555 = vpop.f32.mrf.mxu0
      %v3556 = vadd.f32 0.0, %v3555
      %v3557 = vpop.f32.mrf.mxu0
      %3558 = vmatprep.mubr.bf16.mxu0 0
      %3559 = vmatmul.mubr.bf16.gmra.mxu0 %v3499
      %v3560 = vpop.f32.mrf.mxu0
      %v3561 = vadd.f32 0.0, %v3560
      %v3562 = vpop.f32.mrf.mxu0
      %v3563 = vpop.f32.mrf.mxu0
      %v3564 = vadd.f32 0.0, %v3563
      %v3565 = vpop.f32.mrf.mxu0
      %3566 = vmatprep.mubr.bf16.mxu0 0
      %3567 = vmatmul.mubr.bf16.gmra.mxu0 %v3502
      %v3568 = vpop.f32.mrf.mxu0
      %v3569 = vadd.f32 0.0, %v3568
      %v3570 = vpop.f32.mrf.mxu0
      %v3571 = vpop.f32.mrf.mxu0
      %v3572 = vadd.f32 0.0, %v3571
      %v3573 = vpop.f32.mrf.mxu0
      %3574 = vmatprep.mubr.bf16.mxu0 0
      %3575 = vmatmul.mubr.bf16.gmra.mxu0 %v3505
      %v3576 = vpop.f32.mrf.mxu0
      %v3577 = vadd.f32 0.0, %v3576
      %v3578 = vpop.f32.mrf.mxu0
      %v3579 = vpop.f32.mrf.mxu0
      %v3580 = vadd.f32 0.0, %v3579
      %v3581 = vpop.f32.mrf.mxu0
      %3582 = vdwg.mxu0
      %v3583 = vadd.f32 %v3423, %v3545
      %v3584 = vadd.f32 %v3424, %v3548
      %v3585 = vadd.f32 %v3425, %v3553
      %v3586 = vadd.f32 %v3426, %v3556
      %v3587 = vadd.f32 %v3427, %v3561
      %v3588 = vadd.f32 %v3428, %v3564
      %v3589 = vadd.f32 %v3429, %v3569
      %v3590 = vadd.f32 %v3430, %v3572
      %v3591 = vadd.f32 %v3431, %v3577
      %v3592 = vadd.f32 %v3432, %v3580
      %v3593 = vld [vmem:[%s2837 + $0x4] sm:$0xc]
      %s3594 = scalar_lea.vmem %s1, 46
      %v3595 = vld [vmem:[%s3594] sm:$0x3]
      %v3597 = vunpack.c.l.b16 %v3593
      %v3598 = vpack.c.b16 %v3305, %v3597
      %v3599 = vrot.slane %v3598, 2
      %v3600 = vrot.slane %v3316, 2
      %v3601 = vsel %vm980, %v3599, %v3600
      %v3602 = vrot.slane %v3317, 2
      %v3603 = vsel %vm980, %v3600, %v3602
      %v3604 = vrot.slane %v3318, 2
      %v3605 = vsel %vm980, %v3602, %v3604
      %v3606 = vrot.slane %v3319, 2
      %v3607 = vsel %vm980, %v3604, %v3606
      %v3608 = vrot.slane %v3438, 2
      %v3609 = vsel %vm980, %v3606, %v3608
      %v3611 = vsel %vm362, %v3601, 0
      %v3614 = vsel %vm362, %v3603, 0
      %v3617 = vsel %vm362, %v3605, 0
      %v3620 = vsel %vm362, %v3607, 0
      %v3623 = vsel %vm362, %v3609, 0
      %v3626 = vsel %vm378, %v3595, 0
      %3628 = vmatprep.subr.bf16.mxu0 0
      %3629 = vmatpush1.bf16.msra.mxu0 0
      %3630 = vmatprep.subr.bf16.mxu0 0
      %3631 = vmatpush1.bf16.msra.mxu0 0
      %3632 = vmatprep.subr.bf16.mxu0 0
      %3633 = vmatpush1.bf16.msra.mxu0 0
      %3634 = vmatprep.subr.bf16.mxu0 0
      %3635 = vmatpush1.bf16.msra.mxu0 0
      %3636 = vmatprep.subr.bf16.mxu0 0
      %3637 = vmatpush1.bf16.msra.mxu0 0
      %3638 = vmatprep.subr.bf16.mxu0 0
      %3639 = vmatpush1.bf16.msra.mxu0 0
      %3640 = vmatprep.subr.bf16.mxu0 0
      %3641 = vmatpush1.bf16.msra.mxu0 0
      %3642 = vmatprep.subr.bf16.mxu0 0
      %3643 = vmatpush1.bf16.msra.mxu0 %v3626
      %3644 = vmatprep.subr.bf16.mxu0 0
      %3645 = vmatpush2.bf16.msra.mxu0 0
      %3646 = vmatprep.subr.bf16.mxu0 0
      %3647 = vmatpush2.bf16.msra.mxu0 0
      %3648 = vmatprep.subr.bf16.mxu0 0
      %3649 = vmatpush2.bf16.msra.mxu0 0
      %3650 = vmatprep.subr.bf16.mxu0 0
      %3651 = vmatpush2.bf16.msra.mxu0 0
      %3652 = vmatprep.subr.bf16.mxu0 0
      %3653 = vmatpush2.bf16.msra.mxu0 0
      %3654 = vmatprep.subr.bf16.mxu0 0
      %3655 = vmatpush2.bf16.msra.mxu0 0
      %3656 = vmatprep.subr.bf16.mxu0 0
      %3657 = vmatpush2.bf16.msra.mxu0 0
      %3658 = vmatprep.subr.bf16.mxu0 0
      %3659 = vmatpush2.bf16.msra.mxu0 0
      %3660 = vmatprep.mubr.bf16.mxu0 0
      %3661 = vmatmul.mubr.bf16.gmra.mxu0 %v3611
      %v3662 = vpop.f32.mrf.mxu0
      %v3663 = vadd.f32 0.0, %v3662
      %v3664 = vpop.f32.mrf.mxu0
      %v3665 = vpop.f32.mrf.mxu0
      %v3666 = vadd.f32 0.0, %v3665
      %v3667 = vpop.f32.mrf.mxu0
      %3668 = vmatprep.mubr.bf16.mxu0 0
      %3669 = vmatmul.mubr.bf16.gmra.mxu0 %v3614
      %v3670 = vpop.f32.mrf.mxu0
      %v3671 = vadd.f32 0.0, %v3670
      %v3672 = vpop.f32.mrf.mxu0
      %v3673 = vpop.f32.mrf.mxu0
      %v3674 = vadd.f32 0.0, %v3673
      %v3675 = vpop.f32.mrf.mxu0
      %3676 = vmatprep.mubr.bf16.mxu0 0
      %3677 = vmatmul.mubr.bf16.gmra.mxu0 %v3617
      %v3678 = vpop.f32.mrf.mxu0
      %v3679 = vadd.f32 0.0, %v3678
      %v3680 = vpop.f32.mrf.mxu0
      %v3681 = vpop.f32.mrf.mxu0
      %v3682 = vadd.f32 0.0, %v3681
      %v3683 = vpop.f32.mrf.mxu0
      %3684 = vmatprep.mubr.bf16.mxu0 0
      %3685 = vmatmul.mubr.bf16.gmra.mxu0 %v3620
      %v3686 = vpop.f32.mrf.mxu0
      %v3687 = vadd.f32 0.0, %v3686
      %v3688 = vpop.f32.mrf.mxu0
      %v3689 = vpop.f32.mrf.mxu0
      %v3690 = vadd.f32 0.0, %v3689
      %v3691 = vpop.f32.mrf.mxu0
      %3692 = vmatprep.mubr.bf16.mxu0 0
      %3693 = vmatmul.mubr.bf16.gmra.mxu0 %v3623
      %v3694 = vpop.f32.mrf.mxu0
      %v3695 = vadd.f32 0.0, %v3694
      %v3696 = vpop.f32.mrf.mxu0
      %v3697 = vpop.f32.mrf.mxu0
      %v3698 = vadd.f32 0.0, %v3697
      %v3699 = vpop.f32.mrf.mxu0
      %3700 = vdwg.mxu0
      %v3701 = vadd.f32 %v3583, %v3663
      %v3702 = vadd.f32 %v3584, %v3666
      %v3703 = vadd.f32 %v3585, %v3671
      %v3704 = vadd.f32 %v3586, %v3674
      %v3705 = vadd.f32 %v3587, %v3679
      %v3706 = vadd.f32 %v3588, %v3682
      %v3707 = vadd.f32 %v3589, %v3687
      %v3708 = vadd.f32 %v3590, %v3690
      %v3709 = vadd.f32 %v3591, %v3695
      %v3710 = vadd.f32 %v3592, %v3698
      %v3711 = vld [vmem:[%s2837 + $0x8] sm:$0xc]
      %v3712 = vld [vmem:[%s2837 + $0xc] sm:$0xf]
      %v3713 = vld [vmem:[%s2837 + $0x10] sm:$0xf]
      %v3714 = vld [vmem:[%s2837 + $0x14] sm:$0xf]
      %v3715 = vld [vmem:[%s2837 + $0x18] sm:$0xf]
      %v3716 = vld [vmem:[%s2837 + $0x1c] sm:$0xf]
      %v3717 = vld [vmem:[%s2837 + $0x20] sm:$0xf]
      %v3718 = vld [vmem:[%s2837 + $0x24] sm:$0xf]
      %v3719 = vld [vmem:[%s2837 + $0x28] sm:$0xf]
      %v3720 = vld [vmem:[%s2837 + $0x2c] sm:$0xf]
      %v3721 = vld [vmem:[%s2837 + $0x30] sm:$0x3]
      %s3722 = scalar_lea.vmem %s1, 48
      %v3723 = vld [vmem:[%s3722] sm:$0x3]
      %v3735 = vunpack.c.l.b16 %v3711
      %v3736 = vunpack.c.l.b16 %v3712
      %v3737 = vunpack.c.l.b16 %v3713
      %v3738 = vunpack.c.l.b16 %v3714
      %v3739 = vunpack.c.l.b16 %v3715
      %v3740 = vunpack.c.l.b16 %v3716
      %v3741 = vunpack.c.l.b16 %v3717
      %v3742 = vunpack.c.l.b16 %v3718
      %v3743 = vunpack.c.l.b16 %v3719
      %v3744 = vunpack.c.l.b16 %v3720
      %v3745 = vunpack.c.l.b16 %v3721
      %v3746 = vpack.c.b16 %v3736, %v3735
      %v3747 = vpack.c.b16 %v3738, %v3737
      %v3748 = vpack.c.b16 %v3740, %v3739
      %v3749 = vpack.c.b16 %v3742, %v3741
      %v3750 = vpack.c.b16 %v3744, %v3743
      %v3751 = vpack.c.b16 %v3745, %v3745
      %v3752 = vrot.slane %v3746, 2
      %v3753 = vrot.slane %v3747, 2
      %v3754 = vsel %vm980, %v3752, %v3753
      %v3755 = vrot.slane %v3748, 2
      %v3756 = vsel %vm980, %v3753, %v3755
      %v3757 = vrot.slane %v3749, 2
      %v3758 = vsel %vm980, %v3755, %v3757
      %v3759 = vrot.slane %v3750, 2
      %v3760 = vsel %vm980, %v3757, %v3759
      %v3761 = vrot.slane %v3751, 2
      %v3762 = vsel %vm980, %v3759, %v3761
      %v3764 = vsel %vm362, %v3754, 0
      %v3767 = vsel %vm362, %v3756, 0
      %v3770 = vsel %vm362, %v3758, 0
      %v3773 = vsel %vm362, %v3760, 0
      %v3776 = vsel %vm362, %v3762, 0
      %v3779 = vsel %vm378, %v3723, 0
      %3781 = vmatprep.subr.bf16.mxu0 0
      %3782 = vmatpush1.bf16.msra.mxu0 0
      %3783 = vmatprep.subr.bf16.mxu0 0
      %3784 = vmatpush1.bf16.msra.mxu0 0
      %3785 = vmatprep.subr.bf16.mxu0 0
      %3786 = vmatpush1.bf16.msra.mxu0 0
      %3787 = vmatprep.subr.bf16.mxu0 0
      %3788 = vmatpush1.bf16.msra.mxu0 0
      %3789 = vmatprep.subr.bf16.mxu0 0
      %3790 = vmatpush1.bf16.msra.mxu0 0
      %3791 = vmatprep.subr.bf16.mxu0 0
      %3792 = vmatpush1.bf16.msra.mxu0 0
      %3793 = vmatprep.subr.bf16.mxu0 0
      %3794 = vmatpush1.bf16.msra.mxu0 0
      %3795 = vmatprep.subr.bf16.mxu0 0
      %3796 = vmatpush1.bf16.msra.mxu0 %v3779
      %3797 = vmatprep.subr.bf16.mxu0 0
      %3798 = vmatpush2.bf16.msra.mxu0 0
      %3799 = vmatprep.subr.bf16.mxu0 0
      %3800 = vmatpush2.bf16.msra.mxu0 0
      %3801 = vmatprep.subr.bf16.mxu0 0
      %3802 = vmatpush2.bf16.msra.mxu0 0
      %3803 = vmatprep.subr.bf16.mxu0 0
      %3804 = vmatpush2.bf16.msra.mxu0 0
      %3805 = vmatprep.subr.bf16.mxu0 0
      %3806 = vmatpush2.bf16.msra.mxu0 0
      %3807 = vmatprep.subr.bf16.mxu0 0
      %3808 = vmatpush2.bf16.msra.mxu0 0
      %3809 = vmatprep.subr.bf16.mxu0 0
      %3810 = vmatpush2.bf16.msra.mxu0 0
      %3811 = vmatprep.subr.bf16.mxu0 0
      %3812 = vmatpush2.bf16.msra.mxu0 0
      %3813 = vmatprep.mubr.bf16.mxu0 0
      %3814 = vmatmul.mubr.bf16.gmra.mxu0 %v3764
      %v3815 = vpop.f32.mrf.mxu0
      %v3816 = vadd.f32 0.0, %v3815
      %v3817 = vpop.f32.mrf.mxu0
      %v3818 = vpop.f32.mrf.mxu0
      %v3819 = vadd.f32 0.0, %v3818
      %v3820 = vpop.f32.mrf.mxu0
      %3821 = vmatprep.mubr.bf16.mxu0 0
      %3822 = vmatmul.mubr.bf16.gmra.mxu0 %v3767
      %v3823 = vpop.f32.mrf.mxu0
      %v3824 = vadd.f32 0.0, %v3823
      %v3825 = vpop.f32.mrf.mxu0
      %v3826 = vpop.f32.mrf.mxu0
      %v3827 = vadd.f32 0.0, %v3826
      %v3828 = vpop.f32.mrf.mxu0
      %3829 = vmatprep.mubr.bf16.mxu0 0
      %3830 = vmatmul.mubr.bf16.gmra.mxu0 %v3770
      %v3831 = vpop.f32.mrf.mxu0
      %v3832 = vadd.f32 0.0, %v3831
      %v3833 = vpop.f32.mrf.mxu0
      %v3834 = vpop.f32.mrf.mxu0
      %v3835 = vadd.f32 0.0, %v3834
      %v3836 = vpop.f32.mrf.mxu0
      %3837 = vmatprep.mubr.bf16.mxu0 0
      %3838 = vmatmul.mubr.bf16.gmra.mxu0 %v3773
      %v3839 = vpop.f32.mrf.mxu0
      %v3840 = vadd.f32 0.0, %v3839
      %v3841 = vpop.f32.mrf.mxu0
      %v3842 = vpop.f32.mrf.mxu0
      %v3843 = vadd.f32 0.0, %v3842
      %v3844 = vpop.f32.mrf.mxu0
      %3845 = vmatprep.mubr.bf16.mxu0 0
      %3846 = vmatmul.mubr.bf16.gmra.mxu0 %v3776
      %v3847 = vpop.f32.mrf.mxu0
      %v3848 = vadd.f32 0.0, %v3847
      %v3849 = vpop.f32.mrf.mxu0
      %v3850 = vpop.f32.mrf.mxu0
      %v3851 = vadd.f32 0.0, %v3850
      %v3852 = vpop.f32.mrf.mxu0
      %3853 = vdwg.mxu0
      %v3854 = vadd.f32 %v3701, %v3816
      %v3855 = vadd.f32 %v3702, %v3819
      %v3856 = vadd.f32 %v3703, %v3824
      %v3857 = vadd.f32 %v3704, %v3827
      %v3858 = vadd.f32 %v3705, %v3832
      %v3859 = vadd.f32 %v3706, %v3835
      %v3860 = vadd.f32 %v3707, %v3840
      %v3861 = vadd.f32 %v3708, %v3843
      %v3862 = vadd.f32 %v3709, %v3848
      %v3863 = vadd.f32 %v3710, %v3851
      %v3864 = vld [vmem:[%s2837 + $0x30] sm:$0x7]
      %s3865 = scalar_lea.vmem %s1, 50
      %v3866 = vld [vmem:[%s3865] sm:$0x3]
      %v3868 = vunpack.c.l.b16 %v3864
      %v3869 = vpack.c.b16 %v3868, %v3868
      %v3871 = vshrl.u32 %v3746, 16
      %v3873 = vrot.slane %v3871, 2
      %v3874 = vshll.u32 %v3746, 16
      %v3876 = vrot.slane %v3874, 3
      %v3877 = vor.u32 %v3873, %v3876
      %v3879 = vshrl.u32 %v3747, 16
      %v3881 = vrot.slane %v3879, 2
      %v3882 = vshll.u32 %v3747, 16
      %v3884 = vrot.slane %v3882, 3
      %v3885 = vor.u32 %v3881, %v3884
      %v3886 = vsel %vm1252, %v3877, %v3885
      %v3888 = vshrl.u32 %v3748, 16
      %v3890 = vrot.slane %v3888, 2
      %v3891 = vshll.u32 %v3748, 16
      %v3893 = vrot.slane %v3891, 3
      %v3894 = vor.u32 %v3890, %v3893
      %v3895 = vsel %vm1252, %v3885, %v3894
      %v3897 = vshrl.u32 %v3749, 16
      %v3899 = vrot.slane %v3897, 2
      %v3900 = vshll.u32 %v3749, 16
      %v3902 = vrot.slane %v3900, 3
      %v3903 = vor.u32 %v3899, %v3902
      %v3904 = vsel %vm1252, %v3894, %v3903
      %v3906 = vshrl.u32 %v3750, 16
      %v3908 = vrot.slane %v3906, 2
      %v3909 = vshll.u32 %v3750, 16
      %v3911 = vrot.slane %v3909, 3
      %v3912 = vor.u32 %v3908, %v3911
      %v3913 = vsel %vm1252, %v3903, %v3912
      %v3915 = vshrl.u32 %v3869, 16
      %v3917 = vrot.slane %v3915, 2
      %v3918 = vshll.u32 %v3869, 16
      %v3920 = vrot.slane %v3918, 3
      %v3921 = vor.u32 %v3917, %v3920
      %v3922 = vsel %vm1252, %v3912, %v3921
      %v3924 = vsel %vm362, %v3886, 0
      %v3927 = vsel %vm362, %v3895, 0
      %v3930 = vsel %vm362, %v3904, 0
      %v3933 = vsel %vm362, %v3913, 0
      %v3936 = vsel %vm362, %v3922, 0
      %v3939 = vsel %vm378, %v3866, 0
      %3941 = vmatprep.subr.bf16.mxu0 0
      %3942 = vmatpush1.bf16.msra.mxu0 0
      %3943 = vmatprep.subr.bf16.mxu0 0
      %3944 = vmatpush1.bf16.msra.mxu0 0
      %3945 = vmatprep.subr.bf16.mxu0 0
      %3946 = vmatpush1.bf16.msra.mxu0 0
      %3947 = vmatprep.subr.bf16.mxu0 0
      %3948 = vmatpush1.bf16.msra.mxu0 0
      %3949 = vmatprep.subr.bf16.mxu0 0
      %3950 = vmatpush1.bf16.msra.mxu0 0
      %3951 = vmatprep.subr.bf16.mxu0 0
      %3952 = vmatpush1.bf16.msra.mxu0 0
      %3953 = vmatprep.subr.bf16.mxu0 0
      %3954 = vmatpush1.bf16.msra.mxu0 0
      %3955 = vmatprep.subr.bf16.mxu0 0
      %3956 = vmatpush1.bf16.msra.mxu0 %v3939
      %3957 = vmatprep.subr.bf16.mxu0 0
      %3958 = vmatpush2.bf16.msra.mxu0 0
      %3959 = vmatprep.subr.bf16.mxu0 0
      %3960 = vmatpush2.bf16.msra.mxu0 0
      %3961 = vmatprep.subr.bf16.mxu0 0
      %3962 = vmatpush2.bf16.msra.mxu0 0
      %3963 = vmatprep.subr.bf16.mxu0 0
      %3964 = vmatpush2.bf16.msra.mxu0 0
      %3965 = vmatprep.subr.bf16.mxu0 0
      %3966 = vmatpush2.bf16.msra.mxu0 0
      %3967 = vmatprep.subr.bf16.mxu0 0
      %3968 = vmatpush2.bf16.msra.mxu0 0
      %3969 = vmatprep.subr.bf16.mxu0 0
      %3970 = vmatpush2.bf16.msra.mxu0 0
      %3971 = vmatprep.subr.bf16.mxu0 0
      %3972 = vmatpush2.bf16.msra.mxu0 0
      %3973 = vmatprep.mubr.bf16.mxu0 0
      %3974 = vmatmul.mubr.bf16.gmra.mxu0 %v3924
      %v3975 = vpop.f32.mrf.mxu0
      %v3976 = vadd.f32 0.0, %v3975
      %v3977 = vpop.f32.mrf.mxu0
      %v3978 = vpop.f32.mrf.mxu0
      %v3979 = vadd.f32 0.0, %v3978
      %v3980 = vpop.f32.mrf.mxu0
      %3981 = vmatprep.mubr.bf16.mxu0 0
      %3982 = vmatmul.mubr.bf16.gmra.mxu0 %v3927
      %v3983 = vpop.f32.mrf.mxu0
      %v3984 = vadd.f32 0.0, %v3983
      %v3985 = vpop.f32.mrf.mxu0
      %v3986 = vpop.f32.mrf.mxu0
      %v3987 = vadd.f32 0.0, %v3986
      %v3988 = vpop.f32.mrf.mxu0
      %3989 = vmatprep.mubr.bf16.mxu0 0
      %3990 = vmatmul.mubr.bf16.gmra.mxu0 %v3930
      %v3991 = vpop.f32.mrf.mxu0
      %v3992 = vadd.f32 0.0, %v3991
      %v3993 = vpop.f32.mrf.mxu0
      %v3994 = vpop.f32.mrf.mxu0
      %v3995 = vadd.f32 0.0, %v3994
      %v3996 = vpop.f32.mrf.mxu0
      %3997 = vmatprep.mubr.bf16.mxu0 0
      %3998 = vmatmul.mubr.bf16.gmra.mxu0 %v3933
      %v3999 = vpop.f32.mrf.mxu0
      %v4000 = vadd.f32 0.0, %v3999
      %v4001 = vpop.f32.mrf.mxu0
      %v4002 = vpop.f32.mrf.mxu0
      %v4003 = vadd.f32 0.0, %v4002
      %v4004 = vpop.f32.mrf.mxu0
      %4005 = vmatprep.mubr.bf16.mxu0 0
      %4006 = vmatmul.mubr.bf16.gmra.mxu0 %v3936
      %v4007 = vpop.f32.mrf.mxu0
      %v4008 = vadd.f32 0.0, %v4007
      %v4009 = vpop.f32.mrf.mxu0
      %v4010 = vpop.f32.mrf.mxu0
      %v4011 = vadd.f32 0.0, %v4010
      %v4012 = vpop.f32.mrf.mxu0
      %4013 = vdwg.mxu0
      %v4014 = vadd.f32 %v3854, %v3976
      %v4015 = vadd.f32 %v3855, %v3979
      %v4016 = vadd.f32 %v3856, %v3984
      %v4017 = vadd.f32 %v3857, %v3987
      %v4018 = vadd.f32 %v3858, %v3992
      %v4019 = vadd.f32 %v3859, %v3995
      %v4020 = vadd.f32 %v3860, %v4000
      %v4021 = vadd.f32 %v3861, %v4003
      %v4022 = vadd.f32 %v3862, %v4008
      %v4023 = vadd.f32 %v3863, %v4011
      %v4024 = vld [vmem:[%s2837 + $0x8] sm:$0x8]
      %s4025 = scalar_lea.vmem %s1, 52
      %v4026 = vld [vmem:[%s4025] sm:$0x3]
      %v4028 = vunpack.c.l.b16 %v4024
      %v4029 = vpack.c.b16 %v3736, %v4028
      %v4030 = vrot.slane %v4029, 3
      %v4031 = vrot.slane %v3747, 3
      %v4032 = vsel %vm1413, %v4030, %v4031
      %v4033 = vrot.slane %v3748, 3
      %v4034 = vsel %vm1413, %v4031, %v4033
      %v4035 = vrot.slane %v3749, 3
      %v4036 = vsel %vm1413, %v4033, %v4035
      %v4037 = vrot.slane %v3750, 3
      %v4038 = vsel %vm1413, %v4035, %v4037
      %v4039 = vrot.slane %v3869, 3
      %v4040 = vsel %vm1413, %v4037, %v4039
      %v4042 = vsel %vm362, %v4032, 0
      %v4045 = vsel %vm362, %v4034, 0
      %v4048 = vsel %vm362, %v4036, 0
      %v4051 = vsel %vm362, %v4038, 0
      %v4054 = vsel %vm362, %v4040, 0
      %v4057 = vsel %vm378, %v4026, 0
      %4059 = vmatprep.subr.bf16.mxu0 0
      %4060 = vmatpush1.bf16.msra.mxu0 0
      %4061 = vmatprep.subr.bf16.mxu0 0
      %4062 = vmatpush1.bf16.msra.mxu0 0
      %4063 = vmatprep.subr.bf16.mxu0 0
      %4064 = vmatpush1.bf16.msra.mxu0 0
      %4065 = vmatprep.subr.bf16.mxu0 0
      %4066 = vmatpush1.bf16.msra.mxu0 0
      %4067 = vmatprep.subr.bf16.mxu0 0
      %4068 = vmatpush1.bf16.msra.mxu0 0
      %4069 = vmatprep.subr.bf16.mxu0 0
      %4070 = vmatpush1.bf16.msra.mxu0 0
      %4071 = vmatprep.subr.bf16.mxu0 0
      %4072 = vmatpush1.bf16.msra.mxu0 0
      %4073 = vmatprep.subr.bf16.mxu0 0
      %4074 = vmatpush1.bf16.msra.mxu0 %v4057
      %4075 = vmatprep.subr.bf16.mxu0 0
      %4076 = vmatpush2.bf16.msra.mxu0 0
      %4077 = vmatprep.subr.bf16.mxu0 0
      %4078 = vmatpush2.bf16.msra.mxu0 0
      %4079 = vmatprep.subr.bf16.mxu0 0
      %4080 = vmatpush2.bf16.msra.mxu0 0
      %4081 = vmatprep.subr.bf16.mxu0 0
      %4082 = vmatpush2.bf16.msra.mxu0 0
      %4083 = vmatprep.subr.bf16.mxu0 0
      %4084 = vmatpush2.bf16.msra.mxu0 0
      %4085 = vmatprep.subr.bf16.mxu0 0
      %4086 = vmatpush2.bf16.msra.mxu0 0
      %4087 = vmatprep.subr.bf16.mxu0 0
      %4088 = vmatpush2.bf16.msra.mxu0 0
      %4089 = vmatprep.subr.bf16.mxu0 0
      %4090 = vmatpush2.bf16.msra.mxu0 0
      %4091 = vmatprep.mubr.bf16.mxu0 0
      %4092 = vmatmul.mubr.bf16.gmra.mxu0 %v4042
      %v4093 = vpop.f32.mrf.mxu0
      %v4094 = vadd.f32 0.0, %v4093
      %v4095 = vpop.f32.mrf.mxu0
      %v4096 = vpop.f32.mrf.mxu0
      %v4097 = vadd.f32 0.0, %v4096
      %v4098 = vpop.f32.mrf.mxu0
      %4099 = vmatprep.mubr.bf16.mxu0 0
      %4100 = vmatmul.mubr.bf16.gmra.mxu0 %v4045
      %v4101 = vpop.f32.mrf.mxu0
      %v4102 = vadd.f32 0.0, %v4101
      %v4103 = vpop.f32.mrf.mxu0
      %v4104 = vpop.f32.mrf.mxu0
      %v4105 = vadd.f32 0.0, %v4104
      %v4106 = vpop.f32.mrf.mxu0
      %4107 = vmatprep.mubr.bf16.mxu0 0
      %4108 = vmatmul.mubr.bf16.gmra.mxu0 %v4048
      %v4109 = vpop.f32.mrf.mxu0
      %v4110 = vadd.f32 0.0, %v4109
      %v4111 = vpop.f32.mrf.mxu0
      %v4112 = vpop.f32.mrf.mxu0
      %v4113 = vadd.f32 0.0, %v4112
      %v4114 = vpop.f32.mrf.mxu0
      %4115 = vmatprep.mubr.bf16.mxu0 0
      %4116 = vmatmul.mubr.bf16.gmra.mxu0 %v4051
      %v4117 = vpop.f32.mrf.mxu0
      %v4118 = vadd.f32 0.0, %v4117
      %v4119 = vpop.f32.mrf.mxu0
      %v4120 = vpop.f32.mrf.mxu0
      %v4121 = vadd.f32 0.0, %v4120
      %v4122 = vpop.f32.mrf.mxu0
      %4123 = vmatprep.mubr.bf16.mxu0 0
      %4124 = vmatmul.mubr.bf16.gmra.mxu0 %v4054
      %v4125 = vpop.f32.mrf.mxu0
      %v4126 = vadd.f32 0.0, %v4125
      %v4127 = vpop.f32.mrf.mxu0
      %v4128 = vpop.f32.mrf.mxu0
      %v4129 = vadd.f32 0.0, %v4128
      %v4130 = vpop.f32.mrf.mxu0
      %4131 = vdwg.mxu0
      %v4132 = vadd.f32 %v4014, %v4094
      %v4133 = vadd.f32 %v4015, %v4097
      %v4134 = vadd.f32 %v4016, %v4102
      %v4135 = vadd.f32 %v4017, %v4105
      %v4136 = vadd.f32 %v4018, %v4110
      %v4137 = vadd.f32 %v4019, %v4113
      %v4138 = vadd.f32 %v4020, %v4118
      %v4139 = vadd.f32 %v4021, %v4121
      %v4140 = vadd.f32 %v4022, %v4126
      %v4141 = vadd.f32 %v4023, %v4129
      %vm4142 = vcmask 130048
      %4143 = vst.msk [vmem:[%s257] sm:$0xff] %vm4142, %v4132
      %4144 = vst.msk [vmem:[%s257 + $0x8] sm:$0xff] %vm4142, %v4133
      %4145 = vst.msk [vmem:[%s257 + $0x10] sm:$0xff] %vm4142, %v4134
      %4146 = vst.msk [vmem:[%s257 + $0x18] sm:$0xff] %vm4142, %v4135
      %4147 = vst.msk [vmem:[%s257 + $0x20] sm:$0xff] %vm4142, %v4136
      %4148 = vst.msk [vmem:[%s257 + $0x28] sm:$0xff] %vm4142, %v4137
      %4149 = vst.msk [vmem:[%s257 + $0x30] sm:$0xff] %vm4142, %v4138
      %4150 = vst.msk [vmem:[%s257 + $0x38] sm:$0xff] %vm4142, %v4139
      %4151 = vst.msk [vmem:[%s257 + $0x40] sm:$0xff] %vm4142, %v4140
      %4152 = vst.msk [vmem:[%s257 + $0x48] sm:$0xff] %vm4142, %v4141
      %v4153 = vld [vmem:[%s2] sm:$0xff]
      %v4154 = vld [vmem:[%s2 + $0x8] sm:$0xff]
      %v4155 = vld [vmem:[%s2 + $0x10] sm:$0xff]
      %v4156 = vld [vmem:[%s2 + $0x18] sm:$0xff]
      %v4157 = vld [vmem:[%s2 + $0x20] sm:$0xff]
      %v4158 = vld [vmem:[%s2 + $0x28] sm:$0xff]
      %v4159 = vld [vmem:[%s2 + $0x30] sm:$0xff]
      %v4160 = vld [vmem:[%s2 + $0x38] sm:$0xff]
      %v4161 = vld [vmem:[%s2 + $0x40] sm:$0xff]
      %v4162 = vld [vmem:[%s2 + $0x48] sm:$0xff]
      %4164 = vset.pattern.permute.xlu0 0
      %4165 = vperm.xlu0 %4164, %v4153
      %v4166 = vpop.permute.xlu0 %4165
      %4169 = vset.pattern.permute.xlu0 0
      %4170 = vperm.xlu0 %4169, %v4154
      %v4171 = vpop.permute.xlu0 %4170
      %4174 = vset.pattern.permute.xlu0 0
      %4175 = vperm.xlu0 %4174, %v4155
      %v4176 = vpop.permute.xlu0 %4175
      %4179 = vset.pattern.permute.xlu0 0
      %4180 = vperm.xlu0 %4179, %v4156
      %v4181 = vpop.permute.xlu0 %4180
      %4184 = vset.pattern.permute.xlu0 0
      %4185 = vperm.xlu0 %4184, %v4157
      %v4186 = vpop.permute.xlu0 %4185
      %4189 = vset.pattern.permute.xlu0 0
      %4190 = vperm.xlu0 %4189, %v4158
      %v4191 = vpop.permute.xlu0 %4190
      %4194 = vset.pattern.permute.xlu0 0
      %4195 = vperm.xlu0 %4194, %v4159
      %v4196 = vpop.permute.xlu0 %4195
      %4199 = vset.pattern.permute.xlu0 0
      %4200 = vperm.xlu0 %4199, %v4160
      %v4201 = vpop.permute.xlu0 %4200
      %4204 = vset.pattern.permute.xlu0 0
      %4205 = vperm.xlu0 %4204, %v4161
      %v4206 = vpop.permute.xlu0 %4205
      %4209 = vset.pattern.permute.xlu0 0
      %4210 = vperm.xlu0 %4209, %v4162
      %v4211 = vpop.permute.xlu0 %4210
      %v4213 = vmul.f32 %v4132, %v4166
      %v4214 = vmul.f32 %v4133, %v4171
      %v4215 = vmul.f32 %v4134, %v4176
      %v4216 = vmul.f32 %v4135, %v4181
      %v4217 = vmul.f32 %v4136, %v4186
      %v4218 = vmul.f32 %v4137, %v4191
      %v4219 = vmul.f32 %v4138, %v4196
      %v4220 = vmul.f32 %v4139, %v4201
      %v4221 = vmul.f32 %v4140, %v4206
      %v4222 = vmul.f32 %v4141, %v4211
      %v4223 = vld [vmem:[%s260] sm:$0x1]
      %v4224 = vsel %vm4142, %v4213, 0.0
      %v4225 = vsel %vm4142, %v4214, 0.0
      %v4226 = vadd.f32 %v4224, %v4225
      %v4227 = vsel %vm4142, %v4215, 0.0
      %v4228 = vadd.f32 %v4226, %v4227
      %v4229 = vsel %vm4142, %v4216, 0.0
      %v4230 = vadd.f32 %v4228, %v4229
      %v4231 = vsel %vm4142, %v4217, 0.0
      %v4232 = vadd.f32 %v4230, %v4231
      %v4233 = vsel %vm4142, %v4218, 0.0
      %v4234 = vadd.f32 %v4232, %v4233
      %v4235 = vsel %vm4142, %v4219, 0.0
      %v4236 = vadd.f32 %v4234, %v4235
      %v4237 = vsel %vm4142, %v4220, 0.0
      %v4238 = vadd.f32 %v4236, %v4237
      %v4239 = vsel %vm4142, %v4221, 0.0
      %v4240 = vadd.f32 %v4238, %v4239
      %v4241 = vsel %vm4142, %v4222, 0.0
      %v4242 = vadd.f32 %v4240, %v4241
      %v4243 = vrot.slane %v4242, 4
      %v4244 = vadd.f32 %v4242, %v4243
      %v4245 = vrot.slane %v4244, 2
      %v4246 = vadd.f32 %v4244, %v4245
      %v4247 = vrot.slane %v4246, 1
      %v4248 = vadd.f32 %v4246, %v4247
      %v4249 = vadd.f32 %v4223, %v4248
      %vm4250 = vcmask 122880
      %4251 = vst.msk [vmem:[%s260] sm:$0x1] %vm4250, %v4249
      %v4252 = vld [vmem:[%s263] sm:$0x1]
      %v4253 = vmul.f32 %v4213, %v4132
      %v4254 = vmul.f32 %v4214, %v4133
      %v4255 = vmul.f32 %v4215, %v4134
      %v4256 = vmul.f32 %v4216, %v4135
      %v4257 = vmul.f32 %v4217, %v4136
      %v4258 = vmul.f32 %v4218, %v4137
      %v4259 = vmul.f32 %v4219, %v4138
      %v4260 = vmul.f32 %v4220, %v4139
      %v4261 = vmul.f32 %v4221, %v4140
      %v4262 = vmul.f32 %v4222, %v4141
      %v4263 = vsel %vm4142, %v4253, 0.0
      %v4264 = vsel %vm4142, %v4254, 0.0
      %v4265 = vadd.f32 %v4263, %v4264
      %v4266 = vsel %vm4142, %v4255, 0.0
      %v4267 = vadd.f32 %v4265, %v4266
      %v4268 = vsel %vm4142, %v4256, 0.0
      %v4269 = vadd.f32 %v4267, %v4268
      %v4270 = vsel %vm4142, %v4257, 0.0
      %v4271 = vadd.f32 %v4269, %v4270
      %v4272 = vsel %vm4142, %v4258, 0.0
      %v4273 = vadd.f32 %v4271, %v4272
      %v4274 = vsel %vm4142, %v4259, 0.0
      %v4275 = vadd.f32 %v4273, %v4274
      %v4276 = vsel %vm4142, %v4260, 0.0
      %v4277 = vadd.f32 %v4275, %v4276
      %v4278 = vsel %vm4142, %v4261, 0.0
      %v4279 = vadd.f32 %v4277, %v4278
      %v4280 = vsel %vm4142, %v4262, 0.0
      %v4281 = vadd.f32 %v4279, %v4280
      %v4282 = vrot.slane %v4281, 4
      %v4283 = vadd.f32 %v4281, %v4282
      %v4284 = vrot.slane %v4283, 2
      %v4285 = vadd.f32 %v4283, %v4284
      %v4286 = vrot.slane %v4285, 1
      %v4287 = vadd.f32 %v4285, %v4286
      %v4288 = vadd.f32 %v4252, %v4287
      %4289 = vst.msk [vmem:[%s263] sm:$0x1] %vm4250, %v4288
      %p4290 = scmp.lt.s32.totalorder %s21, 1
      %s4291 = scalar_select %p4290, %s21, 1
      %p4292 = scmp.lt.s32.totalorder %s22, 7
      %s4293 = scalar_select %p4292, %s22, 7
      %s4294 = smul.addr %s4293, 10
      %s4295 = smul.addr %s4291, 80
      %s4296 = sadd.s32 %s4294, %s4295
      %s4297 = smul.addr %s4296, 8
      %s4298 = scalar_lea.vmem %s3, %s4297
      %p4299 = scmp.lt.s32.totalorder %s21, 1
      %s4300 = scalar_select %p4299, %s21, 1
      %s4301 = scalar_lea.vmem %s4, %s4300
      %p4302 = scmp.lt.s32.totalorder %s21, 1
      %s4303 = scalar_select %p4302, %s21, 1
      %s4304 = scalar_lea.vmem %s5, %s4303
      // Predicated region
      $region37: #{res_block_forward.3} parent=31 // pred_check
        %p4305 = pneg %p117
      $region38: #{res_block_forward.3} parent=31 // pred_check_branch
        %4307 = sbr.rel (%p4305) target = $region40
      $region39: #{res_block_forward.3} parent=31 // pred_region
        _
      $region40: #{res_block_forward.3} parent=31 // pred_fallthru
        _
      // Predicated region
      $region41: #{res_block_forward.3} parent=31 // pred_check
        %p4308 = pneg %p143
      $region42: #{res_block_forward.3} parent=31 // pred_check_branch
        %4310 = sbr.rel (%p4308) target = $region44
      $region43: #{res_block_forward.3} parent=31 // pred_region
        _
      $region44: #{res_block_forward.3} parent=31 // pred_fallthru
        _
      // Predicated region
      $region45: #{res_block_forward.3} parent=31 // pred_check
        %p4311 = pneg %p169
      $region46: #{res_block_forward.3} parent=31 // pred_check_branch
        %4313 = sbr.rel (%p4311) target = $region48
      $region47: #{res_block_forward.3} parent=31 // pred_region
        _
      $region48: #{res_block_forward.3} parent=31 // pred_fallthru
        _
    $region32: #{res_block_forward.3} parent=5 // pred_fallthru
      _
    %p4314 = scmp.le.s32.totalorder 2, %s12
    // Predicated region
    $region49: #{res_block_forward.3} parent=5 // pred_check
      %p4315 = pneg %p4314
    $region50: #{res_block_forward.3} parent=5 // pred_check_branch
      %4317 = sbr.rel (%p4315) target = $region52
    $region51: #{res_block_forward.3} parent=5 // pred_region
      %s4318 = ssub.s32 %s12, 2
      // Predicated region
      $region53: #{res_block_forward.3} parent=51 // pred_check
        %p4319 = pneg %p123
      $region54: #{res_block_forward.3} parent=51 // pred_check_branch
        %4321 = sbr.rel (%p4319) target = $region56
      $region55: #{res_block_forward.3} parent=51 // pred_region
        %p4322 = scmp.lt.s32.totalorder %s23, 1
        %s4323 = scalar_select %p4322, %s23, 1
        %p4324 = scmp.lt.s32.totalorder %s24, 7
        %s4325 = scalar_select %p4324, %s24, 7
        %s4326 = smul.addr %s4325, 10
        %s4327 = smul.addr %s4323, 80
        %s4328 = sadd.s32 %s4326, %s4327
        %s4329 = smul.addr %s4328, 8
        %s4330 = scalar_lea.vmem %s3, %s4329
      $region56: #{res_block_forward.3} parent=51 // pred_fallthru
        _
      // Predicated region
      $region57: #{res_block_forward.3} parent=51 // pred_check
        %p4331 = pneg %p149
      $region58: #{res_block_forward.3} parent=51 // pred_check_branch
        %4333 = sbr.rel (%p4331) target = $region60
      $region59: #{res_block_forward.3} parent=51 // pred_region
        %p4334 = scmp.lt.s32.totalorder %s23, 1
        %s4335 = scalar_select %p4334, %s23, 1
        %s4336 = scalar_lea.vmem %s4, %s4335
      $region60: #{res_block_forward.3} parent=51 // pred_fallthru
        _
      // Predicated region
      $region61: #{res_block_forward.3} parent=51 // pred_check
        %p4337 = pneg %p175
      $region62: #{res_block_forward.3} parent=51 // pred_check_branch
        %4339 = sbr.rel (%p4337) target = $region64
      $region63: #{res_block_forward.3} parent=51 // pred_region
        %p4340 = scmp.lt.s32.totalorder %s23, 1
        %s4341 = scalar_select %p4340, %s23, 1
        %s4342 = scalar_lea.vmem %s5, %s4341
      $region64: #{res_block_forward.3} parent=51 // pred_fallthru
        _
    $region52: #{res_block_forward.3} parent=5 // pred_fallthru
      _
  $region6: #{res_block_forward.3} parent=0 // loop_footer
    %s16 = sadd.s32 1, %s12
  $region7: #{res_block_forward.3} parent=0 // loop_footer_branch
    %11 = sbr.rel target = $region3
  $region8: #{res_block_forward.3} parent=0 // loop_exit
    _

// kernel: res_block_forward.5
$region0: #{res_block_forward.5}
  #allocation0 [shape = 'u32[]', space=smem, size = 0x4, offset = 0x4, fixed_abs, tag = 'smem constant byte address 0x4 - core index']
  #allocation1 [shape = 'u32[144,128]{1,0:T(1,128)}', space=vmem, size = 0x12000, scoped, tag = 'internal scratch']
  %s0 = inlined_call_operand.vmem [shape: f32[64,128], index: 0, kind: input, shape index: {}]
  %s1 = inlined_call_operand.vmem [shape: f32[64,128], index: 1, kind: input, shape index: {}]
  %s2 = inlined_call_operand.vmem [shape: f32[1,128], index: 2, kind: input, shape index: {}]
  %s3 = inlined_call_operand.vmem [shape: f32[1,128], index: 3, kind: input, shape index: {}]
  %s4 = inlined_call_operand.vmem [shape: f32[1,128], index: 4, kind: input, shape index: {}]
  %s5 = inlined_call_operand.vmem [shape: f32[64,128], index: 5, kind: output, shape index: {}]
  %s6 = sld [smem:[#allocation0]]
  $region30: #{res_block_forward.5} parent=0
    _
  %s8 = ssub.s32 1, %s6
  %s9 = scalar_select 0, %s8, %s6
  // Predicated region
  $region2: #{res_block_forward.5} parent=0 // pred_check
    _
  $region3: #{res_block_forward.5} parent=0 // pred_check_branch
    %11 = sbr.rel (0) target = $region5
  $region4: #{res_block_forward.5} parent=0 // pred_region
    _
  $region5: #{res_block_forward.5} parent=0 // pred_fallthru
    _
  // Predicated region
  $region6: #{res_block_forward.5} parent=0 // pred_check
    _
  $region7: #{res_block_forward.5} parent=0 // pred_check_branch
    %13 = sbr.rel (0) target = $region9
  $region8: #{res_block_forward.5} parent=0 // pred_region
    _
  $region9: #{res_block_forward.5} parent=0 // pred_fallthru
    _
  // Predicated region
  $region10: #{res_block_forward.5} parent=0 // pred_check
    _
  $region11: #{res_block_forward.5} parent=0 // pred_check_branch
    %15 = sbr.rel (0) target = $region13
  $region12: #{res_block_forward.5} parent=0 // pred_region
    _
  $region13: #{res_block_forward.5} parent=0 // pred_fallthru
    _
  // Predicated region
  $region14: #{res_block_forward.5} parent=0 // pred_check
    _
  $region15: #{res_block_forward.5} parent=0 // pred_check_branch
    %17 = sbr.rel (0) target = $region17
  $region16: #{res_block_forward.5} parent=0 // pred_region
    _
  $region17: #{res_block_forward.5} parent=0 // pred_fallthru
    _
  // Predicated region
  $region18: #{res_block_forward.5} parent=0 // pred_check
    _
  $region19: #{res_block_forward.5} parent=0 // pred_check_branch
    %19 = sbr.rel (0) target = $region21
  $region20: #{res_block_forward.5} parent=0 // pred_region
    _
  $region21: #{res_block_forward.5} parent=0 // pred_fallthru
    _
  %v20 = vld [vmem:[%s0] sm:$0xff]
  %v21 = vld [vmem:[%s0 + $0x8] sm:$0xff]
  %v22 = vld [vmem:[%s0 + $0x10] sm:$0xff]
  %v23 = vld [vmem:[%s0 + $0x18] sm:$0xff]
  %v24 = vld [vmem:[%s0 + $0x20] sm:$0xff]
  %v25 = vld [vmem:[%s0 + $0x28] sm:$0xff]
  %v26 = vld [vmem:[%s0 + $0x30] sm:$0xff]
  %v27 = vld [vmem:[%s0 + $0x38] sm:$0xff]
  %v28 = vld [vmem:[%s2] sm:$0x1]
  %v30 = vlaneseq
  %v31 = vshrl.u32 %v30, 7
  %v32 = vsub.s32 0, %v31
  %v33 = vrot.slane %v28, %v32
  %v35 = vmul.f32 %v20, %v33
  %v36 = vmul.f32 %v21, %v33
  %v37 = vmul.f32 %v22, %v33
  %v38 = vmul.f32 %v23, %v33
  %v39 = vmul.f32 %v24, %v33
  %v40 = vmul.f32 %v25, %v33
  %v41 = vmul.f32 %v26, %v33
  %v42 = vmul.f32 %v27, %v33
  %v43 = vld [vmem:[%s3] sm:$0x1]
  %v45 = vlaneseq
  %v46 = vshrl.u32 %v45, 7
  %v47 = vsub.s32 0, %v46
  %v48 = vrot.slane %v43, %v47
  %v50 = vadd.f32 %v35, %v48
  %v51 = vadd.f32 %v36, %v48
  %v52 = vadd.f32 %v37, %v48
  %v53 = vadd.f32 %v38, %v48
  %v54 = vadd.f32 %v39, %v48
  %v55 = vadd.f32 %v40, %v48
  %v56 = vadd.f32 %v41, %v48
  %v57 = vadd.f32 %v42, %v48
  %v58 = vmax.f32 %v50, 0.0
  %v59 = vmax.f32 %v51, 0.0
  %v60 = vmax.f32 %v52, 0.0
  %v61 = vmax.f32 %v53, 0.0
  %v62 = vmax.f32 %v54, 0.0
  %v63 = vmax.f32 %v55, 0.0
  %v64 = vmax.f32 %v56, 0.0
  %v65 = vmax.f32 %v57, 0.0
  %v66 = vld [vmem:[%s1] sm:$0xff]
  %v67 = vld [vmem:[%s1 + $0x8] sm:$0xff]
  %v68 = vld [vmem:[%s1 + $0x10] sm:$0xff]
  %v69 = vld [vmem:[%s1 + $0x18] sm:$0xff]
  %v70 = vld [vmem:[%s1 + $0x20] sm:$0xff]
  %v71 = vld [vmem:[%s1 + $0x28] sm:$0xff]
  %v72 = vld [vmem:[%s1 + $0x30] sm:$0xff]
  %v73 = vld [vmem:[%s1 + $0x38] sm:$0xff]
  %v74 = vadd.f32 %v58, %v66
  %v75 = vadd.f32 %v59, %v67
  %v76 = vadd.f32 %v60, %v68
  %v77 = vadd.f32 %v61, %v69
  %v78 = vadd.f32 %v62, %v70
  %v79 = vadd.f32 %v63, %v71
  %v80 = vadd.f32 %v64, %v72
  %v81 = vadd.f32 %v65, %v73
  %v82 = vld [vmem:[%s4] sm:$0x1]
  %v84 = vlaneseq
  %v85 = vshrl.u32 %v84, 7
  %v86 = vsub.s32 0, %v85
  %v87 = vrot.slane %v82, %v86
  %v89 = vadd.f32 %v74, %v87
  %v90 = vadd.f32 %v75, %v87
  %v91 = vadd.f32 %v76, %v87
  %v92 = vadd.f32 %v77, %v87
  %v93 = vadd.f32 %v78, %v87
  %v94 = vadd.f32 %v79, %v87
  %v95 = vadd.f32 %v80, %v87
  %v96 = vadd.f32 %v81, %v87
  %97 = vst [vmem:[%s5] sm:$0xff] %v89
  %98 = vst [vmem:[%s5 + $0x8] sm:$0xff] %v90
  %99 = vst [vmem:[%s5 + $0x10] sm:$0xff] %v91
  %100 = vst [vmem:[%s5 + $0x18] sm:$0xff] %v92
  %101 = vst [vmem:[%s5 + $0x20] sm:$0xff] %v93
  %102 = vst [vmem:[%s5 + $0x28] sm:$0xff] %v94
  %103 = vst [vmem:[%s5 + $0x30] sm:$0xff] %v95
  %104 = vst [vmem:[%s5 + $0x38] sm:$0xff] %v96
  // Predicated region
  $region22: #{res_block_forward.5} parent=0 // pred_check
    _
  $region23: #{res_block_forward.5} parent=0 // pred_check_branch
    %106 = sbr.rel (0) target = $region25
  $region24: #{res_block_forward.5} parent=0 // pred_region
    _
  $region25: #{res_block_forward.5} parent=0 // pred_fallthru
    _
  // Predicated region
  $region26: #{res_block_forward.5} parent=0 // pred_check
    _
  $region27: #{res_block_forward.5} parent=0 // pred_check_branch
    %108 = sbr.rel (0) target = $region29
  $region28: #{res_block_forward.5} parent=0 // pred_region
    _
  $region29: #{res_block_forward.5} parent=0 // pred_fallthru
    _

// kernel: res_block_forward.4
$region0: #{res_block_forward.4}
  #allocation0 [shape = 'u32[]', space=smem, size = 0x4, offset = 0x4, fixed_abs, tag = 'smem constant byte address 0x4 - core index']
  #allocation1 [shape = 'u32[144,128]{1,0:T(1,128)}', space=vmem, size = 0x12000, scoped, tag = 'internal scratch']
  %s0 = inlined_call_operand.vmem [shape: bf16[2,10,104,8], index: 0, kind: input, shape index: {}]
  %s1 = inlined_call_operand.vmem [shape: bf16[27,8,8], index: 1, kind: input, shape index: {}]
  %s2 = inlined_call_operand.vmem [shape: f32[80,1], index: 2, kind: input, shape index: {}]
  %s3 = inlined_call_operand.vmem [shape: f32[2,8,80,8], index: 3, kind: output, shape index: {0}]
  %s4 = inlined_call_operand.vmem [shape: f32[2,1,8], index: 4, kind: output, shape index: {1}]
  %s5 = inlined_call_operand.vmem [shape: f32[2,1,8], index: 5, kind: output, shape index: {2}]
  %6 = xla_tuple %s3, %s4, %s5
  %s7 = sld [smem:[#allocation0]]
  $region65: #{res_block_forward.4} parent=0
    _
  %s9 = ssub.s32 1, %s7
  %s10 = scalar_select 0, %s9, %s7
  loop: start=0, step=1, limit=18
  $region2: #{res_block_forward.4} parent=0 // loop_pre_header
    _
  $region3: #{res_block_forward.4} parent=0 // loop_header
    %s12 = sphi 0, %s16
    %p13 = scmp.ge.s32.totalorder %s12, 18
    %s19 = sphi 0, %s31
    %s20 = sphi 0, %s27
    %s21 = sphi 0, %s19
    %s22 = sphi 0, %s20
    %s23 = sphi 0, %s21
    %s24 = sphi 0, %s22
    %s34 = sphi 0, %s36
    %s37 = sphi 0, %s34
    %s38 = sphi 0, %s37
    %s54 = sphi 0, %s38
    %s58 = sphi 0, %s58
    %s60 = sphi 0, %s58
    %s61 = sphi 0, %s60
    %s75 = sphi 0, %s61
    %s79 = sphi 0, %s79
    %s81 = sphi 0, %s79
    %s82 = sphi 0, %s81
    %s96 = sphi 0, %s82
    %s104 = sphi 0, %s106
    %s107 = sphi 0, %s104
    %s108 = sphi 0, %s107
    %s124 = sphi 0, %s108
    %s130 = sphi 0, %s132
    %s133 = sphi 0, %s130
    %s134 = sphi 0, %s133
    %s150 = sphi 0, %s134
    %s156 = sphi 0, %s158
    %s159 = sphi 0, %s156
    %s160 = sphi 0, %s159
    %s176 = sphi 0, %s160
  $region4: #{res_block_forward.4} parent=0 // loop_header_branch
    %15 = sbr.rel (%p13) target = $region8
  $region5: #{res_block_forward.4} parent=0 // loop_body
    %s17 = ssub.s32 %s12, 1
    %s18 = ssub.s32 %s12, 2
    %s25 = sadd.s32 1, %s20
    %p26 = scmp.ge.s32.totalorder %s25, 8
    %s27 = scalar_select %p26, 0, %s25
    %s28 = sadd.s32 1, %s19
    %s29 = scalar_select %p26, %s28, %s19
    %p30 = scmp.ge.s32.totalorder %s29, 2
    %s31 = scalar_select %p30, 0, %s29
    %s32 = ssub.s32 %s19, %s31
    %p33 = scmp.eq.s32.totalorder %s32, 0
    %s35 = sadd.s32 %s34, 1
    %s36 = scalar_select %p33, %s34, %s35
    %p39 = pneg %p33
    %p40 = scmp.eq.s32.totalorder %s12, 15
    %p41 = por %p39, %p40
    %p42 = scmp.ne.s32.totalorder %s34, %s37
    %p43 = scmp.eq.s32.totalorder %s12, 0
    %p44 = por %p42, %p43
    %p45 = scmp.ne.s32.totalorder %s34, %s37
    %p46 = scmp.eq.s32.totalorder %s17, 15
    %p47 = por %p45, %p46
    %p48 = scmp.ne.s32.totalorder %s37, %s38
    %p49 = scmp.eq.s32.totalorder %s17, 0
    %p50 = por %p48, %p49
    %p51 = scmp.ne.s32.totalorder %s37, %s38
    %p52 = scmp.eq.s32.totalorder %s18, 15
    %p53 = por %p51, %p52
    %p55 = scmp.ne.s32.totalorder %s38, %s54
    %p56 = scmp.eq.s32.totalorder %s18, 0
    %p57 = por %p55, %p56
    %s59 = sadd.s32 %s58, 1
    %p62 = scmp.eq.s32.totalorder %s12, 15
    %p63 = scmp.ne.s32.totalorder %s58, %s60
    %p64 = scmp.eq.s32.totalorder %s12, 0
    %p65 = por %p63, %p64
    %p66 = scmp.ne.s32.totalorder %s58, %s60
    %p67 = scmp.eq.s32.totalorder %s17, 15
    %p68 = por %p66, %p67
    %p69 = scmp.ne.s32.totalorder %s60, %s61
    %p70 = scmp.eq.s32.totalorder %s17, 0
    %p71 = por %p69, %p70
    %p72 = scmp.ne.s32.totalorder %s60, %s61
    %p73 = scmp.eq.s32.totalorder %s18, 15
    %p74 = por %p72, %p73
    %p76 = scmp.ne.s32.totalorder %s61, %s75
    %p77 = scmp.eq.s32.totalorder %s18, 0
    %p78 = por %p76, %p77
    %s80 = sadd.s32 %s79, 1
    %p83 = scmp.eq.s32.totalorder %s12, 15
    %p84 = scmp.ne.s32.totalorder %s79, %s81
    %p85 = scmp.eq.s32.totalorder %s12, 0
    %p86 = por %p84, %p85
    %p87 = scmp.ne.s32.totalorder %s79, %s81
    %p88 = scmp.eq.s32.totalorder %s17, 15
    %p89 = por %p87, %p88
    %p90 = scmp.ne.s32.totalorder %s81, %s82
    %p91 = scmp.eq.s32.totalorder %s17, 0
    %p92 = por %p90, %p91
    %p93 = scmp.ne.s32.totalorder %s81, %s82
    %p94 = scmp.eq.s32.totalorder %s18, 15
    %p95 = por %p93, %p94
    %p97 = scmp.ne.s32.totalorder %s82, %s96
    %p98 = scmp.eq.s32.totalorder %s18, 0
    %p99 = por %p97, %p98
    %s100 = ssub.s32 %s19, %s31
    %s101 = ssub.s32 %s20, %s27
    %s102 = sor.u32 %s100, %s101
    %p103 = scmp.eq.s32.totalorder %s102, 0
    %s105 = sadd.s32 %s104, 1
    %s106 = scalar_select %p103, %s104, %s105
    %p109 = pneg %p103
    %p110 = scmp.eq.s32.totalorder %s12, 15
    %p111 = por %p109, %p110
    %p112 = scmp.ne.s32.totalorder %s104, %s107
    %p113 = scmp.eq.s32.totalorder %s12, 0
    %p114 = por %p112, %p113
    %p115 = scmp.ne.s32.totalorder %s104, %s107
    %p116 = scmp.eq.s32.totalorder %s17, 15
    %p117 = por %p115, %p116
    %p118 = scmp.ne.s32.totalorder %s107, %s108
    %p119 = scmp.eq.s32.totalorder %s17, 0
    %p120 = por %p118, %p119
    %p121 = scmp.ne.s32.totalorder %s107, %s108
    %p122 = scmp.eq.s32.totalorder %s18, 15
    %p123 = por %p121, %p122
    %p125 = scmp.ne.s32.totalorder %s108, %s124
    %p126 = scmp.eq.s32.totalorder %s18, 0
    %p127 = por %p125, %p126
    %s128 = ssub.s32 %s19, %s31
    %p129 = scmp.eq.s32.totalorder %s128, 0
    %s131 = sadd.s32 %s130, 1
    %s132 = scalar_select %p129, %s130, %s131
    %p135 = pneg %p129
    %p136 = scmp.eq.s32.totalorder %s12, 15
    %p137 = por %p135, %p136
    %p138 = scmp.ne.s32.totalorder %s130, %s133
    %p139 = scmp.eq.s32.totalorder %s12, 0
    %p140 = por %p138, %p139
    %p141 = scmp.ne.s32.totalorder %s130, %s133
    %p142 = scmp.eq.s32.totalorder %s17, 15
    %p143 = por %p141, %p142
    %p144 = scmp.ne.s32.totalorder %s133, %s134
    %p145 = scmp.eq.s32.totalorder %s17, 0
    %p146 = por %p144, %p145
    %p147 = scmp.ne.s32.totalorder %s133, %s134
    %p148 = scmp.eq.s32.totalorder %s18, 15
    %p149 = por %p147, %p148
    %p151 = scmp.ne.s32.totalorder %s134, %s150
    %p152 = scmp.eq.s32.totalorder %s18, 0
    %p153 = por %p151, %p152
    %s154 = ssub.s32 %s19, %s31
    %p155 = scmp.eq.s32.totalorder %s154, 0
    %s157 = sadd.s32 %s156, 1
    %s158 = scalar_select %p155, %s156, %s157
    %p161 = pneg %p155
    %p162 = scmp.eq.s32.totalorder %s12, 15
    %p163 = por %p161, %p162
    %p164 = scmp.ne.s32.totalorder %s156, %s159
    %p165 = scmp.eq.s32.totalorder %s12, 0
    %p166 = por %p164, %p165
    %p167 = scmp.ne.s32.totalorder %s156, %s159
    %p168 = scmp.eq.s32.totalorder %s17, 15
    %p169 = por %p167, %p168
    %p170 = scmp.ne.s32.totalorder %s159, %s160
    %p171 = scmp.eq.s32.totalorder %s17, 0
    %p172 = por %p170, %p171
    %p173 = scmp.ne.s32.totalorder %s159, %s160
    %p174 = scmp.eq.s32.totalorder %s18, 15
    %p175 = por %p173, %p174
    %p177 = scmp.ne.s32.totalorder %s160, %s176
    %p178 = scmp.eq.s32.totalorder %s18, 0
    %p179 = por %p177, %p178
    %p180 = scmp.le.s32.totalorder 1, %s12
    %p181 = scmp.lt.s32.totalorder %s12, 17
    %p182 = pnand %p180, %p181
    %p183 = pneg %p182
    // Predicated region
    $region9: #{res_block_forward.4} parent=5 // pred_check
      _
    $region10: #{res_block_forward.4} parent=5 // pred_check_branch
      %185 = sbr.rel (%p182) target = $region12
    $region11: #{res_block_forward.4} parent=5 // pred_region
      %s186 = ssub.s32 %s12, 1
      // Predicated region
      $region13: #{res_block_forward.4} parent=11 // pred_check
        %p187 = pneg %p71
      $region14: #{res_block_forward.4} parent=11 // pred_check_branch
        %189 = sbr.rel (%p187) target = $region16
      $region15: #{res_block_forward.4} parent=11 // pred_region
        _
      $region16: #{res_block_forward.4} parent=11 // pred_fallthru
        _
      // Predicated region
      $region17: #{res_block_forward.4} parent=11 // pred_check
        %p190 = pneg %p92
      $region18: #{res_block_forward.4} parent=11 // pred_check_branch
        %192 = sbr.rel (%p190) target = $region20
      $region19: #{res_block_forward.4} parent=11 // pred_region
        _
      $region20: #{res_block_forward.4} parent=11 // pred_fallthru
        _
    $region12: #{res_block_forward.4} parent=5 // pred_fallthru
      _
    %p193 = scmp.lt.s32.totalorder %s12, 16
    // Predicated region
    $region21: #{res_block_forward.4} parent=5 // pred_check
      %p194 = pneg %p193
    $region22: #{res_block_forward.4} parent=5 // pred_check_branch
      %196 = sbr.rel (%p194) target = $region24
    $region23: #{res_block_forward.4} parent=5 // pred_region
      // Predicated region
      $region25: #{res_block_forward.4} parent=23 // pred_check
        %p197 = pneg %p44
      $region26: #{res_block_forward.4} parent=23 // pred_check_branch
        %199 = sbr.rel (%p197) target = $region28
      $region27: #{res_block_forward.4} parent=23 // pred_region
        %p200 = scmp.lt.s32.totalorder %s19, 1
        %s201 = scalar_select %p200, %s19, 1
        %s202 = smul.addr %s201, 130
        %s203 = smul.addr %s202, 4
        %s204 = scalar_lea.vmem %s0, %s203
      $region28: #{res_block_forward.4} parent=23 // pred_fallthru
        _
    $region24: #{res_block_forward.4} parent=5 // pred_fallthru
      _
    %p205 = scmp.le.s32.totalorder 1, %s12
    %p206 = scmp.lt.s32.totalorder %s12, 17
    %p207 = pnand %p205, %p206
    %p208 = pneg %p207
    // Predicated region
    $region29: #{res_block_forward.4} parent=5 // pred_check
      _
    $region30: #{res_block_forward.4} parent=5 // pred_check_branch
      %210 = sbr.rel (%p207) target = $region32
    $region31: #{res_block_forward.4} parent=5 // pred_region
      %s211 = ssub.s32 %s12, 1
      %p212 = scmp.lt.s32.totalorder %s21, 1
      %s213 = scalar_select %p212, %s21, 1
      %s214 = smul.addr %s213, 130
      %s215 = smul.addr %s214, 4
      %s216 = scalar_lea.vmem %s0, %s215
      %p217 = pneg %p50
      %p218 = pneg %p47
      %p219 = pneg %p71
      %p220 = pneg %p68
      %p221 = pneg %p92
      %p222 = pneg %p89
      %p223 = pneg %p120
      %p224 = pneg %p117
      %p225 = scmp.lt.s32.totalorder %s21, 1
      %s226 = scalar_select %p225, %s21, 1
      %p227 = scmp.lt.s32.totalorder %s22, 7
      %s228 = scalar_select %p227, %s22, 7
      %s229 = smul.addr %s228, 10
      %s230 = smul.addr %s226, 80
      %s231 = sadd.s32 %s229, %s230
      %s232 = smul.addr %s231, 8
      %s233 = scalar_lea.vmem %s3, %s232
      %p234 = pneg %p146
      %p235 = pneg %p143
      %p236 = scmp.lt.s32.totalorder %s21, 1
      %s237 = scalar_select %p236, %s21, 1
      %s238 = scalar_lea.vmem %s4, %s237
      %p239 = pneg %p172
      %p240 = pneg %p169
      %p241 = scmp.lt.s32.totalorder %s21, 1
      %s242 = scalar_select %p241, %s21, 1
      %s243 = scalar_lea.vmem %s5, %s242
      %p244 = scmp.lt.s32.totalorder %s21, 1
      %s245 = scalar_select %p244, %s21, 1
      %s246 = smul.addr %s245, 130
      %s247 = smul.addr %s246, 4
      %s248 = scalar_lea.vmem %s0, %s247
      %p249 = scmp.lt.s32.totalorder %s21, 1
      %s250 = scalar_select %p249, %s21, 1
      %p251 = scmp.lt.s32.totalorder %s22, 7
      %s252 = scalar_select %p251, %s22, 7
      %s253 = smul.addr %s252, 10
      %s254 = smul.addr %s250, 80
      %s255 = sadd.s32 %s253, %s254
      %s256 = smul.addr %s255, 8
      %s257 = scalar_lea.vmem %s3, %s256
      %p258 = scmp.lt.s32.totalorder %s21, 1
      %s259 = scalar_select %p258, %s21, 1
      %s260 = scalar_lea.vmem %s4, %s259
      %p261 = scmp.lt.s32.totalorder %s21, 1
      %s262 = scalar_select %p261, %s21, 1
      %s263 = scalar_lea.vmem %s5, %s262
      %p265 = scmp.eq.s32.totalorder %s22, 0
      // Predicated region
      $region33: #{res_block_forward.4} parent=31 // pred_check
        %p266 = pneg %p265
      $region34: #{res_block_forward.4} parent=31 // pred_check_branch
        %268 = sbr.rel (%p266) target = $region36
      $region35: #{res_block_forward.4} parent=31 // pred_region
        %vm269 = vcmask 57344
        %270 = vst.msk [vmem:[%s260] sm:$0x1] %vm269, 0.0
        %271 = vst.msk [vmem:[%s263] sm:$0x1] %vm269, 0.0
      $region36: #{res_block_forward.4} parent=31 // pred_fallthru
        _
      %s272 = smul.u32 %s22, 13
      %s273 = smul.addr %s272, 4
      %s274 = scalar_lea.vmem %s248, %s273
      %v275 = vld [vmem:[%s274] sm:$0xf]
      %v276 = vld [vmem:[%s274 + $0x4] sm:$0xf]
      %v277 = vld [vmem:[%s274 + $0x8] sm:$0xf]
      %v278 = vld [vmem:[%s274 + $0xc] sm:$0xf]
      %v279 = vld [vmem:[%s274 + $0x10] sm:$0xf]
      %v280 = vld [vmem:[%s274 + $0x14] sm:$0xf]
      %v281 = vld [vmem:[%s274 + $0x18] sm:$0xf]
      %v282 = vld [vmem:[%s274 + $0x1c] sm:$0xf]
      %v283 = vld [vmem:[%s274 + $0x20] sm:$0xf]
      %v284 = vld [vmem:[%s274 + $0x24] sm:$0xf]
      %v285 = vld [vmem:[%s1] sm:$0xf]
      %v286 = vld [vmem:[%s274 + $0x28] sm:$0x1]
      %s287 = scalar_lea.vmem %s1, 4
      %v288 = vld [vmem:[%s287] sm:$0xf]
      %v300 = vunpack.c.l.b16 %v275
      %v301 = vunpack.c.l.b16 %v276
      %v302 = vunpack.c.l.b16 %v277
      %v303 = vunpack.c.l.b16 %v278
      %v304 = vunpack.c.l.b16 %v279
      %v305 = vunpack.c.l.b16 %v280
      %v306 = vunpack.c.l.b16 %v281
      %v307 = vunpack.c.l.b16 %v282
      %v308 = vunpack.c.l.b16 %v283
      %v309 = vunpack.c.l.b16 %v284
      %v310 = vunpack.c.l.b16 %v286
      %v311 = vpack.c.b16 %v301, %v300
      %v312 = vpack.c.b16 %v303, %v302
      %v313 = vpack.c.b16 %v305, %v304
      %v314 = vpack.c.b16 %v307, %v306
      %v315 = vpack.c.b16 %v309, %v308
      %v316 = vpack.c.b16 %v310, %v310
      %vm317 = vsmask.f32 7424
      %v319 = vshrl.u32 %v311, 16
      %v321 = vshll.u32 %v311, 16
      %v323 = vrot.slane %v321, 1
      %v324 = vor.u32 %v319, %v323
      %v326 = vshll.u32 %v312, 16
      %v328 = vrot.slane %v326, 1
      %v329 = vsel %vm317, %v324, %v328
      %v330 = vshrl.u32 %v312, 16
      %v332 = vor.u32 %v330, %v328
      %v334 = vshll.u32 %v313, 16
      %v336 = vrot.slane %v334, 1
      %v337 = vsel %vm317, %v332, %v336
      %v338 = vshrl.u32 %v313, 16
      %v340 = vor.u32 %v338, %v336
      %v342 = vshll.u32 %v314, 16
      %v344 = vrot.slane %v342, 1
      %v345 = vsel %vm317, %v340, %v344
      %v346 = vshrl.u32 %v314, 16
      %v348 = vor.u32 %v346, %v344
      %v350 = vshll.u32 %v315, 16
      %v352 = vrot.slane %v350, 1
      %v353 = vsel %vm317, %v348, %v352
      %v354 = vshrl.u32 %v315, 16
      %v356 = vor.u32 %v354, %v352
      %v358 = vshll.u32 %v316, 16
      %v360 = vrot.slane %v358, 1
      %v361 = vsel %vm317, %v356, %v360
      %vm362 = vcmask 64512
      %v364 = vsel %vm362, %v329, 0
      %v367 = vsel %vm362, %v337, 0
      %v370 = vsel %vm362, %v345, 0
      %v373 = vsel %vm362, %v353, 0
      %v376 = vsel %vm362, %v361, 0
      %vm378 = vcmask 1043456
      %v380 = vsel %vm378, %v288, 0
      %382 = vmatprep.subr.bf16.mxu0 0
      %383 = vmatpush1.bf16.msra.mxu0 0
      %384 = vmatprep.subr.bf16.mxu0 0
      %385 = vmatpush1.bf16.msra.mxu0 0
      %386 = vmatprep.subr.bf16.mxu0 0
      %387 = vmatpush1.bf16.msra.mxu0 0
      %388 = vmatprep.subr.bf16.mxu0 0
      %389 = vmatpush1.bf16.msra.mxu0 0
      %390 = vmatprep.subr.bf16.mxu0 0
      %391 = vmatpush1.bf16.msra.mxu0 0
      %392 = vmatprep.subr.bf16.mxu0 0
      %393 = vmatpush1.bf16.msra.mxu0 0
      %394 = vmatprep.subr.bf16.mxu0 0
      %395 = vmatpush1.bf16.msra.mxu0 0
      %396 = vmatprep.subr.bf16.mxu0 0
      %397 = vmatpush1.bf16.msra.mxu0 %v380
      %398 = vmatprep.subr.bf16.mxu0 0
      %399 = vmatpush2.bf16.msra.mxu0 0
      %400 = vmatprep.subr.bf16.mxu0 0
      %401 = vmatpush2.bf16.msra.mxu0 0
      %402 = vmatprep.subr.bf16.mxu0 0
      %403 = vmatpush2.bf16.msra.mxu0 0
      %404 = vmatprep.subr.bf16.mxu0 0
      %405 = vmatpush2.bf16.msra.mxu0 0
      %406 = vmatprep.subr.bf16.mxu0 0
      %407 = vmatpush2.bf16.msra.mxu0 0
      %408 = vmatprep.subr.bf16.mxu0 0
      %409 = vmatpush2.bf16.msra.mxu0 0
      %410 = vmatprep.subr.bf16.mxu0 0
      %411 = vmatpush2.bf16.msra.mxu0 0
      %412 = vmatprep.subr.bf16.mxu0 0
      %413 = vmatpush2.bf16.msra.mxu0 0
      %414 = vmatprep.mubr.bf16.mxu0 0
      %415 = vmatmul.mubr.bf16.gmra.mxu0 %v364
      %v416 = vpop.f32.mrf.mxu0
      %v417 = vadd.f32 0.0, %v416
      %v418 = vpop.f32.mrf.mxu0
      %v419 = vpop.f32.mrf.mxu0
      %v420 = vadd.f32 0.0, %v419
      %v421 = vpop.f32.mrf.mxu0
      %422 = vmatprep.mubr.bf16.mxu0 0
      %423 = vmatmul.mubr.bf16.gmra.mxu0 %v367
      %v424 = vpop.f32.mrf.mxu0
      %v425 = vadd.f32 0.0, %v424
      %v426 = vpop.f32.mrf.mxu0
      %v427 = vpop.f32.mrf.mxu0
      %v428 = vadd.f32 0.0, %v427
      %v429 = vpop.f32.mrf.mxu0
      %430 = vmatprep.mubr.bf16.mxu0 0
      %431 = vmatmul.mubr.bf16.gmra.mxu0 %v370
      %v432 = vpop.f32.mrf.mxu0
      %v433 = vadd.f32 0.0, %v432
      %v434 = vpop.f32.mrf.mxu0
      %v435 = vpop.f32.mrf.mxu0
      %v436 = vadd.f32 0.0, %v435
      %v437 = vpop.f32.mrf.mxu0
      %438 = vmatprep.mubr.bf16.mxu0 0
      %439 = vmatmul.mubr.bf16.gmra.mxu0 %v373
      %v440 = vpop.f32.mrf.mxu0
      %v441 = vadd.f32 0.0, %v440
      %v442 = vpop.f32.mrf.mxu0
      %v443 = vpop.f32.mrf.mxu0
      %v444 = vadd.f32 0.0, %v443
      %v445 = vpop.f32.mrf.mxu0
      %446 = vmatprep.mubr.bf16.mxu0 0
      %447 = vmatmul.mubr.bf16.gmra.mxu0 %v376
      %v448 = vpop.f32.mrf.mxu0
      %v449 = vadd.f32 0.0, %v448
      %v450 = vpop.f32.mrf.mxu0
      %v451 = vpop.f32.mrf.mxu0
      %v452 = vadd.f32 0.0, %v451
      %v453 = vpop.f32.mrf.mxu0
      %454 = vdwg.mxu0
      %v455 = vsel %vm362, %v311, 0
      %v457 = vsel %vm362, %v312, 0
      %v459 = vsel %vm362, %v313, 0
      %v461 = vsel %vm362, %v314, 0
      %v463 = vsel %vm362, %v315, 0
      %v466 = vsel %vm378, %v285, 0
      %468 = vmatprep.subr.bf16.mxu0 0
      %469 = vmatpush1.bf16.msra.mxu0 0
      %470 = vmatprep.subr.bf16.mxu0 0
      %471 = vmatpush1.bf16.msra.mxu0 0
      %472 = vmatprep.subr.bf16.mxu0 0
      %473 = vmatpush1.bf16.msra.mxu0 0
      %474 = vmatprep.subr.bf16.mxu0 0
      %475 = vmatpush1.bf16.msra.mxu0 0
      %476 = vmatprep.subr.bf16.mxu0 0
      %477 = vmatpush1.bf16.msra.mxu0 0
      %478 = vmatprep.subr.bf16.mxu0 0
      %479 = vmatpush1.bf16.msra.mxu0 0
      %480 = vmatprep.subr.bf16.mxu0 0
      %481 = vmatpush1.bf16.msra.mxu0 0
      %482 = vmatprep.subr.bf16.mxu0 0
      %483 = vmatpush1.bf16.msra.mxu0 %v466
      %484 = vmatprep.subr.bf16.mxu0 0
      %485 = vmatpush2.bf16.msra.mxu0 0
      %486 = vmatprep.subr.bf16.mxu0 0
      %487 = vmatpush2.bf16.msra.mxu0 0
      %488 = vmatprep.subr.bf16.mxu0 0
      %489 = vmatpush2.bf16.msra.mxu0 0
      %490 = vmatprep.subr.bf16.mxu0 0
      %491 = vmatpush2.bf16.msra.mxu0 0
      %492 = vmatprep.subr.bf16.mxu0 0
      %493 = vmatpush2.bf16.msra.mxu0 0
      %494 = vmatprep.subr.bf16.mxu0 0
      %495 = vmatpush2.bf16.msra.mxu0 0
      %496 = vmatprep.subr.bf16.mxu0 0
      %497 = vmatpush2.bf16.msra.mxu0 0
      %498 = vmatprep.subr.bf16.mxu0 0
      %499 = vmatpush2.bf16.msra.mxu0 0
      %500 = vmatprep.mubr.bf16.mxu0 0
      %501 = vmatmul.mubr.bf16.gmra.mxu0 %v455
      %v502 = vpop.f32.mrf.mxu0
      %v503 = vadd.f32 %v417, %v502
      %v504 = vpop.f32.mrf.mxu0
      %v505 = vpop.f32.mrf.mxu0
      %v506 = vadd.f32 %v420, %v505
      %v507 = vpop.f32.mrf.mxu0
      %508 = vmatprep.mubr.bf16.mxu0 0
      %509 = vmatmul.mubr.bf16.gmra.mxu0 %v457
      %v510 = vpop.f32.mrf.mxu0
      %v511 = vadd.f32 %v425, %v510
      %v512 = vpop.f32.mrf.mxu0
      %v513 = vpop.f32.mrf.mxu0
      %v514 = vadd.f32 %v428, %v513
      %v515 = vpop.f32.mrf.mxu0
      %516 = vmatprep.mubr.bf16.mxu0 0
      %517 = vmatmul.mubr.bf16.gmra.mxu0 %v459
      %v518 = vpop.f32.mrf.mxu0
      %v519 = vadd.f32 %v433, %v518
      %v520 = vpop.f32.mrf.mxu0
      %v521 = vpop.f32.mrf.mxu0
      %v522 = vadd.f32 %v436, %v521
      %v523 = vpop.f32.mrf.mxu0
      %524 = vmatprep.mubr.bf16.mxu0 0
      %525 = vmatmul.mubr.bf16.gmra.mxu0 %v461
      %v526 = vpop.f32.mrf.mxu0
      %v527 = vadd.f32 %v441, %v526
      %v528 = vpop.f32.mrf.mxu0
      %v529 = vpop.f32.mrf.mxu0
      %v530 = vadd.f32 %v444, %v529
      %v531 = vpop.f32.mrf.mxu0
      %532 = vmatprep.mubr.bf16.mxu0 0
      %533 = vmatmul.mubr.bf16.gmra.mxu0 %v463
      %v534 = vpop.f32.mrf.mxu0
      %v535 = vadd.f32 %v449, %v534
      %v536 = vpop.f32.mrf.mxu0
      %v537 = vpop.f32.mrf.mxu0
      %v538 = vadd.f32 %v452, %v537
      %v539 = vpop.f32.mrf.mxu0
      %540 = vdwg.mxu0
      %v541 = vld [vmem:[%s274] sm:$0xe]
      %s542 = scalar_lea.vmem %s1, 8
      %v543 = vld [vmem:[%s542] sm:$0xf]
      %v545 = vunpack.c.l.b16 %v541
      %v546 = vpack.c.b16 %v301, %v545
      %vm547 = vcmask 1046528
      %v548 = vrot.slane %v546, 1
      %v549 = vrot.slane %v312, 1
      %v550 = vsel %vm547, %v548, %v549
      %v551 = vrot.slane %v313, 1
      %v552 = vsel %vm547, %v549, %v551
      %v553 = vrot.slane %v314, 1
      %v554 = vsel %vm547, %v551, %v553
      %v555 = vrot.slane %v315, 1
      %v556 = vsel %vm547, %v553, %v555
      %v557 = vrot.slane %v316, 1
      %v558 = vsel %vm547, %v555, %v557
      %v560 = vsel %vm362, %v550, 0
      %v563 = vsel %vm362, %v552, 0
      %v566 = vsel %vm362, %v554, 0
      %v569 = vsel %vm362, %v556, 0
      %v572 = vsel %vm362, %v558, 0
      %v575 = vsel %vm378, %v543, 0
      %577 = vmatprep.subr.bf16.mxu0 0
      %578 = vmatpush1.bf16.msra.mxu0 0
      %579 = vmatprep.subr.bf16.mxu0 0
      %580 = vmatpush1.bf16.msra.mxu0 0
      %581 = vmatprep.subr.bf16.mxu0 0
      %582 = vmatpush1.bf16.msra.mxu0 0
      %583 = vmatprep.subr.bf16.mxu0 0
      %584 = vmatpush1.bf16.msra.mxu0 0
      %585 = vmatprep.subr.bf16.mxu0 0
      %586 = vmatpush1.bf16.msra.mxu0 0
      %587 = vmatprep.subr.bf16.mxu0 0
      %588 = vmatpush1.bf16.msra.mxu0 0
      %589 = vmatprep.subr.bf16.mxu0 0
      %590 = vmatpush1.bf16.msra.mxu0 0
      %591 = vmatprep.subr.bf16.mxu0 0
      %592 = vmatpush1.bf16.msra.mxu0 %v575
      %593 = vmatprep.subr.bf16.mxu0 0
      %594 = vmatpush2.bf16.msra.mxu0 0
      %595 = vmatprep.subr.bf16.mxu0 0
      %596 = vmatpush2.bf16.msra.mxu0 0
      %597 = vmatprep.subr.bf16.mxu0 0
      %598 = vmatpush2.bf16.msra.mxu0 0
      %599 = vmatprep.subr.bf16.mxu0 0
      %600 = vmatpush2.bf16.msra.mxu0 0
      %601 = vmatprep.subr.bf16.mxu0 0
      %602 = vmatpush2.bf16.msra.mxu0 0
      %603 = vmatprep.subr.bf16.mxu0 0
      %604 = vmatpush2.bf16.msra.mxu0 0
      %605 = vmatprep.subr.bf16.mxu0 0
      %606 = vmatpush2.bf16.msra.mxu0 0
      %607 = vmatprep.subr.bf16.mxu0 0
      %608 = vmatpush2.bf16.msra.mxu0 0
      %609 = vmatprep.mubr.bf16.mxu0 0
      %610 = vmatmul.mubr.bf16.gmra.mxu0 %v560
      %v611 = vpop.f32.mrf.mxu0
      %v612 = vadd.f32 0.0, %v611
      %v613 = vpop.f32.mrf.mxu0
      %v614 = vpop.f32.mrf.mxu0
      %v615 = vadd.f32 0.0, %v614
      %v616 = vpop.f32.mrf.mxu0
      %617 = vmatprep.mubr.bf16.mxu0 0
      %618 = vmatmul.mubr.bf16.gmra.mxu0 %v563
      %v619 = vpop.f32.mrf.mxu0
      %v620 = vadd.f32 0.0, %v619
      %v621 = vpop.f32.mrf.mxu0
      %v622 = vpop.f32.mrf.mxu0
      %v623 = vadd.f32 0.0, %v622
      %v624 = vpop.f32.mrf.mxu0
      %625 = vmatprep.mubr.bf16.mxu0 0
      %626 = vmatmul.mubr.bf16.gmra.mxu0 %v566
      %v627 = vpop.f32.mrf.mxu0
      %v628 = vadd.f32 0.0, %v627
      %v629 = vpop.f32.mrf.mxu0
      %v630 = vpop.f32.mrf.mxu0
      %v631 = vadd.f32 0.0, %v630
      %v632 = vpop.f32.mrf.mxu0
      %633 = vmatprep.mubr.bf16.mxu0 0
      %634 = vmatmul.mubr.bf16.gmra.mxu0 %v569
      %v635 = vpop.f32.mrf.mxu0
      %v636 = vadd.f32 0.0, %v635
      %v637 = vpop.f32.mrf.mxu0
      %v638 = vpop.f32.mrf.mxu0
      %v639 = vadd.f32 0.0, %v638
      %v640 = vpop.f32.mrf.mxu0
      %641 = vmatprep.mubr.bf16.mxu0 0
      %642 = vmatmul.mubr.bf16.gmra.mxu0 %v572
      %v643 = vpop.f32.mrf.mxu0
      %v644 = vadd.f32 0.0, %v643
      %v645 = vpop.f32.mrf.mxu0
      %v646 = vpop.f32.mrf.mxu0
      %v647 = vadd.f32 0.0, %v646
      %v648 = vpop.f32.mrf.mxu0
      %649 = vdwg.mxu0
      %v650 = vadd.f32 %v503, %v612
      %v651 = vadd.f32 %v506, %v615
      %v652 = vadd.f32 %v511, %v620
      %v653 = vadd.f32 %v514, %v623
      %v654 = vadd.f32 %v519, %v628
      %v655 = vadd.f32 %v522, %v631
      %v656 = vadd.f32 %v527, %v636
      %v657 = vadd.f32 %v530, %v639
      %v658 = vadd.f32 %v535, %v644
      %v659 = vadd.f32 %v538, %v647
      %v660 = vld [vmem:[%s274 + $0x4] sm:$0xe]
      %v661 = vld [vmem:[%s274 + $0x8] sm:$0xf]
      %v662 = vld [vmem:[%s274 + $0xc] sm:$0xf]
      %v663 = vld [vmem:[%s274 + $0x10] sm:$0xf]
      %v664 = vld [vmem:[%s274 + $0x14] sm:$0xf]
      %v665 = vld [vmem:[%s274 + $0x18] sm:$0xf]
      %v666 = vld [vmem:[%s274 + $0x1c] sm:$0xf]
      %v667 = vld [vmem:[%s274 + $0x20] sm:$0xf]
      %v668 = vld [vmem:[%s274 + $0x24] sm:$0xf]
      %v669 = vld [vmem:[%s274 + $0x28] sm:$0xf]
      %v670 = vld [vmem:[%s274 + $0x2c] sm:$0x1]
      %s671 = scalar_lea.vmem %s1, 12
      %v672 = vld [vmem:[%s671] sm:$0xf]
      %v684 = vunpack.c.l.b16 %v660
      %v685 = vunpack.c.l.b16 %v661
      %v686 = vunpack.c.l.b16 %v662
      %v687 = vunpack.c.l.b16 %v663
      %v688 = vunpack.c.l.b16 %v664
      %v689 = vunpack.c.l.b16 %v665
      %v690 = vunpack.c.l.b16 %v666
      %v691 = vunpack.c.l.b16 %v667
      %v692 = vunpack.c.l.b16 %v668
      %v693 = vunpack.c.l.b16 %v669
      %v694 = vunpack.c.l.b16 %v670
      %v695 = vpack.c.b16 %v685, %v684
      %v696 = vpack.c.b16 %v687, %v686
      %v697 = vpack.c.b16 %v689, %v688
      %v698 = vpack.c.b16 %v691, %v690
      %v699 = vpack.c.b16 %v693, %v692
      %v700 = vpack.c.b16 %v694, %v694
      %v701 = vrot.slane %v695, 1
      %v702 = vrot.slane %v696, 1
      %v703 = vsel %vm547, %v701, %v702
      %v704 = vrot.slane %v697, 1
      %v705 = vsel %vm547, %v702, %v704
      %v706 = vrot.slane %v698, 1
      %v707 = vsel %vm547, %v704, %v706
      %v708 = vrot.slane %v699, 1
      %v709 = vsel %vm547, %v706, %v708
      %v710 = vrot.slane %v700, 1
      %v711 = vsel %vm547, %v708, %v710
      %v713 = vsel %vm362, %v703, 0
      %v716 = vsel %vm362, %v705, 0
      %v719 = vsel %vm362, %v707, 0
      %v722 = vsel %vm362, %v709, 0
      %v725 = vsel %vm362, %v711, 0
      %v728 = vsel %vm378, %v672, 0
      %730 = vmatprep.subr.bf16.mxu0 0
      %731 = vmatpush1.bf16.msra.mxu0 0
      %732 = vmatprep.subr.bf16.mxu0 0
      %733 = vmatpush1.bf16.msra.mxu0 0
      %734 = vmatprep.subr.bf16.mxu0 0
      %735 = vmatpush1.bf16.msra.mxu0 0
      %736 = vmatprep.subr.bf16.mxu0 0
      %737 = vmatpush1.bf16.msra.mxu0 0
      %738 = vmatprep.subr.bf16.mxu0 0
      %739 = vmatpush1.bf16.msra.mxu0 0
      %740 = vmatprep.subr.bf16.mxu0 0
      %741 = vmatpush1.bf16.msra.mxu0 0
      %742 = vmatprep.subr.bf16.mxu0 0
      %743 = vmatpush1.bf16.msra.mxu0 0
      %744 = vmatprep.subr.bf16.mxu0 0
      %745 = vmatpush1.bf16.msra.mxu0 %v728
      %746 = vmatprep.subr.bf16.mxu0 0
      %747 = vmatpush2.bf16.msra.mxu0 0
      %748 = vmatprep.subr.bf16.mxu0 0
      %749 = vmatpush2.bf16.msra.mxu0 0
      %750 = vmatprep.subr.bf16.mxu0 0
      %751 = vmatpush2.bf16.msra.mxu0 0
      %752 = vmatprep.subr.bf16.mxu0 0
      %753 = vmatpush2.bf16.msra.mxu0 0
      %754 = vmatprep.subr.bf16.mxu0 0
      %755 = vmatpush2.bf16.msra.mxu0 0
      %756 = vmatprep.subr.bf16.mxu0 0
      %757 = vmatpush2.bf16.msra.mxu0 0
      %758 = vmatprep.subr.bf16.mxu0 0
      %759 = vmatpush2.bf16.msra.mxu0 0
      %760 = vmatprep.subr.bf16.mxu0 0
      %761 = vmatpush2.bf16.msra.mxu0 0
      %762 = vmatprep.mubr.bf16.mxu0 0
      %763 = vmatmul.mubr.bf16.gmra.mxu0 %v713
      %v764 = vpop.f32.mrf.mxu0
      %v765 = vadd.f32 0.0, %v764
      %v766 = vpop.f32.mrf.mxu0
      %v767 = vpop.f32.mrf.mxu0
      %v768 = vadd.f32 0.0, %v767
      %v769 = vpop.f32.mrf.mxu0
      %770 = vmatprep.mubr.bf16.mxu0 0
      %771 = vmatmul.mubr.bf16.gmra.mxu0 %v716
      %v772 = vpop.f32.mrf.mxu0
      %v773 = vadd.f32 0.0, %v772
      %v774 = vpop.f32.mrf.mxu0
      %v775 = vpop.f32.mrf.mxu0
      %v776 = vadd.f32 0.0, %v775
      %v777 = vpop.f32.mrf.mxu0
      %778 = vmatprep.mubr.bf16.mxu0 0
      %779 = vmatmul.mubr.bf16.gmra.mxu0 %v719
      %v780 = vpop.f32.mrf.mxu0
      %v781 = vadd.f32 0.0, %v780
      %v782 = vpop.f32.mrf.mxu0
      %v783 = vpop.f32.mrf.mxu0
      %v784 = vadd.f32 0.0, %v783
      %v785 = vpop.f32.mrf.mxu0
      %786 = vmatprep.mubr.bf16.mxu0 0
      %787 = vmatmul.mubr.bf16.gmra.mxu0 %v722
      %v788 = vpop.f32.mrf.mxu0
      %v789 = vadd.f32 0.0, %v788
      %v790 = vpop.f32.mrf.mxu0
      %v791 = vpop.f32.mrf.mxu0
      %v792 = vadd.f32 0.0, %v791
      %v793 = vpop.f32.mrf.mxu0
      %794 = vmatprep.mubr.bf16.mxu0 0
      %795 = vmatmul.mubr.bf16.gmra.mxu0 %v725
      %v796 = vpop.f32.mrf.mxu0
      %v797 = vadd.f32 0.0, %v796
      %v798 = vpop.f32.mrf.mxu0
      %v799 = vpop.f32.mrf.mxu0
      %v800 = vadd.f32 0.0, %v799
      %v801 = vpop.f32.mrf.mxu0
      %802 = vdwg.mxu0
      %v803 = vadd.f32 %v650, %v765
      %v804 = vadd.f32 %v651, %v768
      %v805 = vadd.f32 %v652, %v773
      %v806 = vadd.f32 %v653, %v776
      %v807 = vadd.f32 %v654, %v781
      %v808 = vadd.f32 %v655, %v784
      %v809 = vadd.f32 %v656, %v789
      %v810 = vadd.f32 %v657, %v792
      %v811 = vadd.f32 %v658, %v797
      %v812 = vadd.f32 %v659, %v800
      %v813 = vld [vmem:[%s274 + $0x2c] sm:$0x3]
      %s814 = scalar_lea.vmem %s1, 16
      %v815 = vld [vmem:[%s814] sm:$0xf]
      %v817 = vunpack.c.l.b16 %v813
      %v818 = vpack.c.b16 %v817, %v817
      %vm819 = vsmask.f32 6400
      %v821 = vshrl.u32 %v695, 16
      %v823 = vrot.slane %v821, 1
      %v824 = vshll.u32 %v695, 16
      %v826 = vrot.slane %v824, 2
      %v827 = vor.u32 %v823, %v826
      %v829 = vshrl.u32 %v696, 16
      %v831 = vrot.slane %v829, 1
      %v832 = vshll.u32 %v696, 16
      %v834 = vrot.slane %v832, 2
      %v835 = vor.u32 %v831, %v834
      %v836 = vsel %vm819, %v827, %v835
      %v838 = vshrl.u32 %v697, 16
      %v840 = vrot.slane %v838, 1
      %v841 = vshll.u32 %v697, 16
      %v843 = vrot.slane %v841, 2
      %v844 = vor.u32 %v840, %v843
      %v845 = vsel %vm819, %v835, %v844
      %v847 = vshrl.u32 %v698, 16
      %v849 = vrot.slane %v847, 1
      %v850 = vshll.u32 %v698, 16
      %v852 = vrot.slane %v850, 2
      %v853 = vor.u32 %v849, %v852
      %v854 = vsel %vm819, %v844, %v853
      %v856 = vshrl.u32 %v699, 16
      %v858 = vrot.slane %v856, 1
      %v859 = vshll.u32 %v699, 16
      %v861 = vrot.slane %v859, 2
      %v862 = vor.u32 %v858, %v861
      %v863 = vsel %vm819, %v853, %v862
      %v865 = vshrl.u32 %v818, 16
      %v867 = vrot.slane %v865, 1
      %v868 = vshll.u32 %v818, 16
      %v870 = vrot.slane %v868, 2
      %v871 = vor.u32 %v867, %v870
      %v872 = vsel %vm819, %v862, %v871
      %v874 = vsel %vm362, %v836, 0
      %v877 = vsel %vm362, %v845, 0
      %v880 = vsel %vm362, %v854, 0
      %v883 = vsel %vm362, %v863, 0
      %v886 = vsel %vm362, %v872, 0
      %v889 = vsel %vm378, %v815, 0
      %891 = vmatprep.subr.bf16.mxu0 0
      %892 = vmatpush1.bf16.msra.mxu0 0
      %893 = vmatprep.subr.bf16.mxu0 0
      %894 = vmatpush1.bf16.msra.mxu0 0
      %895 = vmatprep.subr.bf16.mxu0 0
      %896 = vmatpush1.bf16.msra.mxu0 0
      %897 = vmatprep.subr.bf16.mxu0 0
      %898 = vmatpush1.bf16.msra.mxu0 0
      %899 = vmatprep.subr.bf16.mxu0 0
      %900 = vmatpush1.bf16.msra.mxu0 0
      %901 = vmatprep.subr.bf16.mxu0 0
      %902 = vmatpush1.bf16.msra.mxu0 0
      %903 = vmatprep.subr.bf16.mxu0 0
      %904 = vmatpush1.bf16.msra.mxu0 0
      %905 = vmatprep.subr.bf16.mxu0 0
      %906 = vmatpush1.bf16.msra.mxu0 %v889
      %907 = vmatprep.subr.bf16.mxu0 0
      %908 = vmatpush2.bf16.msra.mxu0 0
      %909 = vmatprep.subr.bf16.mxu0 0
      %910 = vmatpush2.bf16.msra.mxu0 0
      %911 = vmatprep.subr.bf16.mxu0 0
      %912 = vmatpush2.bf16.msra.mxu0 0
      %913 = vmatprep.subr.bf16.mxu0 0
      %914 = vmatpush2.bf16.msra.mxu0 0
      %915 = vmatprep.subr.bf16.mxu0 0
      %916 = vmatpush2.bf16.msra.mxu0 0
      %917 = vmatprep.subr.bf16.mxu0 0
      %918 = vmatpush2.bf16.msra.mxu0 0
      %919 = vmatprep.subr.bf16.mxu0 0
      %920 = vmatpush2.bf16.msra.mxu0 0
      %921 = vmatprep.subr.bf16.mxu0 0
      %922 = vmatpush2.bf16.msra.mxu0 0
      %923 = vmatprep.mubr.bf16.mxu0 0
      %924 = vmatmul.mubr.bf16.gmra.mxu0 %v874
      %v925 = vpop.f32.mrf.mxu0
      %v926 = vadd.f32 0.0, %v925
      %v927 = vpop.f32.mrf.mxu0
      %v928 = vpop.f32.mrf.mxu0
      %v929 = vadd.f32 0.0, %v928
      %v930 = vpop.f32.mrf.mxu0
      %931 = vmatprep.mubr.bf16.mxu0 0
      %932 = vmatmul.mubr.bf16.gmra.mxu0 %v877
      %v933 = vpop.f32.mrf.mxu0
      %v934 = vadd.f32 0.0, %v933
      %v935 = vpop.f32.mrf.mxu0
      %v936 = vpop.f32.mrf.mxu0
      %v937 = vadd.f32 0.0, %v936
      %v938 = vpop.f32.mrf.mxu0
      %939 = vmatprep.mubr.bf16.mxu0 0
      %940 = vmatmul.mubr.bf16.gmra.mxu0 %v880
      %v941 = vpop.f32.mrf.mxu0
      %v942 = vadd.f32 0.0, %v941
      %v943 = vpop.f32.mrf.mxu0
      %v944 = vpop.f32.mrf.mxu0
      %v945 = vadd.f32 0.0, %v944
      %v946 = vpop.f32.mrf.mxu0
      %947 = vmatprep.mubr.bf16.mxu0 0
      %948 = vmatmul.mubr.bf16.gmra.mxu0 %v883
      %v949 = vpop.f32.mrf.mxu0
      %v950 = vadd.f32 0.0, %v949
      %v951 = vpop.f32.mrf.mxu0
      %v952 = vpop.f32.mrf.mxu0
      %v953 = vadd.f32 0.0, %v952
      %v954 = vpop.f32.mrf.mxu0
      %955 = vmatprep.mubr.bf16.mxu0 0
      %956 = vmatmul.mubr.bf16.gmra.mxu0 %v886
      %v957 = vpop.f32.mrf.mxu0
      %v958 = vadd.f32 0.0, %v957
      %v959 = vpop.f32.mrf.mxu0
      %v960 = vpop.f32.mrf.mxu0
      %v961 = vadd.f32 0.0, %v960
      %v962 = vpop.f32.mrf.mxu0
      %963 = vdwg.mxu0
      %v964 = vadd.f32 %v803, %v926
      %v965 = vadd.f32 %v804, %v929
      %v966 = vadd.f32 %v805, %v934
      %v967 = vadd.f32 %v806, %v937
      %v968 = vadd.f32 %v807, %v942
      %v969 = vadd.f32 %v808, %v945
      %v970 = vadd.f32 %v809, %v950
      %v971 = vadd.f32 %v810, %v953
      %v972 = vadd.f32 %v811, %v958
      %v973 = vadd.f32 %v812, %v961
      %v974 = vld [vmem:[%s274 + $0x4] sm:$0xc]
      %s975 = scalar_lea.vmem %s1, 20
      %v976 = vld [vmem:[%s975] sm:$0xf]
      %v978 = vunpack.c.l.b16 %v974
      %v979 = vpack.c.b16 %v685, %v978
      %vm980 = vcmask 1045504
      %v981 = vrot.slane %v979, 2
      %v982 = vrot.slane %v696, 2
      %v983 = vsel %vm980, %v981, %v982
      %v984 = vrot.slane %v697, 2
      %v985 = vsel %vm980, %v982, %v984
      %v986 = vrot.slane %v698, 2
      %v987 = vsel %vm980, %v984, %v986
      %v988 = vrot.slane %v699, 2
      %v989 = vsel %vm980, %v986, %v988
      %v990 = vrot.slane %v818, 2
      %v991 = vsel %vm980, %v988, %v990
      %v993 = vsel %vm362, %v983, 0
      %v996 = vsel %vm362, %v985, 0
      %v999 = vsel %vm362, %v987, 0
      %v1002 = vsel %vm362, %v989, 0
      %v1005 = vsel %vm362, %v991, 0
      %v1008 = vsel %vm378, %v976, 0
      %1010 = vmatprep.subr.bf16.mxu0 0
      %1011 = vmatpush1.bf16.msra.mxu0 0
      %1012 = vmatprep.subr.bf16.mxu0 0
      %1013 = vmatpush1.bf16.msra.mxu0 0
      %1014 = vmatprep.subr.bf16.mxu0 0
      %1015 = vmatpush1.bf16.msra.mxu0 0
      %1016 = vmatprep.subr.bf16.mxu0 0
      %1017 = vmatpush1.bf16.msra.mxu0 0
      %1018 = vmatprep.subr.bf16.mxu0 0
      %1019 = vmatpush1.bf16.msra.mxu0 0
      %1020 = vmatprep.subr.bf16.mxu0 0
      %1021 = vmatpush1.bf16.msra.mxu0 0
      %1022 = vmatprep.subr.bf16.mxu0 0
      %1023 = vmatpush1.bf16.msra.mxu0 0
      %1024 = vmatprep.subr.bf16.mxu0 0
      %1025 = vmatpush1.bf16.msra.mxu0 %v1008
      %1026 = vmatprep.subr.bf16.mxu0 0
      %1027 = vmatpush2.bf16.msra.mxu0 0
      %1028 = vmatprep.subr.bf16.mxu0 0
      %1029 = vmatpush2.bf16.msra.mxu0 0
      %1030 = vmatprep.subr.bf16.mxu0 0
      %1031 = vmatpush2.bf16.msra.mxu0 0
      %1032 = vmatprep.subr.bf16.mxu0 0
      %1033 = vmatpush2.bf16.msra.mxu0 0
      %1034 = vmatprep.subr.bf16.mxu0 0
      %1035 = vmatpush2.bf16.msra.mxu0 0
      %1036 = vmatprep.subr.bf16.mxu0 0
      %1037 = vmatpush2.bf16.msra.mxu0 0
      %1038 = vmatprep.subr.bf16.mxu0 0
      %1039 = vmatpush2.bf16.msra.mxu0 0
      %1040 = vmatprep.subr.bf16.mxu0 0
      %1041 = vmatpush2.bf16.msra.mxu0 0
      %1042 = vmatprep.mubr.bf16.mxu0 0
      %1043 = vmatmul.mubr.bf16.gmra.mxu0 %v993
      %v1044 = vpop.f32.mrf.mxu0
      %v1045 = vadd.f32 0.0, %v1044
      %v1046 = vpop.f32.mrf.mxu0
      %v1047 = vpop.f32.mrf.mxu0
      %v1048 = vadd.f32 0.0, %v1047
      %v1049 = vpop.f32.mrf.mxu0
      %1050 = vmatprep.mubr.bf16.mxu0 0
      %1051 = vmatmul.mubr.bf16.gmra.mxu0 %v996
      %v1052 = vpop.f32.mrf.mxu0
      %v1053 = vadd.f32 0.0, %v1052
      %v1054 = vpop.f32.mrf.mxu0
      %v1055 = vpop.f32.mrf.mxu0
      %v1056 = vadd.f32 0.0, %v1055
      %v1057 = vpop.f32.mrf.mxu0
      %1058 = vmatprep.mubr.bf16.mxu0 0
      %1059 = vmatmul.mubr.bf16.gmra.mxu0 %v999
      %v1060 = vpop.f32.mrf.mxu0
      %v1061 = vadd.f32 0.0, %v1060
      %v1062 = vpop.f32.mrf.mxu0
      %v1063 = vpop.f32.mrf.mxu0
      %v1064 = vadd.f32 0.0, %v1063
      %v1065 = vpop.f32.mrf.mxu0
      %1066 = vmatprep.mubr.bf16.mxu0 0
      %1067 = vmatmul.mubr.bf16.gmra.mxu0 %v1002
      %v1068 = vpop.f32.mrf.mxu0
      %v1069 = vadd.f32 0.0, %v1068
      %v1070 = vpop.f32.mrf.mxu0
      %v1071 = vpop.f32.mrf.mxu0
      %v1072 = vadd.f32 0.0, %v1071
      %v1073 = vpop.f32.mrf.mxu0
      %1074 = vmatprep.mubr.bf16.mxu0 0
      %1075 = vmatmul.mubr.bf16.gmra.mxu0 %v1005
      %v1076 = vpop.f32.mrf.mxu0
      %v1077 = vadd.f32 0.0, %v1076
      %v1078 = vpop.f32.mrf.mxu0
      %v1079 = vpop.f32.mrf.mxu0
      %v1080 = vadd.f32 0.0, %v1079
      %v1081 = vpop.f32.mrf.mxu0
      %1082 = vdwg.mxu0
      %v1083 = vadd.f32 %v964, %v1045
      %v1084 = vadd.f32 %v965, %v1048
      %v1085 = vadd.f32 %v966, %v1053
      %v1086 = vadd.f32 %v967, %v1056
      %v1087 = vadd.f32 %v968, %v1061
      %v1088 = vadd.f32 %v969, %v1064
      %v1089 = vadd.f32 %v970, %v1069
      %v1090 = vadd.f32 %v971, %v1072
      %v1091 = vadd.f32 %v972, %v1077
      %v1092 = vadd.f32 %v973, %v1080
      %v1093 = vld [vmem:[%s274 + $0x8] sm:$0xc]
      %v1094 = vld [vmem:[%s274 + $0xc] sm:$0xf]
      %v1095 = vld [vmem:[%s274 + $0x10] sm:$0xf]
      %v1096 = vld [vmem:[%s274 + $0x14] sm:$0xf]
      %v1097 = vld [vmem:[%s274 + $0x18] sm:$0xf]
      %v1098 = vld [vmem:[%s274 + $0x1c] sm:$0xf]
      %v1099 = vld [vmem:[%s274 + $0x20] sm:$0xf]
      %v1100 = vld [vmem:[%s274 + $0x24] sm:$0xf]
      %v1101 = vld [vmem:[%s274 + $0x28] sm:$0xf]
      %v1102 = vld [vmem:[%s274 + $0x2c] sm:$0xf]
      %v1103 = vld [vmem:[%s274 + $0x30] sm:$0x3]
      %s1104 = scalar_lea.vmem %s1, 24
      %v1105 = vld [vmem:[%s1104] sm:$0xf]
      %v1117 = vunpack.c.l.b16 %v1093
      %v1118 = vunpack.c.l.b16 %v1094
      %v1119 = vunpack.c.l.b16 %v1095
      %v1120 = vunpack.c.l.b16 %v1096
      %v1121 = vunpack.c.l.b16 %v1097
      %v1122 = vunpack.c.l.b16 %v1098
      %v1123 = vunpack.c.l.b16 %v1099
      %v1124 = vunpack.c.l.b16 %v1100
      %v1125 = vunpack.c.l.b16 %v1101
      %v1126 = vunpack.c.l.b16 %v1102
      %v1127 = vunpack.c.l.b16 %v1103
      %v1128 = vpack.c.b16 %v1118, %v1117
      %v1129 = vpack.c.b16 %v1120, %v1119
      %v1130 = vpack.c.b16 %v1122, %v1121
      %v1131 = vpack.c.b16 %v1124, %v1123
      %v1132 = vpack.c.b16 %v1126, %v1125
      %v1133 = vpack.c.b16 %v1127, %v1127
      %v1134 = vrot.slane %v1128, 2
      %v1135 = vrot.slane %v1129, 2
      %v1136 = vsel %vm980, %v1134, %v1135
      %v1137 = vrot.slane %v1130, 2
      %v1138 = vsel %vm980, %v1135, %v1137
      %v1139 = vrot.slane %v1131, 2
      %v1140 = vsel %vm980, %v1137, %v1139
      %v1141 = vrot.slane %v1132, 2
      %v1142 = vsel %vm980, %v1139, %v1141
      %v1143 = vrot.slane %v1133, 2
      %v1144 = vsel %vm980, %v1141, %v1143
      %v1146 = vsel %vm362, %v1136, 0
      %v1149 = vsel %vm362, %v1138, 0
      %v1152 = vsel %vm362, %v1140, 0
      %v1155 = vsel %vm362, %v1142, 0
      %v1158 = vsel %vm362, %v1144, 0
      %v1161 = vsel %vm378, %v1105, 0
      %1163 = vmatprep.subr.bf16.mxu0 0
      %1164 = vmatpush1.bf16.msra.mxu0 0
      %1165 = vmatprep.subr.bf16.mxu0 0
      %1166 = vmatpush1.bf16.msra.mxu0 0
      %1167 = vmatprep.subr.bf16.mxu0 0
      %1168 = vmatpush1.bf16.msra.mxu0 0
      %1169 = vmatprep.subr.bf16.mxu0 0
      %1170 = vmatpush1.bf16.msra.mxu0 0
      %1171 = vmatprep.subr.bf16.mxu0 0
      %1172 = vmatpush1.bf16.msra.mxu0 0
      %1173 = vmatprep.subr.bf16.mxu0 0
      %1174 = vmatpush1.bf16.msra.mxu0 0
      %1175 = vmatprep.subr.bf16.mxu0 0
      %1176 = vmatpush1.bf16.msra.mxu0 0
      %1177 = vmatprep.subr.bf16.mxu0 0
      %1178 = vmatpush1.bf16.msra.mxu0 %v1161
      %1179 = vmatprep.subr.bf16.mxu0 0
      %1180 = vmatpush2.bf16.msra.mxu0 0
      %1181 = vmatprep.subr.bf16.mxu0 0
      %1182 = vmatpush2.bf16.msra.mxu0 0
      %1183 = vmatprep.subr.bf16.mxu0 0
      %1184 = vmatpush2.bf16.msra.mxu0 0
      %1185 = vmatprep.subr.bf16.mxu0 0
      %1186 = vmatpush2.bf16.msra.mxu0 0
      %1187 = vmatprep.subr.bf16.mxu0 0
      %1188 = vmatpush2.bf16.msra.mxu0 0
      %1189 = vmatprep.subr.bf16.mxu0 0
      %1190 = vmatpush2.bf16.msra.mxu0 0
      %1191 = vmatprep.subr.bf16.mxu0 0
      %1192 = vmatpush2.bf16.msra.mxu0 0
      %1193 = vmatprep.subr.bf16.mxu0 0
      %1194 = vmatpush2.bf16.msra.mxu0 0
      %1195 = vmatprep.mubr.bf16.mxu0 0
      %1196 = vmatmul.mubr.bf16.gmra.mxu0 %v1146
      %v1197 = vpop.f32.mrf.mxu0
      %v1198 = vadd.f32 0.0, %v1197
      %v1199 = vpop.f32.mrf.mxu0
      %v1200 = vpop.f32.mrf.mxu0
      %v1201 = vadd.f32 0.0, %v1200
      %v1202 = vpop.f32.mrf.mxu0
      %1203 = vmatprep.mubr.bf16.mxu0 0
      %1204 = vmatmul.mubr.bf16.gmra.mxu0 %v1149
      %v1205 = vpop.f32.mrf.mxu0
      %v1206 = vadd.f32 0.0, %v1205
      %v1207 = vpop.f32.mrf.mxu0
      %v1208 = vpop.f32.mrf.mxu0
      %v1209 = vadd.f32 0.0, %v1208
      %v1210 = vpop.f32.mrf.mxu0
      %1211 = vmatprep.mubr.bf16.mxu0 0
      %1212 = vmatmul.mubr.bf16.gmra.mxu0 %v1152
      %v1213 = vpop.f32.mrf.mxu0
      %v1214 = vadd.f32 0.0, %v1213
      %v1215 = vpop.f32.mrf.mxu0
      %v1216 = vpop.f32.mrf.mxu0
      %v1217 = vadd.f32 0.0, %v1216
      %v1218 = vpop.f32.mrf.mxu0
      %1219 = vmatprep.mubr.bf16.mxu0 0
      %1220 = vmatmul.mubr.bf16.gmra.mxu0 %v1155
      %v1221 = vpop.f32.mrf.mxu0
      %v1222 = vadd.f32 0.0, %v1221
      %v1223 = vpop.f32.mrf.mxu0
      %v1224 = vpop.f32.mrf.mxu0
      %v1225 = vadd.f32 0.0, %v1224
      %v1226 = vpop.f32.mrf.mxu0
      %1227 = vmatprep.mubr.bf16.mxu0 0
      %1228 = vmatmul.mubr.bf16.gmra.mxu0 %v1158
      %v1229 = vpop.f32.mrf.mxu0
      %v1230 = vadd.f32 0.0, %v1229
      %v1231 = vpop.f32.mrf.mxu0
      %v1232 = vpop.f32.mrf.mxu0
      %v1233 = vadd.f32 0.0, %v1232
      %v1234 = vpop.f32.mrf.mxu0
      %1235 = vdwg.mxu0
      %v1236 = vadd.f32 %v1083, %v1198
      %v1237 = vadd.f32 %v1084, %v1201
      %v1238 = vadd.f32 %v1085, %v1206
      %v1239 = vadd.f32 %v1086, %v1209
      %v1240 = vadd.f32 %v1087, %v1214
      %v1241 = vadd.f32 %v1088, %v1217
      %v1242 = vadd.f32 %v1089, %v1222
      %v1243 = vadd.f32 %v1090, %v1225
      %v1244 = vadd.f32 %v1091, %v1230
      %v1245 = vadd.f32 %v1092, %v1233
      %v1246 = vld [vmem:[%s274 + $0x30] sm:$0x7]
      %s1247 = scalar_lea.vmem %s1, 28
      %v1248 = vld [vmem:[%s1247] sm:$0xf]
      %v1250 = vunpack.c.l.b16 %v1246
      %v1251 = vpack.c.b16 %v1250, %v1250
      %vm1252 = vsmask.f32 5376
      %v1254 = vshrl.u32 %v1128, 16
      %v1256 = vrot.slane %v1254, 2
      %v1257 = vshll.u32 %v1128, 16
      %v1259 = vrot.slane %v1257, 3
      %v1260 = vor.u32 %v1256, %v1259
      %v1262 = vshrl.u32 %v1129, 16
      %v1264 = vrot.slane %v1262, 2
      %v1265 = vshll.u32 %v1129, 16
      %v1267 = vrot.slane %v1265, 3
      %v1268 = vor.u32 %v1264, %v1267
      %v1269 = vsel %vm1252, %v1260, %v1268
      %v1271 = vshrl.u32 %v1130, 16
      %v1273 = vrot.slane %v1271, 2
      %v1274 = vshll.u32 %v1130, 16
      %v1276 = vrot.slane %v1274, 3
      %v1277 = vor.u32 %v1273, %v1276
      %v1278 = vsel %vm1252, %v1268, %v1277
      %v1280 = vshrl.u32 %v1131, 16
      %v1282 = vrot.slane %v1280, 2
      %v1283 = vshll.u32 %v1131, 16
      %v1285 = vrot.slane %v1283, 3
      %v1286 = vor.u32 %v1282, %v1285
      %v1287 = vsel %vm1252, %v1277, %v1286
      %v1289 = vshrl.u32 %v1132, 16
      %v1291 = vrot.slane %v1289, 2
      %v1292 = vshll.u32 %v1132, 16
      %v1294 = vrot.slane %v1292, 3
      %v1295 = vor.u32 %v1291, %v1294
      %v1296 = vsel %vm1252, %v1286, %v1295
      %v1298 = vshrl.u32 %v1251, 16
      %v1300 = vrot.slane %v1298, 2
      %v1301 = vshll.u32 %v1251, 16
      %v1303 = vrot.slane %v1301, 3
      %v1304 = vor.u32 %v1300, %v1303
      %v1305 = vsel %vm1252, %v1295, %v1304
      %v1307 = vsel %vm362, %v1269, 0
      %v1310 = vsel %vm362, %v1278, 0
      %v1313 = vsel %vm362, %v1287, 0
      %v1316 = vsel %vm362, %v1296, 0
      %v1319 = vsel %vm362, %v1305, 0
      %v1322 = vsel %vm378, %v1248, 0
      %1324 = vmatprep.subr.bf16.mxu0 0
      %1325 = vmatpush1.bf16.msra.mxu0 0
      %1326 = vmatprep.subr.bf16.mxu0 0
      %1327 = vmatpush1.bf16.msra.mxu0 0
      %1328 = vmatprep.subr.bf16.mxu0 0
      %1329 = vmatpush1.bf16.msra.mxu0 0
      %1330 = vmatprep.subr.bf16.mxu0 0
      %1331 = vmatpush1.bf16.msra.mxu0 0
      %1332 = vmatprep.subr.bf16.mxu0 0
      %1333 = vmatpush1.bf16.msra.mxu0 0
      %1334 = vmatprep.subr.bf16.mxu0 0
      %1335 = vmatpush1.bf16.msra.mxu0 0
      %1336 = vmatprep.subr.bf16.mxu0 0
      %1337 = vmatpush1.bf16.msra.mxu0 0
      %1338 = vmatprep.subr.bf16.mxu0 0
      %1339 = vmatpush1.bf16.msra.mxu0 %v1322
      %1340 = vmatprep.subr.bf16.mxu0 0
      %1341 = vmatpush2.bf16.msra.mxu0 0
      %1342 = vmatprep.subr.bf16.mxu0 0
      %1343 = vmatpush2.bf16.msra.mxu0 0
      %1344 = vmatprep.subr.bf16.mxu0 0
      %1345 = vmatpush2.bf16.msra.mxu0 0
      %1346 = vmatprep.subr.bf16.mxu0 0
      %1347 = vmatpush2.bf16.msra.mxu0 0
      %1348 = vmatprep.subr.bf16.mxu0 0
      %1349 = vmatpush2.bf16.msra.mxu0 0
      %1350 = vmatprep.subr.bf16.mxu0 0
      %1351 = vmatpush2.bf16.msra.mxu0 0
      %1352 = vmatprep.subr.bf16.mxu0 0
      %1353 = vmatpush2.bf16.msra.mxu0 0
      %1354 = vmatprep.subr.bf16.mxu0 0
      %1355 = vmatpush2.bf16.msra.mxu0 0
      %1356 = vmatprep.mubr.bf16.mxu0 0
      %1357 = vmatmul.mubr.bf16.gmra.mxu0 %v1307
      %v1358 = vpop.f32.mrf.mxu0
      %v1359 = vadd.f32 0.0, %v1358
      %v1360 = vpop.f32.mrf.mxu0
      %v1361 = vpop.f32.mrf.mxu0
      %v1362 = vadd.f32 0.0, %v1361
      %v1363 = vpop.f32.mrf.mxu0
      %1364 = vmatprep.mubr.bf16.mxu0 0
      %1365 = vmatmul.mubr.bf16.gmra.mxu0 %v1310
      %v1366 = vpop.f32.mrf.mxu0
      %v1367 = vadd.f32 0.0, %v1366
      %v1368 = vpop.f32.mrf.mxu0
      %v1369 = vpop.f32.mrf.mxu0
      %v1370 = vadd.f32 0.0, %v1369
      %v1371 = vpop.f32.mrf.mxu0
      %1372 = vmatprep.mubr.bf16.mxu0 0
      %1373 = vmatmul.mubr.bf16.gmra.mxu0 %v1313
      %v1374 = vpop.f32.mrf.mxu0
      %v1375 = vadd.f32 0.0, %v1374
      %v1376 = vpop.f32.mrf.mxu0
      %v1377 = vpop.f32.mrf.mxu0
      %v1378 = vadd.f32 0.0, %v1377
      %v1379 = vpop.f32.mrf.mxu0
      %1380 = vmatprep.mubr.bf16.mxu0 0
      %1381 = vmatmul.mubr.bf16.gmra.mxu0 %v1316
      %v1382 = vpop.f32.mrf.mxu0
      %v1383 = vadd.f32 0.0, %v1382
      %v1384 = vpop.f32.mrf.mxu0
      %v1385 = vpop.f32.mrf.mxu0
      %v1386 = vadd.f32 0.0, %v1385
      %v1387 = vpop.f32.mrf.mxu0
      %1388 = vmatprep.mubr.bf16.mxu0 0
      %1389 = vmatmul.mubr.bf16.gmra.mxu0 %v1319
      %v1390 = vpop.f32.mrf.mxu0
      %v1391 = vadd.f32 0.0, %v1390
      %v1392 = vpop.f32.mrf.mxu0
      %v1393 = vpop.f32.mrf.mxu0
      %v1394 = vadd.f32 0.0, %v1393
      %v1395 = vpop.f32.mrf.mxu0
      %1396 = vdwg.mxu0
      %v1397 = vadd.f32 %v1236, %v1359
      %v1398 = vadd.f32 %v1237, %v1362
      %v1399 = vadd.f32 %v1238, %v1367
      %v1400 = vadd.f32 %v1239, %v1370
      %v1401 = vadd.f32 %v1240, %v1375
      %v1402 = vadd.f32 %v1241, %v1378
      %v1403 = vadd.f32 %v1242, %v1383
      %v1404 = vadd.f32 %v1243, %v1386
      %v1405 = vadd.f32 %v1244, %v1391
      %v1406 = vadd.f32 %v1245, %v1394
      %v1407 = vld [vmem:[%s274 + $0x8] sm:$0x8]
      %s1408 = scalar_lea.vmem %s1, 32
      %v1409 = vld [vmem:[%s1408] sm:$0xf]
      %v1411 = vunpack.c.l.b16 %v1407
      %v1412 = vpack.c.b16 %v1118, %v1411
      %vm1413 = vcmask 1044480
      %v1414 = vrot.slane %v1412, 3
      %v1415 = vrot.slane %v1129, 3
      %v1416 = vsel %vm1413, %v1414, %v1415
      %v1417 = vrot.slane %v1130, 3
      %v1418 = vsel %vm1413, %v1415, %v1417
      %v1419 = vrot.slane %v1131, 3
      %v1420 = vsel %vm1413, %v1417, %v1419
      %v1421 = vrot.slane %v1132, 3
      %v1422 = vsel %vm1413, %v1419, %v1421
      %v1423 = vrot.slane %v1251, 3
      %v1424 = vsel %vm1413, %v1421, %v1423
      %v1426 = vsel %vm362, %v1416, 0
      %v1429 = vsel %vm362, %v1418, 0
      %v1432 = vsel %vm362, %v1420, 0
      %v1435 = vsel %vm362, %v1422, 0
      %v1438 = vsel %vm362, %v1424, 0
      %v1441 = vsel %vm378, %v1409, 0
      %1443 = vmatprep.subr.bf16.mxu0 0
      %1444 = vmatpush1.bf16.msra.mxu0 0
      %1445 = vmatprep.subr.bf16.mxu0 0
      %1446 = vmatpush1.bf16.msra.mxu0 0
      %1447 = vmatprep.subr.bf16.mxu0 0
      %1448 = vmatpush1.bf16.msra.mxu0 0
      %1449 = vmatprep.subr.bf16.mxu0 0
      %1450 = vmatpush1.bf16.msra.mxu0 0
      %1451 = vmatprep.subr.bf16.mxu0 0
      %1452 = vmatpush1.bf16.msra.mxu0 0
      %1453 = vmatprep.subr.bf16.mxu0 0
      %1454 = vmatpush1.bf16.msra.mxu0 0
      %1455 = vmatprep.subr.bf16.mxu0 0
      %1456 = vmatpush1.bf16.msra.mxu0 0
      %1457 = vmatprep.subr.bf16.mxu0 0
      %1458 = vmatpush1.bf16.msra.mxu0 %v1441
      %1459 = vmatprep.subr.bf16.mxu0 0
      %1460 = vmatpush2.bf16.msra.mxu0 0
      %1461 = vmatprep.subr.bf16.mxu0 0
      %1462 = vmatpush2.bf16.msra.mxu0 0
      %1463 = vmatprep.subr.bf16.mxu0 0
      %1464 = vmatpush2.bf16.msra.mxu0 0
      %1465 = vmatprep.subr.bf16.mxu0 0
      %1466 = vmatpush2.bf16.msra.mxu0 0
      %1467 = vmatprep.subr.bf16.mxu0 0
      %1468 = vmatpush2.bf16.msra.mxu0 0
      %1469 = vmatprep.subr.bf16.mxu0 0
      %1470 = vmatpush2.bf16.msra.mxu0 0
      %1471 = vmatprep.subr.bf16.mxu0 0
      %1472 = vmatpush2.bf16.msra.mxu0 0
      %1473 = vmatprep.subr.bf16.mxu0 0
      %1474 = vmatpush2.bf16.msra.mxu0 0
      %1475 = vmatprep.mubr.bf16.mxu0 0
      %1476 = vmatmul.mubr.bf16.gmra.mxu0 %v1426
      %v1477 = vpop.f32.mrf.mxu0
      %v1478 = vadd.f32 0.0, %v1477
      %v1479 = vpop.f32.mrf.mxu0
      %v1480 = vpop.f32.mrf.mxu0
      %v1481 = vadd.f32 0.0, %v1480
      %v1482 = vpop.f32.mrf.mxu0
      %1483 = vmatprep.mubr.bf16.mxu0 0
      %1484 = vmatmul.mubr.bf16.gmra.mxu0 %v1429
      %v1485 = vpop.f32.mrf.mxu0
      %v1486 = vadd.f32 0.0, %v1485
      %v1487 = vpop.f32.mrf.mxu0
      %v1488 = vpop.f32.mrf.mxu0
      %v1489 = vadd.f32 0.0, %v1488
      %v1490 = vpop.f32.mrf.mxu0
      %1491 = vmatprep.mubr.bf16.mxu0 0
      %1492 = vmatmul.mubr.bf16.gmra.mxu0 %v1432
      %v1493 = vpop.f32.mrf.mxu0
      %v1494 = vadd.f32 0.0, %v1493
      %v1495 = vpop.f32.mrf.mxu0
      %v1496 = vpop.f32.mrf.mxu0
      %v1497 = vadd.f32 0.0, %v1496
      %v1498 = vpop.f32.mrf.mxu0
      %1499 = vmatprep.mubr.bf16.mxu0 0
      %1500 = vmatmul.mubr.bf16.gmra.mxu0 %v1435
      %v1501 = vpop.f32.mrf.mxu0
      %v1502 = vadd.f32 0.0, %v1501
      %v1503 = vpop.f32.mrf.mxu0
      %v1504 = vpop.f32.mrf.mxu0
      %v1505 = vadd.f32 0.0, %v1504
      %v1506 = vpop.f32.mrf.mxu0
      %1507 = vmatprep.mubr.bf16.mxu0 0
      %1508 = vmatmul.mubr.bf16.gmra.mxu0 %v1438
      %v1509 = vpop.f32.mrf.mxu0
      %v1510 = vadd.f32 0.0, %v1509
      %v1511 = vpop.f32.mrf.mxu0
      %v1512 = vpop.f32.mrf.mxu0
      %v1513 = vadd.f32 0.0, %v1512
      %v1514 = vpop.f32.mrf.mxu0
      %1515 = vdwg.mxu0
      %v1516 = vadd.f32 %v1397, %v1478
      %v1517 = vadd.f32 %v1398, %v1481
      %v1518 = vadd.f32 %v1399, %v1486
      %v1519 = vadd.f32 %v1400, %v1489
      %v1520 = vadd.f32 %v1401, %v1494
      %v1521 = vadd.f32 %v1402, %v1497
      %v1522 = vadd.f32 %v1403, %v1502
      %v1523 = vadd.f32 %v1404, %v1505
      %v1524 = vadd.f32 %v1405, %v1510
      %v1525 = vadd.f32 %v1406, %v1513
      %s1526 = sadd.s32 %s22, 1
      %s1527 = smul.u32 %s1526, 13
      %s1528 = smul.addr %s1527, 4
      %s1529 = scalar_lea.vmem %s248, %s1528
      %v1530 = vld [vmem:[%s1529] sm:$0xf]
      %v1531 = vld [vmem:[%s1529 + $0x4] sm:$0xf]
      %v1532 = vld [vmem:[%s1529 + $0x8] sm:$0xf]
      %v1533 = vld [vmem:[%s1529 + $0xc] sm:$0xf]
      %v1534 = vld [vmem:[%s1529 + $0x10] sm:$0xf]
      %v1535 = vld [vmem:[%s1529 + $0x14] sm:$0xf]
      %v1536 = vld [vmem:[%s1529 + $0x18] sm:$0xf]
      %v1537 = vld [vmem:[%s1529 + $0x1c] sm:$0xf]
      %v1538 = vld [vmem:[%s1529 + $0x20] sm:$0xf]
      %v1539 = vld [vmem:[%s1529 + $0x24] sm:$0xf]
      %s1540 = scalar_lea.vmem %s1, 36
      %v1541 = vld [vmem:[%s1540] sm:$0xf]
      %v1552 = vunpack.c.l.b16 %v1530
      %v1553 = vunpack.c.l.b16 %v1531
      %v1554 = vunpack.c.l.b16 %v1532
      %v1555 = vunpack.c.l.b16 %v1533
      %v1556 = vunpack.c.l.b16 %v1534
      %v1557 = vunpack.c.l.b16 %v1535
      %v1558 = vunpack.c.l.b16 %v1536
      %v1559 = vunpack.c.l.b16 %v1537
      %v1560 = vunpack.c.l.b16 %v1538
      %v1561 = vunpack.c.l.b16 %v1539
      %v1562 = vpack.c.b16 %v1553, %v1552
      %v1563 = vpack.c.b16 %v1555, %v1554
      %v1564 = vpack.c.b16 %v1557, %v1556
      %v1565 = vpack.c.b16 %v1559, %v1558
      %v1566 = vpack.c.b16 %v1561, %v1560
      %v1568 = vsel %vm362, %v1562, 0
      %v1571 = vsel %vm362, %v1563, 0
      %v1574 = vsel %vm362, %v1564, 0
      %v1577 = vsel %vm362, %v1565, 0
      %v1580 = vsel %vm362, %v1566, 0
      %v1583 = vsel %vm378, %v1541, 0
      %1585 = vmatprep.subr.bf16.mxu0 0
      %1586 = vmatpush1.bf16.msra.mxu0 0
      %1587 = vmatprep.subr.bf16.mxu0 0
      %1588 = vmatpush1.bf16.msra.mxu0 0
      %1589 = vmatprep.subr.bf16.mxu0 0
      %1590 = vmatpush1.bf16.msra.mxu0 0
      %1591 = vmatprep.subr.bf16.mxu0 0
      %1592 = vmatpush1.bf16.msra.mxu0 0
      %1593 = vmatprep.subr.bf16.mxu0 0
      %1594 = vmatpush1.bf16.msra.mxu0 0
      %1595 = vmatprep.subr.bf16.mxu0 0
      %1596 = vmatpush1.bf16.msra.mxu0 0
      %1597 = vmatprep.subr.bf16.mxu0 0
      %1598 = vmatpush1.bf16.msra.mxu0 0
      %1599 = vmatprep.subr.bf16.mxu0 0
      %1600 = vmatpush1.bf16.msra.mxu0 %v1583
      %1601 = vmatprep.subr.bf16.mxu0 0
      %1602 = vmatpush2.bf16.msra.mxu0 0
      %1603 = vmatprep.subr.bf16.mxu0 0
      %1604 = vmatpush2.bf16.msra.mxu0 0
      %1605 = vmatprep.subr.bf16.mxu0 0
      %1606 = vmatpush2.bf16.msra.mxu0 0
      %1607 = vmatprep.subr.bf16.mxu0 0
      %1608 = vmatpush2.bf16.msra.mxu0 0
      %1609 = vmatprep.subr.bf16.mxu0 0
      %1610 = vmatpush2.bf16.msra.mxu0 0
      %1611 = vmatprep.subr.bf16.mxu0 0
      %1612 = vmatpush2.bf16.msra.mxu0 0
      %1613 = vmatprep.subr.bf16.mxu0 0
      %1614 = vmatpush2.bf16.msra.mxu0 0
      %1615 = vmatprep.subr.bf16.mxu0 0
      %1616 = vmatpush2.bf16.msra.mxu0 0
      %1617 = vmatprep.mubr.bf16.mxu0 0
      %1618 = vmatmul.mubr.bf16.gmra.mxu0 %v1568
      %v1619 = vpop.f32.mrf.mxu0
      %v1620 = vadd.f32 0.0, %v1619
      %v1621 = vpop.f32.mrf.mxu0
      %v1622 = vpop.f32.mrf.mxu0
      %v1623 = vadd.f32 0.0, %v1622
      %v1624 = vpop.f32.mrf.mxu0
      %1625 = vmatprep.mubr.bf16.mxu0 0
      %1626 = vmatmul.mubr.bf16.gmra.mxu0 %v1571
      %v1627 = vpop.f32.mrf.mxu0
      %v1628 = vadd.f32 0.0, %v1627
      %v1629 = vpop.f32.mrf.mxu0
      %v1630 = vpop.f32.mrf.mxu0
      %v1631 = vadd.f32 0.0, %v1630
      %v1632 = vpop.f32.mrf.mxu0
      %1633 = vmatprep.mubr.bf16.mxu0 0
      %1634 = vmatmul.mubr.bf16.gmra.mxu0 %v1574
      %v1635 = vpop.f32.mrf.mxu0
      %v1636 = vadd.f32 0.0, %v1635
      %v1637 = vpop.f32.mrf.mxu0
      %v1638 = vpop.f32.mrf.mxu0
      %v1639 = vadd.f32 0.0, %v1638
      %v1640 = vpop.f32.mrf.mxu0
      %1641 = vmatprep.mubr.bf16.mxu0 0
      %1642 = vmatmul.mubr.bf16.gmra.mxu0 %v1577
      %v1643 = vpop.f32.mrf.mxu0
      %v1644 = vadd.f32 0.0, %v1643
      %v1645 = vpop.f32.mrf.mxu0
      %v1646 = vpop.f32.mrf.mxu0
      %v1647 = vadd.f32 0.0, %v1646
      %v1648 = vpop.f32.mrf.mxu0
      %1649 = vmatprep.mubr.bf16.mxu0 0
      %1650 = vmatmul.mubr.bf16.gmra.mxu0 %v1580
      %v1651 = vpop.f32.mrf.mxu0
      %v1652 = vadd.f32 0.0, %v1651
      %v1653 = vpop.f32.mrf.mxu0
      %v1654 = vpop.f32.mrf.mxu0
      %v1655 = vadd.f32 0.0, %v1654
      %v1656 = vpop.f32.mrf.mxu0
      %1657 = vdwg.mxu0
      %v1658 = vadd.f32 %v1516, %v1620
      %v1659 = vadd.f32 %v1517, %v1623
      %v1660 = vadd.f32 %v1518, %v1628
      %v1661 = vadd.f32 %v1519, %v1631
      %v1662 = vadd.f32 %v1520, %v1636
      %v1663 = vadd.f32 %v1521, %v1639
      %v1664 = vadd.f32 %v1522, %v1644
      %v1665 = vadd.f32 %v1523, %v1647
      %v1666 = vadd.f32 %v1524, %v1652
      %v1667 = vadd.f32 %v1525, %v1655
      %v1668 = vld [vmem:[%s1529] sm:$0xf]
      %v1669 = vld [vmem:[%s1529 + $0x4] sm:$0xf]
      %v1670 = vld [vmem:[%s1529 + $0x8] sm:$0xf]
      %v1671 = vld [vmem:[%s1529 + $0xc] sm:$0xf]
      %v1672 = vld [vmem:[%s1529 + $0x10] sm:$0xf]
      %v1673 = vld [vmem:[%s1529 + $0x14] sm:$0xf]
      %v1674 = vld [vmem:[%s1529 + $0x18] sm:$0xf]
      %v1675 = vld [vmem:[%s1529 + $0x1c] sm:$0xf]
      %v1676 = vld [vmem:[%s1529 + $0x20] sm:$0xf]
      %v1677 = vld [vmem:[%s1529 + $0x24] sm:$0xf]
      %v1678 = vld [vmem:[%s1529 + $0x28] sm:$0x1]
      %s1679 = scalar_lea.vmem %s1, 40
      %v1680 = vld [vmem:[%s1679] sm:$0xf]
      %v1692 = vunpack.c.l.b16 %v1668
      %v1693 = vunpack.c.l.b16 %v1669
      %v1694 = vunpack.c.l.b16 %v1670
      %v1695 = vunpack.c.l.b16 %v1671
      %v1696 = vunpack.c.l.b16 %v1672
      %v1697 = vunpack.c.l.b16 %v1673
      %v1698 = vunpack.c.l.b16 %v1674
      %v1699 = vunpack.c.l.b16 %v1675
      %v1700 = vunpack.c.l.b16 %v1676
      %v1701 = vunpack.c.l.b16 %v1677
      %v1702 = vunpack.c.l.b16 %v1678
      %v1703 = vpack.c.b16 %v1693, %v1692
      %v1704 = vpack.c.b16 %v1695, %v1694
      %v1705 = vpack.c.b16 %v1697, %v1696
      %v1706 = vpack.c.b16 %v1699, %v1698
      %v1707 = vpack.c.b16 %v1701, %v1700
      %v1708 = vpack.c.b16 %v1702, %v1702
      %v1710 = vshrl.u32 %v1703, 16
      %v1712 = vshll.u32 %v1703, 16
      %v1714 = vrot.slane %v1712, 1
      %v1715 = vor.u32 %v1710, %v1714
      %v1717 = vshll.u32 %v1704, 16
      %v1719 = vrot.slane %v1717, 1
      %v1720 = vsel %vm317, %v1715, %v1719
      %v1721 = vshrl.u32 %v1704, 16
      %v1723 = vor.u32 %v1721, %v1719
      %v1725 = vshll.u32 %v1705, 16
      %v1727 = vrot.slane %v1725, 1
      %v1728 = vsel %vm317, %v1723, %v1727
      %v1729 = vshrl.u32 %v1705, 16
      %v1731 = vor.u32 %v1729, %v1727
      %v1733 = vshll.u32 %v1706, 16
      %v1735 = vrot.slane %v1733, 1
      %v1736 = vsel %vm317, %v1731, %v1735
      %v1737 = vshrl.u32 %v1706, 16
      %v1739 = vor.u32 %v1737, %v1735
      %v1741 = vshll.u32 %v1707, 16
      %v1743 = vrot.slane %v1741, 1
      %v1744 = vsel %vm317, %v1739, %v1743
      %v1745 = vshrl.u32 %v1707, 16
      %v1747 = vor.u32 %v1745, %v1743
      %v1749 = vshll.u32 %v1708, 16
      %v1751 = vrot.slane %v1749, 1
      %v1752 = vsel %vm317, %v1747, %v1751
      %v1754 = vsel %vm362, %v1720, 0
      %v1757 = vsel %vm362, %v1728, 0
      %v1760 = vsel %vm362, %v1736, 0
      %v1763 = vsel %vm362, %v1744, 0
      %v1766 = vsel %vm362, %v1752, 0
      %v1769 = vsel %vm378, %v1680, 0
      %1771 = vmatprep.subr.bf16.mxu0 0
      %1772 = vmatpush1.bf16.msra.mxu0 0
      %1773 = vmatprep.subr.bf16.mxu0 0
      %1774 = vmatpush1.bf16.msra.mxu0 0
      %1775 = vmatprep.subr.bf16.mxu0 0
      %1776 = vmatpush1.bf16.msra.mxu0 0
      %1777 = vmatprep.subr.bf16.mxu0 0
      %1778 = vmatpush1.bf16.msra.mxu0 0
      %1779 = vmatprep.subr.bf16.mxu0 0
      %1780 = vmatpush1.bf16.msra.mxu0 0
      %1781 = vmatprep.subr.bf16.mxu0 0
      %1782 = vmatpush1.bf16.msra.mxu0 0
      %1783 = vmatprep.subr.bf16.mxu0 0
      %1784 = vmatpush1.bf16.msra.mxu0 0
      %1785 = vmatprep.subr.bf16.mxu0 0
      %1786 = vmatpush1.bf16.msra.mxu0 %v1769
      %1787 = vmatprep.subr.bf16.mxu0 0
      %1788 = vmatpush2.bf16.msra.mxu0 0
      %1789 = vmatprep.subr.bf16.mxu0 0
      %1790 = vmatpush2.bf16.msra.mxu0 0
      %1791 = vmatprep.subr.bf16.mxu0 0
      %1792 = vmatpush2.bf16.msra.mxu0 0
      %1793 = vmatprep.subr.bf16.mxu0 0
      %1794 = vmatpush2.bf16.msra.mxu0 0
      %1795 = vmatprep.subr.bf16.mxu0 0
      %1796 = vmatpush2.bf16.msra.mxu0 0
      %1797 = vmatprep.subr.bf16.mxu0 0
      %1798 = vmatpush2.bf16.msra.mxu0 0
      %1799 = vmatprep.subr.bf16.mxu0 0
      %1800 = vmatpush2.bf16.msra.mxu0 0
      %1801 = vmatprep.subr.bf16.mxu0 0
      %1802 = vmatpush2.bf16.msra.mxu0 0
      %1803 = vmatprep.mubr.bf16.mxu0 0
      %1804 = vmatmul.mubr.bf16.gmra.mxu0 %v1754
      %v1805 = vpop.f32.mrf.mxu0
      %v1806 = vadd.f32 0.0, %v1805
      %v1807 = vpop.f32.mrf.mxu0
      %v1808 = vpop.f32.mrf.mxu0
      %v1809 = vadd.f32 0.0, %v1808
      %v1810 = vpop.f32.mrf.mxu0
      %1811 = vmatprep.mubr.bf16.mxu0 0
      %1812 = vmatmul.mubr.bf16.gmra.mxu0 %v1757
      %v1813 = vpop.f32.mrf.mxu0
      %v1814 = vadd.f32 0.0, %v1813
      %v1815 = vpop.f32.mrf.mxu0
      %v1816 = vpop.f32.mrf.mxu0
      %v1817 = vadd.f32 0.0, %v1816
      %v1818 = vpop.f32.mrf.mxu0
      %1819 = vmatprep.mubr.bf16.mxu0 0
      %1820 = vmatmul.mubr.bf16.gmra.mxu0 %v1760
      %v1821 = vpop.f32.mrf.mxu0
      %v1822 = vadd.f32 0.0, %v1821
      %v1823 = vpop.f32.mrf.mxu0
      %v1824 = vpop.f32.mrf.mxu0
      %v1825 = vadd.f32 0.0, %v1824
      %v1826 = vpop.f32.mrf.mxu0
      %1827 = vmatprep.mubr.bf16.mxu0 0
      %1828 = vmatmul.mubr.bf16.gmra.mxu0 %v1763
      %v1829 = vpop.f32.mrf.mxu0
      %v1830 = vadd.f32 0.0, %v1829
      %v1831 = vpop.f32.mrf.mxu0
      %v1832 = vpop.f32.mrf.mxu0
      %v1833 = vadd.f32 0.0, %v1832
      %v1834 = vpop.f32.mrf.mxu0
      %1835 = vmatprep.mubr.bf16.mxu0 0
      %1836 = vmatmul.mubr.bf16.gmra.mxu0 %v1766
      %v1837 = vpop.f32.mrf.mxu0
      %v1838 = vadd.f32 0.0, %v1837
      %v1839 = vpop.f32.mrf.mxu0
      %v1840 = vpop.f32.mrf.mxu0
      %v1841 = vadd.f32 0.0, %v1840
      %v1842 = vpop.f32.mrf.mxu0
      %1843 = vdwg.mxu0
      %v1844 = vadd.f32 %v1658, %v1806
      %v1845 = vadd.f32 %v1659, %v1809
      %v1846 = vadd.f32 %v1660, %v1814
      %v1847 = vadd.f32 %v1661, %v1817
      %v1848 = vadd.f32 %v1662, %v1822
      %v1849 = vadd.f32 %v1663, %v1825
      %v1850 = vadd.f32 %v1664, %v1830
      %v1851 = vadd.f32 %v1665, %v1833
      %v1852 = vadd.f32 %v1666, %v1838
      %v1853 = vadd.f32 %v1667, %v1841
      %v1854 = vld [vmem:[%s1529] sm:$0xe]
      %s1855 = scalar_lea.vmem %s1, 44
      %v1856 = vld [vmem:[%s1855] sm:$0xf]
      %v1858 = vunpack.c.l.b16 %v1854
      %v1859 = vpack.c.b16 %v1693, %v1858
      %v1860 = vrot.slane %v1859, 1
      %v1861 = vrot.slane %v1704, 1
      %v1862 = vsel %vm547, %v1860, %v1861
      %v1863 = vrot.slane %v1705, 1
      %v1864 = vsel %vm547, %v1861, %v1863
      %v1865 = vrot.slane %v1706, 1
      %v1866 = vsel %vm547, %v1863, %v1865
      %v1867 = vrot.slane %v1707, 1
      %v1868 = vsel %vm547, %v1865, %v1867
      %v1869 = vrot.slane %v1708, 1
      %v1870 = vsel %vm547, %v1867, %v1869
      %v1872 = vsel %vm362, %v1862, 0
      %v1875 = vsel %vm362, %v1864, 0
      %v1878 = vsel %vm362, %v1866, 0
      %v1881 = vsel %vm362, %v1868, 0
      %v1884 = vsel %vm362, %v1870, 0
      %v1887 = vsel %vm378, %v1856, 0
      %1889 = vmatprep.subr.bf16.mxu0 0
      %1890 = vmatpush1.bf16.msra.mxu0 0
      %1891 = vmatprep.subr.bf16.mxu0 0
      %1892 = vmatpush1.bf16.msra.mxu0 0
      %1893 = vmatprep.subr.bf16.mxu0 0
      %1894 = vmatpush1.bf16.msra.mxu0 0
      %1895 = vmatprep.subr.bf16.mxu0 0
      %1896 = vmatpush1.bf16.msra.mxu0 0
      %1897 = vmatprep.subr.bf16.mxu0 0
      %1898 = vmatpush1.bf16.msra.mxu0 0
      %1899 = vmatprep.subr.bf16.mxu0 0
      %1900 = vmatpush1.bf16.msra.mxu0 0
      %1901 = vmatprep.subr.bf16.mxu0 0
      %1902 = vmatpush1.bf16.msra.mxu0 0
      %1903 = vmatprep.subr.bf16.mxu0 0
      %1904 = vmatpush1.bf16.msra.mxu0 %v1887
      %1905 = vmatprep.subr.bf16.mxu0 0
      %1906 = vmatpush2.bf16.msra.mxu0 0
      %1907 = vmatprep.subr.bf16.mxu0 0
      %1908 = vmatpush2.bf16.msra.mxu0 0
      %1909 = vmatprep.subr.bf16.mxu0 0
      %1910 = vmatpush2.bf16.msra.mxu0 0
      %1911 = vmatprep.subr.bf16.mxu0 0
      %1912 = vmatpush2.bf16.msra.mxu0 0
      %1913 = vmatprep.subr.bf16.mxu0 0
      %1914 = vmatpush2.bf16.msra.mxu0 0
      %1915 = vmatprep.subr.bf16.mxu0 0
      %1916 = vmatpush2.bf16.msra.mxu0 0
      %1917 = vmatprep.subr.bf16.mxu0 0
      %1918 = vmatpush2.bf16.msra.mxu0 0
      %1919 = vmatprep.subr.bf16.mxu0 0
      %1920 = vmatpush2.bf16.msra.mxu0 0
      %1921 = vmatprep.mubr.bf16.mxu0 0
      %1922 = vmatmul.mubr.bf16.gmra.mxu0 %v1872
      %v1923 = vpop.f32.mrf.mxu0
      %v1924 = vadd.f32 0.0, %v1923
      %v1925 = vpop.f32.mrf.mxu0
      %v1926 = vpop.f32.mrf.mxu0
      %v1927 = vadd.f32 0.0, %v1926
      %v1928 = vpop.f32.mrf.mxu0
      %1929 = vmatprep.mubr.bf16.mxu0 0
      %1930 = vmatmul.mubr.bf16.gmra.mxu0 %v1875
      %v1931 = vpop.f32.mrf.mxu0
      %v1932 = vadd.f32 0.0, %v1931
      %v1933 = vpop.f32.mrf.mxu0
      %v1934 = vpop.f32.mrf.mxu0
      %v1935 = vadd.f32 0.0, %v1934
      %v1936 = vpop.f32.mrf.mxu0
      %1937 = vmatprep.mubr.bf16.mxu0 0
      %1938 = vmatmul.mubr.bf16.gmra.mxu0 %v1878
      %v1939 = vpop.f32.mrf.mxu0
      %v1940 = vadd.f32 0.0, %v1939
      %v1941 = vpop.f32.mrf.mxu0
      %v1942 = vpop.f32.mrf.mxu0
      %v1943 = vadd.f32 0.0, %v1942
      %v1944 = vpop.f32.mrf.mxu0
      %1945 = vmatprep.mubr.bf16.mxu0 0
      %1946 = vmatmul.mubr.bf16.gmra.mxu0 %v1881
      %v1947 = vpop.f32.mrf.mxu0
      %v1948 = vadd.f32 0.0, %v1947
      %v1949 = vpop.f32.mrf.mxu0
      %v1950 = vpop.f32.mrf.mxu0
      %v1951 = vadd.f32 0.0, %v1950
      %v1952 = vpop.f32.mrf.mxu0
      %1953 = vmatprep.mubr.bf16.mxu0 0
      %1954 = vmatmul.mubr.bf16.gmra.mxu0 %v1884
      %v1955 = vpop.f32.mrf.mxu0
      %v1956 = vadd.f32 0.0, %v1955
      %v1957 = vpop.f32.mrf.mxu0
      %v1958 = vpop.f32.mrf.mxu0
      %v1959 = vadd.f32 0.0, %v1958
      %v1960 = vpop.f32.mrf.mxu0
      %1961 = vdwg.mxu0
      %v1962 = vadd.f32 %v1844, %v1924
      %v1963 = vadd.f32 %v1845, %v1927
      %v1964 = vadd.f32 %v1846, %v1932
      %v1965 = vadd.f32 %v1847, %v1935
      %v1966 = vadd.f32 %v1848, %v1940
      %v1967 = vadd.f32 %v1849, %v1943
      %v1968 = vadd.f32 %v1850, %v1948
      %v1969 = vadd.f32 %v1851, %v1951
      %v1970 = vadd.f32 %v1852, %v1956
      %v1971 = vadd.f32 %v1853, %v1959
      %v1972 = vld [vmem:[%s1529 + $0x4] sm:$0xe]
      %v1973 = vld [vmem:[%s1529 + $0x8] sm:$0xf]
      %v1974 = vld [vmem:[%s1529 + $0xc] sm:$0xf]
      %v1975 = vld [vmem:[%s1529 + $0x10] sm:$0xf]
      %v1976 = vld [vmem:[%s1529 + $0x14] sm:$0xf]
      %v1977 = vld [vmem:[%s1529 + $0x18] sm:$0xf]
      %v1978 = vld [vmem:[%s1529 + $0x1c] sm:$0xf]
      %v1979 = vld [vmem:[%s1529 + $0x20] sm:$0xf]
      %v1980 = vld [vmem:[%s1529 + $0x24] sm:$0xf]
      %v1981 = vld [vmem:[%s1529 + $0x28] sm:$0xf]
      %v1982 = vld [vmem:[%s1529 + $0x2c] sm:$0x1]
      %s1983 = scalar_lea.vmem %s1, 48
      %v1984 = vld [vmem:[%s1983] sm:$0xf]
      %v1996 = vunpack.c.l.b16 %v1972
      %v1997 = vunpack.c.l.b16 %v1973
      %v1998 = vunpack.c.l.b16 %v1974
      %v1999 = vunpack.c.l.b16 %v1975
      %v2000 = vunpack.c.l.b16 %v1976
      %v2001 = vunpack.c.l.b16 %v1977
      %v2002 = vunpack.c.l.b16 %v1978
      %v2003 = vunpack.c.l.b16 %v1979
      %v2004 = vunpack.c.l.b16 %v1980
      %v2005 = vunpack.c.l.b16 %v1981
      %v2006 = vunpack.c.l.b16 %v1982
      %v2007 = vpack.c.b16 %v1997, %v1996
      %v2008 = vpack.c.b16 %v1999, %v1998
      %v2009 = vpack.c.b16 %v2001, %v2000
      %v2010 = vpack.c.b16 %v2003, %v2002
      %v2011 = vpack.c.b16 %v2005, %v2004
      %v2012 = vpack.c.b16 %v2006, %v2006
      %v2013 = vrot.slane %v2007, 1
      %v2014 = vrot.slane %v2008, 1
      %v2015 = vsel %vm547, %v2013, %v2014
      %v2016 = vrot.slane %v2009, 1
      %v2017 = vsel %vm547, %v2014, %v2016
      %v2018 = vrot.slane %v2010, 1
      %v2019 = vsel %vm547, %v2016, %v2018
      %v2020 = vrot.slane %v2011, 1
      %v2021 = vsel %vm547, %v2018, %v2020
      %v2022 = vrot.slane %v2012, 1
      %v2023 = vsel %vm547, %v2020, %v2022
      %v2025 = vsel %vm362, %v2015, 0
      %v2028 = vsel %vm362, %v2017, 0
      %v2031 = vsel %vm362, %v2019, 0
      %v2034 = vsel %vm362, %v2021, 0
      %v2037 = vsel %vm362, %v2023, 0
      %v2040 = vsel %vm378, %v1984, 0
      %2042 = vmatprep.subr.bf16.mxu0 0
      %2043 = vmatpush1.bf16.msra.mxu0 0
      %2044 = vmatprep.subr.bf16.mxu0 0
      %2045 = vmatpush1.bf16.msra.mxu0 0
      %2046 = vmatprep.subr.bf16.mxu0 0
      %2047 = vmatpush1.bf16.msra.mxu0 0
      %2048 = vmatprep.subr.bf16.mxu0 0
      %2049 = vmatpush1.bf16.msra.mxu0 0
      %2050 = vmatprep.subr.bf16.mxu0 0
      %2051 = vmatpush1.bf16.msra.mxu0 0
      %2052 = vmatprep.subr.bf16.mxu0 0
      %2053 = vmatpush1.bf16.msra.mxu0 0
      %2054 = vmatprep.subr.bf16.mxu0 0
      %2055 = vmatpush1.bf16.msra.mxu0 0
      %2056 = vmatprep.subr.bf16.mxu0 0
      %2057 = vmatpush1.bf16.msra.mxu0 %v2040
      %2058 = vmatprep.subr.bf16.mxu0 0
      %2059 = vmatpush2.bf16.msra.mxu0 0
      %2060 = vmatprep.subr.bf16.mxu0 0
      %2061 = vmatpush2.bf16.msra.mxu0 0
      %2062 = vmatprep.subr.bf16.mxu0 0
      %2063 = vmatpush2.bf16.msra.mxu0 0
      %2064 = vmatprep.subr.bf16.mxu0 0
      %2065 = vmatpush2.bf16.msra.mxu0 0
      %2066 = vmatprep.subr.bf16.mxu0 0
      %2067 = vmatpush2.bf16.msra.mxu0 0
      %2068 = vmatprep.subr.bf16.mxu0 0
      %2069 = vmatpush2.bf16.msra.mxu0 0
      %2070 = vmatprep.subr.bf16.mxu0 0
      %2071 = vmatpush2.bf16.msra.mxu0 0
      %2072 = vmatprep.subr.bf16.mxu0 0
      %2073 = vmatpush2.bf16.msra.mxu0 0
      %2074 = vmatprep.mubr.bf16.mxu0 0
      %2075 = vmatmul.mubr.bf16.gmra.mxu0 %v2025
      %v2076 = vpop.f32.mrf.mxu0
      %v2077 = vadd.f32 0.0, %v2076
      %v2078 = vpop.f32.mrf.mxu0
      %v2079 = vpop.f32.mrf.mxu0
      %v2080 = vadd.f32 0.0, %v2079
      %v2081 = vpop.f32.mrf.mxu0
      %2082 = vmatprep.mubr.bf16.mxu0 0
      %2083 = vmatmul.mubr.bf16.gmra.mxu0 %v2028
      %v2084 = vpop.f32.mrf.mxu0
      %v2085 = vadd.f32 0.0, %v2084
      %v2086 = vpop.f32.mrf.mxu0
      %v2087 = vpop.f32.mrf.mxu0
      %v2088 = vadd.f32 0.0, %v2087
      %v2089 = vpop.f32.mrf.mxu0
      %2090 = vmatprep.mubr.bf16.mxu0 0
      %2091 = vmatmul.mubr.bf16.gmra.mxu0 %v2031
      %v2092 = vpop.f32.mrf.mxu0
      %v2093 = vadd.f32 0.0, %v2092
      %v2094 = vpop.f32.mrf.mxu0
      %v2095 = vpop.f32.mrf.mxu0
      %v2096 = vadd.f32 0.0, %v2095
      %v2097 = vpop.f32.mrf.mxu0
      %2098 = vmatprep.mubr.bf16.mxu0 0
      %2099 = vmatmul.mubr.bf16.gmra.mxu0 %v2034
      %v2100 = vpop.f32.mrf.mxu0
      %v2101 = vadd.f32 0.0, %v2100
      %v2102 = vpop.f32.mrf.mxu0
      %v2103 = vpop.f32.mrf.mxu0
      %v2104 = vadd.f32 0.0, %v2103
      %v2105 = vpop.f32.mrf.mxu0
      %2106 = vmatprep.mubr.bf16.mxu0 0
      %2107 = vmatmul.mubr.bf16.gmra.mxu0 %v2037
      %v2108 = vpop.f32.mrf.mxu0
      %v2109 = vadd.f32 0.0, %v2108
      %v2110 = vpop.f32.mrf.mxu0
      %v2111 = vpop.f32.mrf.mxu0
      %v2112 = vadd.f32 0.0, %v2111
      %v2113 = vpop.f32.mrf.mxu0
      %2114 = vdwg.mxu0
      %v2115 = vadd.f32 %v1962, %v2077
      %v2116 = vadd.f32 %v1963, %v2080
      %v2117 = vadd.f32 %v1964, %v2085
      %v2118 = vadd.f32 %v1965, %v2088
      %v2119 = vadd.f32 %v1966, %v2093
      %v2120 = vadd.f32 %v1967, %v2096
      %v2121 = vadd.f32 %v1968, %v2101
      %v2122 = vadd.f32 %v1969, %v2104
      %v2123 = vadd.f32 %v1970, %v2109
      %v2124 = vadd.f32 %v1971, %v2112
      %v2125 = vld [vmem:[%s1529 + $0x2c] sm:$0x3]
      %s2126 = scalar_lea.vmem %s1, 52
      %v2127 = vld [vmem:[%s2126] sm:$0xf]
      %v2129 = vunpack.c.l.b16 %v2125
      %v2130 = vpack.c.b16 %v2129, %v2129
      %v2132 = vshrl.u32 %v2007, 16
      %v2134 = vrot.slane %v2132, 1
      %v2135 = vshll.u32 %v2007, 16
      %v2137 = vrot.slane %v2135, 2
      %v2138 = vor.u32 %v2134, %v2137
      %v2140 = vshrl.u32 %v2008, 16
      %v2142 = vrot.slane %v2140, 1
      %v2143 = vshll.u32 %v2008, 16
      %v2145 = vrot.slane %v2143, 2
      %v2146 = vor.u32 %v2142, %v2145
      %v2147 = vsel %vm819, %v2138, %v2146
      %v2149 = vshrl.u32 %v2009, 16
      %v2151 = vrot.slane %v2149, 1
      %v2152 = vshll.u32 %v2009, 16
      %v2154 = vrot.slane %v2152, 2
      %v2155 = vor.u32 %v2151, %v2154
      %v2156 = vsel %vm819, %v2146, %v2155
      %v2158 = vshrl.u32 %v2010, 16
      %v2160 = vrot.slane %v2158, 1
      %v2161 = vshll.u32 %v2010, 16
      %v2163 = vrot.slane %v2161, 2
      %v2164 = vor.u32 %v2160, %v2163
      %v2165 = vsel %vm819, %v2155, %v2164
      %v2167 = vshrl.u32 %v2011, 16
      %v2169 = vrot.slane %v2167, 1
      %v2170 = vshll.u32 %v2011, 16
      %v2172 = vrot.slane %v2170, 2
      %v2173 = vor.u32 %v2169, %v2172
      %v2174 = vsel %vm819, %v2164, %v2173
      %v2176 = vshrl.u32 %v2130, 16
      %v2178 = vrot.slane %v2176, 1
      %v2179 = vshll.u32 %v2130, 16
      %v2181 = vrot.slane %v2179, 2
      %v2182 = vor.u32 %v2178, %v2181
      %v2183 = vsel %vm819, %v2173, %v2182
      %v2185 = vsel %vm362, %v2147, 0
      %v2188 = vsel %vm362, %v2156, 0
      %v2191 = vsel %vm362, %v2165, 0
      %v2194 = vsel %vm362, %v2174, 0
      %v2197 = vsel %vm362, %v2183, 0
      %v2200 = vsel %vm378, %v2127, 0
      %2202 = vmatprep.subr.bf16.mxu0 0
      %2203 = vmatpush1.bf16.msra.mxu0 0
      %2204 = vmatprep.subr.bf16.mxu0 0
      %2205 = vmatpush1.bf16.msra.mxu0 0
      %2206 = vmatprep.subr.bf16.mxu0 0
      %2207 = vmatpush1.bf16.msra.mxu0 0
      %2208 = vmatprep.subr.bf16.mxu0 0
      %2209 = vmatpush1.bf16.msra.mxu0 0
      %2210 = vmatprep.subr.bf16.mxu0 0
      %2211 = vmatpush1.bf16.msra.mxu0 0
      %2212 = vmatprep.subr.bf16.mxu0 0
      %2213 = vmatpush1.bf16.msra.mxu0 0
      %2214 = vmatprep.subr.bf16.mxu0 0
      %2215 = vmatpush1.bf16.msra.mxu0 0
      %2216 = vmatprep.subr.bf16.mxu0 0
      %2217 = vmatpush1.bf16.msra.mxu0 %v2200
      %2218 = vmatprep.subr.bf16.mxu0 0
      %2219 = vmatpush2.bf16.msra.mxu0 0
      %2220 = vmatprep.subr.bf16.mxu0 0
      %2221 = vmatpush2.bf16.msra.mxu0 0
      %2222 = vmatprep.subr.bf16.mxu0 0
      %2223 = vmatpush2.bf16.msra.mxu0 0
      %2224 = vmatprep.subr.bf16.mxu0 0
      %2225 = vmatpush2.bf16.msra.mxu0 0
      %2226 = vmatprep.subr.bf16.mxu0 0
      %2227 = vmatpush2.bf16.msra.mxu0 0
      %2228 = vmatprep.subr.bf16.mxu0 0
      %2229 = vmatpush2.bf16.msra.mxu0 0
      %2230 = vmatprep.subr.bf16.mxu0 0
      %2231 = vmatpush2.bf16.msra.mxu0 0
      %2232 = vmatprep.subr.bf16.mxu0 0
      %2233 = vmatpush2.bf16.msra.mxu0 0
      %2234 = vmatprep.mubr.bf16.mxu0 0
      %2235 = vmatmul.mubr.bf16.gmra.mxu0 %v2185
      %v2236 = vpop.f32.mrf.mxu0
      %v2237 = vadd.f32 0.0, %v2236
      %v2238 = vpop.f32.mrf.mxu0
      %v2239 = vpop.f32.mrf.mxu0
      %v2240 = vadd.f32 0.0, %v2239
      %v2241 = vpop.f32.mrf.mxu0
      %2242 = vmatprep.mubr.bf16.mxu0 0
      %2243 = vmatmul.mubr.bf16.gmra.mxu0 %v2188
      %v2244 = vpop.f32.mrf.mxu0
      %v2245 = vadd.f32 0.0, %v2244
      %v2246 = vpop.f32.mrf.mxu0
      %v2247 = vpop.f32.mrf.mxu0
      %v2248 = vadd.f32 0.0, %v2247
      %v2249 = vpop.f32.mrf.mxu0
      %2250 = vmatprep.mubr.bf16.mxu0 0
      %2251 = vmatmul.mubr.bf16.gmra.mxu0 %v2191
      %v2252 = vpop.f32.mrf.mxu0
      %v2253 = vadd.f32 0.0, %v2252
      %v2254 = vpop.f32.mrf.mxu0
      %v2255 = vpop.f32.mrf.mxu0
      %v2256 = vadd.f32 0.0, %v2255
      %v2257 = vpop.f32.mrf.mxu0
      %2258 = vmatprep.mubr.bf16.mxu0 0
      %2259 = vmatmul.mubr.bf16.gmra.mxu0 %v2194
      %v2260 = vpop.f32.mrf.mxu0
      %v2261 = vadd.f32 0.0, %v2260
      %v2262 = vpop.f32.mrf.mxu0
      %v2263 = vpop.f32.mrf.mxu0
      %v2264 = vadd.f32 0.0, %v2263
      %v2265 = vpop.f32.mrf.mxu0
      %2266 = vmatprep.mubr.bf16.mxu0 0
      %2267 = vmatmul.mubr.bf16.gmra.mxu0 %v2197
      %v2268 = vpop.f32.mrf.mxu0
      %v2269 = vadd.f32 0.0, %v2268
      %v2270 = vpop.f32.mrf.mxu0
      %v2271 = vpop.f32.mrf.mxu0
      %v2272 = vadd.f32 0.0, %v2271
      %v2273 = vpop.f32.mrf.mxu0
      %2274 = vdwg.mxu0
      %v2275 = vadd.f32 %v2115, %v2237
      %v2276 = vadd.f32 %v2116, %v2240
      %v2277 = vadd.f32 %v2117, %v2245
      %v2278 = vadd.f32 %v2118, %v2248
      %v2279 = vadd.f32 %v2119, %v2253
      %v2280 = vadd.f32 %v2120, %v2256
      %v2281 = vadd.f32 %v2121, %v2261
      %v2282 = vadd.f32 %v2122, %v2264
      %v2283 = vadd.f32 %v2123, %v2269
      %v2284 = vadd.f32 %v2124, %v2272
      %v2285 = vld [vmem:[%s1529 + $0x4] sm:$0xc]
      %s2286 = scalar_lea.vmem %s1, 56
      %v2287 = vld [vmem:[%s2286] sm:$0xf]
      %v2289 = vunpack.c.l.b16 %v2285
      %v2290 = vpack.c.b16 %v1997, %v2289
      %v2291 = vrot.slane %v2290, 2
      %v2292 = vrot.slane %v2008, 2
      %v2293 = vsel %vm980, %v2291, %v2292
      %v2294 = vrot.slane %v2009, 2
      %v2295 = vsel %vm980, %v2292, %v2294
      %v2296 = vrot.slane %v2010, 2
      %v2297 = vsel %vm980, %v2294, %v2296
      %v2298 = vrot.slane %v2011, 2
      %v2299 = vsel %vm980, %v2296, %v2298
      %v2300 = vrot.slane %v2130, 2
      %v2301 = vsel %vm980, %v2298, %v2300
      %v2303 = vsel %vm362, %v2293, 0
      %v2306 = vsel %vm362, %v2295, 0
      %v2309 = vsel %vm362, %v2297, 0
      %v2312 = vsel %vm362, %v2299, 0
      %v2315 = vsel %vm362, %v2301, 0
      %v2318 = vsel %vm378, %v2287, 0
      %2320 = vmatprep.subr.bf16.mxu0 0
      %2321 = vmatpush1.bf16.msra.mxu0 0
      %2322 = vmatprep.subr.bf16.mxu0 0
      %2323 = vmatpush1.bf16.msra.mxu0 0
      %2324 = vmatprep.subr.bf16.mxu0 0
      %2325 = vmatpush1.bf16.msra.mxu0 0
      %2326 = vmatprep.subr.bf16.mxu0 0
      %2327 = vmatpush1.bf16.msra.mxu0 0
      %2328 = vmatprep.subr.bf16.mxu0 0
      %2329 = vmatpush1.bf16.msra.mxu0 0
      %2330 = vmatprep.subr.bf16.mxu0 0
      %2331 = vmatpush1.bf16.msra.mxu0 0
      %2332 = vmatprep.subr.bf16.mxu0 0
      %2333 = vmatpush1.bf16.msra.mxu0 0
      %2334 = vmatprep.subr.bf16.mxu0 0
      %2335 = vmatpush1.bf16.msra.mxu0 %v2318
      %2336 = vmatprep.subr.bf16.mxu0 0
      %2337 = vmatpush2.bf16.msra.mxu0 0
      %2338 = vmatprep.subr.bf16.mxu0 0
      %2339 = vmatpush2.bf16.msra.mxu0 0
      %2340 = vmatprep.subr.bf16.mxu0 0
      %2341 = vmatpush2.bf16.msra.mxu0 0
      %2342 = vmatprep.subr.bf16.mxu0 0
      %2343 = vmatpush2.bf16.msra.mxu0 0
      %2344 = vmatprep.subr.bf16.mxu0 0
      %2345 = vmatpush2.bf16.msra.mxu0 0
      %2346 = vmatprep.subr.bf16.mxu0 0
      %2347 = vmatpush2.bf16.msra.mxu0 0
      %2348 = vmatprep.subr.bf16.mxu0 0
      %2349 = vmatpush2.bf16.msra.mxu0 0
      %2350 = vmatprep.subr.bf16.mxu0 0
      %2351 = vmatpush2.bf16.msra.mxu0 0
      %2352 = vmatprep.mubr.bf16.mxu0 0
      %2353 = vmatmul.mubr.bf16.gmra.mxu0 %v2303
      %v2354 = vpop.f32.mrf.mxu0
      %v2355 = vadd.f32 0.0, %v2354
      %v2356 = vpop.f32.mrf.mxu0
      %v2357 = vpop.f32.mrf.mxu0
      %v2358 = vadd.f32 0.0, %v2357
      %v2359 = vpop.f32.mrf.mxu0
      %2360 = vmatprep.mubr.bf16.mxu0 0
      %2361 = vmatmul.mubr.bf16.gmra.mxu0 %v2306
      %v2362 = vpop.f32.mrf.mxu0
      %v2363 = vadd.f32 0.0, %v2362
      %v2364 = vpop.f32.mrf.mxu0
      %v2365 = vpop.f32.mrf.mxu0
      %v2366 = vadd.f32 0.0, %v2365
      %v2367 = vpop.f32.mrf.mxu0
      %2368 = vmatprep.mubr.bf16.mxu0 0
      %2369 = vmatmul.mubr.bf16.gmra.mxu0 %v2309
      %v2370 = vpop.f32.mrf.mxu0
      %v2371 = vadd.f32 0.0, %v2370
      %v2372 = vpop.f32.mrf.mxu0
      %v2373 = vpop.f32.mrf.mxu0
      %v2374 = vadd.f32 0.0, %v2373
      %v2375 = vpop.f32.mrf.mxu0
      %2376 = vmatprep.mubr.bf16.mxu0 0
      %2377 = vmatmul.mubr.bf16.gmra.mxu0 %v2312
      %v2378 = vpop.f32.mrf.mxu0
      %v2379 = vadd.f32 0.0, %v2378
      %v2380 = vpop.f32.mrf.mxu0
      %v2381 = vpop.f32.mrf.mxu0
      %v2382 = vadd.f32 0.0, %v2381
      %v2383 = vpop.f32.mrf.mxu0
      %2384 = vmatprep.mubr.bf16.mxu0 0
      %2385 = vmatmul.mubr.bf16.gmra.mxu0 %v2315
      %v2386 = vpop.f32.mrf.mxu0
      %v2387 = vadd.f32 0.0, %v2386
      %v2388 = vpop.f32.mrf.mxu0
      %v2389 = vpop.f32.mrf.mxu0
      %v2390 = vadd.f32 0.0, %v2389
      %v2391 = vpop.f32.mrf.mxu0
      %2392 = vdwg.mxu0
      %v2393 = vadd.f32 %v2275, %v2355
      %v2394 = vadd.f32 %v2276, %v2358
      %v2395 = vadd.f32 %v2277, %v2363
      %v2396 = vadd.f32 %v2278, %v2366
      %v2397 = vadd.f32 %v2279, %v2371
      %v2398 = vadd.f32 %v2280, %v2374
      %v2399 = vadd.f32 %v2281, %v2379
      %v2400 = vadd.f32 %v2282, %v2382
      %v2401 = vadd.f32 %v2283, %v2387
      %v2402 = vadd.f32 %v2284, %v2390
      %v2403 = vld [vmem:[%s1529 + $0x8] sm:$0xc]
      %v2404 = vld [vmem:[%s1529 + $0xc] sm:$0xf]
      %v2405 = vld [vmem:[%s1529 + $0x10] sm:$0xf]
      %v2406 = vld [vmem:[%s1529 + $0x14] sm:$0xf]
      %v2407 = vld [vmem:[%s1529 + $0x18] sm:$0xf]
      %v2408 = vld [vmem:[%s1529 + $0x1c] sm:$0xf]
      %v2409 = vld [vmem:[%s1529 + $0x20] sm:$0xf]
      %v2410 = vld [vmem:[%s1529 + $0x24] sm:$0xf]
      %v2411 = vld [vmem:[%s1529 + $0x28] sm:$0xf]
      %v2412 = vld [vmem:[%s1529 + $0x2c] sm:$0xf]
      %v2413 = vld [vmem:[%s1529 + $0x30] sm:$0x3]
      %s2414 = scalar_lea.vmem %s1, 60
      %v2415 = vld [vmem:[%s2414] sm:$0xf]
      %v2427 = vunpack.c.l.b16 %v2403
      %v2428 = vunpack.c.l.b16 %v2404
      %v2429 = vunpack.c.l.b16 %v2405
      %v2430 = vunpack.c.l.b16 %v2406
      %v2431 = vunpack.c.l.b16 %v2407
      %v2432 = vunpack.c.l.b16 %v2408
      %v2433 = vunpack.c.l.b16 %v2409
      %v2434 = vunpack.c.l.b16 %v2410
      %v2435 = vunpack.c.l.b16 %v2411
      %v2436 = vunpack.c.l.b16 %v2412
      %v2437 = vunpack.c.l.b16 %v2413
      %v2438 = vpack.c.b16 %v2428, %v2427
      %v2439 = vpack.c.b16 %v2430, %v2429
      %v2440 = vpack.c.b16 %v2432, %v2431
      %v2441 = vpack.c.b16 %v2434, %v2433
      %v2442 = vpack.c.b16 %v2436, %v2435
      %v2443 = vpack.c.b16 %v2437, %v2437
      %v2444 = vrot.slane %v2438, 2
      %v2445 = vrot.slane %v2439, 2
      %v2446 = vsel %vm980, %v2444, %v2445
      %v2447 = vrot.slane %v2440, 2
      %v2448 = vsel %vm980, %v2445, %v2447
      %v2449 = vrot.slane %v2441, 2
      %v2450 = vsel %vm980, %v2447, %v2449
      %v2451 = vrot.slane %v2442, 2
      %v2452 = vsel %vm980, %v2449, %v2451
      %v2453 = vrot.slane %v2443, 2
      %v2454 = vsel %vm980, %v2451, %v2453
      %v2456 = vsel %vm362, %v2446, 0
      %v2459 = vsel %vm362, %v2448, 0
      %v2462 = vsel %vm362, %v2450, 0
      %v2465 = vsel %vm362, %v2452, 0
      %v2468 = vsel %vm362, %v2454, 0
      %v2471 = vsel %vm378, %v2415, 0
      %2473 = vmatprep.subr.bf16.mxu0 0
      %2474 = vmatpush1.bf16.msra.mxu0 0
      %2475 = vmatprep.subr.bf16.mxu0 0
      %2476 = vmatpush1.bf16.msra.mxu0 0
      %2477 = vmatprep.subr.bf16.mxu0 0
      %2478 = vmatpush1.bf16.msra.mxu0 0
      %2479 = vmatprep.subr.bf16.mxu0 0
      %2480 = vmatpush1.bf16.msra.mxu0 0
      %2481 = vmatprep.subr.bf16.mxu0 0
      %2482 = vmatpush1.bf16.msra.mxu0 0
      %2483 = vmatprep.subr.bf16.mxu0 0
      %2484 = vmatpush1.bf16.msra.mxu0 0
      %2485 = vmatprep.subr.bf16.mxu0 0
      %2486 = vmatpush1.bf16.msra.mxu0 0
      %2487 = vmatprep.subr.bf16.mxu0 0
      %2488 = vmatpush1.bf16.msra.mxu0 %v2471
      %2489 = vmatprep.subr.bf16.mxu0 0
      %2490 = vmatpush2.bf16.msra.mxu0 0
      %2491 = vmatprep.subr.bf16.mxu0 0
      %2492 = vmatpush2.bf16.msra.mxu0 0
      %2493 = vmatprep.subr.bf16.mxu0 0
      %2494 = vmatpush2.bf16.msra.mxu0 0
      %2495 = vmatprep.subr.bf16.mxu0 0
      %2496 = vmatpush2.bf16.msra.mxu0 0
      %2497 = vmatprep.subr.bf16.mxu0 0
      %2498 = vmatpush2.bf16.msra.mxu0 0
      %2499 = vmatprep.subr.bf16.mxu0 0
      %2500 = vmatpush2.bf16.msra.mxu0 0
      %2501 = vmatprep.subr.bf16.mxu0 0
      %2502 = vmatpush2.bf16.msra.mxu0 0
      %2503 = vmatprep.subr.bf16.mxu0 0
      %2504 = vmatpush2.bf16.msra.mxu0 0
      %2505 = vmatprep.mubr.bf16.mxu0 0
      %2506 = vmatmul.mubr.bf16.gmra.mxu0 %v2456
      %v2507 = vpop.f32.mrf.mxu0
      %v2508 = vadd.f32 0.0, %v2507
      %v2509 = vpop.f32.mrf.mxu0
      %v2510 = vpop.f32.mrf.mxu0
      %v2511 = vadd.f32 0.0, %v2510
      %v2512 = vpop.f32.mrf.mxu0
      %2513 = vmatprep.mubr.bf16.mxu0 0
      %2514 = vmatmul.mubr.bf16.gmra.mxu0 %v2459
      %v2515 = vpop.f32.mrf.mxu0
      %v2516 = vadd.f32 0.0, %v2515
      %v2517 = vpop.f32.mrf.mxu0
      %v2518 = vpop.f32.mrf.mxu0
      %v2519 = vadd.f32 0.0, %v2518
      %v2520 = vpop.f32.mrf.mxu0
      %2521 = vmatprep.mubr.bf16.mxu0 0
      %2522 = vmatmul.mubr.bf16.gmra.mxu0 %v2462
      %v2523 = vpop.f32.mrf.mxu0
      %v2524 = vadd.f32 0.0, %v2523
      %v2525 = vpop.f32.mrf.mxu0
      %v2526 = vpop.f32.mrf.mxu0
      %v2527 = vadd.f32 0.0, %v2526
      %v2528 = vpop.f32.mrf.mxu0
      %2529 = vmatprep.mubr.bf16.mxu0 0
      %2530 = vmatmul.mubr.bf16.gmra.mxu0 %v2465
      %v2531 = vpop.f32.mrf.mxu0
      %v2532 = vadd.f32 0.0, %v2531
      %v2533 = vpop.f32.mrf.mxu0
      %v2534 = vpop.f32.mrf.mxu0
      %v2535 = vadd.f32 0.0, %v2534
      %v2536 = vpop.f32.mrf.mxu0
      %2537 = vmatprep.mubr.bf16.mxu0 0
      %2538 = vmatmul.mubr.bf16.gmra.mxu0 %v2468
      %v2539 = vpop.f32.mrf.mxu0
      %v2540 = vadd.f32 0.0, %v2539
      %v2541 = vpop.f32.mrf.mxu0
      %v2542 = vpop.f32.mrf.mxu0
      %v2543 = vadd.f32 0.0, %v2542
      %v2544 = vpop.f32.mrf.mxu0
      %2545 = vdwg.mxu0
      %v2546 = vadd.f32 %v2393, %v2508
      %v2547 = vadd.f32 %v2394, %v2511
      %v2548 = vadd.f32 %v2395, %v2516
      %v2549 = vadd.f32 %v2396, %v2519
      %v2550 = vadd.f32 %v2397, %v2524
      %v2551 = vadd.f32 %v2398, %v2527
      %v2552 = vadd.f32 %v2399, %v2532
      %v2553 = vadd.f32 %v2400, %v2535
      %v2554 = vadd.f32 %v2401, %v2540
      %v2555 = vadd.f32 %v2402, %v2543
      %v2556 = vld [vmem:[%s1529 + $0x30] sm:$0x7]
      %s2557 = scalar_lea.vmem %s1, 64
      %v2558 = vld [vmem:[%s2557] sm:$0xf]
      %v2560 = vunpack.c.l.b16 %v2556
      %v2561 = vpack.c.b16 %v2560, %v2560
      %v2563 = vshrl.u32 %v2438, 16
      %v2565 = vrot.slane %v2563, 2
      %v2566 = vshll.u32 %v2438, 16
      %v2568 = vrot.slane %v2566, 3
      %v2569 = vor.u32 %v2565, %v2568
      %v2571 = vshrl.u32 %v2439, 16
      %v2573 = vrot.slane %v2571, 2
      %v2574 = vshll.u32 %v2439, 16
      %v2576 = vrot.slane %v2574, 3
      %v2577 = vor.u32 %v2573, %v2576
      %v2578 = vsel %vm1252, %v2569, %v2577
      %v2580 = vshrl.u32 %v2440, 16
      %v2582 = vrot.slane %v2580, 2
      %v2583 = vshll.u32 %v2440, 16
      %v2585 = vrot.slane %v2583, 3
      %v2586 = vor.u32 %v2582, %v2585
      %v2587 = vsel %vm1252, %v2577, %v2586
      %v2589 = vshrl.u32 %v2441, 16
      %v2591 = vrot.slane %v2589, 2
      %v2592 = vshll.u32 %v2441, 16
      %v2594 = vrot.slane %v2592, 3
      %v2595 = vor.u32 %v2591, %v2594
      %v2596 = vsel %vm1252, %v2586, %v2595
      %v2598 = vshrl.u32 %v2442, 16
      %v2600 = vrot.slane %v2598, 2
      %v2601 = vshll.u32 %v2442, 16
      %v2603 = vrot.slane %v2601, 3
      %v2604 = vor.u32 %v2600, %v2603
      %v2605 = vsel %vm1252, %v2595, %v2604
      %v2607 = vshrl.u32 %v2561, 16
      %v2609 = vrot.slane %v2607, 2
      %v2610 = vshll.u32 %v2561, 16
      %v2612 = vrot.slane %v2610, 3
      %v2613 = vor.u32 %v2609, %v2612
      %v2614 = vsel %vm1252, %v2604, %v2613
      %v2616 = vsel %vm362, %v2578, 0
      %v2619 = vsel %vm362, %v2587, 0
      %v2622 = vsel %vm362, %v2596, 0
      %v2625 = vsel %vm362, %v2605, 0
      %v2628 = vsel %vm362, %v2614, 0
      %v2631 = vsel %vm378, %v2558, 0
      %2633 = vmatprep.subr.bf16.mxu0 0
      %2634 = vmatpush1.bf16.msra.mxu0 0
      %2635 = vmatprep.subr.bf16.mxu0 0
      %2636 = vmatpush1.bf16.msra.mxu0 0
      %2637 = vmatprep.subr.bf16.mxu0 0
      %2638 = vmatpush1.bf16.msra.mxu0 0
      %2639 = vmatprep.subr.bf16.mxu0 0
      %2640 = vmatpush1.bf16.msra.mxu0 0
      %2641 = vmatprep.subr.bf16.mxu0 0
      %2642 = vmatpush1.bf16.msra.mxu0 0
      %2643 = vmatprep.subr.bf16.mxu0 0
      %2644 = vmatpush1.bf16.msra.mxu0 0
      %2645 = vmatprep.subr.bf16.mxu0 0
      %2646 = vmatpush1.bf16.msra.mxu0 0
      %2647 = vmatprep.subr.bf16.mxu0 0
      %2648 = vmatpush1.bf16.msra.mxu0 %v2631
      %2649 = vmatprep.subr.bf16.mxu0 0
      %2650 = vmatpush2.bf16.msra.mxu0 0
      %2651 = vmatprep.subr.bf16.mxu0 0
      %2652 = vmatpush2.bf16.msra.mxu0 0
      %2653 = vmatprep.subr.bf16.mxu0 0
      %2654 = vmatpush2.bf16.msra.mxu0 0
      %2655 = vmatprep.subr.bf16.mxu0 0
      %2656 = vmatpush2.bf16.msra.mxu0 0
      %2657 = vmatprep.subr.bf16.mxu0 0
      %2658 = vmatpush2.bf16.msra.mxu0 0
      %2659 = vmatprep.subr.bf16.mxu0 0
      %2660 = vmatpush2.bf16.msra.mxu0 0
      %2661 = vmatprep.subr.bf16.mxu0 0
      %2662 = vmatpush2.bf16.msra.mxu0 0
      %2663 = vmatprep.subr.bf16.mxu0 0
      %2664 = vmatpush2.bf16.msra.mxu0 0
      %2665 = vmatprep.mubr.bf16.mxu0 0
      %2666 = vmatmul.mubr.bf16.gmra.mxu0 %v2616
      %v2667 = vpop.f32.mrf.mxu0
      %v2668 = vadd.f32 0.0, %v2667
      %v2669 = vpop.f32.mrf.mxu0
      %v2670 = vpop.f32.mrf.mxu0
      %v2671 = vadd.f32 0.0, %v2670
      %v2672 = vpop.f32.mrf.mxu0
      %2673 = vmatprep.mubr.bf16.mxu0 0
      %2674 = vmatmul.mubr.bf16.gmra.mxu0 %v2619
      %v2675 = vpop.f32.mrf.mxu0
      %v2676 = vadd.f32 0.0, %v2675
      %v2677 = vpop.f32.mrf.mxu0
      %v2678 = vpop.f32.mrf.mxu0
      %v2679 = vadd.f32 0.0, %v2678
      %v2680 = vpop.f32.mrf.mxu0
      %2681 = vmatprep.mubr.bf16.mxu0 0
      %2682 = vmatmul.mubr.bf16.gmra.mxu0 %v2622
      %v2683 = vpop.f32.mrf.mxu0
      %v2684 = vadd.f32 0.0, %v2683
      %v2685 = vpop.f32.mrf.mxu0
      %v2686 = vpop.f32.mrf.mxu0
      %v2687 = vadd.f32 0.0, %v2686
      %v2688 = vpop.f32.mrf.mxu0
      %2689 = vmatprep.mubr.bf16.mxu0 0
      %2690 = vmatmul.mubr.bf16.gmra.mxu0 %v2625
      %v2691 = vpop.f32.mrf.mxu0
      %v2692 = vadd.f32 0.0, %v2691
      %v2693 = vpop.f32.mrf.mxu0
      %v2694 = vpop.f32.mrf.mxu0
      %v2695 = vadd.f32 0.0, %v2694
      %v2696 = vpop.f32.mrf.mxu0
      %2697 = vmatprep.mubr.bf16.mxu0 0
      %2698 = vmatmul.mubr.bf16.gmra.mxu0 %v2628
      %v2699 = vpop.f32.mrf.mxu0
      %v2700 = vadd.f32 0.0, %v2699
      %v2701 = vpop.f32.mrf.mxu0
      %v2702 = vpop.f32.mrf.mxu0
      %v2703 = vadd.f32 0.0, %v2702
      %v2704 = vpop.f32.mrf.mxu0
      %2705 = vdwg.mxu0
      %v2706 = vadd.f32 %v2546, %v2668
      %v2707 = vadd.f32 %v2547, %v2671
      %v2708 = vadd.f32 %v2548, %v2676
      %v2709 = vadd.f32 %v2549, %v2679
      %v2710 = vadd.f32 %v2550, %v2684
      %v2711 = vadd.f32 %v2551, %v2687
      %v2712 = vadd.f32 %v2552, %v2692
      %v2713 = vadd.f32 %v2553, %v2695
      %v2714 = vadd.f32 %v2554, %v2700
      %v2715 = vadd.f32 %v2555, %v2703
      %v2716 = vld [vmem:[%s1529 + $0x8] sm:$0x8]
      %s2717 = scalar_lea.vmem %s1, 68
      %v2718 = vld [vmem:[%s2717] sm:$0xf]
      %v2720 = vunpack.c.l.b16 %v2716
      %v2721 = vpack.c.b16 %v2428, %v2720
      %v2722 = vrot.slane %v2721, 3
      %v2723 = vrot.slane %v2439, 3
      %v2724 = vsel %vm1413, %v2722, %v2723
      %v2725 = vrot.slane %v2440, 3
      %v2726 = vsel %vm1413, %v2723, %v2725
      %v2727 = vrot.slane %v2441, 3
      %v2728 = vsel %vm1413, %v2725, %v2727
      %v2729 = vrot.slane %v2442, 3
      %v2730 = vsel %vm1413, %v2727, %v2729
      %v2731 = vrot.slane %v2561, 3
      %v2732 = vsel %vm1413, %v2729, %v2731
      %v2734 = vsel %vm362, %v2724, 0
      %v2737 = vsel %vm362, %v2726, 0
      %v2740 = vsel %vm362, %v2728, 0
      %v2743 = vsel %vm362, %v2730, 0
      %v2746 = vsel %vm362, %v2732, 0
      %v2749 = vsel %vm378, %v2718, 0
      %2751 = vmatprep.subr.bf16.mxu0 0
      %2752 = vmatpush1.bf16.msra.mxu0 0
      %2753 = vmatprep.subr.bf16.mxu0 0
      %2754 = vmatpush1.bf16.msra.mxu0 0
      %2755 = vmatprep.subr.bf16.mxu0 0
      %2756 = vmatpush1.bf16.msra.mxu0 0
      %2757 = vmatprep.subr.bf16.mxu0 0
      %2758 = vmatpush1.bf16.msra.mxu0 0
      %2759 = vmatprep.subr.bf16.mxu0 0
      %2760 = vmatpush1.bf16.msra.mxu0 0
      %2761 = vmatprep.subr.bf16.mxu0 0
      %2762 = vmatpush1.bf16.msra.mxu0 0
      %2763 = vmatprep.subr.bf16.mxu0 0
      %2764 = vmatpush1.bf16.msra.mxu0 0
      %2765 = vmatprep.subr.bf16.mxu0 0
      %2766 = vmatpush1.bf16.msra.mxu0 %v2749
      %2767 = vmatprep.subr.bf16.mxu0 0
      %2768 = vmatpush2.bf16.msra.mxu0 0
      %2769 = vmatprep.subr.bf16.mxu0 0
      %2770 = vmatpush2.bf16.msra.mxu0 0
      %2771 = vmatprep.subr.bf16.mxu0 0
      %2772 = vmatpush2.bf16.msra.mxu0 0
      %2773 = vmatprep.subr.bf16.mxu0 0
      %2774 = vmatpush2.bf16.msra.mxu0 0
      %2775 = vmatprep.subr.bf16.mxu0 0
      %2776 = vmatpush2.bf16.msra.mxu0 0
      %2777 = vmatprep.subr.bf16.mxu0 0
      %2778 = vmatpush2.bf16.msra.mxu0 0
      %2779 = vmatprep.subr.bf16.mxu0 0
      %2780 = vmatpush2.bf16.msra.mxu0 0
      %2781 = vmatprep.subr.bf16.mxu0 0
      %2782 = vmatpush2.bf16.msra.mxu0 0
      %2783 = vmatprep.mubr.bf16.mxu0 0
      %2784 = vmatmul.mubr.bf16.gmra.mxu0 %v2734
      %v2785 = vpop.f32.mrf.mxu0
      %v2786 = vadd.f32 0.0, %v2785
      %v2787 = vpop.f32.mrf.mxu0
      %v2788 = vpop.f32.mrf.mxu0
      %v2789 = vadd.f32 0.0, %v2788
      %v2790 = vpop.f32.mrf.mxu0
      %2791 = vmatprep.mubr.bf16.mxu0 0
      %2792 = vmatmul.mubr.bf16.gmra.mxu0 %v2737
      %v2793 = vpop.f32.mrf.mxu0
      %v2794 = vadd.f32 0.0, %v2793
      %v2795 = vpop.f32.mrf.mxu0
      %v2796 = vpop.f32.mrf.mxu0
      %v2797 = vadd.f32 0.0, %v2796
      %v2798 = vpop.f32.mrf.mxu0
      %2799 = vmatprep.mubr.bf16.mxu0 0
      %2800 = vmatmul.mubr.bf16.gmra.mxu0 %v2740
      %v2801 = vpop.f32.mrf.mxu0
      %v2802 = vadd.f32 0.0, %v2801
      %v2803 = vpop.f32.mrf.mxu0
      %v2804 = vpop.f32.mrf.mxu0
      %v2805 = vadd.f32 0.0, %v2804
      %v2806 = vpop.f32.mrf.mxu0
      %2807 = vmatprep.mubr.bf16.mxu0 0
      %2808 = vmatmul.mubr.bf16.gmra.mxu0 %v2743
      %v2809 = vpop.f32.mrf.mxu0
      %v2810 = vadd.f32 0.0, %v2809
      %v2811 = vpop.f32.mrf.mxu0
      %v2812 = vpop.f32.mrf.mxu0
      %v2813 = vadd.f32 0.0, %v2812
      %v2814 = vpop.f32.mrf.mxu0
      %2815 = vmatprep.mubr.bf16.mxu0 0
      %2816 = vmatmul.mubr.bf16.gmra.mxu0 %v2746
      %v2817 = vpop.f32.mrf.mxu0
      %v2818 = vadd.f32 0.0, %v2817
      %v2819 = vpop.f32.mrf.mxu0
      %v2820 = vpop.f32.mrf.mxu0
      %v2821 = vadd.f32 0.0, %v2820
      %v2822 = vpop.f32.mrf.mxu0
      %2823 = vdwg.mxu0
      %v2824 = vadd.f32 %v2706, %v2786
      %v2825 = vadd.f32 %v2707, %v2789
      %v2826 = vadd.f32 %v2708, %v2794
      %v2827 = vadd.f32 %v2709, %v2797
      %v2828 = vadd.f32 %v2710, %v2802
      %v2829 = vadd.f32 %v2711, %v2805
      %v2830 = vadd.f32 %v2712, %v2810
      %v2831 = vadd.f32 %v2713, %v2813
      %v2832 = vadd.f32 %v2714, %v2818
      %v2833 = vadd.f32 %v2715, %v2821
      %s2834 = sadd.s32 %s22, 2
      %s2835 = smul.u32 %s2834, 13
      %s2836 = smul.addr %s2835, 4
      %s2837 = scalar_lea.vmem %s248, %s2836
      %v2838 = vld [vmem:[%s2837] sm:$0xf]
      %v2839 = vld [vmem:[%s2837 + $0x4] sm:$0xf]
      %v2840 = vld [vmem:[%s2837 + $0x8] sm:$0xf]
      %v2841 = vld [vmem:[%s2837 + $0xc] sm:$0xf]
      %v2842 = vld [vmem:[%s2837 + $0x10] sm:$0xf]
      %v2843 = vld [vmem:[%s2837 + $0x14] sm:$0xf]
      %v2844 = vld [vmem:[%s2837 + $0x18] sm:$0xf]
      %v2845 = vld [vmem:[%s2837 + $0x1c] sm:$0xf]
      %v2846 = vld [vmem:[%s2837 + $0x20] sm:$0xf]
      %v2847 = vld [vmem:[%s2837 + $0x24] sm:$0xf]
      %s2848 = scalar_lea.vmem %s1, 72
      %v2849 = vld [vmem:[%s2848] sm:$0xf]
      %v2860 = vunpack.c.l.b16 %v2838
      %v2861 = vunpack.c.l.b16 %v2839
      %v2862 = vunpack.c.l.b16 %v2840
      %v2863 = vunpack.c.l.b16 %v2841
      %v2864 = vunpack.c.l.b16 %v2842
      %v2865 = vunpack.c.l.b16 %v2843
      %v2866 = vunpack.c.l.b16 %v2844
      %v2867 = vunpack.c.l.b16 %v2845
      %v2868 = vunpack.c.l.b16 %v2846
      %v2869 = vunpack.c.l.b16 %v2847
      %v2870 = vpack.c.b16 %v2861, %v2860
      %v2871 = vpack.c.b16 %v2863, %v2862
      %v2872 = vpack.c.b16 %v2865, %v2864
      %v2873 = vpack.c.b16 %v2867, %v2866
      %v2874 = vpack.c.b16 %v2869, %v2868
      %v2876 = vsel %vm362, %v2870, 0
      %v2879 = vsel %vm362, %v2871, 0
      %v2882 = vsel %vm362, %v2872, 0
      %v2885 = vsel %vm362, %v2873, 0
      %v2888 = vsel %vm362, %v2874, 0
      %v2891 = vsel %vm378, %v2849, 0
      %2893 = vmatprep.subr.bf16.mxu0 0
      %2894 = vmatpush1.bf16.msra.mxu0 0
      %2895 = vmatprep.subr.bf16.mxu0 0
      %2896 = vmatpush1.bf16.msra.mxu0 0
      %2897 = vmatprep.subr.bf16.mxu0 0
      %2898 = vmatpush1.bf16.msra.mxu0 0
      %2899 = vmatprep.subr.bf16.mxu0 0
      %2900 = vmatpush1.bf16.msra.mxu0 0
      %2901 = vmatprep.subr.bf16.mxu0 0
      %2902 = vmatpush1.bf16.msra.mxu0 0
      %2903 = vmatprep.subr.bf16.mxu0 0
      %2904 = vmatpush1.bf16.msra.mxu0 0
      %2905 = vmatprep.subr.bf16.mxu0 0
      %2906 = vmatpush1.bf16.msra.mxu0 0
      %2907 = vmatprep.subr.bf16.mxu0 0
      %2908 = vmatpush1.bf16.msra.mxu0 %v2891
      %2909 = vmatprep.subr.bf16.mxu0 0
      %2910 = vmatpush2.bf16.msra.mxu0 0
      %2911 = vmatprep.subr.bf16.mxu0 0
      %2912 = vmatpush2.bf16.msra.mxu0 0
      %2913 = vmatprep.subr.bf16.mxu0 0
      %2914 = vmatpush2.bf16.msra.mxu0 0
      %2915 = vmatprep.subr.bf16.mxu0 0
      %2916 = vmatpush2.bf16.msra.mxu0 0
      %2917 = vmatprep.subr.bf16.mxu0 0
      %2918 = vmatpush2.bf16.msra.mxu0 0
      %2919 = vmatprep.subr.bf16.mxu0 0
      %2920 = vmatpush2.bf16.msra.mxu0 0
      %2921 = vmatprep.subr.bf16.mxu0 0
      %2922 = vmatpush2.bf16.msra.mxu0 0
      %2923 = vmatprep.subr.bf16.mxu0 0
      %2924 = vmatpush2.bf16.msra.mxu0 0
      %2925 = vmatprep.mubr.bf16.mxu0 0
      %2926 = vmatmul.mubr.bf16.gmra.mxu0 %v2876
      %v2927 = vpop.f32.mrf.mxu0
      %v2928 = vadd.f32 0.0, %v2927
      %v2929 = vpop.f32.mrf.mxu0
      %v2930 = vpop.f32.mrf.mxu0
      %v2931 = vadd.f32 0.0, %v2930
      %v2932 = vpop.f32.mrf.mxu0
      %2933 = vmatprep.mubr.bf16.mxu0 0
      %2934 = vmatmul.mubr.bf16.gmra.mxu0 %v2879
      %v2935 = vpop.f32.mrf.mxu0
      %v2936 = vadd.f32 0.0, %v2935
      %v2937 = vpop.f32.mrf.mxu0
      %v2938 = vpop.f32.mrf.mxu0
      %v2939 = vadd.f32 0.0, %v2938
      %v2940 = vpop.f32.mrf.mxu0
      %2941 = vmatprep.mubr.bf16.mxu0 0
      %2942 = vmatmul.mubr.bf16.gmra.mxu0 %v2882
      %v2943 = vpop.f32.mrf.mxu0
      %v2944 = vadd.f32 0.0, %v2943
      %v2945 = vpop.f32.mrf.mxu0
      %v2946 = vpop.f32.mrf.mxu0
      %v2947 = vadd.f32 0.0, %v2946
      %v2948 = vpop.f32.mrf.mxu0
      %2949 = vmatprep.mubr.bf16.mxu0 0
      %2950 = vmatmul.mubr.bf16.gmra.mxu0 %v2885
      %v2951 = vpop.f32.mrf.mxu0
      %v2952 = vadd.f32 0.0, %v2951
      %v2953 = vpop.f32.mrf.mxu0
      %v2954 = vpop.f32.mrf.mxu0
      %v2955 = vadd.f32 0.0, %v2954
      %v2956 = vpop.f32.mrf.mxu0
      %2957 = vmatprep.mubr.bf16.mxu0 0
      %2958 = vmatmul.mubr.bf16.gmra.mxu0 %v2888
      %v2959 = vpop.f32.mrf.mxu0
      %v2960 = vadd.f32 0.0, %v2959
      %v2961 = vpop.f32.mrf.mxu0
      %v2962 = vpop.f32.mrf.mxu0
      %v2963 = vadd.f32 0.0, %v2962
      %v2964 = vpop.f32.mrf.mxu0
      %2965 = vdwg.mxu0
      %v2966 = vadd.f32 %v2824, %v2928
      %v2967 = vadd.f32 %v2825, %v2931
      %v2968 = vadd.f32 %v2826, %v2936
      %v2969 = vadd.f32 %v2827, %v2939
      %v2970 = vadd.f32 %v2828, %v2944
      %v2971 = vadd.f32 %v2829, %v2947
      %v2972 = vadd.f32 %v2830, %v2952
      %v2973 = vadd.f32 %v2831, %v2955
      %v2974 = vadd.f32 %v2832, %v2960
      %v2975 = vadd.f32 %v2833, %v2963
      %v2976 = vld [vmem:[%s2837] sm:$0xf]
      %v2977 = vld [vmem:[%s2837 + $0x4] sm:$0xf]
      %v2978 = vld [vmem:[%s2837 + $0x8] sm:$0xf]
      %v2979 = vld [vmem:[%s2837 + $0xc] sm:$0xf]
      %v2980 = vld [vmem:[%s2837 + $0x10] sm:$0xf]
      %v2981 = vld [vmem:[%s2837 + $0x14] sm:$0xf]
      %v2982 = vld [vmem:[%s2837 + $0x18] sm:$0xf]
      %v2983 = vld [vmem:[%s2837 + $0x1c] sm:$0xf]
      %v2984 = vld [vmem:[%s2837 + $0x20] sm:$0xf]
      %v2985 = vld [vmem:[%s2837 + $0x24] sm:$0xf]
      %v2986 = vld [vmem:[%s2837 + $0x28] sm:$0x1]
      %s2987 = scalar_lea.vmem %s1, 76
      %v2988 = vld [vmem:[%s2987] sm:$0xf]
      %v3000 = vunpack.c.l.b16 %v2976
      %v3001 = vunpack.c.l.b16 %v2977
      %v3002 = vunpack.c.l.b16 %v2978
      %v3003 = vunpack.c.l.b16 %v2979
      %v3004 = vunpack.c.l.b16 %v2980
      %v3005 = vunpack.c.l.b16 %v2981
      %v3006 = vunpack.c.l.b16 %v2982
      %v3007 = vunpack.c.l.b16 %v2983
      %v3008 = vunpack.c.l.b16 %v2984
      %v3009 = vunpack.c.l.b16 %v2985
      %v3010 = vunpack.c.l.b16 %v2986
      %v3011 = vpack.c.b16 %v3001, %v3000
      %v3012 = vpack.c.b16 %v3003, %v3002
      %v3013 = vpack.c.b16 %v3005, %v3004
      %v3014 = vpack.c.b16 %v3007, %v3006
      %v3015 = vpack.c.b16 %v3009, %v3008
      %v3016 = vpack.c.b16 %v3010, %v3010
      %v3018 = vshrl.u32 %v3011, 16
      %v3020 = vshll.u32 %v3011, 16
      %v3022 = vrot.slane %v3020, 1
      %v3023 = vor.u32 %v3018, %v3022
      %v3025 = vshll.u32 %v3012, 16
      %v3027 = vrot.slane %v3025, 1
      %v3028 = vsel %vm317, %v3023, %v3027
      %v3029 = vshrl.u32 %v3012, 16
      %v3031 = vor.u32 %v3029, %v3027
      %v3033 = vshll.u32 %v3013, 16
      %v3035 = vrot.slane %v3033, 1
      %v3036 = vsel %vm317, %v3031, %v3035
      %v3037 = vshrl.u32 %v3013, 16
      %v3039 = vor.u32 %v3037, %v3035
      %v3041 = vshll.u32 %v3014, 16
      %v3043 = vrot.slane %v3041, 1
      %v3044 = vsel %vm317, %v3039, %v3043
      %v3045 = vshrl.u32 %v3014, 16
      %v3047 = vor.u32 %v3045, %v3043
      %v3049 = vshll.u32 %v3015, 16
      %v3051 = vrot.slane %v3049, 1
      %v3052 = vsel %vm317, %v3047, %v3051
      %v3053 = vshrl.u32 %v3015, 16
      %v3055 = vor.u32 %v3053, %v3051
      %v3057 = vshll.u32 %v3016, 16
      %v3059 = vrot.slane %v3057, 1
      %v3060 = vsel %vm317, %v3055, %v3059
      %v3062 = vsel %vm362, %v3028, 0
      %v3065 = vsel %vm362, %v3036, 0
      %v3068 = vsel %vm362, %v3044, 0
      %v3071 = vsel %vm362, %v3052, 0
      %v3074 = vsel %vm362, %v3060, 0
      %v3077 = vsel %vm378, %v2988, 0
      %3079 = vmatprep.subr.bf16.mxu0 0
      %3080 = vmatpush1.bf16.msra.mxu0 0
      %3081 = vmatprep.subr.bf16.mxu0 0
      %3082 = vmatpush1.bf16.msra.mxu0 0
      %3083 = vmatprep.subr.bf16.mxu0 0
      %3084 = vmatpush1.bf16.msra.mxu0 0
      %3085 = vmatprep.subr.bf16.mxu0 0
      %3086 = vmatpush1.bf16.msra.mxu0 0
      %3087 = vmatprep.subr.bf16.mxu0 0
      %3088 = vmatpush1.bf16.msra.mxu0 0
      %3089 = vmatprep.subr.bf16.mxu0 0
      %3090 = vmatpush1.bf16.msra.mxu0 0
      %3091 = vmatprep.subr.bf16.mxu0 0
      %3092 = vmatpush1.bf16.msra.mxu0 0
      %3093 = vmatprep.subr.bf16.mxu0 0
      %3094 = vmatpush1.bf16.msra.mxu0 %v3077
      %3095 = vmatprep.subr.bf16.mxu0 0
      %3096 = vmatpush2.bf16.msra.mxu0 0
      %3097 = vmatprep.subr.bf16.mxu0 0
      %3098 = vmatpush2.bf16.msra.mxu0 0
      %3099 = vmatprep.subr.bf16.mxu0 0
      %3100 = vmatpush2.bf16.msra.mxu0 0
      %3101 = vmatprep.subr.bf16.mxu0 0
      %3102 = vmatpush2.bf16.msra.mxu0 0
      %3103 = vmatprep.subr.bf16.mxu0 0
      %3104 = vmatpush2.bf16.msra.mxu0 0
      %3105 = vmatprep.subr.bf16.mxu0 0
      %3106 = vmatpush2.bf16.msra.mxu0 0
      %3107 = vmatprep.subr.bf16.mxu0 0
      %3108 = vmatpush2.bf16.msra.mxu0 0
      %3109 = vmatprep.subr.bf16.mxu0 0
      %3110 = vmatpush2.bf16.msra.mxu0 0
      %3111 = vmatprep.mubr.bf16.mxu0 0
      %3112 = vmatmul.mubr.bf16.gmra.mxu0 %v3062
      %v3113 = vpop.f32.mrf.mxu0
      %v3114 = vadd.f32 0.0, %v3113
      %v3115 = vpop.f32.mrf.mxu0
      %v3116 = vpop.f32.mrf.mxu0
      %v3117 = vadd.f32 0.0, %v3116
      %v3118 = vpop.f32.mrf.mxu0
      %3119 = vmatprep.mubr.bf16.mxu0 0
      %3120 = vmatmul.mubr.bf16.gmra.mxu0 %v3065
      %v3121 = vpop.f32.mrf.mxu0
      %v3122 = vadd.f32 0.0, %v3121
      %v3123 = vpop.f32.mrf.mxu0
      %v3124 = vpop.f32.mrf.mxu0
      %v3125 = vadd.f32 0.0, %v3124
      %v3126 = vpop.f32.mrf.mxu0
      %3127 = vmatprep.mubr.bf16.mxu0 0
      %3128 = vmatmul.mubr.bf16.gmra.mxu0 %v3068
      %v3129 = vpop.f32.mrf.mxu0
      %v3130 = vadd.f32 0.0, %v3129
      %v3131 = vpop.f32.mrf.mxu0
      %v3132 = vpop.f32.mrf.mxu0
      %v3133 = vadd.f32 0.0, %v3132
      %v3134 = vpop.f32.mrf.mxu0
      %3135 = vmatprep.mubr.bf16.mxu0 0
      %3136 = vmatmul.mubr.bf16.gmra.mxu0 %v3071
      %v3137 = vpop.f32.mrf.mxu0
      %v3138 = vadd.f32 0.0, %v3137
      %v3139 = vpop.f32.mrf.mxu0
      %v3140 = vpop.f32.mrf.mxu0
      %v3141 = vadd.f32 0.0, %v3140
      %v3142 = vpop.f32.mrf.mxu0
      %3143 = vmatprep.mubr.bf16.mxu0 0
      %3144 = vmatmul.mubr.bf16.gmra.mxu0 %v3074
      %v3145 = vpop.f32.mrf.mxu0
      %v3146 = vadd.f32 0.0, %v3145
      %v3147 = vpop.f32.mrf.mxu0
      %v3148 = vpop.f32.mrf.mxu0
      %v3149 = vadd.f32 0.0, %v3148
      %v3150 = vpop.f32.mrf.mxu0
      %3151 = vdwg.mxu0
      %v3152 = vadd.f32 %v2966, %v3114
      %v3153 = vadd.f32 %v2967, %v3117
      %v3154 = vadd.f32 %v2968, %v3122
      %v3155 = vadd.f32 %v2969, %v3125
      %v3156 = vadd.f32 %v2970, %v3130
      %v3157 = vadd.f32 %v2971, %v3133
      %v3158 = vadd.f32 %v2972, %v3138
      %v3159 = vadd.f32 %v2973, %v3141
      %v3160 = vadd.f32 %v2974, %v3146
      %v3161 = vadd.f32 %v2975, %v3149
      %v3162 = vld [vmem:[%s2837] sm:$0xe]
      %s3163 = scalar_lea.vmem %s1, 80
      %v3164 = vld [vmem:[%s3163] sm:$0xf]
      %v3166 = vunpack.c.l.b16 %v3162
      %v3167 = vpack.c.b16 %v3001, %v3166
      %v3168 = vrot.slane %v3167, 1
      %v3169 = vrot.slane %v3012, 1
      %v3170 = vsel %vm547, %v3168, %v3169
      %v3171 = vrot.slane %v3013, 1
      %v3172 = vsel %vm547, %v3169, %v3171
      %v3173 = vrot.slane %v3014, 1
      %v3174 = vsel %vm547, %v3171, %v3173
      %v3175 = vrot.slane %v3015, 1
      %v3176 = vsel %vm547, %v3173, %v3175
      %v3177 = vrot.slane %v3016, 1
      %v3178 = vsel %vm547, %v3175, %v3177
      %v3180 = vsel %vm362, %v3170, 0
      %v3183 = vsel %vm362, %v3172, 0
      %v3186 = vsel %vm362, %v3174, 0
      %v3189 = vsel %vm362, %v3176, 0
      %v3192 = vsel %vm362, %v3178, 0
      %v3195 = vsel %vm378, %v3164, 0
      %3197 = vmatprep.subr.bf16.mxu0 0
      %3198 = vmatpush1.bf16.msra.mxu0 0
      %3199 = vmatprep.subr.bf16.mxu0 0
      %3200 = vmatpush1.bf16.msra.mxu0 0
      %3201 = vmatprep.subr.bf16.mxu0 0
      %3202 = vmatpush1.bf16.msra.mxu0 0
      %3203 = vmatprep.subr.bf16.mxu0 0
      %3204 = vmatpush1.bf16.msra.mxu0 0
      %3205 = vmatprep.subr.bf16.mxu0 0
      %3206 = vmatpush1.bf16.msra.mxu0 0
      %3207 = vmatprep.subr.bf16.mxu0 0
      %3208 = vmatpush1.bf16.msra.mxu0 0
      %3209 = vmatprep.subr.bf16.mxu0 0
      %3210 = vmatpush1.bf16.msra.mxu0 0
      %3211 = vmatprep.subr.bf16.mxu0 0
      %3212 = vmatpush1.bf16.msra.mxu0 %v3195
      %3213 = vmatprep.subr.bf16.mxu0 0
      %3214 = vmatpush2.bf16.msra.mxu0 0
      %3215 = vmatprep.subr.bf16.mxu0 0
      %3216 = vmatpush2.bf16.msra.mxu0 0
      %3217 = vmatprep.subr.bf16.mxu0 0
      %3218 = vmatpush2.bf16.msra.mxu0 0
      %3219 = vmatprep.subr.bf16.mxu0 0
      %3220 = vmatpush2.bf16.msra.mxu0 0
      %3221 = vmatprep.subr.bf16.mxu0 0
      %3222 = vmatpush2.bf16.msra.mxu0 0
      %3223 = vmatprep.subr.bf16.mxu0 0
      %3224 = vmatpush2.bf16.msra.mxu0 0
      %3225 = vmatprep.subr.bf16.mxu0 0
      %3226 = vmatpush2.bf16.msra.mxu0 0
      %3227 = vmatprep.subr.bf16.mxu0 0
      %3228 = vmatpush2.bf16.msra.mxu0 0
      %3229 = vmatprep.mubr.bf16.mxu0 0
      %3230 = vmatmul.mubr.bf16.gmra.mxu0 %v3180
      %v3231 = vpop.f32.mrf.mxu0
      %v3232 = vadd.f32 0.0, %v3231
      %v3233 = vpop.f32.mrf.mxu0
      %v3234 = vpop.f32.mrf.mxu0
      %v3235 = vadd.f32 0.0, %v3234
      %v3236 = vpop.f32.mrf.mxu0
      %3237 = vmatprep.mubr.bf16.mxu0 0
      %3238 = vmatmul.mubr.bf16.gmra.mxu0 %v3183
      %v3239 = vpop.f32.mrf.mxu0
      %v3240 = vadd.f32 0.0, %v3239
      %v3241 = vpop.f32.mrf.mxu0
      %v3242 = vpop.f32.mrf.mxu0
      %v3243 = vadd.f32 0.0, %v3242
      %v3244 = vpop.f32.mrf.mxu0
      %3245 = vmatprep.mubr.bf16.mxu0 0
      %3246 = vmatmul.mubr.bf16.gmra.mxu0 %v3186
      %v3247 = vpop.f32.mrf.mxu0
      %v3248 = vadd.f32 0.0, %v3247
      %v3249 = vpop.f32.mrf.mxu0
      %v3250 = vpop.f32.mrf.mxu0
      %v3251 = vadd.f32 0.0, %v3250
      %v3252 = vpop.f32.mrf.mxu0
      %3253 = vmatprep.mubr.bf16.mxu0 0
      %3254 = vmatmul.mubr.bf16.gmra.mxu0 %v3189
      %v3255 = vpop.f32.mrf.mxu0
      %v3256 = vadd.f32 0.0, %v3255
      %v3257 = vpop.f32.mrf.mxu0
      %v3258 = vpop.f32.mrf.mxu0
      %v3259 = vadd.f32 0.0, %v3258
      %v3260 = vpop.f32.mrf.mxu0
      %3261 = vmatprep.mubr.bf16.mxu0 0
      %3262 = vmatmul.mubr.bf16.gmra.mxu0 %v3192
      %v3263 = vpop.f32.mrf.mxu0
      %v3264 = vadd.f32 0.0, %v3263
      %v3265 = vpop.f32.mrf.mxu0
      %v3266 = vpop.f32.mrf.mxu0
      %v3267 = vadd.f32 0.0, %v3266
      %v3268 = vpop.f32.mrf.mxu0
      %3269 = vdwg.mxu0
      %v3270 = vadd.f32 %v3152, %v3232
      %v3271 = vadd.f32 %v3153, %v3235
      %v3272 = vadd.f32 %v3154, %v3240
      %v3273 = vadd.f32 %v3155, %v3243
      %v3274 = vadd.f32 %v3156, %v3248
      %v3275 = vadd.f32 %v3157, %v3251
      %v3276 = vadd.f32 %v3158, %v3256
      %v3277 = vadd.f32 %v3159, %v3259
      %v3278 = vadd.f32 %v3160, %v3264
      %v3279 = vadd.f32 %v3161, %v3267
      %v3280 = vld [vmem:[%s2837 + $0x4] sm:$0xe]
      %v3281 = vld [vmem:[%s2837 + $0x8] sm:$0xf]
      %v3282 = vld [vmem:[%s2837 + $0xc] sm:$0xf]
      %v3283 = vld [vmem:[%s2837 + $0x10] sm:$0xf]
      %v3284 = vld [vmem:[%s2837 + $0x14] sm:$0xf]
      %v3285 = vld [vmem:[%s2837 + $0x18] sm:$0xf]
      %v3286 = vld [vmem:[%s2837 + $0x1c] sm:$0xf]
      %v3287 = vld [vmem:[%s2837 + $0x20] sm:$0xf]
      %v3288 = vld [vmem:[%s2837 + $0x24] sm:$0xf]
      %v3289 = vld [vmem:[%s2837 + $0x28] sm:$0xf]
      %v3290 = vld [vmem:[%s2837 + $0x2c] sm:$0x1]
      %s3291 = scalar_lea.vmem %s1, 84
      %v3292 = vld [vmem:[%s3291] sm:$0xf]
      %v3304 = vunpack.c.l.b16 %v3280
      %v3305 = vunpack.c.l.b16 %v3281
      %v3306 = vunpack.c.l.b16 %v3282
      %v3307 = vunpack.c.l.b16 %v3283
      %v3308 = vunpack.c.l.b16 %v3284
      %v3309 = vunpack.c.l.b16 %v3285
      %v3310 = vunpack.c.l.b16 %v3286
      %v3311 = vunpack.c.l.b16 %v3287
      %v3312 = vunpack.c.l.b16 %v3288
      %v3313 = vunpack.c.l.b16 %v3289
      %v3314 = vunpack.c.l.b16 %v3290
      %v3315 = vpack.c.b16 %v3305, %v3304
      %v3316 = vpack.c.b16 %v3307, %v3306
      %v3317 = vpack.c.b16 %v3309, %v3308
      %v3318 = vpack.c.b16 %v3311, %v3310
      %v3319 = vpack.c.b16 %v3313, %v3312
      %v3320 = vpack.c.b16 %v3314, %v3314
      %v3321 = vrot.slane %v3315, 1
      %v3322 = vrot.slane %v3316, 1
      %v3323 = vsel %vm547, %v3321, %v3322
      %v3324 = vrot.slane %v3317, 1
      %v3325 = vsel %vm547, %v3322, %v3324
      %v3326 = vrot.slane %v3318, 1
      %v3327 = vsel %vm547, %v3324, %v3326
      %v3328 = vrot.slane %v3319, 1
      %v3329 = vsel %vm547, %v3326, %v3328
      %v3330 = vrot.slane %v3320, 1
      %v3331 = vsel %vm547, %v3328, %v3330
      %v3333 = vsel %vm362, %v3323, 0
      %v3336 = vsel %vm362, %v3325, 0
      %v3339 = vsel %vm362, %v3327, 0
      %v3342 = vsel %vm362, %v3329, 0
      %v3345 = vsel %vm362, %v3331, 0
      %v3348 = vsel %vm378, %v3292, 0
      %3350 = vmatprep.subr.bf16.mxu0 0
      %3351 = vmatpush1.bf16.msra.mxu0 0
      %3352 = vmatprep.subr.bf16.mxu0 0
      %3353 = vmatpush1.bf16.msra.mxu0 0
      %3354 = vmatprep.subr.bf16.mxu0 0
      %3355 = vmatpush1.bf16.msra.mxu0 0
      %3356 = vmatprep.subr.bf16.mxu0 0
      %3357 = vmatpush1.bf16.msra.mxu0 0
      %3358 = vmatprep.subr.bf16.mxu0 0
      %3359 = vmatpush1.bf16.msra.mxu0 0
      %3360 = vmatprep.subr.bf16.mxu0 0
      %3361 = vmatpush1.bf16.msra.mxu0 0
      %3362 = vmatprep.subr.bf16.mxu0 0
      %3363 = vmatpush1.bf16.msra.mxu0 0
      %3364 = vmatprep.subr.bf16.mxu0 0
      %3365 = vmatpush1.bf16.msra.mxu0 %v3348
      %3366 = vmatprep.subr.bf16.mxu0 0
      %3367 = vmatpush2.bf16.msra.mxu0 0
      %3368 = vmatprep.subr.bf16.mxu0 0
      %3369 = vmatpush2.bf16.msra.mxu0 0
      %3370 = vmatprep.subr.bf16.mxu0 0
      %3371 = vmatpush2.bf16.msra.mxu0 0
      %3372 = vmatprep.subr.bf16.mxu0 0
      %3373 = vmatpush2.bf16.msra.mxu0 0
      %3374 = vmatprep.subr.bf16.mxu0 0
      %3375 = vmatpush2.bf16.msra.mxu0 0
      %3376 = vmatprep.subr.bf16.mxu0 0
      %3377 = vmatpush2.bf16.msra.mxu0 0
      %3378 = vmatprep.subr.bf16.mxu0 0
      %3379 = vmatpush2.bf16.msra.mxu0 0
      %3380 = vmatprep.subr.bf16.mxu0 0
      %3381 = vmatpush2.bf16.msra.mxu0 0
      %3382 = vmatprep.mubr.bf16.mxu0 0
      %3383 = vmatmul.mubr.bf16.gmra.mxu0 %v3333
      %v3384 = vpop.f32.mrf.mxu0
      %v3385 = vadd.f32 0.0, %v3384
      %v3386 = vpop.f32.mrf.mxu0
      %v3387 = vpop.f32.mrf.mxu0
      %v3388 = vadd.f32 0.0, %v3387
      %v3389 = vpop.f32.mrf.mxu0
      %3390 = vmatprep.mubr.bf16.mxu0 0
      %3391 = vmatmul.mubr.bf16.gmra.mxu0 %v3336
      %v3392 = vpop.f32.mrf.mxu0
      %v3393 = vadd.f32 0.0, %v3392
      %v3394 = vpop.f32.mrf.mxu0
      %v3395 = vpop.f32.mrf.mxu0
      %v3396 = vadd.f32 0.0, %v3395
      %v3397 = vpop.f32.mrf.mxu0
      %3398 = vmatprep.mubr.bf16.mxu0 0
      %3399 = vmatmul.mubr.bf16.gmra.mxu0 %v3339
      %v3400 = vpop.f32.mrf.mxu0
      %v3401 = vadd.f32 0.0, %v3400
      %v3402 = vpop.f32.mrf.mxu0
      %v3403 = vpop.f32.mrf.mxu0
      %v3404 = vadd.f32 0.0, %v3403
      %v3405 = vpop.f32.mrf.mxu0
      %3406 = vmatprep.mubr.bf16.mxu0 0
      %3407 = vmatmul.mubr.bf16.gmra.mxu0 %v3342
      %v3408 = vpop.f32.mrf.mxu0
      %v3409 = vadd.f32 0.0, %v3408
      %v3410 = vpop.f32.mrf.mxu0
      %v3411 = vpop.f32.mrf.mxu0
      %v3412 = vadd.f32 0.0, %v3411
      %v3413 = vpop.f32.mrf.mxu0
      %3414 = vmatprep.mubr.bf16.mxu0 0
      %3415 = vmatmul.mubr.bf16.gmra.mxu0 %v3345
      %v3416 = vpop.f32.mrf.mxu0
      %v3417 = vadd.f32 0.0, %v3416
      %v3418 = vpop.f32.mrf.mxu0
      %v3419 = vpop.f32.mrf.mxu0
      %v3420 = vadd.f32 0.0, %v3419
      %v3421 = vpop.f32.mrf.mxu0
      %3422 = vdwg.mxu0
      %v3423 = vadd.f32 %v3270, %v3385
      %v3424 = vadd.f32 %v3271, %v3388
      %v3425 = vadd.f32 %v3272, %v3393
      %v3426 = vadd.f32 %v3273, %v3396
      %v3427 = vadd.f32 %v3274, %v3401
      %v3428 = vadd.f32 %v3275, %v3404
      %v3429 = vadd.f32 %v3276, %v3409
      %v3430 = vadd.f32 %v3277, %v3412
      %v3431 = vadd.f32 %v3278, %v3417
      %v3432 = vadd.f32 %v3279, %v3420
      %v3433 = vld [vmem:[%s2837 + $0x2c] sm:$0x3]
      %s3434 = scalar_lea.vmem %s1, 88
      %v3435 = vld [vmem:[%s3434] sm:$0xf]
      %v3437 = vunpack.c.l.b16 %v3433
      %v3438 = vpack.c.b16 %v3437, %v3437
      %v3440 = vshrl.u32 %v3315, 16
      %v3442 = vrot.slane %v3440, 1
      %v3443 = vshll.u32 %v3315, 16
      %v3445 = vrot.slane %v3443, 2
      %v3446 = vor.u32 %v3442, %v3445
      %v3448 = vshrl.u32 %v3316, 16
      %v3450 = vrot.slane %v3448, 1
      %v3451 = vshll.u32 %v3316, 16
      %v3453 = vrot.slane %v3451, 2
      %v3454 = vor.u32 %v3450, %v3453
      %v3455 = vsel %vm819, %v3446, %v3454
      %v3457 = vshrl.u32 %v3317, 16
      %v3459 = vrot.slane %v3457, 1
      %v3460 = vshll.u32 %v3317, 16
      %v3462 = vrot.slane %v3460, 2
      %v3463 = vor.u32 %v3459, %v3462
      %v3464 = vsel %vm819, %v3454, %v3463
      %v3466 = vshrl.u32 %v3318, 16
      %v3468 = vrot.slane %v3466, 1
      %v3469 = vshll.u32 %v3318, 16
      %v3471 = vrot.slane %v3469, 2
      %v3472 = vor.u32 %v3468, %v3471
      %v3473 = vsel %vm819, %v3463, %v3472
      %v3475 = vshrl.u32 %v3319, 16
      %v3477 = vrot.slane %v3475, 1
      %v3478 = vshll.u32 %v3319, 16
      %v3480 = vrot.slane %v3478, 2
      %v3481 = vor.u32 %v3477, %v3480
      %v3482 = vsel %vm819, %v3472, %v3481
      %v3484 = vshrl.u32 %v3438, 16
      %v3486 = vrot.slane %v3484, 1
      %v3487 = vshll.u32 %v3438, 16
      %v3489 = vrot.slane %v3487, 2
      %v3490 = vor.u32 %v3486, %v3489
      %v3491 = vsel %vm819, %v3481, %v3490
      %v3493 = vsel %vm362, %v3455, 0
      %v3496 = vsel %vm362, %v3464, 0
      %v3499 = vsel %vm362, %v3473, 0
      %v3502 = vsel %vm362, %v3482, 0
      %v3505 = vsel %vm362, %v3491, 0
      %v3508 = vsel %vm378, %v3435, 0
      %3510 = vmatprep.subr.bf16.mxu0 0
      %3511 = vmatpush1.bf16.msra.mxu0 0
      %3512 = vmatprep.subr.bf16.mxu0 0
      %3513 = vmatpush1.bf16.msra.mxu0 0
      %3514 = vmatprep.subr.bf16.mxu0 0
      %3515 = vmatpush1.bf16.msra.mxu0 0
      %3516 = vmatprep.subr.bf16.mxu0 0
      %3517 = vmatpush1.bf16.msra.mxu0 0
      %3518 = vmatprep.subr.bf16.mxu0 0
      %3519 = vmatpush1.bf16.msra.mxu0 0
      %3520 = vmatprep.subr.bf16.mxu0 0
      %3521 = vmatpush1.bf16.msra.mxu0 0
      %3522 = vmatprep.subr.bf16.mxu0 0
      %3523 = vmatpush1.bf16.msra.mxu0 0
      %3524 = vmatprep.subr.bf16.mxu0 0
      %3525 = vmatpush1.bf16.msra.mxu0 %v3508
      %3526 = vmatprep.subr.bf16.mxu0 0
      %3527 = vmatpush2.bf16.msra.mxu0 0
      %3528 = vmatprep.subr.bf16.mxu0 0
      %3529 = vmatpush2.bf16.msra.mxu0 0
      %3530 = vmatprep.subr.bf16.mxu0 0
      %3531 = vmatpush2.bf16.msra.mxu0 0
      %3532 = vmatprep.subr.bf16.mxu0 0
      %3533 = vmatpush2.bf16.msra.mxu0 0
      %3534 = vmatprep.subr.bf16.mxu0 0
      %3535 = vmatpush2.bf16.msra.mxu0 0
      %3536 = vmatprep.subr.bf16.mxu0 0
      %3537 = vmatpush2.bf16.msra.mxu0 0
      %3538 = vmatprep.subr.bf16.mxu0 0
      %3539 = vmatpush2.bf16.msra.mxu0 0
      %3540 = vmatprep.subr.bf16.mxu0 0
      %3541 = vmatpush2.bf16.msra.mxu0 0
      %3542 = vmatprep.mubr.bf16.mxu0 0
      %3543 = vmatmul.mubr.bf16.gmra.mxu0 %v3493
      %v3544 = vpop.f32.mrf.mxu0
      %v3545 = vadd.f32 0.0, %v3544
      %v3546 = vpop.f32.mrf.mxu0
      %v3547 = vpop.f32.mrf.mxu0
      %v3548 = vadd.f32 0.0, %v3547
      %v3549 = vpop.f32.mrf.mxu0
      %3550 = vmatprep.mubr.bf16.mxu0 0
      %3551 = vmatmul.mubr.bf16.gmra.mxu0 %v3496
      %v3552 = vpop.f32.mrf.mxu0
      %v3553 = vadd.f32 0.0, %v3552
      %v3554 = vpop.f32.mrf.mxu0
      %v3555 = vpop.f32.mrf.mxu0
      %v3556 = vadd.f32 0.0, %v3555
      %v3557 = vpop.f32.mrf.mxu0
      %3558 = vmatprep.mubr.bf16.mxu0 0
      %3559 = vmatmul.mubr.bf16.gmra.mxu0 %v3499
      %v3560 = vpop.f32.mrf.mxu0
      %v3561 = vadd.f32 0.0, %v3560
      %v3562 = vpop.f32.mrf.mxu0
      %v3563 = vpop.f32.mrf.mxu0
      %v3564 = vadd.f32 0.0, %v3563
      %v3565 = vpop.f32.mrf.mxu0
      %3566 = vmatprep.mubr.bf16.mxu0 0
      %3567 = vmatmul.mubr.bf16.gmra.mxu0 %v3502
      %v3568 = vpop.f32.mrf.mxu0
      %v3569 = vadd.f32 0.0, %v3568
      %v3570 = vpop.f32.mrf.mxu0
      %v3571 = vpop.f32.mrf.mxu0
      %v3572 = vadd.f32 0.0, %v3571
      %v3573 = vpop.f32.mrf.mxu0
      %3574 = vmatprep.mubr.bf16.mxu0 0
      %3575 = vmatmul.mubr.bf16.gmra.mxu0 %v3505
      %v3576 = vpop.f32.mrf.mxu0
      %v3577 = vadd.f32 0.0, %v3576
      %v3578 = vpop.f32.mrf.mxu0
      %v3579 = vpop.f32.mrf.mxu0
      %v3580 = vadd.f32 0.0, %v3579
      %v3581 = vpop.f32.mrf.mxu0
      %3582 = vdwg.mxu0
      %v3583 = vadd.f32 %v3423, %v3545
      %v3584 = vadd.f32 %v3424, %v3548
      %v3585 = vadd.f32 %v3425, %v3553
      %v3586 = vadd.f32 %v3426, %v3556
      %v3587 = vadd.f32 %v3427, %v3561
      %v3588 = vadd.f32 %v3428, %v3564
      %v3589 = vadd.f32 %v3429, %v3569
      %v3590 = vadd.f32 %v3430, %v3572
      %v3591 = vadd.f32 %v3431, %v3577
      %v3592 = vadd.f32 %v3432, %v3580
      %v3593 = vld [vmem:[%s2837 + $0x4] sm:$0xc]
      %s3594 = scalar_lea.vmem %s1, 92
      %v3595 = vld [vmem:[%s3594] sm:$0xf]
      %v3597 = vunpack.c.l.b16 %v3593
      %v3598 = vpack.c.b16 %v3305, %v3597
      %v3599 = vrot.slane %v3598, 2
      %v3600 = vrot.slane %v3316, 2
      %v3601 = vsel %vm980, %v3599, %v3600
      %v3602 = vrot.slane %v3317, 2
      %v3603 = vsel %vm980, %v3600, %v3602
      %v3604 = vrot.slane %v3318, 2
      %v3605 = vsel %vm980, %v3602, %v3604
      %v3606 = vrot.slane %v3319, 2
      %v3607 = vsel %vm980, %v3604, %v3606
      %v3608 = vrot.slane %v3438, 2
      %v3609 = vsel %vm980, %v3606, %v3608
      %v3611 = vsel %vm362, %v3601, 0
      %v3614 = vsel %vm362, %v3603, 0
      %v3617 = vsel %vm362, %v3605, 0
      %v3620 = vsel %vm362, %v3607, 0
      %v3623 = vsel %vm362, %v3609, 0
      %v3626 = vsel %vm378, %v3595, 0
      %3628 = vmatprep.subr.bf16.mxu0 0
      %3629 = vmatpush1.bf16.msra.mxu0 0
      %3630 = vmatprep.subr.bf16.mxu0 0
      %3631 = vmatpush1.bf16.msra.mxu0 0
      %3632 = vmatprep.subr.bf16.mxu0 0
      %3633 = vmatpush1.bf16.msra.mxu0 0
      %3634 = vmatprep.subr.bf16.mxu0 0
      %3635 = vmatpush1.bf16.msra.mxu0 0
      %3636 = vmatprep.subr.bf16.mxu0 0
      %3637 = vmatpush1.bf16.msra.mxu0 0
      %3638 = vmatprep.subr.bf16.mxu0 0
      %3639 = vmatpush1.bf16.msra.mxu0 0
      %3640 = vmatprep.subr.bf16.mxu0 0
      %3641 = vmatpush1.bf16.msra.mxu0 0
      %3642 = vmatprep.subr.bf16.mxu0 0
      %3643 = vmatpush1.bf16.msra.mxu0 %v3626
      %3644 = vmatprep.subr.bf16.mxu0 0
      %3645 = vmatpush2.bf16.msra.mxu0 0
      %3646 = vmatprep.subr.bf16.mxu0 0
      %3647 = vmatpush2.bf16.msra.mxu0 0
      %3648 = vmatprep.subr.bf16.mxu0 0
      %3649 = vmatpush2.bf16.msra.mxu0 0
      %3650 = vmatprep.subr.bf16.mxu0 0
      %3651 = vmatpush2.bf16.msra.mxu0 0
      %3652 = vmatprep.subr.bf16.mxu0 0
      %3653 = vmatpush2.bf16.msra.mxu0 0
      %3654 = vmatprep.subr.bf16.mxu0 0
      %3655 = vmatpush2.bf16.msra.mxu0 0
      %3656 = vmatprep.subr.bf16.mxu0 0
      %3657 = vmatpush2.bf16.msra.mxu0 0
      %3658 = vmatprep.subr.bf16.mxu0 0
      %3659 = vmatpush2.bf16.msra.mxu0 0
      %3660 = vmatprep.mubr.bf16.mxu0 0
      %3661 = vmatmul.mubr.bf16.gmra.mxu0 %v3611
      %v3662 = vpop.f32.mrf.mxu0
      %v3663 = vadd.f32 0.0, %v3662
      %v3664 = vpop.f32.mrf.mxu0
      %v3665 = vpop.f32.mrf.mxu0
      %v3666 = vadd.f32 0.0, %v3665
      %v3667 = vpop.f32.mrf.mxu0
      %3668 = vmatprep.mubr.bf16.mxu0 0
      %3669 = vmatmul.mubr.bf16.gmra.mxu0 %v3614
      %v3670 = vpop.f32.mrf.mxu0
      %v3671 = vadd.f32 0.0, %v3670
      %v3672 = vpop.f32.mrf.mxu0
      %v3673 = vpop.f32.mrf.mxu0
      %v3674 = vadd.f32 0.0, %v3673
      %v3675 = vpop.f32.mrf.mxu0
      %3676 = vmatprep.mubr.bf16.mxu0 0
      %3677 = vmatmul.mubr.bf16.gmra.mxu0 %v3617
      %v3678 = vpop.f32.mrf.mxu0
      %v3679 = vadd.f32 0.0, %v3678
      %v3680 = vpop.f32.mrf.mxu0
      %v3681 = vpop.f32.mrf.mxu0
      %v3682 = vadd.f32 0.0, %v3681
      %v3683 = vpop.f32.mrf.mxu0
      %3684 = vmatprep.mubr.bf16.mxu0 0
      %3685 = vmatmul.mubr.bf16.gmra.mxu0 %v3620
      %v3686 = vpop.f32.mrf.mxu0
      %v3687 = vadd.f32 0.0, %v3686
      %v3688 = vpop.f32.mrf.mxu0
      %v3689 = vpop.f32.mrf.mxu0
      %v3690 = vadd.f32 0.0, %v3689
      %v3691 = vpop.f32.mrf.mxu0
      %3692 = vmatprep.mubr.bf16.mxu0 0
      %3693 = vmatmul.mubr.bf16.gmra.mxu0 %v3623
      %v3694 = vpop.f32.mrf.mxu0
      %v3695 = vadd.f32 0.0, %v3694
      %v3696 = vpop.f32.mrf.mxu0
      %v3697 = vpop.f32.mrf.mxu0
      %v3698 = vadd.f32 0.0, %v3697
      %v3699 = vpop.f32.mrf.mxu0
      %3700 = vdwg.mxu0
      %v3701 = vadd.f32 %v3583, %v3663
      %v3702 = vadd.f32 %v3584, %v3666
      %v3703 = vadd.f32 %v3585, %v3671
      %v3704 = vadd.f32 %v3586, %v3674
      %v3705 = vadd.f32 %v3587, %v3679
      %v3706 = vadd.f32 %v3588, %v3682
      %v3707 = vadd.f32 %v3589, %v3687
      %v3708 = vadd.f32 %v3590, %v3690
      %v3709 = vadd.f32 %v3591, %v3695
      %v3710 = vadd.f32 %v3592, %v3698
      %v3711 = vld [vmem:[%s2837 + $0x8] sm:$0xc]
      %v3712 = vld [vmem:[%s2837 + $0xc] sm:$0xf]
      %v3713 = vld [vmem:[%s2837 + $0x10] sm:$0xf]
      %v3714 = vld [vmem:[%s2837 + $0x14] sm:$0xf]
      %v3715 = vld [vmem:[%s2837 + $0x18] sm:$0xf]
      %v3716 = vld [vmem:[%s2837 + $0x1c] sm:$0xf]
      %v3717 = vld [vmem:[%s2837 + $0x20] sm:$0xf]
      %v3718 = vld [vmem:[%s2837 + $0x24] sm:$0xf]
      %v3719 = vld [vmem:[%s2837 + $0x28] sm:$0xf]
      %v3720 = vld [vmem:[%s2837 + $0x2c] sm:$0xf]
      %v3721 = vld [vmem:[%s2837 + $0x30] sm:$0x3]
      %s3722 = scalar_lea.vmem %s1, 96
      %v3723 = vld [vmem:[%s3722] sm:$0xf]
      %v3735 = vunpack.c.l.b16 %v3711
      %v3736 = vunpack.c.l.b16 %v3712
      %v3737 = vunpack.c.l.b16 %v3713
      %v3738 = vunpack.c.l.b16 %v3714
      %v3739 = vunpack.c.l.b16 %v3715
      %v3740 = vunpack.c.l.b16 %v3716
      %v3741 = vunpack.c.l.b16 %v3717
      %v3742 = vunpack.c.l.b16 %v3718
      %v3743 = vunpack.c.l.b16 %v3719
      %v3744 = vunpack.c.l.b16 %v3720
      %v3745 = vunpack.c.l.b16 %v3721
      %v3746 = vpack.c.b16 %v3736, %v3735
      %v3747 = vpack.c.b16 %v3738, %v3737
      %v3748 = vpack.c.b16 %v3740, %v3739
      %v3749 = vpack.c.b16 %v3742, %v3741
      %v3750 = vpack.c.b16 %v3744, %v3743
      %v3751 = vpack.c.b16 %v3745, %v3745
      %v3752 = vrot.slane %v3746, 2
      %v3753 = vrot.slane %v3747, 2
      %v3754 = vsel %vm980, %v3752, %v3753
      %v3755 = vrot.slane %v3748, 2
      %v3756 = vsel %vm980, %v3753, %v3755
      %v3757 = vrot.slane %v3749, 2
      %v3758 = vsel %vm980, %v3755, %v3757
      %v3759 = vrot.slane %v3750, 2
      %v3760 = vsel %vm980, %v3757, %v3759
      %v3761 = vrot.slane %v3751, 2
      %v3762 = vsel %vm980, %v3759, %v3761
      %v3764 = vsel %vm362, %v3754, 0
      %v3767 = vsel %vm362, %v3756, 0
      %v3770 = vsel %vm362, %v3758, 0
      %v3773 = vsel %vm362, %v3760, 0
      %v3776 = vsel %vm362, %v3762, 0
      %v3779 = vsel %vm378, %v3723, 0
      %3781 = vmatprep.subr.bf16.mxu0 0
      %3782 = vmatpush1.bf16.msra.mxu0 0
      %3783 = vmatprep.subr.bf16.mxu0 0
      %3784 = vmatpush1.bf16.msra.mxu0 0
      %3785 = vmatprep.subr.bf16.mxu0 0
      %3786 = vmatpush1.bf16.msra.mxu0 0
      %3787 = vmatprep.subr.bf16.mxu0 0
      %3788 = vmatpush1.bf16.msra.mxu0 0
      %3789 = vmatprep.subr.bf16.mxu0 0
      %3790 = vmatpush1.bf16.msra.mxu0 0
      %3791 = vmatprep.subr.bf16.mxu0 0
      %3792 = vmatpush1.bf16.msra.mxu0 0
      %3793 = vmatprep.subr.bf16.mxu0 0
      %3794 = vmatpush1.bf16.msra.mxu0 0
      %3795 = vmatprep.subr.bf16.mxu0 0
      %3796 = vmatpush1.bf16.msra.mxu0 %v3779
      %3797 = vmatprep.subr.bf16.mxu0 0
      %3798 = vmatpush2.bf16.msra.mxu0 0
      %3799 = vmatprep.subr.bf16.mxu0 0
      %3800 = vmatpush2.bf16.msra.mxu0 0
      %3801 = vmatprep.subr.bf16.mxu0 0
      %3802 = vmatpush2.bf16.msra.mxu0 0
      %3803 = vmatprep.subr.bf16.mxu0 0
      %3804 = vmatpush2.bf16.msra.mxu0 0
      %3805 = vmatprep.subr.bf16.mxu0 0
      %3806 = vmatpush2.bf16.msra.mxu0 0
      %3807 = vmatprep.subr.bf16.mxu0 0
      %3808 = vmatpush2.bf16.msra.mxu0 0
      %3809 = vmatprep.subr.bf16.mxu0 0
      %3810 = vmatpush2.bf16.msra.mxu0 0
      %3811 = vmatprep.subr.bf16.mxu0 0
      %3812 = vmatpush2.bf16.msra.mxu0 0
      %3813 = vmatprep.mubr.bf16.mxu0 0
      %3814 = vmatmul.mubr.bf16.gmra.mxu0 %v3764
      %v3815 = vpop.f32.mrf.mxu0
      %v3816 = vadd.f32 0.0, %v3815
      %v3817 = vpop.f32.mrf.mxu0
      %v3818 = vpop.f32.mrf.mxu0
      %v3819 = vadd.f32 0.0, %v3818
      %v3820 = vpop.f32.mrf.mxu0
      %3821 = vmatprep.mubr.bf16.mxu0 0
      %3822 = vmatmul.mubr.bf16.gmra.mxu0 %v3767
      %v3823 = vpop.f32.mrf.mxu0
      %v3824 = vadd.f32 0.0, %v3823
      %v3825 = vpop.f32.mrf.mxu0
      %v3826 = vpop.f32.mrf.mxu0
      %v3827 = vadd.f32 0.0, %v3826
      %v3828 = vpop.f32.mrf.mxu0
      %3829 = vmatprep.mubr.bf16.mxu0 0
      %3830 = vmatmul.mubr.bf16.gmra.mxu0 %v3770
      %v3831 = vpop.f32.mrf.mxu0
      %v3832 = vadd.f32 0.0, %v3831
      %v3833 = vpop.f32.mrf.mxu0
      %v3834 = vpop.f32.mrf.mxu0
      %v3835 = vadd.f32 0.0, %v3834
      %v3836 = vpop.f32.mrf.mxu0
      %3837 = vmatprep.mubr.bf16.mxu0 0
      %3838 = vmatmul.mubr.bf16.gmra.mxu0 %v3773
      %v3839 = vpop.f32.mrf.mxu0
      %v3840 = vadd.f32 0.0, %v3839
      %v3841 = vpop.f32.mrf.mxu0
      %v3842 = vpop.f32.mrf.mxu0
      %v3843 = vadd.f32 0.0, %v3842
      %v3844 = vpop.f32.mrf.mxu0
      %3845 = vmatprep.mubr.bf16.mxu0 0
      %3846 = vmatmul.mubr.bf16.gmra.mxu0 %v3776
      %v3847 = vpop.f32.mrf.mxu0
      %v3848 = vadd.f32 0.0, %v3847
      %v3849 = vpop.f32.mrf.mxu0
      %v3850 = vpop.f32.mrf.mxu0
      %v3851 = vadd.f32 0.0, %v3850
      %v3852 = vpop.f32.mrf.mxu0
      %3853 = vdwg.mxu0
      %v3854 = vadd.f32 %v3701, %v3816
      %v3855 = vadd.f32 %v3702, %v3819
      %v3856 = vadd.f32 %v3703, %v3824
      %v3857 = vadd.f32 %v3704, %v3827
      %v3858 = vadd.f32 %v3705, %v3832
      %v3859 = vadd.f32 %v3706, %v3835
      %v3860 = vadd.f32 %v3707, %v3840
      %v3861 = vadd.f32 %v3708, %v3843
      %v3862 = vadd.f32 %v3709, %v3848
      %v3863 = vadd.f32 %v3710, %v3851
      %v3864 = vld [vmem:[%s2837 + $0x30] sm:$0x7]
      %s3865 = scalar_lea.vmem %s1, 100
      %v3866 = vld [vmem:[%s3865] sm:$0xf]
      %v3868 = vunpack.c.l.b16 %v3864
      %v3869 = vpack.c.b16 %v3868, %v3868
      %v3871 = vshrl.u32 %v3746, 16
      %v3873 = vrot.slane %v3871, 2
      %v3874 = vshll.u32 %v3746, 16
      %v3876 = vrot.slane %v3874, 3
      %v3877 = vor.u32 %v3873, %v3876
      %v3879 = vshrl.u32 %v3747, 16
      %v3881 = vrot.slane %v3879, 2
      %v3882 = vshll.u32 %v3747, 16
      %v3884 = vrot.slane %v3882, 3
      %v3885 = vor.u32 %v3881, %v3884
      %v3886 = vsel %vm1252, %v3877, %v3885
      %v3888 = vshrl.u32 %v3748, 16
      %v3890 = vrot.slane %v3888, 2
      %v3891 = vshll.u32 %v3748, 16
      %v3893 = vrot.slane %v3891, 3
      %v3894 = vor.u32 %v3890, %v3893
      %v3895 = vsel %vm1252, %v3885, %v3894
      %v3897 = vshrl.u32 %v3749, 16
      %v3899 = vrot.slane %v3897, 2
      %v3900 = vshll.u32 %v3749, 16
      %v3902 = vrot.slane %v3900, 3
      %v3903 = vor.u32 %v3899, %v3902
      %v3904 = vsel %vm1252, %v3894, %v3903
      %v3906 = vshrl.u32 %v3750, 16
      %v3908 = vrot.slane %v3906, 2
      %v3909 = vshll.u32 %v3750, 16
      %v3911 = vrot.slane %v3909, 3
      %v3912 = vor.u32 %v3908, %v3911
      %v3913 = vsel %vm1252, %v3903, %v3912
      %v3915 = vshrl.u32 %v3869, 16
      %v3917 = vrot.slane %v3915, 2
      %v3918 = vshll.u32 %v3869, 16
      %v3920 = vrot.slane %v3918, 3
      %v3921 = vor.u32 %v3917, %v3920
      %v3922 = vsel %vm1252, %v3912, %v3921
      %v3924 = vsel %vm362, %v3886, 0
      %v3927 = vsel %vm362, %v3895, 0
      %v3930 = vsel %vm362, %v3904, 0
      %v3933 = vsel %vm362, %v3913, 0
      %v3936 = vsel %vm362, %v3922, 0
      %v3939 = vsel %vm378, %v3866, 0
      %3941 = vmatprep.subr.bf16.mxu0 0
      %3942 = vmatpush1.bf16.msra.mxu0 0
      %3943 = vmatprep.subr.bf16.mxu0 0
      %3944 = vmatpush1.bf16.msra.mxu0 0
      %3945 = vmatprep.subr.bf16.mxu0 0
      %3946 = vmatpush1.bf16.msra.mxu0 0
      %3947 = vmatprep.subr.bf16.mxu0 0
      %3948 = vmatpush1.bf16.msra.mxu0 0
      %3949 = vmatprep.subr.bf16.mxu0 0
      %3950 = vmatpush1.bf16.msra.mxu0 0
      %3951 = vmatprep.subr.bf16.mxu0 0
      %3952 = vmatpush1.bf16.msra.mxu0 0
      %3953 = vmatprep.subr.bf16.mxu0 0
      %3954 = vmatpush1.bf16.msra.mxu0 0
      %3955 = vmatprep.subr.bf16.mxu0 0
      %3956 = vmatpush1.bf16.msra.mxu0 %v3939
      %3957 = vmatprep.subr.bf16.mxu0 0
      %3958 = vmatpush2.bf16.msra.mxu0 0
      %3959 = vmatprep.subr.bf16.mxu0 0
      %3960 = vmatpush2.bf16.msra.mxu0 0
      %3961 = vmatprep.subr.bf16.mxu0 0
      %3962 = vmatpush2.bf16.msra.mxu0 0
      %3963 = vmatprep.subr.bf16.mxu0 0
      %3964 = vmatpush2.bf16.msra.mxu0 0
      %3965 = vmatprep.subr.bf16.mxu0 0
      %3966 = vmatpush2.bf16.msra.mxu0 0
      %3967 = vmatprep.subr.bf16.mxu0 0
      %3968 = vmatpush2.bf16.msra.mxu0 0
      %3969 = vmatprep.subr.bf16.mxu0 0
      %3970 = vmatpush2.bf16.msra.mxu0 0
      %3971 = vmatprep.subr.bf16.mxu0 0
      %3972 = vmatpush2.bf16.msra.mxu0 0
      %3973 = vmatprep.mubr.bf16.mxu0 0
      %3974 = vmatmul.mubr.bf16.gmra.mxu0 %v3924
      %v3975 = vpop.f32.mrf.mxu0
      %v3976 = vadd.f32 0.0, %v3975
      %v3977 = vpop.f32.mrf.mxu0
      %v3978 = vpop.f32.mrf.mxu0
      %v3979 = vadd.f32 0.0, %v3978
      %v3980 = vpop.f32.mrf.mxu0
      %3981 = vmatprep.mubr.bf16.mxu0 0
      %3982 = vmatmul.mubr.bf16.gmra.mxu0 %v3927
      %v3983 = vpop.f32.mrf.mxu0
      %v3984 = vadd.f32 0.0, %v3983
      %v3985 = vpop.f32.mrf.mxu0
      %v3986 = vpop.f32.mrf.mxu0
      %v3987 = vadd.f32 0.0, %v3986
      %v3988 = vpop.f32.mrf.mxu0
      %3989 = vmatprep.mubr.bf16.mxu0 0
      %3990 = vmatmul.mubr.bf16.gmra.mxu0 %v3930
      %v3991 = vpop.f32.mrf.mxu0
      %v3992 = vadd.f32 0.0, %v3991
      %v3993 = vpop.f32.mrf.mxu0
      %v3994 = vpop.f32.mrf.mxu0
      %v3995 = vadd.f32 0.0, %v3994
      %v3996 = vpop.f32.mrf.mxu0
      %3997 = vmatprep.mubr.bf16.mxu0 0
      %3998 = vmatmul.mubr.bf16.gmra.mxu0 %v3933
      %v3999 = vpop.f32.mrf.mxu0
      %v4000 = vadd.f32 0.0, %v3999
      %v4001 = vpop.f32.mrf.mxu0
      %v4002 = vpop.f32.mrf.mxu0
      %v4003 = vadd.f32 0.0, %v4002
      %v4004 = vpop.f32.mrf.mxu0
      %4005 = vmatprep.mubr.bf16.mxu0 0
      %4006 = vmatmul.mubr.bf16.gmra.mxu0 %v3936
      %v4007 = vpop.f32.mrf.mxu0
      %v4008 = vadd.f32 0.0, %v4007
      %v4009 = vpop.f32.mrf.mxu0
      %v4010 = vpop.f32.mrf.mxu0
      %v4011 = vadd.f32 0.0, %v4010
      %v4012 = vpop.f32.mrf.mxu0
      %4013 = vdwg.mxu0
      %v4014 = vadd.f32 %v3854, %v3976
      %v4015 = vadd.f32 %v3855, %v3979
      %v4016 = vadd.f32 %v3856, %v3984
      %v4017 = vadd.f32 %v3857, %v3987
      %v4018 = vadd.f32 %v3858, %v3992
      %v4019 = vadd.f32 %v3859, %v3995
      %v4020 = vadd.f32 %v3860, %v4000
      %v4021 = vadd.f32 %v3861, %v4003
      %v4022 = vadd.f32 %v3862, %v4008
      %v4023 = vadd.f32 %v3863, %v4011
      %v4024 = vld [vmem:[%s2837 + $0x8] sm:$0x8]
      %s4025 = scalar_lea.vmem %s1, 104
      %v4026 = vld [vmem:[%s4025] sm:$0xf]
      %v4028 = vunpack.c.l.b16 %v4024
      %v4029 = vpack.c.b16 %v3736, %v4028
      %v4030 = vrot.slane %v4029, 3
      %v4031 = vrot.slane %v3747, 3
      %v4032 = vsel %vm1413, %v4030, %v4031
      %v4033 = vrot.slane %v3748, 3
      %v4034 = vsel %vm1413, %v4031, %v4033
      %v4035 = vrot.slane %v3749, 3
      %v4036 = vsel %vm1413, %v4033, %v4035
      %v4037 = vrot.slane %v3750, 3
      %v4038 = vsel %vm1413, %v4035, %v4037
      %v4039 = vrot.slane %v3869, 3
      %v4040 = vsel %vm1413, %v4037, %v4039
      %v4042 = vsel %vm362, %v4032, 0
      %v4045 = vsel %vm362, %v4034, 0
      %v4048 = vsel %vm362, %v4036, 0
      %v4051 = vsel %vm362, %v4038, 0
      %v4054 = vsel %vm362, %v4040, 0
      %v4057 = vsel %vm378, %v4026, 0
      %4059 = vmatprep.subr.bf16.mxu0 0
      %4060 = vmatpush1.bf16.msra.mxu0 0
      %4061 = vmatprep.subr.bf16.mxu0 0
      %4062 = vmatpush1.bf16.msra.mxu0 0
      %4063 = vmatprep.subr.bf16.mxu0 0
      %4064 = vmatpush1.bf16.msra.mxu0 0
      %4065 = vmatprep.subr.bf16.mxu0 0
      %4066 = vmatpush1.bf16.msra.mxu0 0
      %4067 = vmatprep.subr.bf16.mxu0 0
      %4068 = vmatpush1.bf16.msra.mxu0 0
      %4069 = vmatprep.subr.bf16.mxu0 0
      %4070 = vmatpush1.bf16.msra.mxu0 0
      %4071 = vmatprep.subr.bf16.mxu0 0
      %4072 = vmatpush1.bf16.msra.mxu0 0
      %4073 = vmatprep.subr.bf16.mxu0 0
      %4074 = vmatpush1.bf16.msra.mxu0 %v4057
      %4075 = vmatprep.subr.bf16.mxu0 0
      %4076 = vmatpush2.bf16.msra.mxu0 0
      %4077 = vmatprep.subr.bf16.mxu0 0
      %4078 = vmatpush2.bf16.msra.mxu0 0
      %4079 = vmatprep.subr.bf16.mxu0 0
      %4080 = vmatpush2.bf16.msra.mxu0 0
      %4081 = vmatprep.subr.bf16.mxu0 0
      %4082 = vmatpush2.bf16.msra.mxu0 0
      %4083 = vmatprep.subr.bf16.mxu0 0
      %4084 = vmatpush2.bf16.msra.mxu0 0
      %4085 = vmatprep.subr.bf16.mxu0 0
      %4086 = vmatpush2.bf16.msra.mxu0 0
      %4087 = vmatprep.subr.bf16.mxu0 0
      %4088 = vmatpush2.bf16.msra.mxu0 0
      %4089 = vmatprep.subr.bf16.mxu0 0
      %4090 = vmatpush2.bf16.msra.mxu0 0
      %4091 = vmatprep.mubr.bf16.mxu0 0
      %4092 = vmatmul.mubr.bf16.gmra.mxu0 %v4042
      %v4093 = vpop.f32.mrf.mxu0
      %v4094 = vadd.f32 0.0, %v4093
      %v4095 = vpop.f32.mrf.mxu0
      %v4096 = vpop.f32.mrf.mxu0
      %v4097 = vadd.f32 0.0, %v4096
      %v4098 = vpop.f32.mrf.mxu0
      %4099 = vmatprep.mubr.bf16.mxu0 0
      %4100 = vmatmul.mubr.bf16.gmra.mxu0 %v4045
      %v4101 = vpop.f32.mrf.mxu0
      %v4102 = vadd.f32 0.0, %v4101
      %v4103 = vpop.f32.mrf.mxu0
      %v4104 = vpop.f32.mrf.mxu0
      %v4105 = vadd.f32 0.0, %v4104
      %v4106 = vpop.f32.mrf.mxu0
      %4107 = vmatprep.mubr.bf16.mxu0 0
      %4108 = vmatmul.mubr.bf16.gmra.mxu0 %v4048
      %v4109 = vpop.f32.mrf.mxu0
      %v4110 = vadd.f32 0.0, %v4109
      %v4111 = vpop.f32.mrf.mxu0
      %v4112 = vpop.f32.mrf.mxu0
      %v4113 = vadd.f32 0.0, %v4112
      %v4114 = vpop.f32.mrf.mxu0
      %4115 = vmatprep.mubr.bf16.mxu0 0
      %4116 = vmatmul.mubr.bf16.gmra.mxu0 %v4051
      %v4117 = vpop.f32.mrf.mxu0
      %v4118 = vadd.f32 0.0, %v4117
      %v4119 = vpop.f32.mrf.mxu0
      %v4120 = vpop.f32.mrf.mxu0
      %v4121 = vadd.f32 0.0, %v4120
      %v4122 = vpop.f32.mrf.mxu0
      %4123 = vmatprep.mubr.bf16.mxu0 0
      %4124 = vmatmul.mubr.bf16.gmra.mxu0 %v4054
      %v4125 = vpop.f32.mrf.mxu0
      %v4126 = vadd.f32 0.0, %v4125
      %v4127 = vpop.f32.mrf.mxu0
      %v4128 = vpop.f32.mrf.mxu0
      %v4129 = vadd.f32 0.0, %v4128
      %v4130 = vpop.f32.mrf.mxu0
      %4131 = vdwg.mxu0
      %v4132 = vadd.f32 %v4014, %v4094
      %v4133 = vadd.f32 %v4015, %v4097
      %v4134 = vadd.f32 %v4016, %v4102
      %v4135 = vadd.f32 %v4017, %v4105
      %v4136 = vadd.f32 %v4018, %v4110
      %v4137 = vadd.f32 %v4019, %v4113
      %v4138 = vadd.f32 %v4020, %v4118
      %v4139 = vadd.f32 %v4021, %v4121
      %v4140 = vadd.f32 %v4022, %v4126
      %v4141 = vadd.f32 %v4023, %v4129
      %4142 = vst.msk [vmem:[%s257] sm:$0xff] %vm362, %v4132
      %4143 = vst.msk [vmem:[%s257 + $0x8] sm:$0xff] %vm362, %v4133
      %4144 = vst.msk [vmem:[%s257 + $0x10] sm:$0xff] %vm362, %v4134
      %4145 = vst.msk [vmem:[%s257 + $0x18] sm:$0xff] %vm362, %v4135
      %4146 = vst.msk [vmem:[%s257 + $0x20] sm:$0xff] %vm362, %v4136
      %4147 = vst.msk [vmem:[%s257 + $0x28] sm:$0xff] %vm362, %v4137
      %4148 = vst.msk [vmem:[%s257 + $0x30] sm:$0xff] %vm362, %v4138
      %4149 = vst.msk [vmem:[%s257 + $0x38] sm:$0xff] %vm362, %v4139
      %4150 = vst.msk [vmem:[%s257 + $0x40] sm:$0xff] %vm362, %v4140
      %4151 = vst.msk [vmem:[%s257 + $0x48] sm:$0xff] %vm362, %v4141
      %v4152 = vld [vmem:[%s2] sm:$0xff]
      %v4153 = vld [vmem:[%s2 + $0x8] sm:$0xff]
      %v4154 = vld [vmem:[%s2 + $0x10] sm:$0xff]
      %v4155 = vld [vmem:[%s2 + $0x18] sm:$0xff]
      %v4156 = vld [vmem:[%s2 + $0x20] sm:$0xff]
      %v4157 = vld [vmem:[%s2 + $0x28] sm:$0xff]
      %v4158 = vld [vmem:[%s2 + $0x30] sm:$0xff]
      %v4159 = vld [vmem:[%s2 + $0x38] sm:$0xff]
      %v4160 = vld [vmem:[%s2 + $0x40] sm:$0xff]
      %v4161 = vld [vmem:[%s2 + $0x48] sm:$0xff]
      %4163 = vset.pattern.permute.xlu0 0
      %4164 = vperm.xlu0 %4163, %v4152
      %v4165 = vpop.permute.xlu0 %4164
      %4168 = vset.pattern.permute.xlu0 0
      %4169 = vperm.xlu0 %4168, %v4153
      %v4170 = vpop.permute.xlu0 %4169
      %4173 = vset.pattern.permute.xlu0 0
      %4174 = vperm.xlu0 %4173, %v4154
      %v4175 = vpop.permute.xlu0 %4174
      %4178 = vset.pattern.permute.xlu0 0
      %4179 = vperm.xlu0 %4178, %v4155
      %v4180 = vpop.permute.xlu0 %4179
      %4183 = vset.pattern.permute.xlu0 0
      %4184 = vperm.xlu0 %4183, %v4156
      %v4185 = vpop.permute.xlu0 %4184
      %4188 = vset.pattern.permute.xlu0 0
      %4189 = vperm.xlu0 %4188, %v4157
      %v4190 = vpop.permute.xlu0 %4189
      %4193 = vset.pattern.permute.xlu0 0
      %4194 = vperm.xlu0 %4193, %v4158
      %v4195 = vpop.permute.xlu0 %4194
      %4198 = vset.pattern.permute.xlu0 0
      %4199 = vperm.xlu0 %4198, %v4159
      %v4200 = vpop.permute.xlu0 %4199
      %4203 = vset.pattern.permute.xlu0 0
      %4204 = vperm.xlu0 %4203, %v4160
      %v4205 = vpop.permute.xlu0 %4204
      %4208 = vset.pattern.permute.xlu0 0
      %4209 = vperm.xlu0 %4208, %v4161
      %v4210 = vpop.permute.xlu0 %4209
      %v4212 = vmul.f32 %v4132, %v4165
      %v4213 = vmul.f32 %v4133, %v4170
      %v4214 = vmul.f32 %v4134, %v4175
      %v4215 = vmul.f32 %v4135, %v4180
      %v4216 = vmul.f32 %v4136, %v4185
      %v4217 = vmul.f32 %v4137, %v4190
      %v4218 = vmul.f32 %v4138, %v4195
      %v4219 = vmul.f32 %v4139, %v4200
      %v4220 = vmul.f32 %v4140, %v4205
      %v4221 = vmul.f32 %v4141, %v4210
      %v4222 = vld [vmem:[%s260] sm:$0x1]
      %v4223 = vsel %vm362, %v4212, 0.0
      %v4224 = vsel %vm362, %v4213, 0.0
      %v4225 = vadd.f32 %v4223, %v4224
      %v4226 = vsel %vm362, %v4214, 0.0
      %v4227 = vadd.f32 %v4225, %v4226
      %v4228 = vsel %vm362, %v4215, 0.0
      %v4229 = vadd.f32 %v4227, %v4228
      %v4230 = vsel %vm362, %v4216, 0.0
      %v4231 = vadd.f32 %v4229, %v4230
      %v4232 = vsel %vm362, %v4217, 0.0
      %v4233 = vadd.f32 %v4231, %v4232
      %v4234 = vsel %vm362, %v4218, 0.0
      %v4235 = vadd.f32 %v4233, %v4234
      %v4236 = vsel %vm362, %v4219, 0.0
      %v4237 = vadd.f32 %v4235, %v4236
      %v4238 = vsel %vm362, %v4220, 0.0
      %v4239 = vadd.f32 %v4237, %v4238
      %v4240 = vsel %vm362, %v4221, 0.0
      %v4241 = vadd.f32 %v4239, %v4240
      %v4242 = vrot.slane %v4241, 4
      %v4243 = vadd.f32 %v4241, %v4242
      %v4244 = vrot.slane %v4243, 2
      %v4245 = vadd.f32 %v4243, %v4244
      %v4246 = vrot.slane %v4245, 1
      %v4247 = vadd.f32 %v4245, %v4246
      %v4248 = vadd.f32 %v4222, %v4247
      %vm4249 = vcmask 57344
      %4250 = vst.msk [vmem:[%s260] sm:$0x1] %vm4249, %v4248
      %v4251 = vld [vmem:[%s263] sm:$0x1]
      %v4252 = vmul.f32 %v4212, %v4132
      %v4253 = vmul.f32 %v4213, %v4133
      %v4254 = vmul.f32 %v4214, %v4134
      %v4255 = vmul.f32 %v4215, %v4135
      %v4256 = vmul.f32 %v4216, %v4136
      %v4257 = vmul.f32 %v4217, %v4137
      %v4258 = vmul.f32 %v4218, %v4138
      %v4259 = vmul.f32 %v4219, %v4139
      %v4260 = vmul.f32 %v4220, %v4140
      %v4261 = vmul.f32 %v4221, %v4141
      %v4262 = vsel %vm362, %v4252, 0.0
      %v4263 = vsel %vm362, %v4253, 0.0
      %v4264 = vadd.f32 %v4262, %v4263
      %v4265 = vsel %vm362, %v4254, 0.0
      %v4266 = vadd.f32 %v4264, %v4265
      %v4267 = vsel %vm362, %v4255, 0.0
      %v4268 = vadd.f32 %v4266, %v4267
      %v4269 = vsel %vm362, %v4256, 0.0
      %v4270 = vadd.f32 %v4268, %v4269
      %v4271 = vsel %vm362, %v4257, 0.0
      %v4272 = vadd.f32 %v4270, %v4271
      %v4273 = vsel %vm362, %v4258, 0.0
      %v4274 = vadd.f32 %v4272, %v4273
      %v4275 = vsel %vm362, %v4259, 0.0
      %v4276 = vadd.f32 %v4274, %v4275
      %v4277 = vsel %vm362, %v4260, 0.0
      %v4278 = vadd.f32 %v4276, %v4277
      %v4279 = vsel %vm362, %v4261, 0.0
      %v4280 = vadd.f32 %v4278, %v4279
      %v4281 = vrot.slane %v4280, 4
      %v4282 = vadd.f32 %v4280, %v4281
      %v4283 = vrot.slane %v4282, 2
      %v4284 = vadd.f32 %v4282, %v4283
      %v4285 = vrot.slane %v4284, 1
      %v4286 = vadd.f32 %v4284, %v4285
      %v4287 = vadd.f32 %v4251, %v4286
      %4288 = vst.msk [vmem:[%s263] sm:$0x1] %vm4249, %v4287
      %p4289 = scmp.lt.s32.totalorder %s21, 1
      %s4290 = scalar_select %p4289, %s21, 1
      %p4291 = scmp.lt.s32.totalorder %s22, 7
      %s4292 = scalar_select %p4291, %s22, 7
      %s4293 = smul.addr %s4292, 10
      %s4294 = smul.addr %s4290, 80
      %s4295 = sadd.s32 %s4293, %s4294
      %s4296 = smul.addr %s4295, 8
      %s4297 = scalar_lea.vmem %s3, %s4296
      %p4298 = scmp.lt.s32.totalorder %s21, 1
      %s4299 = scalar_select %p4298, %s21, 1
      %s4300 = scalar_lea.vmem %s4, %s4299
      %p4301 = scmp.lt.s32.totalorder %s21, 1
      %s4302 = scalar_select %p4301, %s21, 1
      %s4303 = scalar_lea.vmem %s5, %s4302
      // Predicated region
      $region37: #{res_block_forward.4} parent=31 // pred_check
        %p4304 = pneg %p117
      $region38: #{res_block_forward.4} parent=31 // pred_check_branch
        %4306 = sbr.rel (%p4304) target = $region40
      $region39: #{res_block_forward.4} parent=31 // pred_region
        _
      $region40: #{res_block_forward.4} parent=31 // pred_fallthru
        _
      // Predicated region
      $region41: #{res_block_forward.4} parent=31 // pred_check
        %p4307 = pneg %p143
      $region42: #{res_block_forward.4} parent=31 // pred_check_branch
        %4309 = sbr.rel (%p4307) target = $region44
      $region43: #{res_block_forward.4} parent=31 // pred_region
        _
      $region44: #{res_block_forward.4} parent=31 // pred_fallthru
        _
      // Predicated region
      $region45: #{res_block_forward.4} parent=31 // pred_check
        %p4310 = pneg %p169
      $region46: #{res_block_forward.4} parent=31 // pred_check_branch
        %4312 = sbr.rel (%p4310) target = $region48
      $region47: #{res_block_forward.4} parent=31 // pred_region
        _
      $region48: #{res_block_forward.4} parent=31 // pred_fallthru
        _
    $region32: #{res_block_forward.4} parent=5 // pred_fallthru
      _
    %p4313 = scmp.le.s32.totalorder 2, %s12
    // Predicated region
    $region49: #{res_block_forward.4} parent=5 // pred_check
      %p4314 = pneg %p4313
    $region50: #{res_block_forward.4} parent=5 // pred_check_branch
      %4316 = sbr.rel (%p4314) target = $region52
    $region51: #{res_block_forward.4} parent=5 // pred_region
      %s4317 = ssub.s32 %s12, 2
      // Predicated region
      $region53: #{res_block_forward.4} parent=51 // pred_check
        %p4318 = pneg %p123
      $region54: #{res_block_forward.4} parent=51 // pred_check_branch
        %4320 = sbr.rel (%p4318) target = $region56
      $region55: #{res_block_forward.4} parent=51 // pred_region
        %p4321 = scmp.lt.s32.totalorder %s23, 1
        %s4322 = scalar_select %p4321, %s23, 1
        %p4323 = scmp.lt.s32.totalorder %s24, 7
        %s4324 = scalar_select %p4323, %s24, 7
        %s4325 = smul.addr %s4324, 10
        %s4326 = smul.addr %s4322, 80
        %s4327 = sadd.s32 %s4325, %s4326
        %s4328 = smul.addr %s4327, 8
        %s4329 = scalar_lea.vmem %s3, %s4328
      $region56: #{res_block_forward.4} parent=51 // pred_fallthru
        _
      // Predicated region
      $region57: #{res_block_forward.4} parent=51 // pred_check
        %p4330 = pneg %p149
      $region58: #{res_block_forward.4} parent=51 // pred_check_branch
        %4332 = sbr.rel (%p4330) target = $region60
      $region59: #{res_block_forward.4} parent=51 // pred_region
        %p4333 = scmp.lt.s32.totalorder %s23, 1
        %s4334 = scalar_select %p4333, %s23, 1
        %s4335 = scalar_lea.vmem %s4, %s4334
      $region60: #{res_block_forward.4} parent=51 // pred_fallthru
        _
      // Predicated region
      $region61: #{res_block_forward.4} parent=51 // pred_check
        %p4336 = pneg %p175
      $region62: #{res_block_forward.4} parent=51 // pred_check_branch
        %4338 = sbr.rel (%p4336) target = $region64
      $region63: #{res_block_forward.4} parent=51 // pred_region
        %p4339 = scmp.lt.s32.totalorder %s23, 1
        %s4340 = scalar_select %p4339, %s23, 1
        %s4341 = scalar_lea.vmem %s5, %s4340
      $region64: #{res_block_forward.4} parent=51 // pred_fallthru
        _
    $region52: #{res_block_forward.4} parent=5 // pred_fallthru
      _
  $region6: #{res_block_forward.4} parent=0 // loop_footer
    %s16 = sadd.s32 1, %s12
  $region7: #{res_block_forward.4} parent=0 // loop_footer_branch
    %11 = sbr.rel target = $region3
  $region8: #{res_block_forward.4} parent=0 // loop_exit
    _

</llo_original>
